<compile_context>
chip_gen: v5e
topology: v5e:2x2
jax: 0.10.0
libtpu: 0.0.40
codegen_flags: <defaults>
</compile_context>

<pallas_src>
import functools

import numpy as np
import jax
import jax.numpy as jnp
from jax.experimental import pallas as pl
from jax.experimental.pallas import tpu as pltpu

# ----------------------- synthetic hyper-parameters (av / config) ------------
MAX_SET_SIZE = 16        # max(av.MAX_QUERY_SUBGRAPH_SIZE, av.MAX_CORPUS_SUBGRAPH_SIZE)
NODE_FEAT_DIM = 8        # raw node feature dim
EDGE_FEAT_DIM = 4        # raw edge feature dim
NODE_STATE_DIM = 32      # av.filters_3 (prop-layer node embedding dim)
EDGE_STATE_DIM = 1       # encoder edge output dim (must be 1: edge scoring feeds ones)
TRANSFORM_DIM = 16       # av.transform_dim
MSG_HIDDEN = 128         # hidden width of prop_layer._message_net
MSG_DIM = 64             # prop_layer._message_net[-1].out_features
N_PROP_LAYERS = 3
SINKHORN_TEMP = 0.1
SINKHORN_ITERS = 20
ROW_CHUNK = 8            # edge-score row chunk (bounds vreg live ranges)
BATCH_BLOCK = 2          # graphs per grid step (BB); raise towards 16-64 for real
                         # batch sizes (keep >=2 grid steps for v7x megacore).
# TODO(synk): pytorch_sinkhorn_iters adds Gumbel noise (noise_factor); omitted
# here (noise_factor = 0) to keep the kernel deterministic.


# ============================== fused Pallas kernel ===========================

def _fused_kernel(qsz_ref, csz_ref,                       # scalar prefetch (SMEM)
                  x_ref, qadj_ref, cadj_ref,
                  fc1w_ref, fc1b_ref, fc2w_ref, fc2b_ref,
                  we_ref, be_ref, vf_ref, vr_ref, cc_ref,
                  out_ref,
                  p_sc, qedge_sc, cedge_sc,
                  *, BB, M, EH, row_chunk, temp, n_iters):
    """One block of BB (query, corpus) graph pairs per grid step.

    x_ref      : (BB, 2M, D)  stacked [query ; corpus] node embeddings
    q/cadj_ref : (BB, M, M)   adjacency matrices (set-size mask built in-kernel)
    we_ref     : (D, 4*EH) [wfa | wfb | wra | wrb], be_ref matching bias row
    vf/vr_ref  : (1, EH)   fused (msg layer2 @ edge_score_fc) vectors
    cc_ref     : (1, 1)    fused constant (both direction biases + 2*esc bias)
    out_ref    : (1, BB)   per-graph scores (lane-contiguous VMEM block)
    p_sc       : (BB*2M, 4*EH) VMEM scratch of edge pre-activations
    q/cedge_sc : (BB, M, M)    VMEM scratch edge-score matrices
    """
    g0 = pl.program_id(0) * BB
    TWO_M = 2 * M

    X = x_ref[...].reshape(BB * TWO_M, -1)                       # (BB*2M, D)

    # ---- phase 1: fc2(relu(fc1(x))) for all BB graphs in one MXU pass --------
    h = jnp.maximum(jnp.dot(X, fc1w_ref[...],
                            preferred_element_type=jnp.float32) + fc1b_ref[...], 0.0)
    t = jnp.dot(h, fc2w_ref[...],
                preferred_element_type=jnp.float32) + fc2b_ref[...]   # (BB*2M, T)

    # ---- phase 2: edge pre-activations for all BB graphs in one MXU pass -----
    p_sc[...] = (jnp.dot(X, we_ref[...],
                         preferred_element_type=jnp.float32) + be_ref[...])

    vf = vf_ref[...]                                             # (1, EH)
    vr = vr_ref[...]
    cc = cc_ref[...]                                             # (1, 1)

    rowsM = jax.lax.broadcasted_iota(jnp.int32, (M, 1), 0)       # node ids
    iota_i = jax.lax.broadcasted_iota(jnp.int32, (M, M), 0)
    iota_j = jax.lax.broadcasted_iota(jnp.int32, (M, M), 1)

    sk_list = []
    for bi in range(BB):              # compile-time unrolled over the graph block
        qs = qsz_ref[g0 + bi]
        cs = csz_ref[g0 + bi]
        qbase = bi * TWO_M
        cbase = qbase + M

        # sinkhorn input: (mask_q * t_q) @ (mask_c * t_c)^T  (tiny per-graph)
        tq = t[qbase:qbase + M]                                  # (M, T)
        tc = t[cbase:cbase + M]
        mq = jnp.where(rowsM < qs, tq, 0.0)
        mc = jnp.where(rowsM < cs, tc, 0.0)
        sk_list.append(jax.lax.dot_general(
            mq, mc, (((1,), (1,)), ((), ())),
            preferred_element_type=jnp.float32))                 # (M, M)

        # pairwise edge scores for both graphs of the pair (unrolled chunks)
        for base, sz, adj_ref, edge_sc in ((qbase, qs, qadj_ref, qedge_sc),
                                           (cbase, cs, cadj_ref, cedge_sc)):
            # set-size mask * adjacency, rebuilt from the scalar size
            mask = jnp.where((iota_i < sz) & (iota_j < sz), adj_ref[bi], 0.0)
            bfm = p_sc[base:base + M, EH:2 * EH]        # forward, dst-node term
            ar = p_sc[base:base + M, 2 * EH:3 * EH]     # reverse, dst-node term
            for ci in range(M // row_chunk):            # fully unrolled (2 trips)
                i0 = ci * row_chunk
                af = p_sc[base + i0:base + i0 + row_chunk, 0:EH]
                brm = p_sc[base + i0:base + i0 + row_chunk, 3 * EH:4 * EH]
                rf = jnp.maximum(af[:, None, :] + bfm[None, :, :], 0.0)  # (RC,M,EH)
                sf = jnp.sum(rf * vf[None, :, :], axis=-1)               # (RC, M)
                rr = jnp.maximum(brm[:, None, :] + ar[None, :, :], 0.0)
                sr = jnp.sum(rr * vr[None, :, :], axis=-1)
                edge_sc[bi, i0:i0 + row_chunk, :] = (
                    (sf + sr + cc) * mask[i0:i0 + row_chunk, :])

    sk = jnp.stack(sk_list)                                      # (BB, M, M)

    # ---- phase 3: Sinkhorn (unrolled, batched over BB) + bilinear hinge ------
    la = sk * (1.0 / temp)

    def lse(z, axis):
        zm = jnp.max(z, axis=axis, keepdims=True)
        return zm + jnp.log(jnp.sum(jnp.exp(z - zm), axis=axis, keepdims=True))

    for _ in range(n_iters):          # n_iters is a compile-time constant
        la = la - lse(la, 2)          # torch dim=2 (normalize rows)
        la = la - lse(la, 1)          # torch dim=1 (normalize columns)
    tp = jnp.exp(la)                                             # (BB, M, M)

    q_edge = qedge_sc[...]
    c_edge = cedge_sc[...]
    tmp = jnp.einsum('bij,bjk->bik', tp, c_edge,
                     preferred_element_type=jnp.float32)
    s = jnp.einsum('bik,blk->bil', tmp, tp,
                   preferred_element_type=jnp.float32)
    hinge = jnp.maximum(q_edge - s, 0.0)
    per_graph = jnp.sum(jnp.sum(hinge, axis=2), axis=1)          # (BB,)
    out_ref[...] = (-per_graph).reshape(1, BB)


def fused_scores(p, q_emb, c_emb, q_sizes, c_sizes, q_adj, c_adj,
                 *, block_b=BATCH_BLOCK):
    """Fold weights, stack q/c rows, launch the single fused batched kernel."""
    B, M, D = q_emb.shape
    T = p["fc1_w"].shape[1]
    EH = p["msg_w1"].shape[1]

    wfa, wfb, bf, vf, cf = _split_msg_weights(p, "msg")
    wra, wrb, br, vr, cr = _split_msg_weights(p, "rmsg")
    we = jnp.concatenate([wfa, wfb, wra, wrb], axis=1)           # (D, 4*EH)
    be = jnp.concatenate([bf, jnp.zeros_like(bf), jnp.zeros_like(br), br], axis=1)
    cc = jnp.reshape(cf + cr, (1, 1))

    x = jnp.concatenate([q_emb, c_emb], axis=1)                  # (B, 2M, D)

    BB = max(1, min(block_b, B))
    nblocks = -(-B // BB)
    Bp = nblocks * BB
    q_sizes = np.asarray(q_sizes, np.int32)
    c_sizes = np.asarray(c_sizes, np.int32)
    if Bp != B:
        pad = Bp - B
        x = jnp.pad(x, ((0, pad), (0, 0), (0, 0)))
        q_adj = jnp.pad(q_adj, ((0, pad), (0, 0), (0, 0)))
        c_adj = jnp.pad(c_adj, ((0, pad), (0, 0), (0, 0)))
        q_sizes = np.pad(q_sizes, (0, pad))
        c_sizes = np.pad(c_sizes, (0, pad))
    q_sizes = jnp.asarray(q_sizes, jnp.int32)
    c_sizes = jnp.asarray(c_sizes, jnp.int32)

    kernel = functools.partial(_fused_kernel, BB=BB, M=M, EH=EH,
                               row_chunk=ROW_CHUNK, temp=SINKHORN_TEMP,
                               n_iters=SINKHORN_ITERS)

    grid_spec = pltpu.PrefetchScalarGridSpec(
        num_scalar_prefetch=2,
        grid=(nblocks,),
        in_specs=[
            pl.BlockSpec((BB, 2 * M, D), lambda b, *_: (b, 0, 0)),   # x
            pl.BlockSpec((BB, M, M), lambda b, *_: (b, 0, 0)),       # q adjacency
            pl.BlockSpec((BB, M, M), lambda b, *_: (b, 0, 0)),       # c adjacency
            pl.BlockSpec((D, T), lambda b, *_: (0, 0)),              # fc1_w
            pl.BlockSpec((1, T), lambda b, *_: (0, 0)),              # fc1_b
            pl.BlockSpec((T, T), lambda b, *_: (0, 0)),              # fc2_w
            pl.BlockSpec((1, T), lambda b, *_: (0, 0)),              # fc2_b
            pl.BlockSpec((D, 4 * EH), lambda b, *_: (0, 0)),         # we
            pl.BlockSpec((1, 4 * EH), lambda b, *_: (0, 0)),         # be
            pl.BlockSpec((1, EH), lambda b, *_: (0, 0)),             # vf
            pl.BlockSpec((1, EH), lambda b, *_: (0, 0)),             # vr
            pl.BlockSpec((1, 1), lambda b, *_: (0, 0)),              # cc
        ],
        out_specs=pl.BlockSpec((None, 1, BB), lambda b, *_: (b, 0, 0)),
        scratch_shapes=[
            pltpu.VMEM((BB * 2 * M, 4 * EH), jnp.float32),  # edge pre-activations
            pltpu.VMEM((BB, M, M), jnp.float32),            # q edge scores
            pltpu.VMEM((BB, M, M), jnp.float32),            # c edge scores
        ],
    )

    out = pl.pallas_call(
        kernel,
        grid_spec=grid_spec,
        out_shape=jax.ShapeDtypeStruct((nblocks, 1, BB), jnp.float32),
        compiler_params=pltpu.CompilerParams(dimension_semantics=("parallel",)),
    )(q_sizes, c_sizes, x, q_adj, c_adj,
      p["fc1_w"], p["fc1_b"][None, :], p["fc2_w"], p["fc2_b"][None, :],
      we, be, vf, vr, cc)
    return out.reshape(-1)[:B]


# ============================ plain-JAX glue (GMN) ============================

def _mlp2(x, w1, b1, w2, b2):
    return jnp.maximum(x @ w1 + b1, 0.0) @ w2 + b2


def prop_layer_apply(p, node_states, from_idx, to_idx, edge_features):
    """GraphPropLayer: bidirectional message passing + node update."""
    n = node_states.shape[0]
    fs = node_states[from_idx]
    ts = node_states[to_idx]
    fwd = _mlp2(jnp.concatenate([fs, ts, edge_features], -1),
                p["msg_w1"], p["msg_b1"], p["msg_w2"], p["msg_b2"])
    agg = jax.ops.segment_sum(fwd, to_idx, num_segments=n)
    rev = _mlp2(jnp.concatenate([ts, fs, edge_features], -1),
                p["rmsg_w1"], p["rmsg_b1"], p["rmsg_w2"], p["rmsg_b2"])
    agg = agg + jax.ops.segment_sum(rev, from_idx, num_segments=n)
    # TODO(synk): gmngen.GraphPropLayer uses a GRU/MLP node update; simplified
    # here to a bounded tanh-MLP update (synthetic parameters anyway).
    return jnp.tanh(jnp.concatenate([node_states, agg], -1) @ p["upd_w"] + p["upd_b"])


def graph_size_mask(sz, M, T):
    return (jnp.arange(M)[:, None] < sz).astype(jnp.float32) * jnp.ones((1, T), jnp.float32)


def set_size_mask(sz, M):
    r = (jnp.arange(M) < sz).astype(jnp.float32)
    return r[:, None] * r[None, :]


def _gmn_frontend(p, node_features, edge_features, from_idx, to_idx, batch_data_sizes):
    """Encoder + n_prop_layers of message passing + split / pad into (B, M, D)."""
    M = MAX_SET_SIZE
    nfe = node_features @ p["enc_node_w"] + p["enc_node_b"]
    efe = edge_features @ p["enc_edge_w"] + p["enc_edge_b"]
    for _ in range(N_PROP_LAYERS):
        nfe = prop_layer_apply(p, nfe, from_idx, to_idx, efe)

    flat = [s for pair in batch_data_sizes for s in pair]
    offs = np.cumsum([0] + flat)
    padded = [jnp.pad(nfe[int(offs[i]):int(offs[i + 1])], ((0, M - flat[i]), (0, 0)))
              for i in range(len(flat))]
    q_emb = jnp.stack(padded[0::2])
    c_emb = jnp.stack(padded[1::2])
    q_sizes = np.array([a for a, _ in batch_data_sizes], np.int32)
    c_sizes = np.array([b for _, b in batch_data_sizes], np.int32)
    return q_emb, c_emb, q_sizes, c_sizes


def _split_msg_weights(p, prefix):
    """Fold the concat structure [src, dst, edge==1] of the message MLP and the
    (layer2 @ edge_score_fc) composition into kernel-friendly pieces."""
    D = NODE_STATE_DIM
    w1 = p[f"{prefix}_w1"]
    b1 = p[f"{prefix}_b1"]
    wa = w1[:D]
    wb = w1[D:2 * D]
    b = (w1[2 * D] + b1)[None, :]                       # edge feature is constant 1
    v = (p[f"{prefix}_w2"] @ p["esc_w"]).T              # (1, MSG_HIDDEN)
    c = p[f"{prefix}_b2"] @ p["esc_w"] + p["esc_b"]     # (1,)
    return wa, wb, b, v, c


def forward(p, node_features, edge_features, from_idx, to_idx,
            batch_data_sizes, q_adj, c_adj):
    q_emb, c_emb, q_sizes, c_sizes = _gmn_frontend(
        p, node_features, edge_features, from_idx, to_idx, batch_data_sizes)
    return fused_scores(p, q_emb, c_emb, q_sizes, c_sizes, q_adj, c_adj)


# ----------------------- pure-JAX reference (torch semantics) ----------------

def reference_forward(p, node_features, edge_features, from_idx, to_idx,
                      batch_data_sizes, q_adj, c_adj):
    q_emb, c_emb, q_sizes, c_sizes = _gmn_frontend(
        p, node_features, edge_features, from_idx, to_idx, batch_data_sizes)
    M = MAX_SET_SIZE
    q_nmask = jnp.stack([graph_size_mask(int(s), M, TRANSFORM_DIM) for s in q_sizes])
    c_nmask = jnp.stack([graph_size_mask(int(s), M, TRANSFORM_DIM) for s in c_sizes])
    q_smask = jnp.stack([set_size_mask(int(s), M) for s in q_sizes])
    c_smask = jnp.stack([set_size_mask(int(s), M) for s in c_sizes])

    def transform(x):
        return jnp.maximum(x @ p["fc1_w"] + p["fc1_b"], 0.0) @ p["fc2_w"] + p["fc2_b"]

    mq = q_nmask * transform(q_emb)
    mc = c_nmask * transform(c_emb)
    sk = jnp.einsum("bik,bjk->bij", mq, mc)

    la = sk / SINKHORN_TEMP
    for _ in range(SINKHORN_ITERS):
        la = la - jax.scipy.special.logsumexp(la, axis=2, keepdims=True)
        la = la - jax.scipy.special.logsumexp(la, axis=1, keepdims=True)
    tp = jnp.exp(la)

    def edge_scores(H, smask):
        B = H.shape[0]
        src = jnp.repeat(H, M, axis=1)
        dst = jnp.tile(H, (1, M, 1))
        ones = jnp.ones((B, M * M, 1), jnp.float32)
        fb = jnp.concatenate([src, dst, ones], -1)
        bb = jnp.concatenate([dst, src, ones], -1)
        fm = _mlp2(fb, p["msg_w1"], p["msg_b1"], p["msg_w2"], p["msg_b2"]) @ p["esc_w"] + p["esc_b"]
        bm = _mlp2(bb, p["rmsg_w1"], p["rmsg_b1"], p["rmsg_w2"], p["rmsg_b2"]) @ p["esc_w"] + p["esc_b"]
        return (fm + bm)[..., 0].reshape(B, M, M) * smask

    q_edge = edge_scores(q_emb, q_smask) * q_adj
    c_edge = edge_scores(c_emb, c_smask) * c_adj
    s = jnp.einsum("bij,bjk,blk->bil", tp, c_edge, tp)
    return -jnp.sum(jnp.maximum(q_edge - s, 0.0), axis=(1, 2))


# ============================ parameters & data ===============================

def init_params(key):
    ks = jax.random.split(key, 12)

    def lin(k, fan_in, fan_out):
        kw, kb = jax.random.split(k)
        s = 1.0 / np.sqrt(fan_in)
        return (jax.random.uniform(kw, (fan_in, fan_out), jnp.float32, -s, s),
                jax.random.uniform(kb, (fan_out,), jnp.float32, -s, s))

    p = {}
    p["enc_node_w"], p["enc_node_b"] = lin(ks[0], NODE_FEAT_DIM, NODE_STATE_DIM)
    p["enc_edge_w"], p["enc_edge_b"] = lin(ks[1], EDGE_FEAT_DIM, EDGE_STATE_DIM)
    msg_in = 2 * NODE_STATE_DIM + EDGE_STATE_DIM
    p["msg_w1"], p["msg_b1"] = lin(ks[2], msg_in, MSG_HIDDEN)
    p["msg_w2"], p["msg_b2"] = lin(ks[3], MSG_HIDDEN, MSG_DIM)
    p["rmsg_w1"], p["rmsg_b1"] = lin(ks[4], msg_in, MSG_HIDDEN)
    p["rmsg_w2"], p["rmsg_b2"] = lin(ks[5], MSG_HIDDEN, MSG_DIM)
    p["upd_w"], p["upd_b"] = lin(ks[6], NODE_STATE_DIM + MSG_DIM, NODE_STATE_DIM)
    p["fc1_w"], p["fc1_b"] = lin(ks[7], NODE_STATE_DIM, TRANSFORM_DIM)    # fc_transform1
    p["fc2_w"], p["fc2_b"] = lin(ks[8], TRANSFORM_DIM, TRANSFORM_DIM)     # fc_transform2
    p["esc_w"], p["esc_b"] = lin(ks[9], MSG_DIM, 1)                       # edge_score_fc
    return p


def build_batch(key):
    # 4 (query_size, corpus_size) pairs -> batch block BB=2, grid=(2,)
    batch_data_sizes = [(10, 12), (8, 15), (12, 9), (16, 13)]
    flat = [s for pair in batch_data_sizes for s in pair]
    total_nodes = sum(flat)
    kn, ke = jax.random.split(key)
    node_features = jax.random.normal(kn, (total_nodes, NODE_FEAT_DIM), jnp.float32)

    from_local, to_local, adjs = [], [], []
    off = 0
    for n in flat:
        f = list(range(n)) + [0]
        t = [(i + 1) % n for i in range(n)] + [n // 2]   # cycle + one chord
        adj = np.zeros((MAX_SET_SIZE, MAX_SET_SIZE), np.float32)
        for a, b in zip(f, t):
            adj[a, b] = 1.0
            adj[b, a] = 1.0
        adjs.append(adj)
        from_local += [x + off for x in f]
        to_local += [x + off for x in t]
        off += n

    from_idx = jnp.array(from_local, jnp.int32)
    to_idx = jnp.array(to_local, jnp.int32)
    edge_features = jax.random.normal(ke, (from_idx.shape[0], EDGE_FEAT_DIM), jnp.float32)
    q_adj = jnp.stack([jnp.array(adjs[i]) for i in range(0, len(adjs), 2)])
    c_adj = jnp.stack([jnp.array(adjs[i]) for i in range(1, len(adjs), 2)])
    return node_features, edge_features, from_idx, to_idx, batch_data_sizes, q_adj, c_adj


if __name__ == "__main__":
    key = jax.random.PRNGKey(0)
    kp, kd = jax.random.split(key)
    params = init_params(kp)
    data = build_batch(kd)

    scores = jax.block_until_ready(forward(params, *data))
    ref = jax.block_until_ready(reference_forward(params, *data))

    # Default MXU matmul precision is used on both paths; the sinkhorn
    # temperature (0.1) amplifies any bf16-pass rounding of the sinkhorn-input
    # matmul chain, so the tolerance leaves headroom for that.
    np.testing.assert_allclose(np.asarray(scores), np.asarray(ref),
                               rtol=5e-2, atol=2e-1)

    print("KERNEL_OK")
</pallas_src>

<mosaic_0001>
module attributes {stable_mosaic.version = 11 : i64} {
  func.func @_fused_kernel(%arg0: i32, %arg1: memref<4xi32, #tpu.memory_space<smem>>, %arg2: memref<4xi32, #tpu.memory_space<smem>>, %arg3: memref<2x32x32xf32, #tpu.memory_space<vmem>>, %arg4: memref<2x16x16xf32, #tpu.memory_space<vmem>>, %arg5: memref<2x16x16xf32, #tpu.memory_space<vmem>>, %arg6: memref<32x16xf32, #tpu.memory_space<vmem>>, %arg7: memref<1x16xf32, #tpu.memory_space<vmem>>, %arg8: memref<16x16xf32, #tpu.memory_space<vmem>>, %arg9: memref<1x16xf32, #tpu.memory_space<vmem>>, %arg10: memref<32x512xf32, #tpu.memory_space<vmem>>, %arg11: memref<1x512xf32, #tpu.memory_space<vmem>>, %arg12: memref<1x128xf32, #tpu.memory_space<vmem>>, %arg13: memref<1x128xf32, #tpu.memory_space<vmem>>, %arg14: memref<1x1xf32, #tpu.memory_space<vmem>>, %arg15: memref<1x1x2xf32, #tpu.memory_space<vmem>>, %arg16: memref<64x512xf32, #tpu.memory_space<vmem>>, %arg17: memref<2x16x16xf32, #tpu.memory_space<vmem>>, %arg18: memref<2x16x16xf32, #tpu.memory_space<vmem>>) attributes {dimension_semantics = [#tpu.dimension_semantics<parallel>], iteration_bounds = array<i64: 2>, scalar_prefetch = 2 : i64, scratch_operands = 3 : i64, tpu.core_type = #tpu.core_type<tc>, window_params = [{transform_indices = @transform_0, window_bounds = array<i64: 2, 32, 32>}, {transform_indices = @transform_1, window_bounds = array<i64: 2, 16, 16>}, {transform_indices = @transform_2, window_bounds = array<i64: 2, 16, 16>}, {pipeline_mode = #tpu.pipeline_mode<synchronous>, transform_indices = @transform_3, window_bounds = array<i64: 32, 16>}, {pipeline_mode = #tpu.pipeline_mode<synchronous>, transform_indices = @transform_4, window_bounds = array<i64: 1, 16>}, {pipeline_mode = #tpu.pipeline_mode<synchronous>, transform_indices = @transform_5, window_bounds = array<i64: 16, 16>}, {pipeline_mode = #tpu.pipeline_mode<synchronous>, transform_indices = @transform_6, window_bounds = array<i64: 1, 16>}, {pipeline_mode = #tpu.pipeline_mode<synchronous>, transform_indices = @transform_7, window_bounds = array<i64: 32, 512>}, {pipeline_mode = #tpu.pipeline_mode<synchronous>, transform_indices = @transform_8, window_bounds = array<i64: 1, 512>}, {pipeline_mode = #tpu.pipeline_mode<synchronous>, transform_indices = @transform_9, window_bounds = array<i64: 1, 128>}, {pipeline_mode = #tpu.pipeline_mode<synchronous>, transform_indices = @transform_10, window_bounds = array<i64: 1, 128>}, {pipeline_mode = #tpu.pipeline_mode<synchronous>, transform_indices = @transform_11, window_bounds = array<i64: 1, 1>}, {transform_indices = @transform_12, window_bounds = array<i64: 1, 1, 2>}]} {
    %c2_i32 = arith.constant 2 : i32
    %0 = arith.muli %arg0, %c2_i32 : i32
    %c0 = arith.constant 0 : index
    %c0_0 = arith.constant 0 : index
    %c0_1 = arith.constant 0 : index
    %1 = vector.load %arg3[%c0, %c0_0, %c0_1] : memref<2x32x32xf32, #tpu.memory_space<vmem>>, vector<2x32x32xf32>
    %2 = vector.shape_cast %1 : vector<2x32x32xf32> to vector<64x32xf32>
    %c0_2 = arith.constant 0 : index
    %c0_3 = arith.constant 0 : index
    %3 = vector.load %arg6[%c0_2, %c0_3] : memref<32x16xf32, #tpu.memory_space<vmem>>, vector<32x16xf32>
    %cst = arith.constant dense<0.000000e+00> : vector<64x16xf32>
    %4 = tpu.matmul %2, %3, %cst {dimension_numbers = #tpu.dot_dimension_numbers<[1], [0], [0], [1], [0, 0, 1, 1], [], []>} : vector<64x32xf32>, vector<32x16xf32>, vector<64x16xf32> -> vector<64x16xf32>
    %c0_4 = arith.constant 0 : index
    %c0_5 = arith.constant 0 : index
    %5 = vector.load %arg7[%c0_4, %c0_5] : memref<1x16xf32, #tpu.memory_space<vmem>>, vector<1x16xf32>
    %6 = vector.broadcast %5 : vector<1x16xf32> to vector<64x16xf32>
    %7 = arith.addf %4, %6 : vector<64x16xf32>
    %cst_6 = arith.constant 0.000000e+00 : f32
    %8 = vector.broadcast %cst_6 : f32 to vector<64x16xf32>
    %9 = arith.maximumf %7, %8 : vector<64x16xf32>
    %c0_7 = arith.constant 0 : index
    %c0_8 = arith.constant 0 : index
    %10 = vector.load %arg8[%c0_7, %c0_8] : memref<16x16xf32, #tpu.memory_space<vmem>>, vector<16x16xf32>
    %cst_9 = arith.constant dense<0.000000e+00> : vector<64x16xf32>
    %11 = tpu.matmul %9, %10, %cst_9 {dimension_numbers = #tpu.dot_dimension_numbers<[1], [0], [0], [1], [0, 0, 1, 1], [], []>} : vector<64x16xf32>, vector<16x16xf32>, vector<64x16xf32> -> vector<64x16xf32>
    %c0_10 = arith.constant 0 : index
    %c0_11 = arith.constant 0 : index
    %12 = vector.load %arg9[%c0_10, %c0_11] : memref<1x16xf32, #tpu.memory_space<vmem>>, vector<1x16xf32>
    %13 = vector.broadcast %12 : vector<1x16xf32> to vector<64x16xf32>
    %14 = arith.addf %11, %13 : vector<64x16xf32>
    %c0_12 = arith.constant 0 : index
    %c0_13 = arith.constant 0 : index
    %15 = vector.load %arg10[%c0_12, %c0_13] : memref<32x512xf32, #tpu.memory_space<vmem>>, vector<32x512xf32>
    %cst_14 = arith.constant dense<0.000000e+00> : vector<64x512xf32>
    %16 = tpu.matmul %2, %15, %cst_14 {dimension_numbers = #tpu.dot_dimension_numbers<[1], [0], [0], [1], [0, 0, 1, 1], [], []>} : vector<64x32xf32>, vector<32x512xf32>, vector<64x512xf32> -> vector<64x512xf32>
    %c0_15 = arith.constant 0 : index
    %c0_16 = arith.constant 0 : index
    %17 = vector.load %arg11[%c0_15, %c0_16] : memref<1x512xf32, #tpu.memory_space<vmem>>, vector<1x512xf32>
    %18 = vector.broadcast %17 : vector<1x512xf32> to vector<64x512xf32>
    %19 = arith.addf %16, %18 : vector<64x512xf32>
    %c0_17 = arith.constant 0 : index
    %c0_18 = arith.constant 0 : index
    %20 = vector.load %arg16[%c0_17, %c0_18] : memref<64x512xf32, #tpu.memory_space<vmem>>, vector<64x512xf32>
    tpu.vector_store %arg16[%c0_17, %c0_18], %19 {strides = array<i32>} : memref<64x512xf32, #tpu.memory_space<vmem>>, vector<64x512xf32>,
    %c0_19 = arith.constant 0 : index
    %c0_20 = arith.constant 0 : index
    %21 = vector.load %arg12[%c0_19, %c0_20] : memref<1x128xf32, #tpu.memory_space<vmem>>, vector<1x128xf32>
    %c0_21 = arith.constant 0 : index
    %c0_22 = arith.constant 0 : index
    %22 = vector.load %arg13[%c0_21, %c0_22] : memref<1x128xf32, #tpu.memory_space<vmem>>, vector<1x128xf32>
    %c0_23 = arith.constant 0 : index
    %c0_24 = arith.constant 0 : index
    %23 = vector.load %arg14[%c0_23, %c0_24] : memref<1x1xf32, #tpu.memory_space<vmem>>, vector<1x1xf32>
    %24 = tpu.iota {dimensions = array<i32: 0>} : vector<16x1xi32>
    %25 = tpu.iota {dimensions = array<i32: 0>} : vector<16x16xi32>
    %26 = tpu.iota {dimensions = array<i32: 1>} : vector<16x16xi32>
    %c0_i32 = arith.constant 0 : i32
    %27 = arith.addi %0, %c0_i32 : i32
    %28 = arith.index_cast %27 : i32 to index
    %29 = memref.load %arg1[%28] : memref<4xi32, #tpu.memory_space<smem>>
    %c0_i32_25 = arith.constant 0 : i32
    %30 = arith.addi %0, %c0_i32_25 : i32
    %31 = arith.index_cast %30 : i32 to index
    %32 = memref.load %arg2[%31] : memref<4xi32, #tpu.memory_space<smem>>
    %33 = vector.extract_strided_slice %14 {offsets = [0, 0], sizes = [16, 16], strides = [1, 1]} : vector<64x16xf32> to vector<16x16xf32>
    %34 = vector.extract_strided_slice %14 {offsets = [16, 0], sizes = [16, 16], strides = [1, 1]} : vector<64x16xf32> to vector<16x16xf32>
    %35 = vector.broadcast %29 : i32 to vector<16x1xi32>
    %36 = arith.cmpi slt, %24, %35 : vector<16x1xi32>
    %cst_26 = arith.constant 0.000000e+00 : f32
    %37 = vector.shape_cast %36 : vector<16x1xi1> to vector<16x1xi1>
    %38 = vector.broadcast %37 : vector<16x1xi1> to vector<16x16xi1>
    %39 = vector.broadcast %cst_26 : f32 to vector<16x16xf32>
    %40 = arith.select %38, %33, %39 : vector<16x16xi1>, vector<16x16xf32>
    %41 = vector.broadcast %32 : i32 to vector<16x1xi32>
    %42 = arith.cmpi slt, %24, %41 : vector<16x1xi32>
    %cst_27 = arith.constant 0.000000e+00 : f32
    %43 = vector.shape_cast %42 : vector<16x1xi1> to vector<16x1xi1>
    %44 = vector.broadcast %43 : vector<16x1xi1> to vector<16x16xi1>
    %45 = vector.broadcast %cst_27 : f32 to vector<16x16xf32>
    %46 = arith.select %44, %34, %45 : vector<16x16xi1>, vector<16x16xf32>
    %cst_28 = arith.constant dense<0.000000e+00> : vector<16x16xf32>
    %47 = tpu.matmul %40, %46, %cst_28 {dimension_numbers = #tpu.dot_dimension_numbers<[1], [1], [0], [0], [0, 0, 1, 0], [], []>} : vector<16x16xf32>, vector<16x16xf32>, vector<16x16xf32> -> vector<16x16xf32>
    %48 = vector.broadcast %29 : i32 to vector<16x16xi32>
    %49 = arith.cmpi slt, %25, %48 : vector<16x16xi32>
    %50 = vector.broadcast %29 : i32 to vector<16x16xi32>
    %51 = arith.cmpi slt, %26, %50 : vector<16x16xi32>
    %52 = arith.andi %49, %51 : vector<16x16xi1>
    %c0_29 = arith.constant 0 : index
    %c0_30 = arith.constant 0 : index
    %c0_31 = arith.constant 0 : index
    %53 = vector.load %arg4[%c0_29, %c0_30, %c0_31] : memref<2x16x16xf32, #tpu.memory_space<vmem>>, vector<1x16x16xf32>
    %54 = vector.shape_cast %53 : vector<1x16x16xf32> to vector<16x16xf32>
    %cst_32 = arith.constant 0.000000e+00 : f32
    %55 = vector.broadcast %cst_32 : f32 to vector<16x16xf32>
    %56 = arith.select %52, %54, %55 : vector<16x16xi1>, vector<16x16xf32>
    %c0_33 = arith.constant 0 : index
    %c128 = arith.constant 128 : index
    %57 = vector.load %arg16[%c0_33, %c128] : memref<64x512xf32, #tpu.memory_space<vmem>>, vector<16x128xf32>
    %c0_34 = arith.constant 0 : index
    %c256 = arith.constant 256 : index
    %58 = vector.load %arg16[%c0_34, %c256] : memref<64x512xf32, #tpu.memory_space<vmem>>, vector<16x128xf32>
    %c0_35 = arith.constant 0 : index
    %c0_36 = arith.constant 0 : index
    %59 = vector.load %arg16[%c0_35, %c0_36] : memref<64x512xf32, #tpu.memory_space<vmem>>, vector<8x128xf32>
    %c0_37 = arith.constant 0 : index
    %c384 = arith.constant 384 : index
    %60 = vector.load %arg16[%c0_37, %c384] : memref<64x512xf32, #tpu.memory_space<vmem>>, vector<8x128xf32>
    %61 = vector.shape_cast %59 : vector<8x128xf32> to vector<8x1x128xf32>
    %62 = vector.shape_cast %57 : vector<16x128xf32> to vector<1x16x128xf32>
    %63 = vector.broadcast %61 : vector<8x1x128xf32> to vector<8x16x128xf32>
    %64 = vector.broadcast %62 : vector<1x16x128xf32> to vector<8x16x128xf32>
    %65 = arith.addf %63, %64 : vector<8x16x128xf32>
    %cst_38 = arith.constant 0.000000e+00 : f32
    %66 = vector.broadcast %cst_38 : f32 to vector<8x16x128xf32>
    %67 = arith.maximumf %65, %66 : vector<8x16x128xf32>
    %68 = vector.shape_cast %21 : vector<1x128xf32> to vector<1x1x128xf32>
    %69 = vector.broadcast %68 : vector<1x1x128xf32> to vector<8x16x128xf32>
    %70 = arith.mulf %67, %69 : vector<8x16x128xf32>
    %cst_39 = arith.constant dense<0.000000e+00> : vector<8x16xf32>
    %71 = vector.multi_reduction <add>, %70, %cst_39 [2] : vector<8x16x128xf32> to vector<8x16xf32>
    %72 = vector.shape_cast %60 : vector<8x128xf32> to vector<8x1x128xf32>
    %73 = vector.shape_cast %58 : vector<16x128xf32> to vector<1x16x128xf32>
    %74 = vector.broadcast %72 : vector<8x1x128xf32> to vector<8x16x128xf32>
    %75 = vector.broadcast %73 : vector<1x16x128xf32> to vector<8x16x128xf32>
    %76 = arith.addf %74, %75 : vector<8x16x128xf32>
    %cst_40 = arith.constant 0.000000e+00 : f32
    %77 = vector.broadcast %cst_40 : f32 to vector<8x16x128xf32>
    %78 = arith.maximumf %76, %77 : vector<8x16x128xf32>
    %79 = vector.shape_cast %22 : vector<1x128xf32> to vector<1x1x128xf32>
    %80 = vector.broadcast %79 : vector<1x1x128xf32> to vector<8x16x128xf32>
    %81 = arith.mulf %78, %80 : vector<8x16x128xf32>
    %cst_41 = arith.constant dense<0.000000e+00> : vector<8x16xf32>
    %82 = vector.multi_reduction <add>, %81, %cst_41 [2] : vector<8x16x128xf32> to vector<8x16xf32>
    %83 = arith.addf %71, %82 : vector<8x16xf32>
    %84 = vector.broadcast %23 : vector<1x1xf32> to vector<8x16xf32>
    %85 = arith.addf %83, %84 : vector<8x16xf32>
    %86 = vector.extract_strided_slice %56 {offsets = [0, 0], sizes = [8, 16], strides = [1, 1]} : vector<16x16xf32> to vector<8x16xf32>
    %87 = arith.mulf %85, %86 : vector<8x16xf32>
    %c0_42 = arith.constant 0 : index
    %c0_43 = arith.constant 0 : index
    %c0_44 = arith.constant 0 : index
    %88 = vector.load %arg17[%c0_42, %c0_43, %c0_44] : memref<2x16x16xf32, #tpu.memory_space<vmem>>, vector<1x8x16xf32>
    %89 = vector.shape_cast %88 : vector<1x8x16xf32> to vector<8x16xf32>
    %90 = vector.shape_cast %87 : vector<8x16xf32> to vector<1x8x16xf32>
    tpu.vector_store %arg17[%c0_42, %c0_43, %c0_44], %90 {strides = array<i32>} : memref<2x16x16xf32, #tpu.memory_space<vmem>>, vector<1x8x16xf32>,
    %c8 = arith.constant 8 : index
    %c0_45 = arith.constant 0 : index
    %91 = vector.load %arg16[%c8, %c0_45] : memref<64x512xf32, #tpu.memory_space<vmem>>, vector<8x128xf32>
    %c8_46 = arith.constant 8 : index
    %c384_47 = arith.constant 384 : index
    %92 = vector.load %arg16[%c8_46, %c384_47] : memref<64x512xf32, #tpu.memory_space<vmem>>, vector<8x128xf32>
    %93 = vector.shape_cast %91 : vector<8x128xf32> to vector<8x1x128xf32>
    %94 = vector.shape_cast %57 : vector<16x128xf32> to vector<1x16x128xf32>
    %95 = vector.broadcast %93 : vector<8x1x128xf32> to vector<8x16x128xf32>
    %96 = vector.broadcast %94 : vector<1x16x128xf32> to vector<8x16x128xf32>
    %97 = arith.addf %95, %96 : vector<8x16x128xf32>
    %cst_48 = arith.constant 0.000000e+00 : f32
    %98 = vector.broadcast %cst_48 : f32 to vector<8x16x128xf32>
    %99 = arith.maximumf %97, %98 : vector<8x16x128xf32>
    %100 = vector.shape_cast %21 : vector<1x128xf32> to vector<1x1x128xf32>
    %101 = vector.broadcast %100 : vector<1x1x128xf32> to vector<8x16x128xf32>
    %102 = arith.mulf %99, %101 : vector<8x16x128xf32>
    %cst_49 = arith.constant dense<0.000000e+00> : vector<8x16xf32>
    %103 = vector.multi_reduction <add>, %102, %cst_49 [2] : vector<8x16x128xf32> to vector<8x16xf32>
    %104 = vector.shape_cast %92 : vector<8x128xf32> to vector<8x1x128xf32>
    %105 = vector.shape_cast %58 : vector<16x128xf32> to vector<1x16x128xf32>
    %106 = vector.broadcast %104 : vector<8x1x128xf32> to vector<8x16x128xf32>
    %107 = vector.broadcast %105 : vector<1x16x128xf32> to vector<8x16x128xf32>
    %108 = arith.addf %106, %107 : vector<8x16x128xf32>
    %cst_50 = arith.constant 0.000000e+00 : f32
    %109 = vector.broadcast %cst_50 : f32 to vector<8x16x128xf32>
    %110 = arith.maximumf %108, %109 : vector<8x16x128xf32>
    %111 = vector.shape_cast %22 : vector<1x128xf32> to vector<1x1x128xf32>
    %112 = vector.broadcast %111 : vector<1x1x128xf32> to vector<8x16x128xf32>
    %113 = arith.mulf %110, %112 : vector<8x16x128xf32>
    %cst_51 = arith.constant dense<0.000000e+00> : vector<8x16xf32>
    %114 = vector.multi_reduction <add>, %113, %cst_51 [2] : vector<8x16x128xf32> to vector<8x16xf32>
    %115 = arith.addf %103, %114 : vector<8x16xf32>
    %116 = vector.broadcast %23 : vector<1x1xf32> to vector<8x16xf32>
    %117 = arith.addf %115, %116 : vector<8x16xf32>
    %118 = vector.extract_strided_slice %56 {offsets = [8, 0], sizes = [8, 16], strides = [1, 1]} : vector<16x16xf32> to vector<8x16xf32>
    %119 = arith.mulf %117, %118 : vector<8x16xf32>
    %c0_52 = arith.constant 0 : index
    %c8_53 = arith.constant 8 : index
    %c0_54 = arith.constant 0 : index
    %120 = vector.load %arg17[%c0_52, %c8_53, %c0_54] : memref<2x16x16xf32, #tpu.memory_space<vmem>>, vector<1x8x16xf32>
    %121 = vector.shape_cast %120 : vector<1x8x16xf32> to vector<8x16xf32>
    %122 = vector.shape_cast %119 : vector<8x16xf32> to vector<1x8x16xf32>
    tpu.vector_store %arg17[%c0_52, %c8_53, %c0_54], %122 {strides = array<i32>} : memref<2x16x16xf32, #tpu.memory_space<vmem>>, vector<1x8x16xf32>,
    %123 = vector.broadcast %32 : i32 to vector<16x16xi32>
    %124 = arith.cmpi slt, %25, %123 : vector<16x16xi32>
    %125 = vector.broadcast %32 : i32 to vector<16x16xi32>
    %126 = arith.cmpi slt, %26, %125 : vector<16x16xi32>
    %127 = arith.andi %124, %126 : vector<16x16xi1>
    %c0_55 = arith.constant 0 : index
    %c0_56 = arith.constant 0 : index
    %c0_57 = arith.constant 0 : index
    %128 = vector.load %arg5[%c0_55, %c0_56, %c0_57] : memref<2x16x16xf32, #tpu.memory_space<vmem>>, vector<1x16x16xf32>
    %129 = vector.shape_cast %128 : vector<1x16x16xf32> to vector<16x16xf32>
    %cst_58 = arith.constant 0.000000e+00 : f32
    %130 = vector.broadcast %cst_58 : f32 to vector<16x16xf32>
    %131 = arith.select %127, %129, %130 : vector<16x16xi1>, vector<16x16xf32>
    %c16 = arith.constant 16 : index
    %c128_59 = arith.constant 128 : index
    %132 = vector.load %arg16[%c16, %c128_59] : memref<64x512xf32, #tpu.memory_space<vmem>>, vector<16x128xf32>
    %c16_60 = arith.constant 16 : index
    %c256_61 = arith.constant 256 : index
    %133 = vector.load %arg16[%c16_60, %c256_61] : memref<64x512xf32, #tpu.memory_space<vmem>>, vector<16x128xf32>
    %c16_62 = arith.constant 16 : index
    %c0_63 = arith.constant 0 : index
    %134 = vector.load %arg16[%c16_62, %c0_63] : memref<64x512xf32, #tpu.memory_space<vmem>>, vector<8x128xf32>
    %c16_64 = arith.constant 16 : index
    %c384_65 = arith.constant 384 : index
    %135 = vector.load %arg16[%c16_64, %c384_65] : memref<64x512xf32, #tpu.memory_space<vmem>>, vector<8x128xf32>
    %136 = vector.shape_cast %134 : vector<8x128xf32> to vector<8x1x128xf32>
    %137 = vector.shape_cast %132 : vector<16x128xf32> to vector<1x16x128xf32>
    %138 = vector.broadcast %136 : vector<8x1x128xf32> to vector<8x16x128xf32>
    %139 = vector.broadcast %137 : vector<1x16x128xf32> to vector<8x16x128xf32>
    %140 = arith.addf %138, %139 : vector<8x16x128xf32>
    %cst_66 = arith.constant 0.000000e+00 : f32
    %141 = vector.broadcast %cst_66 : f32 to vector<8x16x128xf32>
    %142 = arith.maximumf %140, %141 : vector<8x16x128xf32>
    %143 = vector.shape_cast %21 : vector<1x128xf32> to vector<1x1x128xf32>
    %144 = vector.broadcast %143 : vector<1x1x128xf32> to vector<8x16x128xf32>
    %145 = arith.mulf %142, %144 : vector<8x16x128xf32>
    %cst_67 = arith.constant dense<0.000000e+00> : vector<8x16xf32>
    %146 = vector.multi_reduction <add>, %145, %cst_67 [2] : vector<8x16x128xf32> to vector<8x16xf32>
    %147 = vector.shape_cast %135 : vector<8x128xf32> to vector<8x1x128xf32>
    %148 = vector.shape_cast %133 : vector<16x128xf32> to vector<1x16x128xf32>
    %149 = vector.broadcast %147 : vector<8x1x128xf32> to vector<8x16x128xf32>
    %150 = vector.broadcast %148 : vector<1x16x128xf32> to vector<8x16x128xf32>
    %151 = arith.addf %149, %150 : vector<8x16x128xf32>
    %cst_68 = arith.constant 0.000000e+00 : f32
    %152 = vector.broadcast %cst_68 : f32 to vector<8x16x128xf32>
    %153 = arith.maximumf %151, %152 : vector<8x16x128xf32>
    %154 = vector.shape_cast %22 : vector<1x128xf32> to vector<1x1x128xf32>
    %155 = vector.broadcast %154 : vector<1x1x128xf32> to vector<8x16x128xf32>
    %156 = arith.mulf %153, %155 : vector<8x16x128xf32>
    %cst_69 = arith.constant dense<0.000000e+00> : vector<8x16xf32>
    %157 = vector.multi_reduction <add>, %156, %cst_69 [2] : vector<8x16x128xf32> to vector<8x16xf32>
    %158 = arith.addf %146, %157 : vector<8x16xf32>
    %159 = vector.broadcast %23 : vector<1x1xf32> to vector<8x16xf32>
    %160 = arith.addf %158, %159 : vector<8x16xf32>
    %161 = vector.extract_strided_slice %131 {offsets = [0, 0], sizes = [8, 16], strides = [1, 1]} : vector<16x16xf32> to vector<8x16xf32>
    %162 = arith.mulf %160, %161 : vector<8x16xf32>
    %c0_70 = arith.constant 0 : index
    %c0_71 = arith.constant 0 : index
    %c0_72 = arith.constant 0 : index
    %163 = vector.load %arg18[%c0_70, %c0_71, %c0_72] : memref<2x16x16xf32, #tpu.memory_space<vmem>>, vector<1x8x16xf32>
    %164 = vector.shape_cast %163 : vector<1x8x16xf32> to vector<8x16xf32>
    %165 = vector.shape_cast %162 : vector<8x16xf32> to vector<1x8x16xf32>
    tpu.vector_store %arg18[%c0_70, %c0_71, %c0_72], %165 {strides = array<i32>} : memref<2x16x16xf32, #tpu.memory_space<vmem>>, vector<1x8x16xf32>,
    %c24 = arith.constant 24 : index
    %c0_73 = arith.constant 0 : index
    %166 = vector.load %arg16[%c24, %c0_73] : memref<64x512xf32, #tpu.memory_space<vmem>>, vector<8x128xf32>
    %c24_74 = arith.constant 24 : index
    %c384_75 = arith.constant 384 : index
    %167 = vector.load %arg16[%c24_74, %c384_75] : memref<64x512xf32, #tpu.memory_space<vmem>>, vector<8x128xf32>
    %168 = vector.shape_cast %166 : vector<8x128xf32> to vector<8x1x128xf32>
    %169 = vector.shape_cast %132 : vector<16x128xf32> to vector<1x16x128xf32>
    %170 = vector.broadcast %168 : vector<8x1x128xf32> to vector<8x16x128xf32>
    %171 = vector.broadcast %169 : vector<1x16x128xf32> to vector<8x16x128xf32>
    %172 = arith.addf %170, %171 : vector<8x16x128xf32>
    %cst_76 = arith.constant 0.000000e+00 : f32
    %173 = vector.broadcast %cst_76 : f32 to vector<8x16x128xf32>
    %174 = arith.maximumf %172, %173 : vector<8x16x128xf32>
    %175 = vector.shape_cast %21 : vector<1x128xf32> to vector<1x1x128xf32>
    %176 = vector.broadcast %175 : vector<1x1x128xf32> to vector<8x16x128xf32>
    %177 = arith.mulf %174, %176 : vector<8x16x128xf32>
    %cst_77 = arith.constant dense<0.000000e+00> : vector<8x16xf32>
    %178 = vector.multi_reduction <add>, %177, %cst_77 [2] : vector<8x16x128xf32> to vector<8x16xf32>
    %179 = vector.shape_cast %167 : vector<8x128xf32> to vector<8x1x128xf32>
    %180 = vector.shape_cast %133 : vector<16x128xf32> to vector<1x16x128xf32>
    %181 = vector.broadcast %179 : vector<8x1x128xf32> to vector<8x16x128xf32>
    %182 = vector.broadcast %180 : vector<1x16x128xf32> to vector<8x16x128xf32>
    %183 = arith.addf %181, %182 : vector<8x16x128xf32>
    %cst_78 = arith.constant 0.000000e+00 : f32
    %184 = vector.broadcast %cst_78 : f32 to vector<8x16x128xf32>
    %185 = arith.maximumf %183, %184 : vector<8x16x128xf32>
    %186 = vector.shape_cast %22 : vector<1x128xf32> to vector<1x1x128xf32>
    %187 = vector.broadcast %186 : vector<1x1x128xf32> to vector<8x16x128xf32>
    %188 = arith.mulf %185, %187 : vector<8x16x128xf32>
    %cst_79 = arith.constant dense<0.000000e+00> : vector<8x16xf32>
    %189 = vector.multi_reduction <add>, %188, %cst_79 [2] : vector<8x16x128xf32> to vector<8x16xf32>
    %190 = arith.addf %178, %189 : vector<8x16xf32>
    %191 = vector.broadcast %23 : vector<1x1xf32> to vector<8x16xf32>
    %192 = arith.addf %190, %191 : vector<8x16xf32>
    %193 = vector.extract_strided_slice %131 {offsets = [8, 0], sizes = [8, 16], strides = [1, 1]} : vector<16x16xf32> to vector<8x16xf32>
    %194 = arith.mulf %192, %193 : vector<8x16xf32>
    %c0_80 = arith.constant 0 : index
    %c8_81 = arith.constant 8 : index
    %c0_82 = arith.constant 0 : index
    %195 = vector.load %arg18[%c0_80, %c8_81, %c0_82] : memref<2x16x16xf32, #tpu.memory_space<vmem>>, vector<1x8x16xf32>
    %196 = vector.shape_cast %195 : vector<1x8x16xf32> to vector<8x16xf32>
    %197 = vector.shape_cast %194 : vector<8x16xf32> to vector<1x8x16xf32>
    tpu.vector_store %arg18[%c0_80, %c8_81, %c0_82], %197 {strides = array<i32>} : memref<2x16x16xf32, #tpu.memory_space<vmem>>, vector<1x8x16xf32>,
    %c1_i32 = arith.constant 1 : i32
    %198 = arith.addi %0, %c1_i32 : i32
    %199 = arith.index_cast %198 : i32 to index
    %200 = memref.load %arg1[%199] : memref<4xi32, #tpu.memory_space<smem>>
    %c1_i32_83 = arith.constant 1 : i32
    %201 = arith.addi %0, %c1_i32_83 : i32
    %202 = arith.index_cast %201 : i32 to index
    %203 = memref.load %arg2[%202] : memref<4xi32, #tpu.memory_space<smem>>
    %204 = vector.extract_strided_slice %14 {offsets = [32, 0], sizes = [16, 16], strides = [1, 1]} : vector<64x16xf32> to vector<16x16xf32>
    %205 = vector.extract_strided_slice %14 {offsets = [48, 0], sizes = [16, 16], strides = [1, 1]} : vector<64x16xf32> to vector<16x16xf32>
    %206 = vector.broadcast %200 : i32 to vector<16x1xi32>
    %207 = arith.cmpi slt, %24, %206 : vector<16x1xi32>
    %cst_84 = arith.constant 0.000000e+00 : f32
    %208 = vector.shape_cast %207 : vector<16x1xi1> to vector<16x1xi1>
    %209 = vector.broadcast %208 : vector<16x1xi1> to vector<16x16xi1>
    %210 = vector.broadcast %cst_84 : f32 to vector<16x16xf32>
    %211 = arith.select %209, %204, %210 : vector<16x16xi1>, vector<16x16xf32>
    %212 = vector.broadcast %203 : i32 to vector<16x1xi32>
    %213 = arith.cmpi slt, %24, %212 : vector<16x1xi32>
    %cst_85 = arith.constant 0.000000e+00 : f32
    %214 = vector.shape_cast %213 : vector<16x1xi1> to vector<16x1xi1>
    %215 = vector.broadcast %214 : vector<16x1xi1> to vector<16x16xi1>
    %216 = vector.broadcast %cst_85 : f32 to vector<16x16xf32>
    %217 = arith.select %215, %205, %216 : vector<16x16xi1>, vector<16x16xf32>
    %cst_86 = arith.constant dense<0.000000e+00> : vector<16x16xf32>
    %218 = tpu.matmul %211, %217, %cst_86 {dimension_numbers = #tpu.dot_dimension_numbers<[1], [1], [0], [0], [0, 0, 1, 0], [], []>} : vector<16x16xf32>, vector<16x16xf32>, vector<16x16xf32> -> vector<16x16xf32>
    %219 = vector.broadcast %200 : i32 to vector<16x16xi32>
    %220 = arith.cmpi slt, %25, %219 : vector<16x16xi32>
    %221 = vector.broadcast %200 : i32 to vector<16x16xi32>
    %222 = arith.cmpi slt, %26, %221 : vector<16x16xi32>
    %223 = arith.andi %220, %222 : vector<16x16xi1>
    %c1 = arith.constant 1 : index
    %c0_87 = arith.constant 0 : index
    %c0_88 = arith.constant 0 : index
    %224 = vector.load %arg4[%c1, %c0_87, %c0_88] : memref<2x16x16xf32, #tpu.memory_space<vmem>>, vector<1x16x16xf32>
    %225 = vector.shape_cast %224 : vector<1x16x16xf32> to vector<16x16xf32>
    %cst_89 = arith.constant 0.000000e+00 : f32
    %226 = vector.broadcast %cst_89 : f32 to vector<16x16xf32>
    %227 = arith.select %223, %225, %226 : vector<16x16xi1>, vector<16x16xf32>
    %c32 = arith.constant 32 : index
    %c128_90 = arith.constant 128 : index
    %228 = vector.load %arg16[%c32, %c128_90] : memref<64x512xf32, #tpu.memory_space<vmem>>, vector<16x128xf32>
    %c32_91 = arith.constant 32 : index
    %c256_92 = arith.constant 256 : index
    %229 = vector.load %arg16[%c32_91, %c256_92] : memref<64x512xf32, #tpu.memory_space<vmem>>, vector<16x128xf32>
    %c32_93 = arith.constant 32 : index
    %c0_94 = arith.constant 0 : index
    %230 = vector.load %arg16[%c32_93, %c0_94] : memref<64x512xf32, #tpu.memory_space<vmem>>, vector<8x128xf32>
    %c32_95 = arith.constant 32 : index
    %c384_96 = arith.constant 384 : index
    %231 = vector.load %arg16[%c32_95, %c384_96] : memref<64x512xf32, #tpu.memory_space<vmem>>, vector<8x128xf32>
    %232 = vector.shape_cast %230 : vector<8x128xf32> to vector<8x1x128xf32>
    %233 = vector.shape_cast %228 : vector<16x128xf32> to vector<1x16x128xf32>
    %234 = vector.broadcast %232 : vector<8x1x128xf32> to vector<8x16x128xf32>
    %235 = vector.broadcast %233 : vector<1x16x128xf32> to vector<8x16x128xf32>
    %236 = arith.addf %234, %235 : vector<8x16x128xf32>
    %cst_97 = arith.constant 0.000000e+00 : f32
    %237 = vector.broadcast %cst_97 : f32 to vector<8x16x128xf32>
    %238 = arith.maximumf %236, %237 : vector<8x16x128xf32>
    %239 = vector.shape_cast %21 : vector<1x128xf32> to vector<1x1x128xf32>
    %240 = vector.broadcast %239 : vector<1x1x128xf32> to vector<8x16x128xf32>
    %241 = arith.mulf %238, %240 : vector<8x16x128xf32>
    %cst_98 = arith.constant dense<0.000000e+00> : vector<8x16xf32>
    %242 = vector.multi_reduction <add>, %241, %cst_98 [2] : vector<8x16x128xf32> to vector<8x16xf32>
    %243 = vector.shape_cast %231 : vector<8x128xf32> to vector<8x1x128xf32>
    %244 = vector.shape_cast %229 : vector<16x128xf32> to vector<1x16x128xf32>
    %245 = vector.broadcast %243 : vector<8x1x128xf32> to vector<8x16x128xf32>
    %246 = vector.broadcast %244 : vector<1x16x128xf32> to vector<8x16x128xf32>
    %247 = arith.addf %245, %246 : vector<8x16x128xf32>
    %cst_99 = arith.constant 0.000000e+00 : f32
    %248 = vector.broadcast %cst_99 : f32 to vector<8x16x128xf32>
    %249 = arith.maximumf %247, %248 : vector<8x16x128xf32>
    %250 = vector.shape_cast %22 : vector<1x128xf32> to vector<1x1x128xf32>
    %251 = vector.broadcast %250 : vector<1x1x128xf32> to vector<8x16x128xf32>
    %252 = arith.mulf %249, %251 : vector<8x16x128xf32>
    %cst_100 = arith.constant dense<0.000000e+00> : vector<8x16xf32>
    %253 = vector.multi_reduction <add>, %252, %cst_100 [2] : vector<8x16x128xf32> to vector<8x16xf32>
    %254 = arith.addf %242, %253 : vector<8x16xf32>
    %255 = vector.broadcast %23 : vector<1x1xf32> to vector<8x16xf32>
    %256 = arith.addf %254, %255 : vector<8x16xf32>
    %257 = vector.extract_strided_slice %227 {offsets = [0, 0], sizes = [8, 16], strides = [1, 1]} : vector<16x16xf32> to vector<8x16xf32>
    %258 = arith.mulf %256, %257 : vector<8x16xf32>
    %c1_101 = arith.constant 1 : index
    %c0_102 = arith.constant 0 : index
    %c0_103 = arith.constant 0 : index
    %259 = vector.load %arg17[%c1_101, %c0_102, %c0_103] : memref<2x16x16xf32, #tpu.memory_space<vmem>>, vector<1x8x16xf32>
    %260 = vector.shape_cast %259 : vector<1x8x16xf32> to vector<8x16xf32>
    %261 = vector.shape_cast %258 : vector<8x16xf32> to vector<1x8x16xf32>
    tpu.vector_store %arg17[%c1_101, %c0_102, %c0_103], %261 {strides = array<i32>} : memref<2x16x16xf32, #tpu.memory_space<vmem>>, vector<1x8x16xf32>,
    %c40 = arith.constant 40 : index
    %c0_104 = arith.constant 0 : index
    %262 = vector.load %arg16[%c40, %c0_104] : memref<64x512xf32, #tpu.memory_space<vmem>>, vector<8x128xf32>
    %c40_105 = arith.constant 40 : index
    %c384_106 = arith.constant 384 : index
    %263 = vector.load %arg16[%c40_105, %c384_106] : memref<64x512xf32, #tpu.memory_space<vmem>>, vector<8x128xf32>
    %264 = vector.shape_cast %262 : vector<8x128xf32> to vector<8x1x128xf32>
    %265 = vector.shape_cast %228 : vector<16x128xf32> to vector<1x16x128xf32>
    %266 = vector.broadcast %264 : vector<8x1x128xf32> to vector<8x16x128xf32>
    %267 = vector.broadcast %265 : vector<1x16x128xf32> to vector<8x16x128xf32>
    %268 = arith.addf %266, %267 : vector<8x16x128xf32>
    %cst_107 = arith.constant 0.000000e+00 : f32
    %269 = vector.broadcast %cst_107 : f32 to vector<8x16x128xf32>
    %270 = arith.maximumf %268, %269 : vector<8x16x128xf32>
    %271 = vector.shape_cast %21 : vector<1x128xf32> to vector<1x1x128xf32>
    %272 = vector.broadcast %271 : vector<1x1x128xf32> to vector<8x16x128xf32>
    %273 = arith.mulf %270, %272 : vector<8x16x128xf32>
    %cst_108 = arith.constant dense<0.000000e+00> : vector<8x16xf32>
    %274 = vector.multi_reduction <add>, %273, %cst_108 [2] : vector<8x16x128xf32> to vector<8x16xf32>
    %275 = vector.shape_cast %263 : vector<8x128xf32> to vector<8x1x128xf32>
    %276 = vector.shape_cast %229 : vector<16x128xf32> to vector<1x16x128xf32>
    %277 = vector.broadcast %275 : vector<8x1x128xf32> to vector<8x16x128xf32>
    %278 = vector.broadcast %276 : vector<1x16x128xf32> to vector<8x16x128xf32>
    %279 = arith.addf %277, %278 : vector<8x16x128xf32>
    %cst_109 = arith.constant 0.000000e+00 : f32
    %280 = vector.broadcast %cst_109 : f32 to vector<8x16x128xf32>
    %281 = arith.maximumf %279, %280 : vector<8x16x128xf32>
    %282 = vector.shape_cast %22 : vector<1x128xf32> to vector<1x1x128xf32>
    %283 = vector.broadcast %282 : vector<1x1x128xf32> to vector<8x16x128xf32>
    %284 = arith.mulf %281, %283 : vector<8x16x128xf32>
    %cst_110 = arith.constant dense<0.000000e+00> : vector<8x16xf32>
    %285 = vector.multi_reduction <add>, %284, %cst_110 [2] : vector<8x16x128xf32> to vector<8x16xf32>
    %286 = arith.addf %274, %285 : vector<8x16xf32>
    %287 = vector.broadcast %23 : vector<1x1xf32> to vector<8x16xf32>
    %288 = arith.addf %286, %287 : vector<8x16xf32>
    %289 = vector.extract_strided_slice %227 {offsets = [8, 0], sizes = [8, 16], strides = [1, 1]} : vector<16x16xf32> to vector<8x16xf32>
    %290 = arith.mulf %288, %289 : vector<8x16xf32>
    %c1_111 = arith.constant 1 : index
    %c8_112 = arith.constant 8 : index
    %c0_113 = arith.constant 0 : index
    %291 = vector.load %arg17[%c1_111, %c8_112, %c0_113] : memref<2x16x16xf32, #tpu.memory_space<vmem>>, vector<1x8x16xf32>
    %292 = vector.shape_cast %291 : vector<1x8x16xf32> to vector<8x16xf32>
    %293 = vector.shape_cast %290 : vector<8x16xf32> to vector<1x8x16xf32>
    tpu.vector_store %arg17[%c1_111, %c8_112, %c0_113], %293 {strides = array<i32>} : memref<2x16x16xf32, #tpu.memory_space<vmem>>, vector<1x8x16xf32>,
    %294 = vector.broadcast %203 : i32 to vector<16x16xi32>
    %295 = arith.cmpi slt, %25, %294 : vector<16x16xi32>
    %296 = vector.broadcast %203 : i32 to vector<16x16xi32>
    %297 = arith.cmpi slt, %26, %296 : vector<16x16xi32>
    %298 = arith.andi %295, %297 : vector<16x16xi1>
    %c1_114 = arith.constant 1 : index
    %c0_115 = arith.constant 0 : index
    %c0_116 = arith.constant 0 : index
    %299 = vector.load %arg5[%c1_114, %c0_115, %c0_116] : memref<2x16x16xf32, #tpu.memory_space<vmem>>, vector<1x16x16xf32>
    %300 = vector.shape_cast %299 : vector<1x16x16xf32> to vector<16x16xf32>
    %cst_117 = arith.constant 0.000000e+00 : f32
    %301 = vector.broadcast %cst_117 : f32 to vector<16x16xf32>
    %302 = arith.select %298, %300, %301 : vector<16x16xi1>, vector<16x16xf32>
    %c48 = arith.constant 48 : index
    %c128_118 = arith.constant 128 : index
    %303 = vector.load %arg16[%c48, %c128_118] : memref<64x512xf32, #tpu.memory_space<vmem>>, vector<16x128xf32>
    %c48_119 = arith.constant 48 : index
    %c256_120 = arith.constant 256 : index
    %304 = vector.load %arg16[%c48_119, %c256_120] : memref<64x512xf32, #tpu.memory_space<vmem>>, vector<16x128xf32>
    %c48_121 = arith.constant 48 : index
    %c0_122 = arith.constant 0 : index
    %305 = vector.load %arg16[%c48_121, %c0_122] : memref<64x512xf32, #tpu.memory_space<vmem>>, vector<8x128xf32>
    %c48_123 = arith.constant 48 : index
    %c384_124 = arith.constant 384 : index
    %306 = vector.load %arg16[%c48_123, %c384_124] : memref<64x512xf32, #tpu.memory_space<vmem>>, vector<8x128xf32>
    %307 = vector.shape_cast %305 : vector<8x128xf32> to vector<8x1x128xf32>
    %308 = vector.shape_cast %303 : vector<16x128xf32> to vector<1x16x128xf32>
    %309 = vector.broadcast %307 : vector<8x1x128xf32> to vector<8x16x128xf32>
    %310 = vector.broadcast %308 : vector<1x16x128xf32> to vector<8x16x128xf32>
    %311 = arith.addf %309, %310 : vector<8x16x128xf32>
    %cst_125 = arith.constant 0.000000e+00 : f32
    %312 = vector.broadcast %cst_125 : f32 to vector<8x16x128xf32>
    %313 = arith.maximumf %311, %312 : vector<8x16x128xf32>
    %314 = vector.shape_cast %21 : vector<1x128xf32> to vector<1x1x128xf32>
    %315 = vector.broadcast %314 : vector<1x1x128xf32> to vector<8x16x128xf32>
    %316 = arith.mulf %313, %315 : vector<8x16x128xf32>
    %cst_126 = arith.constant dense<0.000000e+00> : vector<8x16xf32>
    %317 = vector.multi_reduction <add>, %316, %cst_126 [2] : vector<8x16x128xf32> to vector<8x16xf32>
    %318 = vector.shape_cast %306 : vector<8x128xf32> to vector<8x1x128xf32>
    %319 = vector.shape_cast %304 : vector<16x128xf32> to vector<1x16x128xf32>
    %320 = vector.broadcast %318 : vector<8x1x128xf32> to vector<8x16x128xf32>
    %321 = vector.broadcast %319 : vector<1x16x128xf32> to vector<8x16x128xf32>
    %322 = arith.addf %320, %321 : vector<8x16x128xf32>
    %cst_127 = arith.constant 0.000000e+00 : f32
    %323 = vector.broadcast %cst_127 : f32 to vector<8x16x128xf32>
    %324 = arith.maximumf %322, %323 : vector<8x16x128xf32>
    %325 = vector.shape_cast %22 : vector<1x128xf32> to vector<1x1x128xf32>
    %326 = vector.broadcast %325 : vector<1x1x128xf32> to vector<8x16x128xf32>
    %327 = arith.mulf %324, %326 : vector<8x16x128xf32>
    %cst_128 = arith.constant dense<0.000000e+00> : vector<8x16xf32>
    %328 = vector.multi_reduction <add>, %327, %cst_128 [2] : vector<8x16x128xf32> to vector<8x16xf32>
    %329 = arith.addf %317, %328 : vector<8x16xf32>
    %330 = vector.broadcast %23 : vector<1x1xf32> to vector<8x16xf32>
    %331 = arith.addf %329, %330 : vector<8x16xf32>
    %332 = vector.extract_strided_slice %302 {offsets = [0, 0], sizes = [8, 16], strides = [1, 1]} : vector<16x16xf32> to vector<8x16xf32>
    %333 = arith.mulf %331, %332 : vector<8x16xf32>
    %c1_129 = arith.constant 1 : index
    %c0_130 = arith.constant 0 : index
    %c0_131 = arith.constant 0 : index
    %334 = vector.load %arg18[%c1_129, %c0_130, %c0_131] : memref<2x16x16xf32, #tpu.memory_space<vmem>>, vector<1x8x16xf32>
    %335 = vector.shape_cast %334 : vector<1x8x16xf32> to vector<8x16xf32>
    %336 = vector.shape_cast %333 : vector<8x16xf32> to vector<1x8x16xf32>
    tpu.vector_store %arg18[%c1_129, %c0_130, %c0_131], %336 {strides = array<i32>} : memref<2x16x16xf32, #tpu.memory_space<vmem>>, vector<1x8x16xf32>,
    %c56 = arith.constant 56 : index
    %c0_132 = arith.constant 0 : index
    %337 = vector.load %arg16[%c56, %c0_132] : memref<64x512xf32, #tpu.memory_space<vmem>>, vector<8x128xf32>
    %c56_133 = arith.constant 56 : index
    %c384_134 = arith.constant 384 : index
    %338 = vector.load %arg16[%c56_133, %c384_134] : memref<64x512xf32, #tpu.memory_space<vmem>>, vector<8x128xf32>
    %339 = vector.shape_cast %337 : vector<8x128xf32> to vector<8x1x128xf32>
    %340 = vector.shape_cast %303 : vector<16x128xf32> to vector<1x16x128xf32>
    %341 = vector.broadcast %339 : vector<8x1x128xf32> to vector<8x16x128xf32>
    %342 = vector.broadcast %340 : vector<1x16x128xf32> to vector<8x16x128xf32>
    %343 = arith.addf %341, %342 : vector<8x16x128xf32>
    %cst_135 = arith.constant 0.000000e+00 : f32
    %344 = vector.broadcast %cst_135 : f32 to vector<8x16x128xf32>
    %345 = arith.maximumf %343, %344 : vector<8x16x128xf32>
    %346 = vector.shape_cast %21 : vector<1x128xf32> to vector<1x1x128xf32>
    %347 = vector.broadcast %346 : vector<1x1x128xf32> to vector<8x16x128xf32>
    %348 = arith.mulf %345, %347 : vector<8x16x128xf32>
    %cst_136 = arith.constant dense<0.000000e+00> : vector<8x16xf32>
    %349 = vector.multi_reduction <add>, %348, %cst_136 [2] : vector<8x16x128xf32> to vector<8x16xf32>
    %350 = vector.shape_cast %338 : vector<8x128xf32> to vector<8x1x128xf32>
    %351 = vector.shape_cast %304 : vector<16x128xf32> to vector<1x16x128xf32>
    %352 = vector.broadcast %350 : vector<8x1x128xf32> to vector<8x16x128xf32>
    %353 = vector.broadcast %351 : vector<1x16x128xf32> to vector<8x16x128xf32>
    %354 = arith.addf %352, %353 : vector<8x16x128xf32>
    %cst_137 = arith.constant 0.000000e+00 : f32
    %355 = vector.broadcast %cst_137 : f32 to vector<8x16x128xf32>
    %356 = arith.maximumf %354, %355 : vector<8x16x128xf32>
    %357 = vector.shape_cast %22 : vector<1x128xf32> to vector<1x1x128xf32>
    %358 = vector.broadcast %357 : vector<1x1x128xf32> to vector<8x16x128xf32>
    %359 = arith.mulf %356, %358 : vector<8x16x128xf32>
    %cst_138 = arith.constant dense<0.000000e+00> : vector<8x16xf32>
    %360 = vector.multi_reduction <add>, %359, %cst_138 [2] : vector<8x16x128xf32> to vector<8x16xf32>
    %361 = arith.addf %349, %360 : vector<8x16xf32>
    %362 = vector.broadcast %23 : vector<1x1xf32> to vector<8x16xf32>
    %363 = arith.addf %361, %362 : vector<8x16xf32>
    %364 = vector.extract_strided_slice %302 {offsets = [8, 0], sizes = [8, 16], strides = [1, 1]} : vector<16x16xf32> to vector<8x16xf32>
    %365 = arith.mulf %363, %364 : vector<8x16xf32>
    %c1_139 = arith.constant 1 : index
    %c8_140 = arith.constant 8 : index
    %c0_141 = arith.constant 0 : index
    %366 = vector.load %arg18[%c1_139, %c8_140, %c0_141] : memref<2x16x16xf32, #tpu.memory_space<vmem>>, vector<1x8x16xf32>
    %367 = vector.shape_cast %366 : vector<1x8x16xf32> to vector<8x16xf32>
    %368 = vector.shape_cast %365 : vector<8x16xf32> to vector<1x8x16xf32>
    tpu.vector_store %arg18[%c1_139, %c8_140, %c0_141], %368 {strides = array<i32>} : memref<2x16x16xf32, #tpu.memory_space<vmem>>, vector<1x8x16xf32>,
    %369 = vector.shape_cast %47 : vector<16x16xf32> to vector<1x16x16xf32>
    %370 = vector.shape_cast %218 : vector<16x16xf32> to vector<1x16x16xf32>
    %371 = tpu.concatenate %369, %370 in 0 : vector<1x16x16xf32>, vector<1x16x16xf32> -> vector<2x16x16xf32>
    %cst_142 = arith.constant 1.000000e+01 : f32
    %372 = vector.broadcast %cst_142 : f32 to vector<2x16x16xf32>
    %373 = arith.mulf %371, %372 : vector<2x16x16xf32>
    %cst_143 = arith.constant dense<0xFF800000> : vector<2x16xf32>
    %374 = vector.multi_reduction <maximumf>, %373, %cst_143 [2] : vector<2x16x16xf32> to vector<2x16xf32>
    %375 = vector.shape_cast %374 : vector<2x16xf32> to vector<2x16x1xf32>
    %376 = vector.broadcast %375 : vector<2x16x1xf32> to vector<2x16x16xf32>
    %377 = arith.subf %373, %376 : vector<2x16x16xf32>
    %378 = math.exp %377 : vector<2x16x16xf32>
    %cst_144 = arith.constant dense<0.000000e+00> : vector<2x16xf32>
    %379 = vector.multi_reduction <add>, %378, %cst_144 [2] : vector<2x16x16xf32> to vector<2x16xf32>
    %380 = vector.shape_cast %379 : vector<2x16xf32> to vector<2x16x1xf32>
    %381 = math.log %380 : vector<2x16x1xf32>
    %382 = arith.addf %375, %381 : vector<2x16x1xf32>
    %383 = vector.broadcast %382 : vector<2x16x1xf32> to vector<2x16x16xf32>
    %384 = arith.subf %373, %383 : vector<2x16x16xf32>
    %cst_145 = arith.constant dense<0xFF800000> : vector<2x16xf32>
    %385 = vector.multi_reduction <maximumf>, %384, %cst_145 [1] : vector<2x16x16xf32> to vector<2x16xf32>
    %386 = vector.shape_cast %385 : vector<2x16xf32> to vector<2x1x16xf32>
    %387 = vector.broadcast %386 : vector<2x1x16xf32> to vector<2x16x16xf32>
    %388 = arith.subf %384, %387 : vector<2x16x16xf32>
    %389 = math.exp %388 : vector<2x16x16xf32>
    %cst_146 = arith.constant dense<0.000000e+00> : vector<2x16xf32>
    %390 = vector.multi_reduction <add>, %389, %cst_146 [1] : vector<2x16x16xf32> to vector<2x16xf32>
    %391 = vector.shape_cast %390 : vector<2x16xf32> to vector<2x1x16xf32>
    %392 = math.log %391 : vector<2x1x16xf32>
    %393 = arith.addf %386, %392 : vector<2x1x16xf32>
    %394 = vector.broadcast %393 : vector<2x1x16xf32> to vector<2x16x16xf32>
    %395 = arith.subf %384, %394 : vector<2x16x16xf32>
    %cst_147 = arith.constant dense<0xFF800000> : vector<2x16xf32>
    %396 = vector.multi_reduction <maximumf>, %395, %cst_147 [2] : vector<2x16x16xf32> to vector<2x16xf32>
    %397 = vector.shape_cast %396 : vector<2x16xf32> to vector<2x16x1xf32>
    %398 = vector.broadcast %397 : vector<2x16x1xf32> to vector<2x16x16xf32>
    %399 = arith.subf %395, %398 : vector<2x16x16xf32>
    %400 = math.exp %399 : vector<2x16x16xf32>
    %cst_148 = arith.constant dense<0.000000e+00> : vector<2x16xf32>
    %401 = vector.multi_reduction <add>, %400, %cst_148 [2] : vector<2x16x16xf32> to vector<2x16xf32>
    %402 = vector.shape_cast %401 : vector<2x16xf32> to vector<2x16x1xf32>
    %403 = math.log %402 : vector<2x16x1xf32>
    %404 = arith.addf %397, %403 : vector<2x16x1xf32>
    %405 = vector.broadcast %404 : vector<2x16x1xf32> to vector<2x16x16xf32>
    %406 = arith.subf %395, %405 : vector<2x16x16xf32>
    %cst_149 = arith.constant dense<0xFF800000> : vector<2x16xf32>
    %407 = vector.multi_reduction <maximumf>, %406, %cst_149 [1] : vector<2x16x16xf32> to vector<2x16xf32>
    %408 = vector.shape_cast %407 : vector<2x16xf32> to vector<2x1x16xf32>
    %409 = vector.broadcast %408 : vector<2x1x16xf32> to vector<2x16x16xf32>
    %410 = arith.subf %406, %409 : vector<2x16x16xf32>
    %411 = math.exp %410 : vector<2x16x16xf32>
    %cst_150 = arith.constant dense<0.000000e+00> : vector<2x16xf32>
    %412 = vector.multi_reduction <add>, %411, %cst_150 [1] : vector<2x16x16xf32> to vector<2x16xf32>
    %413 = vector.shape_cast %412 : vector<2x16xf32> to vector<2x1x16xf32>
    %414 = math.log %413 : vector<2x1x16xf32>
    %415 = arith.addf %408, %414 : vector<2x1x16xf32>
    %416 = vector.broadcast %415 : vector<2x1x16xf32> to vector<2x16x16xf32>
    %417 = arith.subf %406, %416 : vector<2x16x16xf32>
    %cst_151 = arith.constant dense<0xFF800000> : vector<2x16xf32>
    %418 = vector.multi_reduction <maximumf>, %417, %cst_151 [2] : vector<2x16x16xf32> to vector<2x16xf32>
    %419 = vector.shape_cast %418 : vector<2x16xf32> to vector<2x16x1xf32>
    %420 = vector.broadcast %419 : vector<2x16x1xf32> to vector<2x16x16xf32>
    %421 = arith.subf %417, %420 : vector<2x16x16xf32>
    %422 = math.exp %421 : vector<2x16x16xf32>
    %cst_152 = arith.constant dense<0.000000e+00> : vector<2x16xf32>
    %423 = vector.multi_reduction <add>, %422, %cst_152 [2] : vector<2x16x16xf32> to vector<2x16xf32>
    %424 = vector.shape_cast %423 : vector<2x16xf32> to vector<2x16x1xf32>
    %425 = math.log %424 : vector<2x16x1xf32>
    %426 = arith.addf %419, %425 : vector<2x16x1xf32>
    %427 = vector.broadcast %426 : vector<2x16x1xf32> to vector<2x16x16xf32>
    %428 = arith.subf %417, %427 : vector<2x16x16xf32>
    %cst_153 = arith.constant dense<0xFF800000> : vector<2x16xf32>
    %429 = vector.multi_reduction <maximumf>, %428, %cst_153 [1] : vector<2x16x16xf32> to vector<2x16xf32>
    %430 = vector.shape_cast %429 : vector<2x16xf32> to vector<2x1x16xf32>
    %431 = vector.broadcast %430 : vector<2x1x16xf32> to vector<2x16x16xf32>
    %432 = arith.subf %428, %431 : vector<2x16x16xf32>
    %433 = math.exp %432 : vector<2x16x16xf32>
    %cst_154 = arith.constant dense<0.000000e+00> : vector<2x16xf32>
    %434 = vector.multi_reduction <add>, %433, %cst_154 [1] : vector<2x16x16xf32> to vector<2x16xf32>
    %435 = vector.shape_cast %434 : vector<2x16xf32> to vector<2x1x16xf32>
    %436 = math.log %435 : vector<2x1x16xf32>
    %437 = arith.addf %430, %436 : vector<2x1x16xf32>
    %438 = vector.broadcast %437 : vector<2x1x16xf32> to vector<2x16x16xf32>
    %439 = arith.subf %428, %438 : vector<2x16x16xf32>
    %cst_155 = arith.constant dense<0xFF800000> : vector<2x16xf32>
    %440 = vector.multi_reduction <maximumf>, %439, %cst_155 [2] : vector<2x16x16xf32> to vector<2x16xf32>
    %441 = vector.shape_cast %440 : vector<2x16xf32> to vector<2x16x1xf32>
    %442 = vector.broadcast %441 : vector<2x16x1xf32> to vector<2x16x16xf32>
    %443 = arith.subf %439, %442 : vector<2x16x16xf32>
    %444 = math.exp %443 : vector<2x16x16xf32>
    %cst_156 = arith.constant dense<0.000000e+00> : vector<2x16xf32>
    %445 = vector.multi_reduction <add>, %444, %cst_156 [2] : vector<2x16x16xf32> to vector<2x16xf32>
    %446 = vector.shape_cast %445 : vector<2x16xf32> to vector<2x16x1xf32>
    %447 = math.log %446 : vector<2x16x1xf32>
    %448 = arith.addf %441, %447 : vector<2x16x1xf32>
    %449 = vector.broadcast %448 : vector<2x16x1xf32> to vector<2x16x16xf32>
    %450 = arith.subf %439, %449 : vector<2x16x16xf32>
    %cst_157 = arith.constant dense<0xFF800000> : vector<2x16xf32>
    %451 = vector.multi_reduction <maximumf>, %450, %cst_157 [1] : vector<2x16x16xf32> to vector<2x16xf32>
    %452 = vector.shape_cast %451 : vector<2x16xf32> to vector<2x1x16xf32>
    %453 = vector.broadcast %452 : vector<2x1x16xf32> to vector<2x16x16xf32>
    %454 = arith.subf %450, %453 : vector<2x16x16xf32>
    %455 = math.exp %454 : vector<2x16x16xf32>
    %cst_158 = arith.constant dense<0.000000e+00> : vector<2x16xf32>
    %456 = vector.multi_reduction <add>, %455, %cst_158 [1] : vector<2x16x16xf32> to vector<2x16xf32>
    %457 = vector.shape_cast %456 : vector<2x16xf32> to vector<2x1x16xf32>
    %458 = math.log %457 : vector<2x1x16xf32>
    %459 = arith.addf %452, %458 : vector<2x1x16xf32>
    %460 = vector.broadcast %459 : vector<2x1x16xf32> to vector<2x16x16xf32>
    %461 = arith.subf %450, %460 : vector<2x16x16xf32>
    %cst_159 = arith.constant dense<0xFF800000> : vector<2x16xf32>
    %462 = vector.multi_reduction <maximumf>, %461, %cst_159 [2] : vector<2x16x16xf32> to vector<2x16xf32>
    %463 = vector.shape_cast %462 : vector<2x16xf32> to vector<2x16x1xf32>
    %464 = vector.broadcast %463 : vector<2x16x1xf32> to vector<2x16x16xf32>
    %465 = arith.subf %461, %464 : vector<2x16x16xf32>
    %466 = math.exp %465 : vector<2x16x16xf32>
    %cst_160 = arith.constant dense<0.000000e+00> : vector<2x16xf32>
    %467 = vector.multi_reduction <add>, %466, %cst_160 [2] : vector<2x16x16xf32> to vector<2x16xf32>
    %468 = vector.shape_cast %467 : vector<2x16xf32> to vector<2x16x1xf32>
    %469 = math.log %468 : vector<2x16x1xf32>
    %470 = arith.addf %463, %469 : vector<2x16x1xf32>
    %471 = vector.broadcast %470 : vector<2x16x1xf32> to vector<2x16x16xf32>
    %472 = arith.subf %461, %471 : vector<2x16x16xf32>
    %cst_161 = arith.constant dense<0xFF800000> : vector<2x16xf32>
    %473 = vector.multi_reduction <maximumf>, %472, %cst_161 [1] : vector<2x16x16xf32> to vector<2x16xf32>
    %474 = vector.shape_cast %473 : vector<2x16xf32> to vector<2x1x16xf32>
    %475 = vector.broadcast %474 : vector<2x1x16xf32> to vector<2x16x16xf32>
    %476 = arith.subf %472, %475 : vector<2x16x16xf32>
    %477 = math.exp %476 : vector<2x16x16xf32>
    %cst_162 = arith.constant dense<0.000000e+00> : vector<2x16xf32>
    %478 = vector.multi_reduction <add>, %477, %cst_162 [1] : vector<2x16x16xf32> to vector<2x16xf32>
    %479 = vector.shape_cast %478 : vector<2x16xf32> to vector<2x1x16xf32>
    %480 = math.log %479 : vector<2x1x16xf32>
    %481 = arith.addf %474, %480 : vector<2x1x16xf32>
    %482 = vector.broadcast %481 : vector<2x1x16xf32> to vector<2x16x16xf32>
    %483 = arith.subf %472, %482 : vector<2x16x16xf32>
    %cst_163 = arith.constant dense<0xFF800000> : vector<2x16xf32>
    %484 = vector.multi_reduction <maximumf>, %483, %cst_163 [2] : vector<2x16x16xf32> to vector<2x16xf32>
    %485 = vector.shape_cast %484 : vector<2x16xf32> to vector<2x16x1xf32>
    %486 = vector.broadcast %485 : vector<2x16x1xf32> to vector<2x16x16xf32>
    %487 = arith.subf %483, %486 : vector<2x16x16xf32>
    %488 = math.exp %487 : vector<2x16x16xf32>
    %cst_164 = arith.constant dense<0.000000e+00> : vector<2x16xf32>
    %489 = vector.multi_reduction <add>, %488, %cst_164 [2] : vector<2x16x16xf32> to vector<2x16xf32>
    %490 = vector.shape_cast %489 : vector<2x16xf32> to vector<2x16x1xf32>
    %491 = math.log %490 : vector<2x16x1xf32>
    %492 = arith.addf %485, %491 : vector<2x16x1xf32>
    %493 = vector.broadcast %492 : vector<2x16x1xf32> to vector<2x16x16xf32>
    %494 = arith.subf %483, %493 : vector<2x16x16xf32>
    %cst_165 = arith.constant dense<0xFF800000> : vector<2x16xf32>
    %495 = vector.multi_reduction <maximumf>, %494, %cst_165 [1] : vector<2x16x16xf32> to vector<2x16xf32>
    %496 = vector.shape_cast %495 : vector<2x16xf32> to vector<2x1x16xf32>
    %497 = vector.broadcast %496 : vector<2x1x16xf32> to vector<2x16x16xf32>
    %498 = arith.subf %494, %497 : vector<2x16x16xf32>
    %499 = math.exp %498 : vector<2x16x16xf32>
    %cst_166 = arith.constant dense<0.000000e+00> : vector<2x16xf32>
    %500 = vector.multi_reduction <add>, %499, %cst_166 [1] : vector<2x16x16xf32> to vector<2x16xf32>
    %501 = vector.shape_cast %500 : vector<2x16xf32> to vector<2x1x16xf32>
    %502 = math.log %501 : vector<2x1x16xf32>
    %503 = arith.addf %496, %502 : vector<2x1x16xf32>
    %504 = vector.broadcast %503 : vector<2x1x16xf32> to vector<2x16x16xf32>
    %505 = arith.subf %494, %504 : vector<2x16x16xf32>
    %cst_167 = arith.constant dense<0xFF800000> : vector<2x16xf32>
    %506 = vector.multi_reduction <maximumf>, %505, %cst_167 [2] : vector<2x16x16xf32> to vector<2x16xf32>
    %507 = vector.shape_cast %506 : vector<2x16xf32> to vector<2x16x1xf32>
    %508 = vector.broadcast %507 : vector<2x16x1xf32> to vector<2x16x16xf32>
    %509 = arith.subf %505, %508 : vector<2x16x16xf32>
    %510 = math.exp %509 : vector<2x16x16xf32>
    %cst_168 = arith.constant dense<0.000000e+00> : vector<2x16xf32>
    %511 = vector.multi_reduction <add>, %510, %cst_168 [2] : vector<2x16x16xf32> to vector<2x16xf32>
    %512 = vector.shape_cast %511 : vector<2x16xf32> to vector<2x16x1xf32>
    %513 = math.log %512 : vector<2x16x1xf32>
    %514 = arith.addf %507, %513 : vector<2x16x1xf32>
    %515 = vector.broadcast %514 : vector<2x16x1xf32> to vector<2x16x16xf32>
    %516 = arith.subf %505, %515 : vector<2x16x16xf32>
    %cst_169 = arith.constant dense<0xFF800000> : vector<2x16xf32>
    %517 = vector.multi_reduction <maximumf>, %516, %cst_169 [1] : vector<2x16x16xf32> to vector<2x16xf32>
    %518 = vector.shape_cast %517 : vector<2x16xf32> to vector<2x1x16xf32>
    %519 = vector.broadcast %518 : vector<2x1x16xf32> to vector<2x16x16xf32>
    %520 = arith.subf %516, %519 : vector<2x16x16xf32>
    %521 = math.exp %520 : vector<2x16x16xf32>
    %cst_170 = arith.constant dense<0.000000e+00> : vector<2x16xf32>
    %522 = vector.multi_reduction <add>, %521, %cst_170 [1] : vector<2x16x16xf32> to vector<2x16xf32>
    %523 = vector.shape_cast %522 : vector<2x16xf32> to vector<2x1x16xf32>
    %524 = math.log %523 : vector<2x1x16xf32>
    %525 = arith.addf %518, %524 : vector<2x1x16xf32>
    %526 = vector.broadcast %525 : vector<2x1x16xf32> to vector<2x16x16xf32>
    %527 = arith.subf %516, %526 : vector<2x16x16xf32>
    %cst_171 = arith.constant dense<0xFF800000> : vector<2x16xf32>
    %528 = vector.multi_reduction <maximumf>, %527, %cst_171 [2] : vector<2x16x16xf32> to vector<2x16xf32>
    %529 = vector.shape_cast %528 : vector<2x16xf32> to vector<2x16x1xf32>
    %530 = vector.broadcast %529 : vector<2x16x1xf32> to vector<2x16x16xf32>
    %531 = arith.subf %527, %530 : vector<2x16x16xf32>
    %532 = math.exp %531 : vector<2x16x16xf32>
    %cst_172 = arith.constant dense<0.000000e+00> : vector<2x16xf32>
    %533 = vector.multi_reduction <add>, %532, %cst_172 [2] : vector<2x16x16xf32> to vector<2x16xf32>
    %534 = vector.shape_cast %533 : vector<2x16xf32> to vector<2x16x1xf32>
    %535 = math.log %534 : vector<2x16x1xf32>
    %536 = arith.addf %529, %535 : vector<2x16x1xf32>
    %537 = vector.broadcast %536 : vector<2x16x1xf32> to vector<2x16x16xf32>
    %538 = arith.subf %527, %537 : vector<2x16x16xf32>
    %cst_173 = arith.constant dense<0xFF800000> : vector<2x16xf32>
    %539 = vector.multi_reduction <maximumf>, %538, %cst_173 [1] : vector<2x16x16xf32> to vector<2x16xf32>
    %540 = vector.shape_cast %539 : vector<2x16xf32> to vector<2x1x16xf32>
    %541 = vector.broadcast %540 : vector<2x1x16xf32> to vector<2x16x16xf32>
    %542 = arith.subf %538, %541 : vector<2x16x16xf32>
    %543 = math.exp %542 : vector<2x16x16xf32>
    %cst_174 = arith.constant dense<0.000000e+00> : vector<2x16xf32>
    %544 = vector.multi_reduction <add>, %543, %cst_174 [1] : vector<2x16x16xf32> to vector<2x16xf32>
    %545 = vector.shape_cast %544 : vector<2x16xf32> to vector<2x1x16xf32>
    %546 = math.log %545 : vector<2x1x16xf32>
    %547 = arith.addf %540, %546 : vector<2x1x16xf32>
    %548 = vector.broadcast %547 : vector<2x1x16xf32> to vector<2x16x16xf32>
    %549 = arith.subf %538, %548 : vector<2x16x16xf32>
    %cst_175 = arith.constant dense<0xFF800000> : vector<2x16xf32>
    %550 = vector.multi_reduction <maximumf>, %549, %cst_175 [2] : vector<2x16x16xf32> to vector<2x16xf32>
    %551 = vector.shape_cast %550 : vector<2x16xf32> to vector<2x16x1xf32>
    %552 = vector.broadcast %551 : vector<2x16x1xf32> to vector<2x16x16xf32>
    %553 = arith.subf %549, %552 : vector<2x16x16xf32>
    %554 = math.exp %553 : vector<2x16x16xf32>
    %cst_176 = arith.constant dense<0.000000e+00> : vector<2x16xf32>
    %555 = vector.multi_reduction <add>, %554, %cst_176 [2] : vector<2x16x16xf32> to vector<2x16xf32>
    %556 = vector.shape_cast %555 : vector<2x16xf32> to vector<2x16x1xf32>
    %557 = math.log %556 : vector<2x16x1xf32>
    %558 = arith.addf %551, %557 : vector<2x16x1xf32>
    %559 = vector.broadcast %558 : vector<2x16x1xf32> to vector<2x16x16xf32>
    %560 = arith.subf %549, %559 : vector<2x16x16xf32>
    %cst_177 = arith.constant dense<0xFF800000> : vector<2x16xf32>
    %561 = vector.multi_reduction <maximumf>, %560, %cst_177 [1] : vector<2x16x16xf32> to vector<2x16xf32>
    %562 = vector.shape_cast %561 : vector<2x16xf32> to vector<2x1x16xf32>
    %563 = vector.broadcast %562 : vector<2x1x16xf32> to vector<2x16x16xf32>
    %564 = arith.subf %560, %563 : vector<2x16x16xf32>
    %565 = math.exp %564 : vector<2x16x16xf32>
    %cst_178 = arith.constant dense<0.000000e+00> : vector<2x16xf32>
    %566 = vector.multi_reduction <add>, %565, %cst_178 [1] : vector<2x16x16xf32> to vector<2x16xf32>
    %567 = vector.shape_cast %566 : vector<2x16xf32> to vector<2x1x16xf32>
    %568 = math.log %567 : vector<2x1x16xf32>
    %569 = arith.addf %562, %568 : vector<2x1x16xf32>
    %570 = vector.broadcast %569 : vector<2x1x16xf32> to vector<2x16x16xf32>
    %571 = arith.subf %560, %570 : vector<2x16x16xf32>
    %cst_179 = arith.constant dense<0xFF800000> : vector<2x16xf32>
    %572 = vector.multi_reduction <maximumf>, %571, %cst_179 [2] : vector<2x16x16xf32> to vector<2x16xf32>
    %573 = vector.shape_cast %572 : vector<2x16xf32> to vector<2x16x1xf32>
    %574 = vector.broadcast %573 : vector<2x16x1xf32> to vector<2x16x16xf32>
    %575 = arith.subf %571, %574 : vector<2x16x16xf32>
    %576 = math.exp %575 : vector<2x16x16xf32>
    %cst_180 = arith.constant dense<0.000000e+00> : vector<2x16xf32>
    %577 = vector.multi_reduction <add>, %576, %cst_180 [2] : vector<2x16x16xf32> to vector<2x16xf32>
    %578 = vector.shape_cast %577 : vector<2x16xf32> to vector<2x16x1xf32>
    %579 = math.log %578 : vector<2x16x1xf32>
    %580 = arith.addf %573, %579 : vector<2x16x1xf32>
    %581 = vector.broadcast %580 : vector<2x16x1xf32> to vector<2x16x16xf32>
    %582 = arith.subf %571, %581 : vector<2x16x16xf32>
    %cst_181 = arith.constant dense<0xFF800000> : vector<2x16xf32>
    %583 = vector.multi_reduction <maximumf>, %582, %cst_181 [1] : vector<2x16x16xf32> to vector<2x16xf32>
    %584 = vector.shape_cast %583 : vector<2x16xf32> to vector<2x1x16xf32>
    %585 = vector.broadcast %584 : vector<2x1x16xf32> to vector<2x16x16xf32>
    %586 = arith.subf %582, %585 : vector<2x16x16xf32>
    %587 = math.exp %586 : vector<2x16x16xf32>
    %cst_182 = arith.constant dense<0.000000e+00> : vector<2x16xf32>
    %588 = vector.multi_reduction <add>, %587, %cst_182 [1] : vector<2x16x16xf32> to vector<2x16xf32>
    %589 = vector.shape_cast %588 : vector<2x16xf32> to vector<2x1x16xf32>
    %590 = math.log %589 : vector<2x1x16xf32>
    %591 = arith.addf %584, %590 : vector<2x1x16xf32>
    %592 = vector.broadcast %591 : vector<2x1x16xf32> to vector<2x16x16xf32>
    %593 = arith.subf %582, %592 : vector<2x16x16xf32>
    %cst_183 = arith.constant dense<0xFF800000> : vector<2x16xf32>
    %594 = vector.multi_reduction <maximumf>, %593, %cst_183 [2] : vector<2x16x16xf32> to vector<2x16xf32>
    %595 = vector.shape_cast %594 : vector<2x16xf32> to vector<2x16x1xf32>
    %596 = vector.broadcast %595 : vector<2x16x1xf32> to vector<2x16x16xf32>
    %597 = arith.subf %593, %596 : vector<2x16x16xf32>
    %598 = math.exp %597 : vector<2x16x16xf32>
    %cst_184 = arith.constant dense<0.000000e+00> : vector<2x16xf32>
    %599 = vector.multi_reduction <add>, %598, %cst_184 [2] : vector<2x16x16xf32> to vector<2x16xf32>
    %600 = vector.shape_cast %599 : vector<2x16xf32> to vector<2x16x1xf32>
    %601 = math.log %600 : vector<2x16x1xf32>
    %602 = arith.addf %595, %601 : vector<2x16x1xf32>
    %603 = vector.broadcast %602 : vector<2x16x1xf32> to vector<2x16x16xf32>
    %604 = arith.subf %593, %603 : vector<2x16x16xf32>
    %cst_185 = arith.constant dense<0xFF800000> : vector<2x16xf32>
    %605 = vector.multi_reduction <maximumf>, %604, %cst_185 [1] : vector<2x16x16xf32> to vector<2x16xf32>
    %606 = vector.shape_cast %605 : vector<2x16xf32> to vector<2x1x16xf32>
    %607 = vector.broadcast %606 : vector<2x1x16xf32> to vector<2x16x16xf32>
    %608 = arith.subf %604, %607 : vector<2x16x16xf32>
    %609 = math.exp %608 : vector<2x16x16xf32>
    %cst_186 = arith.constant dense<0.000000e+00> : vector<2x16xf32>
    %610 = vector.multi_reduction <add>, %609, %cst_186 [1] : vector<2x16x16xf32> to vector<2x16xf32>
    %611 = vector.shape_cast %610 : vector<2x16xf32> to vector<2x1x16xf32>
    %612 = math.log %611 : vector<2x1x16xf32>
    %613 = arith.addf %606, %612 : vector<2x1x16xf32>
    %614 = vector.broadcast %613 : vector<2x1x16xf32> to vector<2x16x16xf32>
    %615 = arith.subf %604, %614 : vector<2x16x16xf32>
    %cst_187 = arith.constant dense<0xFF800000> : vector<2x16xf32>
    %616 = vector.multi_reduction <maximumf>, %615, %cst_187 [2] : vector<2x16x16xf32> to vector<2x16xf32>
    %617 = vector.shape_cast %616 : vector<2x16xf32> to vector<2x16x1xf32>
    %618 = vector.broadcast %617 : vector<2x16x1xf32> to vector<2x16x16xf32>
    %619 = arith.subf %615, %618 : vector<2x16x16xf32>
    %620 = math.exp %619 : vector<2x16x16xf32>
    %cst_188 = arith.constant dense<0.000000e+00> : vector<2x16xf32>
    %621 = vector.multi_reduction <add>, %620, %cst_188 [2] : vector<2x16x16xf32> to vector<2x16xf32>
    %622 = vector.shape_cast %621 : vector<2x16xf32> to vector<2x16x1xf32>
    %623 = math.log %622 : vector<2x16x1xf32>
    %624 = arith.addf %617, %623 : vector<2x16x1xf32>
    %625 = vector.broadcast %624 : vector<2x16x1xf32> to vector<2x16x16xf32>
    %626 = arith.subf %615, %625 : vector<2x16x16xf32>
    %cst_189 = arith.constant dense<0xFF800000> : vector<2x16xf32>
    %627 = vector.multi_reduction <maximumf>, %626, %cst_189 [1] : vector<2x16x16xf32> to vector<2x16xf32>
    %628 = vector.shape_cast %627 : vector<2x16xf32> to vector<2x1x16xf32>
    %629 = vector.broadcast %628 : vector<2x1x16xf32> to vector<2x16x16xf32>
    %630 = arith.subf %626, %629 : vector<2x16x16xf32>
    %631 = math.exp %630 : vector<2x16x16xf32>
    %cst_190 = arith.constant dense<0.000000e+00> : vector<2x16xf32>
    %632 = vector.multi_reduction <add>, %631, %cst_190 [1] : vector<2x16x16xf32> to vector<2x16xf32>
    %633 = vector.shape_cast %632 : vector<2x16xf32> to vector<2x1x16xf32>
    %634 = math.log %633 : vector<2x1x16xf32>
    %635 = arith.addf %628, %634 : vector<2x1x16xf32>
    %636 = vector.broadcast %635 : vector<2x1x16xf32> to vector<2x16x16xf32>
    %637 = arith.subf %626, %636 : vector<2x16x16xf32>
    %cst_191 = arith.constant dense<0xFF800000> : vector<2x16xf32>
    %638 = vector.multi_reduction <maximumf>, %637, %cst_191 [2] : vector<2x16x16xf32> to vector<2x16xf32>
    %639 = vector.shape_cast %638 : vector<2x16xf32> to vector<2x16x1xf32>
    %640 = vector.broadcast %639 : vector<2x16x1xf32> to vector<2x16x16xf32>
    %641 = arith.subf %637, %640 : vector<2x16x16xf32>
    %642 = math.exp %641 : vector<2x16x16xf32>
    %cst_192 = arith.constant dense<0.000000e+00> : vector<2x16xf32>
    %643 = vector.multi_reduction <add>, %642, %cst_192 [2] : vector<2x16x16xf32> to vector<2x16xf32>
    %644 = vector.shape_cast %643 : vector<2x16xf32> to vector<2x16x1xf32>
    %645 = math.log %644 : vector<2x16x1xf32>
    %646 = arith.addf %639, %645 : vector<2x16x1xf32>
    %647 = vector.broadcast %646 : vector<2x16x1xf32> to vector<2x16x16xf32>
    %648 = arith.subf %637, %647 : vector<2x16x16xf32>
    %cst_193 = arith.constant dense<0xFF800000> : vector<2x16xf32>
    %649 = vector.multi_reduction <maximumf>, %648, %cst_193 [1] : vector<2x16x16xf32> to vector<2x16xf32>
    %650 = vector.shape_cast %649 : vector<2x16xf32> to vector<2x1x16xf32>
    %651 = vector.broadcast %650 : vector<2x1x16xf32> to vector<2x16x16xf32>
    %652 = arith.subf %648, %651 : vector<2x16x16xf32>
    %653 = math.exp %652 : vector<2x16x16xf32>
    %cst_194 = arith.constant dense<0.000000e+00> : vector<2x16xf32>
    %654 = vector.multi_reduction <add>, %653, %cst_194 [1] : vector<2x16x16xf32> to vector<2x16xf32>
    %655 = vector.shape_cast %654 : vector<2x16xf32> to vector<2x1x16xf32>
    %656 = math.log %655 : vector<2x1x16xf32>
    %657 = arith.addf %650, %656 : vector<2x1x16xf32>
    %658 = vector.broadcast %657 : vector<2x1x16xf32> to vector<2x16x16xf32>
    %659 = arith.subf %648, %658 : vector<2x16x16xf32>
    %cst_195 = arith.constant dense<0xFF800000> : vector<2x16xf32>
    %660 = vector.multi_reduction <maximumf>, %659, %cst_195 [2] : vector<2x16x16xf32> to vector<2x16xf32>
    %661 = vector.shape_cast %660 : vector<2x16xf32> to vector<2x16x1xf32>
    %662 = vector.broadcast %661 : vector<2x16x1xf32> to vector<2x16x16xf32>
    %663 = arith.subf %659, %662 : vector<2x16x16xf32>
    %664 = math.exp %663 : vector<2x16x16xf32>
    %cst_196 = arith.constant dense<0.000000e+00> : vector<2x16xf32>
    %665 = vector.multi_reduction <add>, %664, %cst_196 [2] : vector<2x16x16xf32> to vector<2x16xf32>
    %666 = vector.shape_cast %665 : vector<2x16xf32> to vector<2x16x1xf32>
    %667 = math.log %666 : vector<2x16x1xf32>
    %668 = arith.addf %661, %667 : vector<2x16x1xf32>
    %669 = vector.broadcast %668 : vector<2x16x1xf32> to vector<2x16x16xf32>
    %670 = arith.subf %659, %669 : vector<2x16x16xf32>
    %cst_197 = arith.constant dense<0xFF800000> : vector<2x16xf32>
    %671 = vector.multi_reduction <maximumf>, %670, %cst_197 [1] : vector<2x16x16xf32> to vector<2x16xf32>
    %672 = vector.shape_cast %671 : vector<2x16xf32> to vector<2x1x16xf32>
    %673 = vector.broadcast %672 : vector<2x1x16xf32> to vector<2x16x16xf32>
    %674 = arith.subf %670, %673 : vector<2x16x16xf32>
    %675 = math.exp %674 : vector<2x16x16xf32>
    %cst_198 = arith.constant dense<0.000000e+00> : vector<2x16xf32>
    %676 = vector.multi_reduction <add>, %675, %cst_198 [1] : vector<2x16x16xf32> to vector<2x16xf32>
    %677 = vector.shape_cast %676 : vector<2x16xf32> to vector<2x1x16xf32>
    %678 = math.log %677 : vector<2x1x16xf32>
    %679 = arith.addf %672, %678 : vector<2x1x16xf32>
    %680 = vector.broadcast %679 : vector<2x1x16xf32> to vector<2x16x16xf32>
    %681 = arith.subf %670, %680 : vector<2x16x16xf32>
    %cst_199 = arith.constant dense<0xFF800000> : vector<2x16xf32>
    %682 = vector.multi_reduction <maximumf>, %681, %cst_199 [2] : vector<2x16x16xf32> to vector<2x16xf32>
    %683 = vector.shape_cast %682 : vector<2x16xf32> to vector<2x16x1xf32>
    %684 = vector.broadcast %683 : vector<2x16x1xf32> to vector<2x16x16xf32>
    %685 = arith.subf %681, %684 : vector<2x16x16xf32>
    %686 = math.exp %685 : vector<2x16x16xf32>
    %cst_200 = arith.constant dense<0.000000e+00> : vector<2x16xf32>
    %687 = vector.multi_reduction <add>, %686, %cst_200 [2] : vector<2x16x16xf32> to vector<2x16xf32>
    %688 = vector.shape_cast %687 : vector<2x16xf32> to vector<2x16x1xf32>
    %689 = math.log %688 : vector<2x16x1xf32>
    %690 = arith.addf %683, %689 : vector<2x16x1xf32>
    %691 = vector.broadcast %690 : vector<2x16x1xf32> to vector<2x16x16xf32>
    %692 = arith.subf %681, %691 : vector<2x16x16xf32>
    %cst_201 = arith.constant dense<0xFF800000> : vector<2x16xf32>
    %693 = vector.multi_reduction <maximumf>, %692, %cst_201 [1] : vector<2x16x16xf32> to vector<2x16xf32>
    %694 = vector.shape_cast %693 : vector<2x16xf32> to vector<2x1x16xf32>
    %695 = vector.broadcast %694 : vector<2x1x16xf32> to vector<2x16x16xf32>
    %696 = arith.subf %692, %695 : vector<2x16x16xf32>
    %697 = math.exp %696 : vector<2x16x16xf32>
    %cst_202 = arith.constant dense<0.000000e+00> : vector<2x16xf32>
    %698 = vector.multi_reduction <add>, %697, %cst_202 [1] : vector<2x16x16xf32> to vector<2x16xf32>
    %699 = vector.shape_cast %698 : vector<2x16xf32> to vector<2x1x16xf32>
    %700 = math.log %699 : vector<2x1x16xf32>
    %701 = arith.addf %694, %700 : vector<2x1x16xf32>
    %702 = vector.broadcast %701 : vector<2x1x16xf32> to vector<2x16x16xf32>
    %703 = arith.subf %692, %702 : vector<2x16x16xf32>
    %cst_203 = arith.constant dense<0xFF800000> : vector<2x16xf32>
    %704 = vector.multi_reduction <maximumf>, %703, %cst_203 [2] : vector<2x16x16xf32> to vector<2x16xf32>
    %705 = vector.shape_cast %704 : vector<2x16xf32> to vector<2x16x1xf32>
    %706 = vector.broadcast %705 : vector<2x16x1xf32> to vector<2x16x16xf32>
    %707 = arith.subf %703, %706 : vector<2x16x16xf32>
    %708 = math.exp %707 : vector<2x16x16xf32>
    %cst_204 = arith.constant dense<0.000000e+00> : vector<2x16xf32>
    %709 = vector.multi_reduction <add>, %708, %cst_204 [2] : vector<2x16x16xf32> to vector<2x16xf32>
    %710 = vector.shape_cast %709 : vector<2x16xf32> to vector<2x16x1xf32>
    %711 = math.log %710 : vector<2x16x1xf32>
    %712 = arith.addf %705, %711 : vector<2x16x1xf32>
    %713 = vector.broadcast %712 : vector<2x16x1xf32> to vector<2x16x16xf32>
    %714 = arith.subf %703, %713 : vector<2x16x16xf32>
    %cst_205 = arith.constant dense<0xFF800000> : vector<2x16xf32>
    %715 = vector.multi_reduction <maximumf>, %714, %cst_205 [1] : vector<2x16x16xf32> to vector<2x16xf32>
    %716 = vector.shape_cast %715 : vector<2x16xf32> to vector<2x1x16xf32>
    %717 = vector.broadcast %716 : vector<2x1x16xf32> to vector<2x16x16xf32>
    %718 = arith.subf %714, %717 : vector<2x16x16xf32>
    %719 = math.exp %718 : vector<2x16x16xf32>
    %cst_206 = arith.constant dense<0.000000e+00> : vector<2x16xf32>
    %720 = vector.multi_reduction <add>, %719, %cst_206 [1] : vector<2x16x16xf32> to vector<2x16xf32>
    %721 = vector.shape_cast %720 : vector<2x16xf32> to vector<2x1x16xf32>
    %722 = math.log %721 : vector<2x1x16xf32>
    %723 = arith.addf %716, %722 : vector<2x1x16xf32>
    %724 = vector.broadcast %723 : vector<2x1x16xf32> to vector<2x16x16xf32>
    %725 = arith.subf %714, %724 : vector<2x16x16xf32>
    %cst_207 = arith.constant dense<0xFF800000> : vector<2x16xf32>
    %726 = vector.multi_reduction <maximumf>, %725, %cst_207 [2] : vector<2x16x16xf32> to vector<2x16xf32>
    %727 = vector.shape_cast %726 : vector<2x16xf32> to vector<2x16x1xf32>
    %728 = vector.broadcast %727 : vector<2x16x1xf32> to vector<2x16x16xf32>
    %729 = arith.subf %725, %728 : vector<2x16x16xf32>
    %730 = math.exp %729 : vector<2x16x16xf32>
    %cst_208 = arith.constant dense<0.000000e+00> : vector<2x16xf32>
    %731 = vector.multi_reduction <add>, %730, %cst_208 [2] : vector<2x16x16xf32> to vector<2x16xf32>
    %732 = vector.shape_cast %731 : vector<2x16xf32> to vector<2x16x1xf32>
    %733 = math.log %732 : vector<2x16x1xf32>
    %734 = arith.addf %727, %733 : vector<2x16x1xf32>
    %735 = vector.broadcast %734 : vector<2x16x1xf32> to vector<2x16x16xf32>
    %736 = arith.subf %725, %735 : vector<2x16x16xf32>
    %cst_209 = arith.constant dense<0xFF800000> : vector<2x16xf32>
    %737 = vector.multi_reduction <maximumf>, %736, %cst_209 [1] : vector<2x16x16xf32> to vector<2x16xf32>
    %738 = vector.shape_cast %737 : vector<2x16xf32> to vector<2x1x16xf32>
    %739 = vector.broadcast %738 : vector<2x1x16xf32> to vector<2x16x16xf32>
    %740 = arith.subf %736, %739 : vector<2x16x16xf32>
    %741 = math.exp %740 : vector<2x16x16xf32>
    %cst_210 = arith.constant dense<0.000000e+00> : vector<2x16xf32>
    %742 = vector.multi_reduction <add>, %741, %cst_210 [1] : vector<2x16x16xf32> to vector<2x16xf32>
    %743 = vector.shape_cast %742 : vector<2x16xf32> to vector<2x1x16xf32>
    %744 = math.log %743 : vector<2x1x16xf32>
    %745 = arith.addf %738, %744 : vector<2x1x16xf32>
    %746 = vector.broadcast %745 : vector<2x1x16xf32> to vector<2x16x16xf32>
    %747 = arith.subf %736, %746 : vector<2x16x16xf32>
    %cst_211 = arith.constant dense<0xFF800000> : vector<2x16xf32>
    %748 = vector.multi_reduction <maximumf>, %747, %cst_211 [2] : vector<2x16x16xf32> to vector<2x16xf32>
    %749 = vector.shape_cast %748 : vector<2x16xf32> to vector<2x16x1xf32>
    %750 = vector.broadcast %749 : vector<2x16x1xf32> to vector<2x16x16xf32>
    %751 = arith.subf %747, %750 : vector<2x16x16xf32>
    %752 = math.exp %751 : vector<2x16x16xf32>
    %cst_212 = arith.constant dense<0.000000e+00> : vector<2x16xf32>
    %753 = vector.multi_reduction <add>, %752, %cst_212 [2] : vector<2x16x16xf32> to vector<2x16xf32>
    %754 = vector.shape_cast %753 : vector<2x16xf32> to vector<2x16x1xf32>
    %755 = math.log %754 : vector<2x16x1xf32>
    %756 = arith.addf %749, %755 : vector<2x16x1xf32>
    %757 = vector.broadcast %756 : vector<2x16x1xf32> to vector<2x16x16xf32>
    %758 = arith.subf %747, %757 : vector<2x16x16xf32>
    %cst_213 = arith.constant dense<0xFF800000> : vector<2x16xf32>
    %759 = vector.multi_reduction <maximumf>, %758, %cst_213 [1] : vector<2x16x16xf32> to vector<2x16xf32>
    %760 = vector.shape_cast %759 : vector<2x16xf32> to vector<2x1x16xf32>
    %761 = vector.broadcast %760 : vector<2x1x16xf32> to vector<2x16x16xf32>
    %762 = arith.subf %758, %761 : vector<2x16x16xf32>
    %763 = math.exp %762 : vector<2x16x16xf32>
    %cst_214 = arith.constant dense<0.000000e+00> : vector<2x16xf32>
    %764 = vector.multi_reduction <add>, %763, %cst_214 [1] : vector<2x16x16xf32> to vector<2x16xf32>
    %765 = vector.shape_cast %764 : vector<2x16xf32> to vector<2x1x16xf32>
    %766 = math.log %765 : vector<2x1x16xf32>
    %767 = arith.addf %760, %766 : vector<2x1x16xf32>
    %768 = vector.broadcast %767 : vector<2x1x16xf32> to vector<2x16x16xf32>
    %769 = arith.subf %758, %768 : vector<2x16x16xf32>
    %cst_215 = arith.constant dense<0xFF800000> : vector<2x16xf32>
    %770 = vector.multi_reduction <maximumf>, %769, %cst_215 [2] : vector<2x16x16xf32> to vector<2x16xf32>
    %771 = vector.shape_cast %770 : vector<2x16xf32> to vector<2x16x1xf32>
    %772 = vector.broadcast %771 : vector<2x16x1xf32> to vector<2x16x16xf32>
    %773 = arith.subf %769, %772 : vector<2x16x16xf32>
    %774 = math.exp %773 : vector<2x16x16xf32>
    %cst_216 = arith.constant dense<0.000000e+00> : vector<2x16xf32>
    %775 = vector.multi_reduction <add>, %774, %cst_216 [2] : vector<2x16x16xf32> to vector<2x16xf32>
    %776 = vector.shape_cast %775 : vector<2x16xf32> to vector<2x16x1xf32>
    %777 = math.log %776 : vector<2x16x1xf32>
    %778 = arith.addf %771, %777 : vector<2x16x1xf32>
    %779 = vector.broadcast %778 : vector<2x16x1xf32> to vector<2x16x16xf32>
    %780 = arith.subf %769, %779 : vector<2x16x16xf32>
    %cst_217 = arith.constant dense<0xFF800000> : vector<2x16xf32>
    %781 = vector.multi_reduction <maximumf>, %780, %cst_217 [1] : vector<2x16x16xf32> to vector<2x16xf32>
    %782 = vector.shape_cast %781 : vector<2x16xf32> to vector<2x1x16xf32>
    %783 = vector.broadcast %782 : vector<2x1x16xf32> to vector<2x16x16xf32>
    %784 = arith.subf %780, %783 : vector<2x16x16xf32>
    %785 = math.exp %784 : vector<2x16x16xf32>
    %cst_218 = arith.constant dense<0.000000e+00> : vector<2x16xf32>
    %786 = vector.multi_reduction <add>, %785, %cst_218 [1] : vector<2x16x16xf32> to vector<2x16xf32>
    %787 = vector.shape_cast %786 : vector<2x16xf32> to vector<2x1x16xf32>
    %788 = math.log %787 : vector<2x1x16xf32>
    %789 = arith.addf %782, %788 : vector<2x1x16xf32>
    %790 = vector.broadcast %789 : vector<2x1x16xf32> to vector<2x16x16xf32>
    %791 = arith.subf %780, %790 : vector<2x16x16xf32>
    %cst_219 = arith.constant dense<0xFF800000> : vector<2x16xf32>
    %792 = vector.multi_reduction <maximumf>, %791, %cst_219 [2] : vector<2x16x16xf32> to vector<2x16xf32>
    %793 = vector.shape_cast %792 : vector<2x16xf32> to vector<2x16x1xf32>
    %794 = vector.broadcast %793 : vector<2x16x1xf32> to vector<2x16x16xf32>
    %795 = arith.subf %791, %794 : vector<2x16x16xf32>
    %796 = math.exp %795 : vector<2x16x16xf32>
    %cst_220 = arith.constant dense<0.000000e+00> : vector<2x16xf32>
    %797 = vector.multi_reduction <add>, %796, %cst_220 [2] : vector<2x16x16xf32> to vector<2x16xf32>
    %798 = vector.shape_cast %797 : vector<2x16xf32> to vector<2x16x1xf32>
    %799 = math.log %798 : vector<2x16x1xf32>
    %800 = arith.addf %793, %799 : vector<2x16x1xf32>
    %801 = vector.broadcast %800 : vector<2x16x1xf32> to vector<2x16x16xf32>
    %802 = arith.subf %791, %801 : vector<2x16x16xf32>
    %cst_221 = arith.constant dense<0xFF800000> : vector<2x16xf32>
    %803 = vector.multi_reduction <maximumf>, %802, %cst_221 [1] : vector<2x16x16xf32> to vector<2x16xf32>
    %804 = vector.shape_cast %803 : vector<2x16xf32> to vector<2x1x16xf32>
    %805 = vector.broadcast %804 : vector<2x1x16xf32> to vector<2x16x16xf32>
    %806 = arith.subf %802, %805 : vector<2x16x16xf32>
    %807 = math.exp %806 : vector<2x16x16xf32>
    %cst_222 = arith.constant dense<0.000000e+00> : vector<2x16xf32>
    %808 = vector.multi_reduction <add>, %807, %cst_222 [1] : vector<2x16x16xf32> to vector<2x16xf32>
    %809 = vector.shape_cast %808 : vector<2x16xf32> to vector<2x1x16xf32>
    %810 = math.log %809 : vector<2x1x16xf32>
    %811 = arith.addf %804, %810 : vector<2x1x16xf32>
    %812 = vector.broadcast %811 : vector<2x1x16xf32> to vector<2x16x16xf32>
    %813 = arith.subf %802, %812 : vector<2x16x16xf32>
    %814 = math.exp %813 : vector<2x16x16xf32>
    %c0_223 = arith.constant 0 : index
    %c0_224 = arith.constant 0 : index
    %c0_225 = arith.constant 0 : index
    %815 = vector.load %arg17[%c0_223, %c0_224, %c0_225] : memref<2x16x16xf32, #tpu.memory_space<vmem>>, vector<2x16x16xf32>
    %c0_226 = arith.constant 0 : index
    %c0_227 = arith.constant 0 : index
    %c0_228 = arith.constant 0 : index
    %816 = vector.load %arg18[%c0_226, %c0_227, %c0_228] : memref<2x16x16xf32, #tpu.memory_space<vmem>>, vector<2x16x16xf32>
    "tpu.trace_start"() <{level = 10 : i32, message = "bij,bjk->bik"}> : () -> ()
    %cst_229 = arith.constant dense<0.000000e+00> : vector<2x16x16xf32>
    %817 = tpu.matmul %814, %816, %cst_229 {dimension_numbers = #tpu.dot_dimension_numbers<[2], [1], [1], [2], [0, 0, 0, 1, 1, 2], [0], [0]>} : vector<2x16x16xf32>, vector<2x16x16xf32>, vector<2x16x16xf32> -> vector<2x16x16xf32>
    "tpu.trace_stop"() : () -> ()
    "tpu.trace_start"() <{level = 10 : i32, message = "bik,blk->bil"}> : () -> ()
    %cst_230 = arith.constant dense<0.000000e+00> : vector<2x16x16xf32>
    %818 = tpu.matmul %817, %814, %cst_230 {dimension_numbers = #tpu.dot_dimension_numbers<[2], [2], [1], [1], [0, 0, 0, 1, 1, 1], [0], [0]>} : vector<2x16x16xf32>, vector<2x16x16xf32>, vector<2x16x16xf32> -> vector<2x16x16xf32>
    "tpu.trace_stop"() : () -> ()
    %819 = arith.subf %815, %818 : vector<2x16x16xf32>
    %cst_231 = arith.constant 0.000000e+00 : f32
    %820 = vector.broadcast %cst_231 : f32 to vector<2x16x16xf32>
    %821 = arith.maximumf %819, %820 : vector<2x16x16xf32>
    %cst_232 = arith.constant dense<0.000000e+00> : vector<2x16xf32>
    %822 = vector.multi_reduction <add>, %821, %cst_232 [2] : vector<2x16x16xf32> to vector<2x16xf32>
    %cst_233 = arith.constant dense<0.000000e+00> : vector<2xf32>
    %823 = vector.multi_reduction <add>, %822, %cst_233 [1] : vector<2x16xf32> to vector<2xf32>
    %cst_234 = arith.constant 0.000000e+00 : f32
    %824 = vector.broadcast %cst_234 : f32 to vector<2xf32>
    %825 = arith.subf %824, %823 : vector<2xf32>
    %826 = vector.shape_cast %825 : vector<2xf32> to vector<1x2xf32>
    %c0_235 = arith.constant 0 : index
    %c0_236 = arith.constant 0 : index
    %c0_237 = arith.constant 0 : index
    %827 = vector.load %arg15[%c0_235, %c0_236, %c0_237] : memref<1x1x2xf32, #tpu.memory_space<vmem>>, vector<1x1x2xf32>
    %828 = vector.shape_cast %827 : vector<1x1x2xf32> to vector<1x2xf32>
    %829 = vector.shape_cast %826 : vector<1x2xf32> to vector<1x1x2xf32>
    tpu.vector_store %arg15[%c0_235, %c0_236, %c0_237], %829 {strides = array<i32>} : memref<1x1x2xf32, #tpu.memory_space<vmem>>, vector<1x1x2xf32>,
    return
  }
  func.func @transform_0(%arg0: i32, %arg1: memref<4xi32, #tpu.memory_space<smem>>, %arg2: memref<4xi32, #tpu.memory_space<smem>>) -> (i32, i32, i32) {
    %c0_i32 = arith.constant 0 : i32
    %c0_i32_0 = arith.constant 0 : i32
    %c0_i32_1 = arith.constant 0 : i32
    return %arg0, %c0_i32, %c0_i32_0 : i32, i32, i32
  }
  func.func @transform_1(%arg0: i32, %arg1: memref<4xi32, #tpu.memory_space<smem>>, %arg2: memref<4xi32, #tpu.memory_space<smem>>) -> (i32, i32, i32) {
    %c0_i32 = arith.constant 0 : i32
    %c0_i32_0 = arith.constant 0 : i32
    %c0_i32_1 = arith.constant 0 : i32
    return %arg0, %c0_i32, %c0_i32_0 : i32, i32, i32
  }
  func.func @transform_2(%arg0: i32, %arg1: memref<4xi32, #tpu.memory_space<smem>>, %arg2: memref<4xi32, #tpu.memory_space<smem>>) -> (i32, i32, i32) {
    %c0_i32 = arith.constant 0 : i32
    %c0_i32_0 = arith.constant 0 : i32
    %c0_i32_1 = arith.constant 0 : i32
    return %arg0, %c0_i32, %c0_i32_0 : i32, i32, i32
  }
  func.func @transform_3(%arg0: i32, %arg1: memref<4xi32, #tpu.memory_space<smem>>, %arg2: memref<4xi32, #tpu.memory_space<smem>>) -> (i32, i32) {
    %c0_i32 = arith.constant 0 : i32
    %c0_i32_0 = arith.constant 0 : i32
    %c0_i32_1 = arith.constant 0 : i32
    return %c0_i32, %c0_i32_0 : i32, i32
  }
  func.func @transform_4(%arg0: i32, %arg1: memref<4xi32, #tpu.memory_space<smem>>, %arg2: memref<4xi32, #tpu.memory_space<smem>>) -> (i32, i32) {
    %c0_i32 = arith.constant 0 : i32
    %c0_i32_0 = arith.constant 0 : i32
    %c0_i32_1 = arith.constant 0 : i32
    return %c0_i32, %c0_i32_0 : i32, i32
  }
  func.func @transform_5(%arg0: i32, %arg1: memref<4xi32, #tpu.memory_space<smem>>, %arg2: memref<4xi32, #tpu.memory_space<smem>>) -> (i32, i32) {
    %c0_i32 = arith.constant 0 : i32
    %c0_i32_0 = arith.constant 0 : i32
    %c0_i32_1 = arith.constant 0 : i32
    return %c0_i32, %c0_i32_0 : i32, i32
  }
  func.func @transform_6(%arg0: i32, %arg1: memref<4xi32, #tpu.memory_space<smem>>, %arg2: memref<4xi32, #tpu.memory_space<smem>>) -> (i32, i32) {
    %c0_i32 = arith.constant 0 : i32
    %c0_i32_0 = arith.constant 0 : i32
    %c0_i32_1 = arith.constant 0 : i32
    return %c0_i32, %c0_i32_0 : i32, i32
  }
  func.func @transform_7(%arg0: i32, %arg1: memref<4xi32, #tpu.memory_space<smem>>, %arg2: memref<4xi32, #tpu.memory_space<smem>>) -> (i32, i32) {
    %c0_i32 = arith.constant 0 : i32
    %c0_i32_0 = arith.constant 0 : i32
    %c0_i32_1 = arith.constant 0 : i32
    return %c0_i32, %c0_i32_0 : i32, i32
  }
  func.func @transform_8(%arg0: i32, %arg1: memref<4xi32, #tpu.memory_space<smem>>, %arg2: memref<4xi32, #tpu.memory_space<smem>>) -> (i32, i32) {
    %c0_i32 = arith.constant 0 : i32
    %c0_i32_0 = arith.constant 0 : i32
    %c0_i32_1 = arith.constant 0 : i32
    return %c0_i32, %c0_i32_0 : i32, i32
  }
  func.func @transform_9(%arg0: i32, %arg1: memref<4xi32, #tpu.memory_space<smem>>, %arg2: memref<4xi32, #tpu.memory_space<smem>>) -> (i32, i32) {
    %c0_i32 = arith.constant 0 : i32
    %c0_i32_0 = arith.constant 0 : i32
    %c0_i32_1 = arith.constant 0 : i32
    return %c0_i32, %c0_i32_0 : i32, i32
  }
  func.func @transform_10(%arg0: i32, %arg1: memref<4xi32, #tpu.memory_space<smem>>, %arg2: memref<4xi32, #tpu.memory_space<smem>>) -> (i32, i32) {
    %c0_i32 = arith.constant 0 : i32
    %c0_i32_0 = arith.constant 0 : i32
    %c0_i32_1 = arith.constant 0 : i32
    return %c0_i32, %c0_i32_0 : i32, i32
  }
  func.func @transform_11(%arg0: i32, %arg1: memref<4xi32, #tpu.memory_space<smem>>, %arg2: memref<4xi32, #tpu.memory_space<smem>>) -> (i32, i32) {
    %c0_i32 = arith.constant 0 : i32
    %c0_i32_0 = arith.constant 0 : i32
    %c0_i32_1 = arith.constant 0 : i32
    return %c0_i32, %c0_i32_0 : i32, i32
  }
  func.func @transform_12(%arg0: i32, %arg1: memref<4xi32, #tpu.memory_space<smem>>, %arg2: memref<4xi32, #tpu.memory_space<smem>>) -> (i32, i32, i32) {
    %c0_i32 = arith.constant 0 : i32
    %c0_i32_0 = arith.constant 0 : i32
    %c0_i32_1 = arith.constant 0 : i32
    return %arg0, %c0_i32, %c0_i32_0 : i32, i32, i32
  }
}

</mosaic_0001>

<llo_original>
// kernel: tpu_custom_call.1
$region0: #{tpu_custom_call.1}
  #allocation0 [shape = 'u32[]', space=smem, size = 0x4, offset = 0x4, fixed_abs, tag = 'smem constant byte address 0x4 - core index']
  #allocation1 [shape = 'u32[72,128]{1,0:T(1,128)}', space=vmem, size = 0x9000, scoped, tag = 'internal scratch']
  #allocation2 [shape = 'f32[64,512]{1,0:T(8,128)}', space=vmem, size = 0x20000, scoped, tag = 'scratch operand']
  #allocation3 [shape = 'f32[2,16,16]{2,1,0:T(8,128)}', space=vmem, size = 0x4000, scoped, tag = 'scratch operand']
  #allocation4 [shape = 'f32[2,16,16]{2,1,0:T(8,128)}', space=vmem, size = 0x4000, scoped, tag = 'scratch operand']
  #allocation5 [shape = 's32[1]{0}', space=sflag, size = 0x4, scoped, tag = 'scoped memory for tpu_custom_call.1']
  #allocation6 [shape = 'u8[512]{0}', space=smem, size = 0x200, scoped, tag = 'prefetched SMEM operand 0']
  #allocation7 [shape = 'u8[512]{0}', space=smem, size = 0x200, scoped, tag = 'prefetched SMEM operand 1']
  #allocation8 [shape = 'f32[1,1]{1,0:T(1,128)S(1)}', space=vmem, size = 0x200, scoped, tag = 'scoped memory for tpu_custom_call.1']
  %s0 = inlined_call_operand.vmem [shape: s32[4], index: 0, kind: input, shape index: {}]
  %s1 = inlined_call_operand.vmem [shape: s32[4], index: 1, kind: input, shape index: {}]
  %s2 = inlined_call_operand.hbm [shape: f32[4,32,32], index: 2, kind: input, shape index: {}]
  %s3 = inlined_call_operand.hbm [shape: f32[4,16,16], index: 3, kind: input, shape index: {}]
  %s4 = inlined_call_operand.hbm [shape: f32[4,16,16], index: 4, kind: input, shape index: {}]
  %s5 = inlined_call_operand.vmem [shape: f32[32,16], index: 5, kind: input, shape index: {}]
  %s6 = inlined_call_operand.vmem [shape: f32[1,16], index: 6, kind: input, shape index: {}]
  %s7 = inlined_call_operand.vmem [shape: f32[16,16], index: 7, kind: input, shape index: {}]
  %s8 = inlined_call_operand.vmem [shape: f32[1,16], index: 8, kind: input, shape index: {}]
  %s9 = inlined_call_operand.hbm [shape: f32[32,512], index: 9, kind: input, shape index: {}]
  %s10 = inlined_call_operand.vmem [shape: f32[1,512], index: 10, kind: input, shape index: {}]
  %s11 = inlined_call_operand.vmem [shape: f32[1,128], index: 11, kind: input, shape index: {}]
  %s12 = inlined_call_operand.vmem [shape: f32[1,128], index: 12, kind: input, shape index: {}]
  %s13 = inlined_call_operand.<no memory space> [shape: f32[1,1], index: 13, kind: input, shape index: {}]
  %s14 = inlined_call_operand.hbm [shape: f32[2,1,2], index: 14, kind: output, shape index: {}]
  %s15 = sld [smem:[#allocation0]]
  $region97: #{tpu_custom_call.1} parent=0
    _
  %s17 = ssub.s32 1, %s15
  %s18 = scalar_select 0, %s17, %s15
  %s20 = sshll.u32 %s0, 4
  %s21 = int_to_ptr.vmem [resolvable:$true] %s20
  %23 = dma.vmem_to_smem %s21, 16, [#allocation6], [#allocation5]
  %s25 = sshll.u32 %s1, 4
  %s26 = int_to_ptr.vmem [resolvable:$true] %s25
  %28 = dma.vmem_to_smem %s26, 16, [#allocation7], [#allocation5]
  %v29 = vstv %s13
  %30 = vst [vmem:[#allocation8] sm:$0x1] %v29
  %32 = dma.done [#allocation5], 32
  %33 = sfence
  $region1: #{tpu_custom_call.1} parent=0
    #allocation9 [shape = 'u8[65536]{0}', space=vmem, size = 0x10000, scoped, tag = 'input window, operand 2']
    #allocation10 [shape = 's32[2]{0}', space=sflag, size = 0x8, scoped, tag = 'scoped memory for tpu_custom_call.1']
    #allocation11 [shape = 's32[2]{0}', space=sflag, size = 0x8, scoped, tag = 'scoped memory for tpu_custom_call.1']
    #allocation12 [shape = 'u8[32768]{0}', space=vmem, size = 0x8000, scoped, tag = 'input window, operand 3']
    #allocation13 [shape = 's32[2]{0}', space=sflag, size = 0x8, scoped, tag = 'scoped memory for tpu_custom_call.1']
    #allocation14 [shape = 'u8[32768]{0}', space=vmem, size = 0x8000, scoped, tag = 'input window, operand 4']
    #allocation15 [shape = 'u8[65536]{0}', space=vmem, size = 0x10000, scoped, tag = 'input window, operand 9, single buffered']
    #allocation16 [shape = 's32[1]{0}', space=sflag, size = 0x4, scoped, tag = 'scoped memory for tpu_custom_call.1']
    #allocation17 [shape = 'u8[1024]{0}', space=vmem, size = 0x400, scoped, tag = 'output window, operand 0']
    %34 = vsyncpa [#allocation10], 0
    %s35 = scalar_lea.sflag [#allocation10], 1
    %36 = vsyncpa %s35, 0
    %37 = vsyncpa [#allocation13], 0
    %s38 = scalar_lea.sflag [#allocation13], 1
    %39 = vsyncpa %s38, 0
    %40 = vsyncpa [#allocation16], 0
    %41 = vsyncpa [#allocation11], 0
    %s42 = scalar_lea.sflag [#allocation11], 1
    %43 = vsyncpa %s42, 0
    loop: start=0, step=1, limit=4
    $region2: #{tpu_custom_call.1} parent=1 // loop_pre_header
      _
    $region3: #{tpu_custom_call.1} parent=1 // loop_header
      %s45 = sphi 0, %s49
      %p46 = scmp.ge.s32.totalorder %s45, 4
      %s55 = sphi 0, %s57
      %s58 = sphi 0, %s55
      %s59 = sphi 0, %s58
      %s75 = sphi 0, %s59
      %s81 = sphi 0, %s83
      %s84 = sphi 0, %s81
      %s85 = sphi 0, %s84
      %s101 = sphi 0, %s85
      %s107 = sphi 0, %s109
      %s110 = sphi 0, %s107
      %s111 = sphi 0, %s110
      %s127 = sphi 0, %s111
      %s131 = sphi 0, %s131
      %s133 = sphi 0, %s131
      %s134 = sphi 0, %s133
      %s148 = sphi 0, %s134
      %s152 = sphi 0, %s152
      %s154 = sphi 0, %s152
      %s155 = sphi 0, %s154
      %s169 = sphi 0, %s155
      %s173 = sphi 0, %s173
      %s175 = sphi 0, %s173
      %s176 = sphi 0, %s175
      %s190 = sphi 0, %s176
      %s194 = sphi 0, %s194
      %s196 = sphi 0, %s194
      %s197 = sphi 0, %s196
      %s211 = sphi 0, %s197
      %s215 = sphi 0, %s215
      %s217 = sphi 0, %s215
      %s218 = sphi 0, %s217
      %s232 = sphi 0, %s218
      %s236 = sphi 0, %s236
      %s238 = sphi 0, %s236
      %s239 = sphi 0, %s238
      %s253 = sphi 0, %s239
      %s257 = sphi 0, %s257
      %s259 = sphi 0, %s257
      %s260 = sphi 0, %s259
      %s274 = sphi 0, %s260
      %s278 = sphi 0, %s278
      %s280 = sphi 0, %s278
      %s281 = sphi 0, %s280
      %s295 = sphi 0, %s281
      %s299 = sphi 0, %s299
      %s301 = sphi 0, %s299
      %s302 = sphi 0, %s301
      %s316 = sphi 0, %s302
      %s322 = sphi 0, %s324
      %s325 = sphi 0, %s322
      %s326 = sphi 0, %s325
      %s342 = sphi 0, %s326
    $region4: #{tpu_custom_call.1} parent=1 // loop_header_branch
      %48 = sbr.rel (%p46) target = $region8
    $region5: #{tpu_custom_call.1} parent=1 // loop_body
      %s50 = ssub.s32 %s45, 1
      %s51 = ssub.s32 %s45, 2
      %s52 = sadd.s32 %s45, 1
      %s53 = ssub.s32 %s45, %s52
      %p54 = scmp.eq.s32.totalorder %s53, 0
      %s56 = sadd.s32 %s55, 1
      %s57 = scalar_select %p54, %s55, %s56
      %p60 = pneg %p54
      %p61 = scmp.eq.s32.totalorder %s45, 1
      %p62 = por %p60, %p61
      %p63 = scmp.ne.s32.totalorder %s55, %s58
      %p64 = scmp.eq.s32.totalorder %s45, 0
      %p65 = por %p63, %p64
      %p66 = scmp.ne.s32.totalorder %s55, %s58
      %p67 = scmp.eq.s32.totalorder %s50, 1
      %p68 = por %p66, %p67
      %p69 = scmp.ne.s32.totalorder %s58, %s59
      %p70 = scmp.eq.s32.totalorder %s50, 0
      %p71 = por %p69, %p70
      %p72 = scmp.ne.s32.totalorder %s58, %s59
      %p73 = scmp.eq.s32.totalorder %s51, 1
      %p74 = por %p72, %p73
      %p76 = scmp.ne.s32.totalorder %s59, %s75
      %p77 = scmp.eq.s32.totalorder %s51, 0
      %p78 = por %p76, %p77
      %s79 = ssub.s32 %s45, %s52
      %p80 = scmp.eq.s32.totalorder %s79, 0
      %s82 = sadd.s32 %s81, 1
      %s83 = scalar_select %p80, %s81, %s82
      %p86 = pneg %p80
      %p87 = scmp.eq.s32.totalorder %s45, 1
      %p88 = por %p86, %p87
      %p89 = scmp.ne.s32.totalorder %s81, %s84
      %p90 = scmp.eq.s32.totalorder %s45, 0
      %p91 = por %p89, %p90
      %p92 = scmp.ne.s32.totalorder %s81, %s84
      %p93 = scmp.eq.s32.totalorder %s50, 1
      %p94 = por %p92, %p93
      %p95 = scmp.ne.s32.totalorder %s84, %s85
      %p96 = scmp.eq.s32.totalorder %s50, 0
      %p97 = por %p95, %p96
      %p98 = scmp.ne.s32.totalorder %s84, %s85
      %p99 = scmp.eq.s32.totalorder %s51, 1
      %p100 = por %p98, %p99
      %p102 = scmp.ne.s32.totalorder %s85, %s101
      %p103 = scmp.eq.s32.totalorder %s51, 0
      %p104 = por %p102, %p103
      %s105 = ssub.s32 %s45, %s52
      %p106 = scmp.eq.s32.totalorder %s105, 0
      %s108 = sadd.s32 %s107, 1
      %s109 = scalar_select %p106, %s107, %s108
      %p112 = pneg %p106
      %p113 = scmp.eq.s32.totalorder %s45, 1
      %p114 = por %p112, %p113
      %p115 = scmp.ne.s32.totalorder %s107, %s110
      %p116 = scmp.eq.s32.totalorder %s45, 0
      %p117 = por %p115, %p116
      %p118 = scmp.ne.s32.totalorder %s107, %s110
      %p119 = scmp.eq.s32.totalorder %s50, 1
      %p120 = por %p118, %p119
      %p121 = scmp.ne.s32.totalorder %s110, %s111
      %p122 = scmp.eq.s32.totalorder %s50, 0
      %p123 = por %p121, %p122
      %p124 = scmp.ne.s32.totalorder %s110, %s111
      %p125 = scmp.eq.s32.totalorder %s51, 1
      %p126 = por %p124, %p125
      %p128 = scmp.ne.s32.totalorder %s111, %s127
      %p129 = scmp.eq.s32.totalorder %s51, 0
      %p130 = por %p128, %p129
      %s132 = sadd.s32 %s131, 1
      %p135 = scmp.eq.s32.totalorder %s45, 1
      %p136 = scmp.ne.s32.totalorder %s131, %s133
      %p137 = scmp.eq.s32.totalorder %s45, 0
      %p138 = por %p136, %p137
      %p139 = scmp.ne.s32.totalorder %s131, %s133
      %p140 = scmp.eq.s32.totalorder %s50, 1
      %p141 = por %p139, %p140
      %p142 = scmp.ne.s32.totalorder %s133, %s134
      %p143 = scmp.eq.s32.totalorder %s50, 0
      %p144 = por %p142, %p143
      %p145 = scmp.ne.s32.totalorder %s133, %s134
      %p146 = scmp.eq.s32.totalorder %s51, 1
      %p147 = por %p145, %p146
      %p149 = scmp.ne.s32.totalorder %s134, %s148
      %p150 = scmp.eq.s32.totalorder %s51, 0
      %p151 = por %p149, %p150
      %s153 = sadd.s32 %s152, 1
      %p156 = scmp.eq.s32.totalorder %s45, 1
      %p157 = scmp.ne.s32.totalorder %s152, %s154
      %p158 = scmp.eq.s32.totalorder %s45, 0
      %p159 = por %p157, %p158
      %p160 = scmp.ne.s32.totalorder %s152, %s154
      %p161 = scmp.eq.s32.totalorder %s50, 1
      %p162 = por %p160, %p161
      %p163 = scmp.ne.s32.totalorder %s154, %s155
      %p164 = scmp.eq.s32.totalorder %s50, 0
      %p165 = por %p163, %p164
      %p166 = scmp.ne.s32.totalorder %s154, %s155
      %p167 = scmp.eq.s32.totalorder %s51, 1
      %p168 = por %p166, %p167
      %p170 = scmp.ne.s32.totalorder %s155, %s169
      %p171 = scmp.eq.s32.totalorder %s51, 0
      %p172 = por %p170, %p171
      %s174 = sadd.s32 %s173, 1
      %p177 = scmp.eq.s32.totalorder %s45, 1
      %p178 = scmp.ne.s32.totalorder %s173, %s175
      %p179 = scmp.eq.s32.totalorder %s45, 0
      %p180 = por %p178, %p179
      %p181 = scmp.ne.s32.totalorder %s173, %s175
      %p182 = scmp.eq.s32.totalorder %s50, 1
      %p183 = por %p181, %p182
      %p184 = scmp.ne.s32.totalorder %s175, %s176
      %p185 = scmp.eq.s32.totalorder %s50, 0
      %p186 = por %p184, %p185
      %p187 = scmp.ne.s32.totalorder %s175, %s176
      %p188 = scmp.eq.s32.totalorder %s51, 1
      %p189 = por %p187, %p188
      %p191 = scmp.ne.s32.totalorder %s176, %s190
      %p192 = scmp.eq.s32.totalorder %s51, 0
      %p193 = por %p191, %p192
      %s195 = sadd.s32 %s194, 1
      %p198 = scmp.eq.s32.totalorder %s45, 1
      %p199 = scmp.ne.s32.totalorder %s194, %s196
      %p200 = scmp.eq.s32.totalorder %s45, 0
      %p201 = por %p199, %p200
      %p202 = scmp.ne.s32.totalorder %s194, %s196
      %p203 = scmp.eq.s32.totalorder %s50, 1
      %p204 = por %p202, %p203
      %p205 = scmp.ne.s32.totalorder %s196, %s197
      %p206 = scmp.eq.s32.totalorder %s50, 0
      %p207 = por %p205, %p206
      %p208 = scmp.ne.s32.totalorder %s196, %s197
      %p209 = scmp.eq.s32.totalorder %s51, 1
      %p210 = por %p208, %p209
      %p212 = scmp.ne.s32.totalorder %s197, %s211
      %p213 = scmp.eq.s32.totalorder %s51, 0
      %p214 = por %p212, %p213
      %s216 = sadd.s32 %s215, 1
      %p219 = scmp.eq.s32.totalorder %s45, 1
      %p220 = scmp.ne.s32.totalorder %s215, %s217
      %p221 = scmp.eq.s32.totalorder %s45, 0
      %p222 = por %p220, %p221
      %p223 = scmp.ne.s32.totalorder %s215, %s217
      %p224 = scmp.eq.s32.totalorder %s50, 1
      %p225 = por %p223, %p224
      %p226 = scmp.ne.s32.totalorder %s217, %s218
      %p227 = scmp.eq.s32.totalorder %s50, 0
      %p228 = por %p226, %p227
      %p229 = scmp.ne.s32.totalorder %s217, %s218
      %p230 = scmp.eq.s32.totalorder %s51, 1
      %p231 = por %p229, %p230
      %p233 = scmp.ne.s32.totalorder %s218, %s232
      %p234 = scmp.eq.s32.totalorder %s51, 0
      %p235 = por %p233, %p234
      %s237 = sadd.s32 %s236, 1
      %p240 = scmp.eq.s32.totalorder %s45, 1
      %p241 = scmp.ne.s32.totalorder %s236, %s238
      %p242 = scmp.eq.s32.totalorder %s45, 0
      %p243 = por %p241, %p242
      %p244 = scmp.ne.s32.totalorder %s236, %s238
      %p245 = scmp.eq.s32.totalorder %s50, 1
      %p246 = por %p244, %p245
      %p247 = scmp.ne.s32.totalorder %s238, %s239
      %p248 = scmp.eq.s32.totalorder %s50, 0
      %p249 = por %p247, %p248
      %p250 = scmp.ne.s32.totalorder %s238, %s239
      %p251 = scmp.eq.s32.totalorder %s51, 1
      %p252 = por %p250, %p251
      %p254 = scmp.ne.s32.totalorder %s239, %s253
      %p255 = scmp.eq.s32.totalorder %s51, 0
      %p256 = por %p254, %p255
      %s258 = sadd.s32 %s257, 1
      %p261 = scmp.eq.s32.totalorder %s45, 1
      %p262 = scmp.ne.s32.totalorder %s257, %s259
      %p263 = scmp.eq.s32.totalorder %s45, 0
      %p264 = por %p262, %p263
      %p265 = scmp.ne.s32.totalorder %s257, %s259
      %p266 = scmp.eq.s32.totalorder %s50, 1
      %p267 = por %p265, %p266
      %p268 = scmp.ne.s32.totalorder %s259, %s260
      %p269 = scmp.eq.s32.totalorder %s50, 0
      %p270 = por %p268, %p269
      %p271 = scmp.ne.s32.totalorder %s259, %s260
      %p272 = scmp.eq.s32.totalorder %s51, 1
      %p273 = por %p271, %p272
      %p275 = scmp.ne.s32.totalorder %s260, %s274
      %p276 = scmp.eq.s32.totalorder %s51, 0
      %p277 = por %p275, %p276
      %s279 = sadd.s32 %s278, 1
      %p282 = scmp.eq.s32.totalorder %s45, 1
      %p283 = scmp.ne.s32.totalorder %s278, %s280
      %p284 = scmp.eq.s32.totalorder %s45, 0
      %p285 = por %p283, %p284
      %p286 = scmp.ne.s32.totalorder %s278, %s280
      %p287 = scmp.eq.s32.totalorder %s50, 1
      %p288 = por %p286, %p287
      %p289 = scmp.ne.s32.totalorder %s280, %s281
      %p290 = scmp.eq.s32.totalorder %s50, 0
      %p291 = por %p289, %p290
      %p292 = scmp.ne.s32.totalorder %s280, %s281
      %p293 = scmp.eq.s32.totalorder %s51, 1
      %p294 = por %p292, %p293
      %p296 = scmp.ne.s32.totalorder %s281, %s295
      %p297 = scmp.eq.s32.totalorder %s51, 0
      %p298 = por %p296, %p297
      %s300 = sadd.s32 %s299, 1
      %p303 = scmp.eq.s32.totalorder %s45, 1
      %p304 = scmp.ne.s32.totalorder %s299, %s301
      %p305 = scmp.eq.s32.totalorder %s45, 0
      %p306 = por %p304, %p305
      %p307 = scmp.ne.s32.totalorder %s299, %s301
      %p308 = scmp.eq.s32.totalorder %s50, 1
      %p309 = por %p307, %p308
      %p310 = scmp.ne.s32.totalorder %s301, %s302
      %p311 = scmp.eq.s32.totalorder %s50, 0
      %p312 = por %p310, %p311
      %p313 = scmp.ne.s32.totalorder %s301, %s302
      %p314 = scmp.eq.s32.totalorder %s51, 1
      %p315 = por %p313, %p314
      %p317 = scmp.ne.s32.totalorder %s302, %s316
      %p318 = scmp.eq.s32.totalorder %s51, 0
      %p319 = por %p317, %p318
      %s320 = ssub.s32 %s45, %s52
      %p321 = scmp.eq.s32.totalorder %s320, 0
      %s323 = sadd.s32 %s322, 1
      %s324 = scalar_select %p321, %s322, %s323
      %p327 = pneg %p321
      %p328 = scmp.eq.s32.totalorder %s45, 1
      %p329 = por %p327, %p328
      %p330 = scmp.ne.s32.totalorder %s322, %s325
      %p331 = scmp.eq.s32.totalorder %s45, 0
      %p332 = por %p330, %p331
      %p333 = scmp.ne.s32.totalorder %s322, %s325
      %p334 = scmp.eq.s32.totalorder %s50, 1
      %p335 = por %p333, %p334
      %p336 = scmp.ne.s32.totalorder %s325, %s326
      %p337 = scmp.eq.s32.totalorder %s50, 0
      %p338 = por %p336, %p337
      %p339 = scmp.ne.s32.totalorder %s325, %s326
      %p340 = scmp.eq.s32.totalorder %s51, 1
      %p341 = por %p339, %p340
      %p343 = scmp.ne.s32.totalorder %s326, %s342
      %p344 = scmp.eq.s32.totalorder %s51, 0
      %p345 = por %p343, %p344
      %p346 = scmp.le.s32.totalorder 1, %s45
      %p347 = scmp.lt.s32.totalorder %s45, 3
      %p348 = pnand %p346, %p347
      %p349 = pneg %p348
      // Predicated region
      $region9: #{tpu_custom_call.1} parent=5 // pred_check
        _
      $region10: #{tpu_custom_call.1} parent=5 // pred_check_branch
        %351 = sbr.rel (%p348) target = $region12
      $region11: #{tpu_custom_call.1} parent=5 // pred_region
        %s352 = ssub.s32 %s45, 1
        // Predicated region
        $region13: #{tpu_custom_call.1} parent=11 // pred_check
          %p353 = pneg %p144
        $region14: #{tpu_custom_call.1} parent=11 // pred_check_branch
          %355 = sbr.rel (%p353) target = $region16
        $region15: #{tpu_custom_call.1} parent=11 // pred_region
          _
        $region16: #{tpu_custom_call.1} parent=11 // pred_fallthru
          _
        // Predicated region
        $region17: #{tpu_custom_call.1} parent=11 // pred_check
          %p356 = pneg %p165
        $region18: #{tpu_custom_call.1} parent=11 // pred_check_branch
          %358 = sbr.rel (%p356) target = $region20
        $region19: #{tpu_custom_call.1} parent=11 // pred_region
          _
        $region20: #{tpu_custom_call.1} parent=11 // pred_fallthru
          _
        // Predicated region
        $region21: #{tpu_custom_call.1} parent=11 // pred_check
          %p359 = pneg %p186
        $region22: #{tpu_custom_call.1} parent=11 // pred_check_branch
          %361 = sbr.rel (%p359) target = $region24
        $region23: #{tpu_custom_call.1} parent=11 // pred_region
          _
        $region24: #{tpu_custom_call.1} parent=11 // pred_fallthru
          _
        // Predicated region
        $region25: #{tpu_custom_call.1} parent=11 // pred_check
          %p362 = pneg %p207
        $region26: #{tpu_custom_call.1} parent=11 // pred_check_branch
          %364 = sbr.rel (%p362) target = $region28
        $region27: #{tpu_custom_call.1} parent=11 // pred_region
          _
        $region28: #{tpu_custom_call.1} parent=11 // pred_fallthru
          _
        // Predicated region
        $region29: #{tpu_custom_call.1} parent=11 // pred_check
          %p365 = pneg %p228
        $region30: #{tpu_custom_call.1} parent=11 // pred_check_branch
          %367 = sbr.rel (%p365) target = $region32
        $region31: #{tpu_custom_call.1} parent=11 // pred_region
          %369 = vsyncadd [#allocation16], 0
          %s370 = sshll.u32 %s9, 4
          %s371 = int_to_ptr.hbm [resolvable:$true] %s370
          %s372 = sshll.u32 [#allocation15], 4
          %s373 = int_to_ptr.vmem [resolvable:$true] %s372
          %378 = dma.hbm_to_vmem [thread:$0]  %s371, 2048, %s373, [#allocation16], 512, 512, 32
        $region32: #{tpu_custom_call.1} parent=11 // pred_fallthru
          _
        // Predicated region
        $region33: #{tpu_custom_call.1} parent=11 // pred_check
          %p379 = pneg %p249
        $region34: #{tpu_custom_call.1} parent=11 // pred_check_branch
          %381 = sbr.rel (%p379) target = $region36
        $region35: #{tpu_custom_call.1} parent=11 // pred_region
          _
        $region36: #{tpu_custom_call.1} parent=11 // pred_fallthru
          _
        // Predicated region
        $region37: #{tpu_custom_call.1} parent=11 // pred_check
          %p382 = pneg %p270
        $region38: #{tpu_custom_call.1} parent=11 // pred_check_branch
          %384 = sbr.rel (%p382) target = $region40
        $region39: #{tpu_custom_call.1} parent=11 // pred_region
          _
        $region40: #{tpu_custom_call.1} parent=11 // pred_fallthru
          _
        // Predicated region
        $region41: #{tpu_custom_call.1} parent=11 // pred_check
          %p385 = pneg %p291
        $region42: #{tpu_custom_call.1} parent=11 // pred_check_branch
          %387 = sbr.rel (%p385) target = $region44
        $region43: #{tpu_custom_call.1} parent=11 // pred_region
          _
        $region44: #{tpu_custom_call.1} parent=11 // pred_fallthru
          _
        // Predicated region
        $region45: #{tpu_custom_call.1} parent=11 // pred_check
          %p388 = pneg %p312
        $region46: #{tpu_custom_call.1} parent=11 // pred_check_branch
          %390 = sbr.rel (%p388) target = $region48
        $region47: #{tpu_custom_call.1} parent=11 // pred_region
          _
        $region48: #{tpu_custom_call.1} parent=11 // pred_fallthru
          _
      $region12: #{tpu_custom_call.1} parent=5 // pred_fallthru
        _
      %p391 = scmp.lt.s32.totalorder %s45, 2
      // Predicated region
      $region49: #{tpu_custom_call.1} parent=5 // pred_check
        %p392 = pneg %p391
      $region50: #{tpu_custom_call.1} parent=5 // pred_check_branch
        %394 = sbr.rel (%p392) target = $region52
      $region51: #{tpu_custom_call.1} parent=5 // pred_region
        // Predicated region
        $region53: #{tpu_custom_call.1} parent=51 // pred_check
          %p395 = pneg %p65
        $region54: #{tpu_custom_call.1} parent=51 // pred_check_branch
          %397 = sbr.rel (%p395) target = $region56
        $region55: #{tpu_custom_call.1} parent=51 // pred_region
          %s398 = sand.u32 %s55, 1
          %s399 = scalar_lea.sflag [#allocation10], %s398
          %s400 = sand.u32 %s55, 1
          %s401 = smul.addr %s400, 64
          %s402 = scalar_lea.vmem [#allocation9], %s401
          %s403 = smul.u32 2, %s45
          %405 = vsyncadd %s399, 0
          %s406 = smul.addr %s403, 4
          %s407 = smul.addr %s406, 8
          %s408 = scalar_lea.hbm %s2, %s407
          %s409 = sshll.u32 %s408, 4
          %s410 = int_to_ptr.hbm [resolvable:$true] %s409
          %s411 = sshll.u32 %s402, 4
          %s412 = int_to_ptr.vmem [resolvable:$true] %s411
          %417 = dma.hbm_to_vmem [thread:$0]  %s410, 1024, %s412, %s399, 128, 128, 8
        $region56: #{tpu_custom_call.1} parent=51 // pred_fallthru
          _
        // Predicated region
        $region57: #{tpu_custom_call.1} parent=51 // pred_check
          %p418 = pneg %p91
        $region58: #{tpu_custom_call.1} parent=51 // pred_check_branch
          %420 = sbr.rel (%p418) target = $region60
        $region59: #{tpu_custom_call.1} parent=51 // pred_region
          %s421 = sand.u32 %s45, 1
          %s422 = scalar_lea.sflag [#allocation13], %s421
          %s423 = sand.u32 %s81, 1
          %s424 = smul.addr %s423, 32
          %s425 = scalar_lea.vmem [#allocation12], %s424
          %s426 = smul.u32 2, %s45
          %428 = vsyncadd %s422, 0
          %s429 = smul.addr %s426, 2
          %s430 = smul.addr %s429, 8
          %s431 = scalar_lea.hbm %s3, %s430
          %s432 = sshll.u32 %s431, 4
          %s433 = int_to_ptr.hbm [resolvable:$true] %s432
          %s434 = sshll.u32 %s425, 4
          %s435 = int_to_ptr.vmem [resolvable:$true] %s434
          %440 = dma.hbm_to_vmem [thread:$0]  %s433, 512, %s435, %s422, 128, 128, 8
        $region60: #{tpu_custom_call.1} parent=51 // pred_fallthru
          _
        // Predicated region
        $region61: #{tpu_custom_call.1} parent=51 // pred_check
          %p441 = pneg %p117
        $region62: #{tpu_custom_call.1} parent=51 // pred_check_branch
          %443 = sbr.rel (%p441) target = $region64
        $region63: #{tpu_custom_call.1} parent=51 // pred_region
          %s444 = sand.u32 %s45, 1
          %s445 = scalar_lea.sflag [#allocation13], %s444
          %s446 = sand.u32 %s107, 1
          %s447 = smul.addr %s446, 32
          %s448 = scalar_lea.vmem [#allocation14], %s447
          %s449 = smul.u32 2, %s45
          %451 = vsyncadd %s445, 0
          %s452 = smul.addr %s449, 2
          %s453 = smul.addr %s452, 8
          %s454 = scalar_lea.hbm %s4, %s453
          %s455 = sshll.u32 %s454, 4
          %s456 = int_to_ptr.hbm [resolvable:$true] %s455
          %s457 = sshll.u32 %s448, 4
          %s458 = int_to_ptr.vmem [resolvable:$true] %s457
          %463 = dma.hbm_to_vmem [thread:$0]  %s456, 512, %s458, %s445, 128, 128, 8
        $region64: #{tpu_custom_call.1} parent=51 // pred_fallthru
          _
      $region52: #{tpu_custom_call.1} parent=5 // pred_fallthru
        _
      %p464 = scmp.le.s32.totalorder 1, %s45
      %p465 = scmp.lt.s32.totalorder %s45, 3
      %p466 = pnand %p464, %p465
      %p467 = pneg %p466
      // Predicated region
      $region65: #{tpu_custom_call.1} parent=5 // pred_check
        _
      $region66: #{tpu_custom_call.1} parent=5 // pred_check_branch
        %469 = sbr.rel (%p466) target = $region68
      $region67: #{tpu_custom_call.1} parent=5 // pred_region
        %s470 = ssub.s32 %s45, 1
        %s471 = sand.u32 %s58, 1
        %s472 = scalar_lea.sflag [#allocation10], %s471
        %s473 = sand.u32 %s58, 1
        %s474 = smul.addr %s473, 64
        %s475 = scalar_lea.vmem [#allocation9], %s474
        // Predicated region
        $region69: #{tpu_custom_call.1} parent=67 // pred_check
          %p476 = pneg %p71
        $region70: #{tpu_custom_call.1} parent=67 // pred_check_branch
          %478 = sbr.rel (%p476) target = $region72
        $region71: #{tpu_custom_call.1} parent=67 // pred_region
          %480 = dma.done %s472, 1024
        $region72: #{tpu_custom_call.1} parent=67 // pred_fallthru
          _
        %s481 = sand.u32 %s50, 1
        %s482 = scalar_lea.sflag [#allocation13], %s481
        %s483 = sand.u32 %s84, 1
        %s484 = smul.addr %s483, 32
        %s485 = scalar_lea.vmem [#allocation12], %s484
        // Predicated region
        $region73: #{tpu_custom_call.1} parent=67 // pred_check
          %p486 = pneg %p97
        $region74: #{tpu_custom_call.1} parent=67 // pred_check_branch
          %488 = sbr.rel (%p486) target = $region76
        $region75: #{tpu_custom_call.1} parent=67 // pred_region
          %490 = dma.done %s482, 512
        $region76: #{tpu_custom_call.1} parent=67 // pred_fallthru
          _
        %s491 = sand.u32 %s50, 1
        %s492 = scalar_lea.sflag [#allocation13], %s491
        %s493 = sand.u32 %s110, 1
        %s494 = smul.addr %s493, 32
        %s495 = scalar_lea.vmem [#allocation14], %s494
        // Predicated region
        $region77: #{tpu_custom_call.1} parent=67 // pred_check
          %p496 = pneg %p123
        $region78: #{tpu_custom_call.1} parent=67 // pred_check_branch
          %498 = sbr.rel (%p496) target = $region80
        $region79: #{tpu_custom_call.1} parent=67 // pred_region
          %500 = dma.done %s492, 512
        $region80: #{tpu_custom_call.1} parent=67 // pred_fallthru
          _
        // Predicated region
        $region81: #{tpu_custom_call.1} parent=67 // pred_check
          %p501 = pneg %p228
        $region82: #{tpu_custom_call.1} parent=67 // pred_check_branch
          %503 = sbr.rel (%p501) target = $region84
        $region83: #{tpu_custom_call.1} parent=67 // pred_region
          %505 = dma.done [#allocation16], 2048
        $region84: #{tpu_custom_call.1} parent=67 // pred_fallthru
          _
        %s506 = sand.u32 %s58, 1
        %s507 = scalar_lea.sflag [#allocation10], %s506
        %s508 = sand.u32 %s58, 1
        %s509 = smul.addr %s508, 64
        %s510 = scalar_lea.vmem [#allocation9], %s509
        %p511 = pneg %p71
        %p512 = pneg %p68
        %s513 = sand.u32 %s50, 1
        %s514 = scalar_lea.sflag [#allocation13], %s513
        %s515 = sand.u32 %s84, 1
        %s516 = smul.addr %s515, 32
        %s517 = scalar_lea.vmem [#allocation12], %s516
        %p518 = pneg %p97
        %p519 = pneg %p94
        %s520 = sand.u32 %s50, 1
        %s521 = scalar_lea.sflag [#allocation13], %s520
        %s522 = sand.u32 %s110, 1
        %s523 = smul.addr %s522, 32
        %s524 = scalar_lea.vmem [#allocation14], %s523
        %p525 = pneg %p123
        %p526 = pneg %p120
        %p527 = pneg %p144
        %p528 = pneg %p141
        %p529 = pneg %p165
        %p530 = pneg %p162
        %p531 = pneg %p186
        %p532 = pneg %p183
        %p533 = pneg %p207
        %p534 = pneg %p204
        %p535 = pneg %p228
        %p536 = pneg %p225
        %p537 = pneg %p249
        %p538 = pneg %p246
        %p539 = pneg %p270
        %p540 = pneg %p267
        %p541 = pneg %p291
        %p542 = pneg %p288
        %p543 = pneg %p312
        %p544 = pneg %p309
        %p545 = pneg %p338
        %p546 = pneg %p335
        %s547 = sand.u32 %s325, 1
        %s548 = scalar_lea.sflag [#allocation11], %s547
        %s549 = sand.u32 %s325, 1
        %s550 = scalar_lea.vmem [#allocation17], %s549
        %s551 = smul.u32 2, %s50
        %s552 = smul.u32 2, %s50
        %s553 = smul.u32 2, %s50
        %s554 = smul.u32 %s50, 2
        %v555 = vld [vmem:[%s475] sm:$0xff]
        %v556 = vld [vmem:[%s475 + $0x8] sm:$0xff]
        %v557 = vld [vmem:[%s475 + $0x10] sm:$0xff]
        %v558 = vld [vmem:[%s475 + $0x18] sm:$0xff]
        %v559 = vld [vmem:[%s475 + $0x20] sm:$0xff]
        %v560 = vld [vmem:[%s475 + $0x28] sm:$0xff]
        %v561 = vld [vmem:[%s475 + $0x30] sm:$0xff]
        %v562 = vld [vmem:[%s475 + $0x38] sm:$0xff]
        %v563 = vld [vmem:[%s5] sm:$0xff]
        %v564 = vld [vmem:[%s5 + $0x8] sm:$0xff]
        %v565 = vld [vmem:[%s5 + $0x10] sm:$0xff]
        %v566 = vld [vmem:[%s5 + $0x18] sm:$0xff]
        %v567 = vld [vmem:[%s6] sm:$0x1]
        %v569 = vperm.slane %v567, 0
        %vm571 = vcmask 261120
        %v573 = vsel %vm571, %v555, 0
        %v576 = vsel %vm571, %v556, 0
        %v579 = vsel %vm571, %v557, 0
        %v582 = vsel %vm571, %v558, 0
        %v585 = vsel %vm571, %v559, 0
        %v588 = vsel %vm571, %v560, 0
        %v591 = vsel %vm571, %v561, 0
        %v594 = vsel %vm571, %v562, 0
        %596 = vmatpush.msra.mxu0 0.0
        %597 = vmatpush.msra.mxu0 0.0
        %598 = vmatpush.msra.mxu0 0.0
        %599 = vmatpush.msra.mxu0 0.0
        %600 = vmatpush.msra.mxu0 0.0
        %601 = vmatpush.msra.mxu0 0.0
        %602 = vmatpush.msra.mxu0 0.0
        %603 = vmatpush.msra.mxu0 0.0
        %604 = vmatpush.msra.mxu0 0.0
        %605 = vmatpush.msra.mxu0 0.0
        %606 = vmatpush.msra.mxu0 0.0
        %607 = vmatpush.msra.mxu0 0.0
        %608 = vmatpush.msra.mxu0 %v566
        %609 = vmatpush.msra.mxu0 %v565
        %610 = vmatpush.msra.mxu0 %v564
        %611 = vmatpush.msra.mxu0 %v563
        %612 = vmatmul.f32.gmra.mxu0 %v573
        %v613 = vpop.f32.mrf.mxu0
        %v614 = vadd.f32 %v569, %v613
        %615 = vmatmul.f32.gmra.mxu0 %v576
        %v616 = vpop.f32.mrf.mxu0
        %v617 = vadd.f32 %v569, %v616
        %618 = vmatmul.f32.gmra.mxu0 %v579
        %v619 = vpop.f32.mrf.mxu0
        %v620 = vadd.f32 %v569, %v619
        %621 = vmatmul.f32.gmra.mxu0 %v582
        %v622 = vpop.f32.mrf.mxu0
        %v623 = vadd.f32 %v569, %v622
        %624 = vmatmul.f32.gmra.mxu0 %v585
        %v625 = vpop.f32.mrf.mxu0
        %v626 = vadd.f32 %v569, %v625
        %627 = vmatmul.f32.gmra.mxu0 %v588
        %v628 = vpop.f32.mrf.mxu0
        %v629 = vadd.f32 %v569, %v628
        %630 = vmatmul.f32.gmra.mxu0 %v591
        %v631 = vpop.f32.mrf.mxu0
        %v632 = vadd.f32 %v569, %v631
        %633 = vmatmul.f32.gmra.mxu0 %v594
        %v634 = vpop.f32.mrf.mxu0
        %v635 = vadd.f32 %v569, %v634
        %636 = vdwg.mxu0
        %v637 = vmax.f32 %v614, 0.0
        %v638 = vmax.f32 %v617, 0.0
        %v639 = vmax.f32 %v620, 0.0
        %v640 = vmax.f32 %v623, 0.0
        %v641 = vmax.f32 %v626, 0.0
        %v642 = vmax.f32 %v629, 0.0
        %v643 = vmax.f32 %v632, 0.0
        %v644 = vmax.f32 %v635, 0.0
        %v645 = vld [vmem:[%s7] sm:$0xff]
        %v646 = vld [vmem:[%s7 + $0x8] sm:$0xff]
        %v647 = vld [vmem:[%s8] sm:$0x1]
        %v649 = vperm.slane %v647, 0
        %vm651 = vcmask 130048
        %v653 = vsel %vm651, %v637, 0
        %v656 = vsel %vm651, %v638, 0
        %v659 = vsel %vm651, %v639, 0
        %v662 = vsel %vm651, %v640, 0
        %v665 = vsel %vm651, %v641, 0
        %v668 = vsel %vm651, %v642, 0
        %v671 = vsel %vm651, %v643, 0
        %v674 = vsel %vm651, %v644, 0
        %676 = vmatpush.msra.mxu0 0.0
        %677 = vmatpush.msra.mxu0 0.0
        %678 = vmatpush.msra.mxu0 0.0
        %679 = vmatpush.msra.mxu0 0.0
        %680 = vmatpush.msra.mxu0 0.0
        %681 = vmatpush.msra.mxu0 0.0
        %682 = vmatpush.msra.mxu0 0.0
        %683 = vmatpush.msra.mxu0 0.0
        %684 = vmatpush.msra.mxu0 0.0
        %685 = vmatpush.msra.mxu0 0.0
        %686 = vmatpush.msra.mxu0 0.0
        %687 = vmatpush.msra.mxu0 0.0
        %688 = vmatpush.msra.mxu0 0.0
        %689 = vmatpush.msra.mxu0 0.0
        %690 = vmatpush.msra.mxu0 %v646
        %691 = vmatpush.msra.mxu0 %v645
        %692 = vmatmul.f32.gmra.mxu0 %v653
        %v693 = vpop.f32.mrf.mxu0
        %v694 = vadd.f32 %v649, %v693
        %695 = vmatmul.f32.gmra.mxu0 %v656
        %v696 = vpop.f32.mrf.mxu0
        %v697 = vadd.f32 %v649, %v696
        %698 = vmatmul.f32.gmra.mxu0 %v659
        %v699 = vpop.f32.mrf.mxu0
        %v700 = vadd.f32 %v649, %v699
        %701 = vmatmul.f32.gmra.mxu0 %v662
        %v702 = vpop.f32.mrf.mxu0
        %v703 = vadd.f32 %v649, %v702
        %704 = vmatmul.f32.gmra.mxu0 %v665
        %v705 = vpop.f32.mrf.mxu0
        %v706 = vadd.f32 %v649, %v705
        %707 = vmatmul.f32.gmra.mxu0 %v668
        %v708 = vpop.f32.mrf.mxu0
        %v709 = vadd.f32 %v649, %v708
        %710 = vmatmul.f32.gmra.mxu0 %v671
        %v711 = vpop.f32.mrf.mxu0
        %v712 = vadd.f32 %v649, %v711
        %713 = vmatmul.f32.gmra.mxu0 %v674
        %v714 = vpop.f32.mrf.mxu0
        %v715 = vadd.f32 %v649, %v714
        %716 = vdwg.mxu0
        %v717 = vld [vmem:[#allocation15] sm:$0xff]
        %v718 = vld [vmem:[#allocation15 + $0x8] sm:$0xff]
        %v719 = vld [vmem:[#allocation15 + $0x10] sm:$0xff]
        %v720 = vld [vmem:[#allocation15 + $0x18] sm:$0xff]
        %v721 = vld [vmem:[#allocation15 + $0x20] sm:$0xff]
        %v722 = vld [vmem:[#allocation15 + $0x28] sm:$0xff]
        %v723 = vld [vmem:[#allocation15 + $0x30] sm:$0xff]
        %v724 = vld [vmem:[#allocation15 + $0x38] sm:$0xff]
        %v725 = vld [vmem:[#allocation15 + $0x40] sm:$0xff]
        %v726 = vld [vmem:[#allocation15 + $0x48] sm:$0xff]
        %v727 = vld [vmem:[#allocation15 + $0x50] sm:$0xff]
        %v728 = vld [vmem:[#allocation15 + $0x58] sm:$0xff]
        %v729 = vld [vmem:[#allocation15 + $0x60] sm:$0xff]
        %v730 = vld [vmem:[#allocation15 + $0x68] sm:$0xff]
        %v731 = vld [vmem:[#allocation15 + $0x70] sm:$0xff]
        %v732 = vld [vmem:[#allocation15 + $0x78] sm:$0xff]
        %v733 = vld [vmem:[%s10] sm:$0xf]
        %v735 = vperm.slane %v733, 0
        %v736 = vperm.slane %v733, 1
        %v737 = vperm.slane %v733, 2
        %v738 = vperm.slane %v733, 3
        %743 = vmatpush.msra.mxu0 0.0
        %744 = vmatpush.msra.mxu0 0.0
        %745 = vmatpush.msra.mxu0 0.0
        %746 = vmatpush.msra.mxu0 0.0
        %747 = vmatpush.msra.mxu0 0.0
        %748 = vmatpush.msra.mxu0 0.0
        %749 = vmatpush.msra.mxu0 0.0
        %750 = vmatpush.msra.mxu0 0.0
        %751 = vmatpush.msra.mxu0 0.0
        %752 = vmatpush.msra.mxu0 0.0
        %753 = vmatpush.msra.mxu0 0.0
        %754 = vmatpush.msra.mxu0 0.0
        %755 = vmatpush.msra.mxu0 %v729
        %756 = vmatpush.msra.mxu0 %v725
        %757 = vmatpush.msra.mxu0 %v721
        %758 = vmatpush.msra.mxu0 %v717
        %759 = vmatmul.f32.gmra.mxu0 %v573
        %v760 = vpop.f32.mrf.mxu0
        %v761 = vadd.f32 %v735, %v760
        %762 = vmatmul.f32.gmra.mxu0 %v576
        %v763 = vpop.f32.mrf.mxu0
        %v764 = vadd.f32 %v735, %v763
        %765 = vmatmul.f32.gmra.mxu0 %v579
        %v766 = vpop.f32.mrf.mxu0
        %v767 = vadd.f32 %v735, %v766
        %768 = vmatmul.f32.gmra.mxu0 %v582
        %v769 = vpop.f32.mrf.mxu0
        %v770 = vadd.f32 %v735, %v769
        %771 = vmatmul.f32.gmra.mxu0 %v585
        %v772 = vpop.f32.mrf.mxu0
        %v773 = vadd.f32 %v735, %v772
        %774 = vmatmul.f32.gmra.mxu0 %v588
        %v775 = vpop.f32.mrf.mxu0
        %v776 = vadd.f32 %v735, %v775
        %777 = vmatmul.f32.gmra.mxu0 %v591
        %v778 = vpop.f32.mrf.mxu0
        %v779 = vadd.f32 %v735, %v778
        %780 = vmatmul.f32.gmra.mxu0 %v594
        %v781 = vpop.f32.mrf.mxu0
        %v782 = vadd.f32 %v735, %v781
        %783 = vdwg.mxu0
        %784 = vmatpush.msra.mxu0 0.0
        %785 = vmatpush.msra.mxu0 0.0
        %786 = vmatpush.msra.mxu0 0.0
        %787 = vmatpush.msra.mxu0 0.0
        %788 = vmatpush.msra.mxu0 0.0
        %789 = vmatpush.msra.mxu0 0.0
        %790 = vmatpush.msra.mxu0 0.0
        %791 = vmatpush.msra.mxu0 0.0
        %792 = vmatpush.msra.mxu0 0.0
        %793 = vmatpush.msra.mxu0 0.0
        %794 = vmatpush.msra.mxu0 0.0
        %795 = vmatpush.msra.mxu0 0.0
        %796 = vmatpush.msra.mxu0 %v730
        %797 = vmatpush.msra.mxu0 %v726
        %798 = vmatpush.msra.mxu0 %v722
        %799 = vmatpush.msra.mxu0 %v718
        %800 = vmatmul.f32.gmra.mxu0 %v573
        %v801 = vpop.f32.mrf.mxu0
        %v802 = vadd.f32 %v736, %v801
        %803 = vmatmul.f32.gmra.mxu0 %v576
        %v804 = vpop.f32.mrf.mxu0
        %v805 = vadd.f32 %v736, %v804
        %806 = vmatmul.f32.gmra.mxu0 %v579
        %v807 = vpop.f32.mrf.mxu0
        %v808 = vadd.f32 %v736, %v807
        %809 = vmatmul.f32.gmra.mxu0 %v582
        %v810 = vpop.f32.mrf.mxu0
        %v811 = vadd.f32 %v736, %v810
        %812 = vmatmul.f32.gmra.mxu0 %v585
        %v813 = vpop.f32.mrf.mxu0
        %v814 = vadd.f32 %v736, %v813
        %815 = vmatmul.f32.gmra.mxu0 %v588
        %v816 = vpop.f32.mrf.mxu0
        %v817 = vadd.f32 %v736, %v816
        %818 = vmatmul.f32.gmra.mxu0 %v591
        %v819 = vpop.f32.mrf.mxu0
        %v820 = vadd.f32 %v736, %v819
        %821 = vmatmul.f32.gmra.mxu0 %v594
        %v822 = vpop.f32.mrf.mxu0
        %v823 = vadd.f32 %v736, %v822
        %824 = vdwg.mxu0
        %825 = vmatpush.msra.mxu0 0.0
        %826 = vmatpush.msra.mxu0 0.0
        %827 = vmatpush.msra.mxu0 0.0
        %828 = vmatpush.msra.mxu0 0.0
        %829 = vmatpush.msra.mxu0 0.0
        %830 = vmatpush.msra.mxu0 0.0
        %831 = vmatpush.msra.mxu0 0.0
        %832 = vmatpush.msra.mxu0 0.0
        %833 = vmatpush.msra.mxu0 0.0
        %834 = vmatpush.msra.mxu0 0.0
        %835 = vmatpush.msra.mxu0 0.0
        %836 = vmatpush.msra.mxu0 0.0
        %837 = vmatpush.msra.mxu0 %v731
        %838 = vmatpush.msra.mxu0 %v727
        %839 = vmatpush.msra.mxu0 %v723
        %840 = vmatpush.msra.mxu0 %v719
        %841 = vmatmul.f32.gmra.mxu0 %v573
        %v842 = vpop.f32.mrf.mxu0
        %v843 = vadd.f32 %v737, %v842
        %844 = vmatmul.f32.gmra.mxu0 %v576
        %v845 = vpop.f32.mrf.mxu0
        %v846 = vadd.f32 %v737, %v845
        %847 = vmatmul.f32.gmra.mxu0 %v579
        %v848 = vpop.f32.mrf.mxu0
        %v849 = vadd.f32 %v737, %v848
        %850 = vmatmul.f32.gmra.mxu0 %v582
        %v851 = vpop.f32.mrf.mxu0
        %v852 = vadd.f32 %v737, %v851
        %853 = vmatmul.f32.gmra.mxu0 %v585
        %v854 = vpop.f32.mrf.mxu0
        %v855 = vadd.f32 %v737, %v854
        %856 = vmatmul.f32.gmra.mxu0 %v588
        %v857 = vpop.f32.mrf.mxu0
        %v858 = vadd.f32 %v737, %v857
        %859 = vmatmul.f32.gmra.mxu0 %v591
        %v860 = vpop.f32.mrf.mxu0
        %v861 = vadd.f32 %v737, %v860
        %862 = vmatmul.f32.gmra.mxu0 %v594
        %v863 = vpop.f32.mrf.mxu0
        %v864 = vadd.f32 %v737, %v863
        %865 = vdwg.mxu0
        %866 = vmatpush.msra.mxu0 0.0
        %867 = vmatpush.msra.mxu0 0.0
        %868 = vmatpush.msra.mxu0 0.0
        %869 = vmatpush.msra.mxu0 0.0
        %870 = vmatpush.msra.mxu0 0.0
        %871 = vmatpush.msra.mxu0 0.0
        %872 = vmatpush.msra.mxu0 0.0
        %873 = vmatpush.msra.mxu0 0.0
        %874 = vmatpush.msra.mxu0 0.0
        %875 = vmatpush.msra.mxu0 0.0
        %876 = vmatpush.msra.mxu0 0.0
        %877 = vmatpush.msra.mxu0 0.0
        %878 = vmatpush.msra.mxu0 %v732
        %879 = vmatpush.msra.mxu0 %v728
        %880 = vmatpush.msra.mxu0 %v724
        %881 = vmatpush.msra.mxu0 %v720
        %882 = vmatmul.f32.gmra.mxu0 %v573
        %v883 = vpop.f32.mrf.mxu0
        %v884 = vadd.f32 %v738, %v883
        %885 = vmatmul.f32.gmra.mxu0 %v576
        %v886 = vpop.f32.mrf.mxu0
        %v887 = vadd.f32 %v738, %v886
        %888 = vmatmul.f32.gmra.mxu0 %v579
        %v889 = vpop.f32.mrf.mxu0
        %v890 = vadd.f32 %v738, %v889
        %891 = vmatmul.f32.gmra.mxu0 %v582
        %v892 = vpop.f32.mrf.mxu0
        %v893 = vadd.f32 %v738, %v892
        %894 = vmatmul.f32.gmra.mxu0 %v585
        %v895 = vpop.f32.mrf.mxu0
        %v896 = vadd.f32 %v738, %v895
        %897 = vmatmul.f32.gmra.mxu0 %v588
        %v898 = vpop.f32.mrf.mxu0
        %v899 = vadd.f32 %v738, %v898
        %900 = vmatmul.f32.gmra.mxu0 %v591
        %v901 = vpop.f32.mrf.mxu0
        %v902 = vadd.f32 %v738, %v901
        %903 = vmatmul.f32.gmra.mxu0 %v594
        %v904 = vpop.f32.mrf.mxu0
        %v905 = vadd.f32 %v738, %v904
        %906 = vdwg.mxu0
        %907 = vst [vmem:[#allocation2] sm:$0xff] %v761
        %908 = vst [vmem:[#allocation2 + $0x8] sm:$0xff] %v802
        %909 = vst [vmem:[#allocation2 + $0x10] sm:$0xff] %v843
        %910 = vst [vmem:[#allocation2 + $0x18] sm:$0xff] %v884
        %911 = vst [vmem:[#allocation2 + $0x20] sm:$0xff] %v764
        %912 = vst [vmem:[#allocation2 + $0x28] sm:$0xff] %v805
        %913 = vst [vmem:[#allocation2 + $0x30] sm:$0xff] %v846
        %914 = vst [vmem:[#allocation2 + $0x38] sm:$0xff] %v887
        %915 = vst [vmem:[#allocation2 + $0x40] sm:$0xff] %v767
        %916 = vst [vmem:[#allocation2 + $0x48] sm:$0xff] %v808
        %917 = vst [vmem:[#allocation2 + $0x50] sm:$0xff] %v849
        %918 = vst [vmem:[#allocation2 + $0x58] sm:$0xff] %v890
        %919 = vst [vmem:[#allocation2 + $0x60] sm:$0xff] %v770
        %920 = vst [vmem:[#allocation2 + $0x68] sm:$0xff] %v811
        %921 = vst [vmem:[#allocation2 + $0x70] sm:$0xff] %v852
        %922 = vst [vmem:[#allocation2 + $0x78] sm:$0xff] %v893
        %923 = vst [vmem:[#allocation2 + $0x80] sm:$0xff] %v773
        %924 = vst [vmem:[#allocation2 + $0x88] sm:$0xff] %v814
        %925 = vst [vmem:[#allocation2 + $0x90] sm:$0xff] %v855
        %926 = vst [vmem:[#allocation2 + $0x98] sm:$0xff] %v896
        %927 = vst [vmem:[#allocation2 + $0xa0] sm:$0xff] %v776
        %928 = vst [vmem:[#allocation2 + $0xa8] sm:$0xff] %v817
        %929 = vst [vmem:[#allocation2 + $0xb0] sm:$0xff] %v858
        %930 = vst [vmem:[#allocation2 + $0xb8] sm:$0xff] %v899
        %931 = vst [vmem:[#allocation2 + $0xc0] sm:$0xff] %v779
        %932 = vst [vmem:[#allocation2 + $0xc8] sm:$0xff] %v820
        %933 = vst [vmem:[#allocation2 + $0xd0] sm:$0xff] %v861
        %934 = vst [vmem:[#allocation2 + $0xd8] sm:$0xff] %v902
        %935 = vst [vmem:[#allocation2 + $0xe0] sm:$0xff] %v782
        %936 = vst [vmem:[#allocation2 + $0xe8] sm:$0xff] %v823
        %937 = vst [vmem:[#allocation2 + $0xf0] sm:$0xff] %v864
        %938 = vst [vmem:[#allocation2 + $0xf8] sm:$0xff] %v905
        %v939 = vld [vmem:[%s11] sm:$0x1]
        %v940 = vld [vmem:[%s12] sm:$0x1]
        %v941 = vld [vmem:[#allocation8] sm:$0x1]
        %v942 = vlaneseq
        %v943 = vshrl.u32 %v942, 7
        %v944 = vadd.s32 %v943, 8
        %v945 = vlaneseq
        %v946 = vand.u32 %v945, 127
        %s947 = sld [smem:[#allocation6 + %s554]]
        %s948 = sld [smem:[#allocation7 + %s554]]
        %v949 = vstv %s947
        %vm950 = vcmp.lt.s32.totalorder %v943, %v949
        %vm951 = vcmp.lt.s32.totalorder %v944, %v949
        %v952 = vsel %vm950, 1, 0
        %v953 = vsel %vm951, 1, 0
        %vm954 = vcmp.eq.s32.totalorder %v952, 1
        %vm955 = vcmp.eq.s32.totalorder %v953, 1
        %v956 = vsel %vm954, %v694, 0.0
        %v957 = vsel %vm955, %v697, 0.0
        %v958 = vstv %s948
        %vm959 = vcmp.lt.s32.totalorder %v943, %v958
        %vm960 = vcmp.lt.s32.totalorder %v944, %v958
        %v961 = vsel %vm959, 1, 0
        %v962 = vsel %vm960, 1, 0
        %vm963 = vcmp.eq.s32.totalorder %v961, 1
        %vm964 = vcmp.eq.s32.totalorder %v962, 1
        %v965 = vsel %vm963, %v700, 0.0
        %v966 = vsel %vm964, %v703, 0.0
        %v968 = vsel %vm651, %v956, 0
        %v971 = vsel %vm651, %v957, 0
        %v974 = vsel %vm651, %v965, 0
        %v977 = vsel %vm651, %v966, 0
        %979 = vmatpush.xpose.msra.mxu0 0.0
        %980 = vmatpush.xpose.msra.mxu0 0.0
        %981 = vmatpush.xpose.msra.mxu0 0.0
        %982 = vmatpush.xpose.msra.mxu0 0.0
        %983 = vmatpush.xpose.msra.mxu0 0.0
        %984 = vmatpush.xpose.msra.mxu0 0.0
        %985 = vmatpush.xpose.msra.mxu0 0.0
        %986 = vmatpush.xpose.msra.mxu0 0.0
        %987 = vmatpush.xpose.msra.mxu0 0.0
        %988 = vmatpush.xpose.msra.mxu0 0.0
        %989 = vmatpush.xpose.msra.mxu0 0.0
        %990 = vmatpush.xpose.msra.mxu0 0.0
        %991 = vmatpush.xpose.msra.mxu0 0.0
        %992 = vmatpush.xpose.msra.mxu0 0.0
        %993 = vmatpush.xpose.msra.mxu0 %v977
        %994 = vmatpush.xpose.msra.mxu0 %v974
        %995 = vmatmul.f32.gmra.mxu0 %v968
        %v996 = vpop.f32.mrf.mxu0
        %v997 = vadd.f32 0.0, %v996
        %998 = vmatmul.f32.gmra.mxu0 %v971
        %v999 = vpop.f32.mrf.mxu0
        %v1000 = vadd.f32 0.0, %v999
        %1001 = vdwg.mxu0
        %vm1002 = vcmp.lt.s32.totalorder %v946, %v949
        %vm1003 = vmand %vm950, %vm1002
        %vm1004 = vmand %vm951, %vm1002
        %v1005 = vld [vmem:[%s485] sm:$0xff]
        %v1006 = vld [vmem:[%s485 + $0x8] sm:$0xff]
        %v1007 = vsel %vm1003, %v1005, 0.0
        %v1008 = vsel %vm1004, %v1006, 0.0
        %v1009 = vld [vmem:[#allocation2 + $0x8] sm:$0xff]
        %v1010 = vld [vmem:[#allocation2 + $0x28] sm:$0xff]
        %v1011 = vld [vmem:[#allocation2 + $0x10] sm:$0xff]
        %v1012 = vld [vmem:[#allocation2 + $0x30] sm:$0xff]
        %v1013 = vld [vmem:[#allocation2] sm:$0xff]
        %v1014 = vld [vmem:[#allocation2 + $0x18] sm:$0xff]
        %v1016 = vrot.slane %v1013, 1
        %v1017 = vrot.slane %v1013, 2
        %v1018 = vrot.slane %v1013, 3
        %v1019 = vrot.slane %v1013, 4
        %v1020 = vrot.slane %v1013, 5
        %v1021 = vrot.slane %v1013, 6
        %v1022 = vrot.slane %v1013, 7
        %v1023 = vperm.slane %v1013, 0
        %v1024 = vperm.slane %v1016, 0
        %v1025 = vperm.slane %v1017, 0
        %v1026 = vperm.slane %v1018, 0
        %v1027 = vperm.slane %v1019, 0
        %v1028 = vperm.slane %v1020, 0
        %v1029 = vperm.slane %v1021, 0
        %v1030 = vperm.slane %v1022, 0
        %v1039 = vadd.f32 %v1023, %v1009
        %v1040 = vadd.f32 %v1023, %v1010
        %v1041 = vadd.f32 %v1024, %v1009
        %v1042 = vadd.f32 %v1024, %v1010
        %v1043 = vadd.f32 %v1025, %v1009
        %v1044 = vadd.f32 %v1025, %v1010
        %v1045 = vadd.f32 %v1026, %v1009
        %v1046 = vadd.f32 %v1026, %v1010
        %v1047 = vadd.f32 %v1027, %v1009
        %v1048 = vadd.f32 %v1027, %v1010
        %v1049 = vadd.f32 %v1028, %v1009
        %v1050 = vadd.f32 %v1028, %v1010
        %v1051 = vadd.f32 %v1029, %v1009
        %v1052 = vadd.f32 %v1029, %v1010
        %v1053 = vadd.f32 %v1030, %v1009
        %v1054 = vadd.f32 %v1030, %v1010
        %v1055 = vmax.f32 %v1039, 0.0
        %v1056 = vmax.f32 %v1040, 0.0
        %v1057 = vmax.f32 %v1041, 0.0
        %v1058 = vmax.f32 %v1042, 0.0
        %v1059 = vmax.f32 %v1043, 0.0
        %v1060 = vmax.f32 %v1044, 0.0
        %v1061 = vmax.f32 %v1045, 0.0
        %v1062 = vmax.f32 %v1046, 0.0
        %v1063 = vmax.f32 %v1047, 0.0
        %v1064 = vmax.f32 %v1048, 0.0
        %v1065 = vmax.f32 %v1049, 0.0
        %v1066 = vmax.f32 %v1050, 0.0
        %v1067 = vmax.f32 %v1051, 0.0
        %v1068 = vmax.f32 %v1052, 0.0
        %v1069 = vmax.f32 %v1053, 0.0
        %v1070 = vmax.f32 %v1054, 0.0
        %v1072 = vperm.slane %v939, 0
        %v1074 = vmul.f32 %v1055, %v1072
        %v1075 = vmul.f32 %v1056, %v1072
        %v1076 = vmul.f32 %v1057, %v1072
        %v1077 = vmul.f32 %v1058, %v1072
        %v1078 = vmul.f32 %v1059, %v1072
        %v1079 = vmul.f32 %v1060, %v1072
        %v1080 = vmul.f32 %v1061, %v1072
        %v1081 = vmul.f32 %v1062, %v1072
        %v1082 = vmul.f32 %v1063, %v1072
        %v1083 = vmul.f32 %v1064, %v1072
        %v1084 = vmul.f32 %v1065, %v1072
        %v1085 = vmul.f32 %v1066, %v1072
        %v1086 = vmul.f32 %v1067, %v1072
        %v1087 = vmul.f32 %v1068, %v1072
        %v1088 = vmul.f32 %v1069, %v1072
        %v1089 = vmul.f32 %v1070, %v1072
        %1090 = vadd.xlane.f32.xlu0 %v1074
        %v1091 = vpop.xlane.xlu0 %1090
        %1092 = vadd.xlane.f32.xlu0 %v1075
        %v1093 = vpop.xlane.xlu0 %1092
        %1094 = vadd.xlane.f32.xlu0 %v1076
        %v1095 = vpop.xlane.xlu0 %1094
        %1096 = vadd.xlane.f32.xlu0 %v1077
        %v1097 = vpop.xlane.xlu0 %1096
        %1098 = vadd.xlane.f32.xlu0 %v1078
        %v1099 = vpop.xlane.xlu0 %1098
        %1100 = vadd.xlane.f32.xlu0 %v1079
        %v1101 = vpop.xlane.xlu0 %1100
        %1102 = vadd.xlane.f32.xlu0 %v1080
        %v1103 = vpop.xlane.xlu0 %1102
        %1104 = vadd.xlane.f32.xlu0 %v1081
        %v1105 = vpop.xlane.xlu0 %1104
        %1106 = vadd.xlane.f32.xlu0 %v1082
        %v1107 = vpop.xlane.xlu0 %1106
        %1108 = vadd.xlane.f32.xlu0 %v1083
        %v1109 = vpop.xlane.xlu0 %1108
        %1110 = vadd.xlane.f32.xlu0 %v1084
        %v1111 = vpop.xlane.xlu0 %1110
        %1112 = vadd.xlane.f32.xlu0 %v1085
        %v1113 = vpop.xlane.xlu0 %1112
        %1114 = vadd.xlane.f32.xlu0 %v1086
        %v1115 = vpop.xlane.xlu0 %1114
        %1116 = vadd.xlane.f32.xlu0 %v1087
        %v1117 = vpop.xlane.xlu0 %1116
        %1118 = vadd.xlane.f32.xlu0 %v1088
        %v1119 = vpop.xlane.xlu0 %1118
        %1120 = vadd.xlane.f32.xlu0 %v1089
        %v1121 = vpop.xlane.xlu0 %1120
        %v1123 = vrot.slane %v1014, 1
        %v1124 = vrot.slane %v1014, 2
        %v1125 = vrot.slane %v1014, 3
        %v1126 = vrot.slane %v1014, 4
        %v1127 = vrot.slane %v1014, 5
        %v1128 = vrot.slane %v1014, 6
        %v1129 = vrot.slane %v1014, 7
        %v1130 = vperm.slane %v1014, 0
        %v1131 = vperm.slane %v1123, 0
        %v1132 = vperm.slane %v1124, 0
        %v1133 = vperm.slane %v1125, 0
        %v1134 = vperm.slane %v1126, 0
        %v1135 = vperm.slane %v1127, 0
        %v1136 = vperm.slane %v1128, 0
        %v1137 = vperm.slane %v1129, 0
        %v1146 = vadd.f32 %v1130, %v1011
        %v1147 = vadd.f32 %v1130, %v1012
        %v1148 = vadd.f32 %v1131, %v1011
        %v1149 = vadd.f32 %v1131, %v1012
        %v1150 = vadd.f32 %v1132, %v1011
        %v1151 = vadd.f32 %v1132, %v1012
        %v1152 = vadd.f32 %v1133, %v1011
        %v1153 = vadd.f32 %v1133, %v1012
        %v1154 = vadd.f32 %v1134, %v1011
        %v1155 = vadd.f32 %v1134, %v1012
        %v1156 = vadd.f32 %v1135, %v1011
        %v1157 = vadd.f32 %v1135, %v1012
        %v1158 = vadd.f32 %v1136, %v1011
        %v1159 = vadd.f32 %v1136, %v1012
        %v1160 = vadd.f32 %v1137, %v1011
        %v1161 = vadd.f32 %v1137, %v1012
        %v1162 = vmax.f32 %v1146, 0.0
        %v1163 = vmax.f32 %v1147, 0.0
        %v1164 = vmax.f32 %v1148, 0.0
        %v1165 = vmax.f32 %v1149, 0.0
        %v1166 = vmax.f32 %v1150, 0.0
        %v1167 = vmax.f32 %v1151, 0.0
        %v1168 = vmax.f32 %v1152, 0.0
        %v1169 = vmax.f32 %v1153, 0.0
        %v1170 = vmax.f32 %v1154, 0.0
        %v1171 = vmax.f32 %v1155, 0.0
        %v1172 = vmax.f32 %v1156, 0.0
        %v1173 = vmax.f32 %v1157, 0.0
        %v1174 = vmax.f32 %v1158, 0.0
        %v1175 = vmax.f32 %v1159, 0.0
        %v1176 = vmax.f32 %v1160, 0.0
        %v1177 = vmax.f32 %v1161, 0.0
        %v1179 = vperm.slane %v940, 0
        %v1181 = vmul.f32 %v1162, %v1179
        %v1182 = vmul.f32 %v1163, %v1179
        %v1183 = vmul.f32 %v1164, %v1179
        %v1184 = vmul.f32 %v1165, %v1179
        %v1185 = vmul.f32 %v1166, %v1179
        %v1186 = vmul.f32 %v1167, %v1179
        %v1187 = vmul.f32 %v1168, %v1179
        %v1188 = vmul.f32 %v1169, %v1179
        %v1189 = vmul.f32 %v1170, %v1179
        %v1190 = vmul.f32 %v1171, %v1179
        %v1191 = vmul.f32 %v1172, %v1179
        %v1192 = vmul.f32 %v1173, %v1179
        %v1193 = vmul.f32 %v1174, %v1179
        %v1194 = vmul.f32 %v1175, %v1179
        %v1195 = vmul.f32 %v1176, %v1179
        %v1196 = vmul.f32 %v1177, %v1179
        %1197 = vadd.xlane.f32.xlu0 %v1181
        %v1198 = vpop.xlane.xlu0 %1197
        %1199 = vadd.xlane.f32.xlu0 %v1182
        %v1200 = vpop.xlane.xlu0 %1199
        %1201 = vadd.xlane.f32.xlu0 %v1183
        %v1202 = vpop.xlane.xlu0 %1201
        %1203 = vadd.xlane.f32.xlu0 %v1184
        %v1204 = vpop.xlane.xlu0 %1203
        %1205 = vadd.xlane.f32.xlu0 %v1185
        %v1206 = vpop.xlane.xlu0 %1205
        %1207 = vadd.xlane.f32.xlu0 %v1186
        %v1208 = vpop.xlane.xlu0 %1207
        %1209 = vadd.xlane.f32.xlu0 %v1187
        %v1210 = vpop.xlane.xlu0 %1209
        %1211 = vadd.xlane.f32.xlu0 %v1188
        %v1212 = vpop.xlane.xlu0 %1211
        %1213 = vadd.xlane.f32.xlu0 %v1189
        %v1214 = vpop.xlane.xlu0 %1213
        %1215 = vadd.xlane.f32.xlu0 %v1190
        %v1216 = vpop.xlane.xlu0 %1215
        %1217 = vadd.xlane.f32.xlu0 %v1191
        %v1218 = vpop.xlane.xlu0 %1217
        %1219 = vadd.xlane.f32.xlu0 %v1192
        %v1220 = vpop.xlane.xlu0 %1219
        %1221 = vadd.xlane.f32.xlu0 %v1193
        %v1222 = vpop.xlane.xlu0 %1221
        %1223 = vadd.xlane.f32.xlu0 %v1194
        %v1224 = vpop.xlane.xlu0 %1223
        %1225 = vadd.xlane.f32.xlu0 %v1195
        %v1226 = vpop.xlane.xlu0 %1225
        %1227 = vadd.xlane.f32.xlu0 %v1196
        %v1228 = vpop.xlane.xlu0 %1227
        %v1229 = vadd.f32 %v1091, %v1198
        %v1230 = vadd.f32 %v1093, %v1200
        %v1231 = vadd.f32 %v1095, %v1202
        %v1232 = vadd.f32 %v1097, %v1204
        %v1233 = vadd.f32 %v1099, %v1206
        %v1234 = vadd.f32 %v1101, %v1208
        %v1235 = vadd.f32 %v1103, %v1210
        %v1236 = vadd.f32 %v1105, %v1212
        %v1237 = vadd.f32 %v1107, %v1214
        %v1238 = vadd.f32 %v1109, %v1216
        %v1239 = vadd.f32 %v1111, %v1218
        %v1240 = vadd.f32 %v1113, %v1220
        %v1241 = vadd.f32 %v1115, %v1222
        %v1242 = vadd.f32 %v1117, %v1224
        %v1243 = vadd.f32 %v1119, %v1226
        %v1244 = vadd.f32 %v1121, %v1228
        %v1246 = vperm.slane %v941, 0
        %1247 = vset.pattern.permute.xlu0 0
        %1248 = vperm.xlu0 %1247, %v1246
        %v1249 = vpop.permute.xlu0 %1248
        %v1251 = vadd.f32 %v1229, %v1249
        %v1252 = vadd.f32 %v1230, %v1249
        %v1253 = vadd.f32 %v1231, %v1249
        %v1254 = vadd.f32 %v1232, %v1249
        %v1255 = vadd.f32 %v1233, %v1249
        %v1256 = vadd.f32 %v1234, %v1249
        %v1257 = vadd.f32 %v1235, %v1249
        %v1258 = vadd.f32 %v1236, %v1249
        %v1259 = vadd.f32 %v1237, %v1249
        %v1260 = vadd.f32 %v1238, %v1249
        %v1261 = vadd.f32 %v1239, %v1249
        %v1262 = vadd.f32 %v1240, %v1249
        %v1263 = vadd.f32 %v1241, %v1249
        %v1264 = vadd.f32 %v1242, %v1249
        %v1265 = vadd.f32 %v1243, %v1249
        %v1266 = vadd.f32 %v1244, %v1249
        %v1268 = vperm.slane %v1007, 0
        %v1269 = vlaneseq
        %v1270 = vshrl.u32 %v1269, 7
        %1272 = vset.pattern.permute.xlu0 %v1270
        %1273 = vperm.xlu0 %1272, %v1268
        %v1274 = vpop.permute.xlu0 %1273
        %v1275 = vlaneseq
        %v1276 = vshrl.u32 %v1275, 7
        %v1277 = vadd.s32 %v1276, 8
        %1278 = vset.pattern.permute.xlu0 %v1277
        %1279 = vperm.xlu0 %1278, %v1268
        %v1280 = vpop.permute.xlu0 %1279
        %v1281 = vperm.slane %v1007, 1
        %v1282 = vlaneseq
        %v1283 = vshrl.u32 %v1282, 7
        %1285 = vset.pattern.permute.xlu0 %v1283
        %1286 = vperm.xlu0 %1285, %v1281
        %v1287 = vpop.permute.xlu0 %1286
        %v1288 = vlaneseq
        %v1289 = vshrl.u32 %v1288, 7
        %v1290 = vadd.s32 %v1289, 8
        %1291 = vset.pattern.permute.xlu0 %v1290
        %1292 = vperm.xlu0 %1291, %v1281
        %v1293 = vpop.permute.xlu0 %1292
        %v1294 = vperm.slane %v1007, 2
        %v1295 = vlaneseq
        %v1296 = vshrl.u32 %v1295, 7
        %1298 = vset.pattern.permute.xlu0 %v1296
        %1299 = vperm.xlu0 %1298, %v1294
        %v1300 = vpop.permute.xlu0 %1299
        %v1301 = vlaneseq
        %v1302 = vshrl.u32 %v1301, 7
        %v1303 = vadd.s32 %v1302, 8
        %1304 = vset.pattern.permute.xlu0 %v1303
        %1305 = vperm.xlu0 %1304, %v1294
        %v1306 = vpop.permute.xlu0 %1305
        %v1307 = vperm.slane %v1007, 3
        %v1308 = vlaneseq
        %v1309 = vshrl.u32 %v1308, 7
        %1311 = vset.pattern.permute.xlu0 %v1309
        %1312 = vperm.xlu0 %1311, %v1307
        %v1313 = vpop.permute.xlu0 %1312
        %v1314 = vlaneseq
        %v1315 = vshrl.u32 %v1314, 7
        %v1316 = vadd.s32 %v1315, 8
        %1317 = vset.pattern.permute.xlu0 %v1316
        %1318 = vperm.xlu0 %1317, %v1307
        %v1319 = vpop.permute.xlu0 %1318
        %v1320 = vperm.slane %v1007, 4
        %v1321 = vlaneseq
        %v1322 = vshrl.u32 %v1321, 7
        %1324 = vset.pattern.permute.xlu0 %v1322
        %1325 = vperm.xlu0 %1324, %v1320
        %v1326 = vpop.permute.xlu0 %1325
        %v1327 = vlaneseq
        %v1328 = vshrl.u32 %v1327, 7
        %v1329 = vadd.s32 %v1328, 8
        %1330 = vset.pattern.permute.xlu0 %v1329
        %1331 = vperm.xlu0 %1330, %v1320
        %v1332 = vpop.permute.xlu0 %1331
        %v1333 = vperm.slane %v1007, 5
        %v1334 = vlaneseq
        %v1335 = vshrl.u32 %v1334, 7
        %1337 = vset.pattern.permute.xlu0 %v1335
        %1338 = vperm.xlu0 %1337, %v1333
        %v1339 = vpop.permute.xlu0 %1338
        %v1340 = vlaneseq
        %v1341 = vshrl.u32 %v1340, 7
        %v1342 = vadd.s32 %v1341, 8
        %1343 = vset.pattern.permute.xlu0 %v1342
        %1344 = vperm.xlu0 %1343, %v1333
        %v1345 = vpop.permute.xlu0 %1344
        %v1346 = vperm.slane %v1007, 6
        %v1347 = vlaneseq
        %v1348 = vshrl.u32 %v1347, 7
        %1350 = vset.pattern.permute.xlu0 %v1348
        %1351 = vperm.xlu0 %1350, %v1346
        %v1352 = vpop.permute.xlu0 %1351
        %v1353 = vlaneseq
        %v1354 = vshrl.u32 %v1353, 7
        %v1355 = vadd.s32 %v1354, 8
        %1356 = vset.pattern.permute.xlu0 %v1355
        %1357 = vperm.xlu0 %1356, %v1346
        %v1358 = vpop.permute.xlu0 %1357
        %v1359 = vperm.slane %v1007, 7
        %v1360 = vlaneseq
        %v1361 = vshrl.u32 %v1360, 7
        %1363 = vset.pattern.permute.xlu0 %v1361
        %1364 = vperm.xlu0 %1363, %v1359
        %v1365 = vpop.permute.xlu0 %1364
        %v1366 = vlaneseq
        %v1367 = vshrl.u32 %v1366, 7
        %v1368 = vadd.s32 %v1367, 8
        %1369 = vset.pattern.permute.xlu0 %v1368
        %1370 = vperm.xlu0 %1369, %v1359
        %v1371 = vpop.permute.xlu0 %1370
        %v1388 = vmul.f32 %v1251, %v1274
        %v1389 = vmul.f32 %v1252, %v1280
        %v1390 = vmul.f32 %v1253, %v1287
        %v1391 = vmul.f32 %v1254, %v1293
        %v1392 = vmul.f32 %v1255, %v1300
        %v1393 = vmul.f32 %v1256, %v1306
        %v1394 = vmul.f32 %v1257, %v1313
        %v1395 = vmul.f32 %v1258, %v1319
        %v1396 = vmul.f32 %v1259, %v1326
        %v1397 = vmul.f32 %v1260, %v1332
        %v1398 = vmul.f32 %v1261, %v1339
        %v1399 = vmul.f32 %v1262, %v1345
        %v1400 = vmul.f32 %v1263, %v1352
        %v1401 = vmul.f32 %v1264, %v1358
        %v1402 = vmul.f32 %v1265, %v1365
        %v1403 = vmul.f32 %v1266, %v1371
        %1420 = vset.pattern.permute.xlu0 0
        %1421 = vperm.xlu0 %1420, %v1388
        %v1422 = vpop.permute.xlu0 %1421
        %1423 = vset.pattern.permute.xlu0 0
        %1424 = vperm.xlu0 %1423, %v1389
        %v1425 = vpop.permute.xlu0 %1424
        %1426 = vset.pattern.permute.xlu0 0
        %1427 = vperm.xlu0 %1426, %v1390
        %v1428 = vpop.permute.xlu0 %1427
        %1429 = vset.pattern.permute.xlu0 0
        %1430 = vperm.xlu0 %1429, %v1391
        %v1431 = vpop.permute.xlu0 %1430
        %1432 = vset.pattern.permute.xlu0 0
        %1433 = vperm.xlu0 %1432, %v1392
        %v1434 = vpop.permute.xlu0 %1433
        %1435 = vset.pattern.permute.xlu0 0
        %1436 = vperm.xlu0 %1435, %v1393
        %v1437 = vpop.permute.xlu0 %1436
        %1438 = vset.pattern.permute.xlu0 0
        %1439 = vperm.xlu0 %1438, %v1394
        %v1440 = vpop.permute.xlu0 %1439
        %1441 = vset.pattern.permute.xlu0 0
        %1442 = vperm.xlu0 %1441, %v1395
        %v1443 = vpop.permute.xlu0 %1442
        %1444 = vset.pattern.permute.xlu0 0
        %1445 = vperm.xlu0 %1444, %v1396
        %v1446 = vpop.permute.xlu0 %1445
        %1447 = vset.pattern.permute.xlu0 0
        %1448 = vperm.xlu0 %1447, %v1397
        %v1449 = vpop.permute.xlu0 %1448
        %1450 = vset.pattern.permute.xlu0 0
        %1451 = vperm.xlu0 %1450, %v1398
        %v1452 = vpop.permute.xlu0 %1451
        %1453 = vset.pattern.permute.xlu0 0
        %1454 = vperm.xlu0 %1453, %v1399
        %v1455 = vpop.permute.xlu0 %1454
        %1456 = vset.pattern.permute.xlu0 0
        %1457 = vperm.xlu0 %1456, %v1400
        %v1458 = vpop.permute.xlu0 %1457
        %1459 = vset.pattern.permute.xlu0 0
        %1460 = vperm.xlu0 %1459, %v1401
        %v1461 = vpop.permute.xlu0 %1460
        %1462 = vset.pattern.permute.xlu0 0
        %1463 = vperm.xlu0 %1462, %v1402
        %v1464 = vpop.permute.xlu0 %1463
        %1465 = vset.pattern.permute.xlu0 0
        %1466 = vperm.xlu0 %1465, %v1403
        %v1467 = vpop.permute.xlu0 %1466
        %v1468 = vperm.slane %v1422, %v946
        %v1469 = vadd.s32 %v946, 4294967288
        %v1470 = vperm.slane %v1425, %v1469
        %vm1471 = vcmask 130112
        %v1472 = vsel %vm1471, %v1470, %v1468
        %v1473 = vperm.slane %v1428, %v946
        %v1474 = vperm.slane %v1431, %v1469
        %v1475 = vsel %vm1471, %v1474, %v1473
        %v1476 = vperm.slane %v1434, %v946
        %v1477 = vperm.slane %v1437, %v1469
        %v1478 = vsel %vm1471, %v1477, %v1476
        %v1479 = vperm.slane %v1440, %v946
        %v1480 = vperm.slane %v1443, %v1469
        %v1481 = vsel %vm1471, %v1480, %v1479
        %v1482 = vperm.slane %v1446, %v946
        %v1483 = vperm.slane %v1449, %v1469
        %v1484 = vsel %vm1471, %v1483, %v1482
        %v1485 = vperm.slane %v1452, %v946
        %v1486 = vperm.slane %v1455, %v1469
        %v1487 = vsel %vm1471, %v1486, %v1485
        %v1488 = vperm.slane %v1458, %v946
        %v1489 = vperm.slane %v1461, %v1469
        %v1490 = vsel %vm1471, %v1489, %v1488
        %v1491 = vperm.slane %v1464, %v946
        %v1492 = vperm.slane %v1467, %v1469
        %v1493 = vsel %vm1471, %v1492, %v1491
        %vm1494 = vcmask 1041409
        %v1495 = vsel %vm1494, %v1475, %v1472
        %vm1496 = vcmask 1042434
        %v1497 = vsel %vm1496, %v1478, %v1495
        %vm1498 = vcmask 1043459
        %v1499 = vsel %vm1498, %v1481, %v1497
        %vm1500 = vcmask 1044484
        %v1501 = vsel %vm1500, %v1484, %v1499
        %vm1502 = vcmask 1045509
        %v1503 = vsel %vm1502, %v1487, %v1501
        %vm1504 = vcmask 1046534
        %v1505 = vsel %vm1504, %v1490, %v1503
        %vm1506 = vcmask 1047559
        %v1507 = vsel %vm1506, %v1493, %v1505
        %1509 = vst.msk [vmem:[#allocation3] sm:$0xff] %vm651, %v1507
        %v1510 = vld [vmem:[#allocation2 + $0x20] sm:$0xff]
        %v1511 = vld [vmem:[#allocation2 + $0x38] sm:$0xff]
        %v1513 = vrot.slane %v1510, 1
        %v1514 = vrot.slane %v1510, 2
        %v1515 = vrot.slane %v1510, 3
        %v1516 = vrot.slane %v1510, 4
        %v1517 = vrot.slane %v1510, 5
        %v1518 = vrot.slane %v1510, 6
        %v1519 = vrot.slane %v1510, 7
        %v1520 = vperm.slane %v1510, 0
        %v1521 = vperm.slane %v1513, 0
        %v1522 = vperm.slane %v1514, 0
        %v1523 = vperm.slane %v1515, 0
        %v1524 = vperm.slane %v1516, 0
        %v1525 = vperm.slane %v1517, 0
        %v1526 = vperm.slane %v1518, 0
        %v1527 = vperm.slane %v1519, 0
        %v1536 = vadd.f32 %v1520, %v1009
        %v1537 = vadd.f32 %v1520, %v1010
        %v1538 = vadd.f32 %v1521, %v1009
        %v1539 = vadd.f32 %v1521, %v1010
        %v1540 = vadd.f32 %v1522, %v1009
        %v1541 = vadd.f32 %v1522, %v1010
        %v1542 = vadd.f32 %v1523, %v1009
        %v1543 = vadd.f32 %v1523, %v1010
        %v1544 = vadd.f32 %v1524, %v1009
        %v1545 = vadd.f32 %v1524, %v1010
        %v1546 = vadd.f32 %v1525, %v1009
        %v1547 = vadd.f32 %v1525, %v1010
        %v1548 = vadd.f32 %v1526, %v1009
        %v1549 = vadd.f32 %v1526, %v1010
        %v1550 = vadd.f32 %v1527, %v1009
        %v1551 = vadd.f32 %v1527, %v1010
        %v1552 = vmax.f32 %v1536, 0.0
        %v1553 = vmax.f32 %v1537, 0.0
        %v1554 = vmax.f32 %v1538, 0.0
        %v1555 = vmax.f32 %v1539, 0.0
        %v1556 = vmax.f32 %v1540, 0.0
        %v1557 = vmax.f32 %v1541, 0.0
        %v1558 = vmax.f32 %v1542, 0.0
        %v1559 = vmax.f32 %v1543, 0.0
        %v1560 = vmax.f32 %v1544, 0.0
        %v1561 = vmax.f32 %v1545, 0.0
        %v1562 = vmax.f32 %v1546, 0.0
        %v1563 = vmax.f32 %v1547, 0.0
        %v1564 = vmax.f32 %v1548, 0.0
        %v1565 = vmax.f32 %v1549, 0.0
        %v1566 = vmax.f32 %v1550, 0.0
        %v1567 = vmax.f32 %v1551, 0.0
        %v1568 = vmul.f32 %v1552, %v1072
        %v1569 = vmul.f32 %v1553, %v1072
        %v1570 = vmul.f32 %v1554, %v1072
        %v1571 = vmul.f32 %v1555, %v1072
        %v1572 = vmul.f32 %v1556, %v1072
        %v1573 = vmul.f32 %v1557, %v1072
        %v1574 = vmul.f32 %v1558, %v1072
        %v1575 = vmul.f32 %v1559, %v1072
        %v1576 = vmul.f32 %v1560, %v1072
        %v1577 = vmul.f32 %v1561, %v1072
        %v1578 = vmul.f32 %v1562, %v1072
        %v1579 = vmul.f32 %v1563, %v1072
        %v1580 = vmul.f32 %v1564, %v1072
        %v1581 = vmul.f32 %v1565, %v1072
        %v1582 = vmul.f32 %v1566, %v1072
        %v1583 = vmul.f32 %v1567, %v1072
        %1584 = vadd.xlane.f32.xlu0 %v1568
        %v1585 = vpop.xlane.xlu0 %1584
        %1586 = vadd.xlane.f32.xlu0 %v1569
        %v1587 = vpop.xlane.xlu0 %1586
        %1588 = vadd.xlane.f32.xlu0 %v1570
        %v1589 = vpop.xlane.xlu0 %1588
        %1590 = vadd.xlane.f32.xlu0 %v1571
        %v1591 = vpop.xlane.xlu0 %1590
        %1592 = vadd.xlane.f32.xlu0 %v1572
        %v1593 = vpop.xlane.xlu0 %1592
        %1594 = vadd.xlane.f32.xlu0 %v1573
        %v1595 = vpop.xlane.xlu0 %1594
        %1596 = vadd.xlane.f32.xlu0 %v1574
        %v1597 = vpop.xlane.xlu0 %1596
        %1598 = vadd.xlane.f32.xlu0 %v1575
        %v1599 = vpop.xlane.xlu0 %1598
        %1600 = vadd.xlane.f32.xlu0 %v1576
        %v1601 = vpop.xlane.xlu0 %1600
        %1602 = vadd.xlane.f32.xlu0 %v1577
        %v1603 = vpop.xlane.xlu0 %1602
        %1604 = vadd.xlane.f32.xlu0 %v1578
        %v1605 = vpop.xlane.xlu0 %1604
        %1606 = vadd.xlane.f32.xlu0 %v1579
        %v1607 = vpop.xlane.xlu0 %1606
        %1608 = vadd.xlane.f32.xlu0 %v1580
        %v1609 = vpop.xlane.xlu0 %1608
        %1610 = vadd.xlane.f32.xlu0 %v1581
        %v1611 = vpop.xlane.xlu0 %1610
        %1612 = vadd.xlane.f32.xlu0 %v1582
        %v1613 = vpop.xlane.xlu0 %1612
        %1614 = vadd.xlane.f32.xlu0 %v1583
        %v1615 = vpop.xlane.xlu0 %1614
        %v1617 = vrot.slane %v1511, 1
        %v1618 = vrot.slane %v1511, 2
        %v1619 = vrot.slane %v1511, 3
        %v1620 = vrot.slane %v1511, 4
        %v1621 = vrot.slane %v1511, 5
        %v1622 = vrot.slane %v1511, 6
        %v1623 = vrot.slane %v1511, 7
        %v1624 = vperm.slane %v1511, 0
        %v1625 = vperm.slane %v1617, 0
        %v1626 = vperm.slane %v1618, 0
        %v1627 = vperm.slane %v1619, 0
        %v1628 = vperm.slane %v1620, 0
        %v1629 = vperm.slane %v1621, 0
        %v1630 = vperm.slane %v1622, 0
        %v1631 = vperm.slane %v1623, 0
        %v1640 = vadd.f32 %v1624, %v1011
        %v1641 = vadd.f32 %v1624, %v1012
        %v1642 = vadd.f32 %v1625, %v1011
        %v1643 = vadd.f32 %v1625, %v1012
        %v1644 = vadd.f32 %v1626, %v1011
        %v1645 = vadd.f32 %v1626, %v1012
        %v1646 = vadd.f32 %v1627, %v1011
        %v1647 = vadd.f32 %v1627, %v1012
        %v1648 = vadd.f32 %v1628, %v1011
        %v1649 = vadd.f32 %v1628, %v1012
        %v1650 = vadd.f32 %v1629, %v1011
        %v1651 = vadd.f32 %v1629, %v1012
        %v1652 = vadd.f32 %v1630, %v1011
        %v1653 = vadd.f32 %v1630, %v1012
        %v1654 = vadd.f32 %v1631, %v1011
        %v1655 = vadd.f32 %v1631, %v1012
        %v1656 = vmax.f32 %v1640, 0.0
        %v1657 = vmax.f32 %v1641, 0.0
        %v1658 = vmax.f32 %v1642, 0.0
        %v1659 = vmax.f32 %v1643, 0.0
        %v1660 = vmax.f32 %v1644, 0.0
        %v1661 = vmax.f32 %v1645, 0.0
        %v1662 = vmax.f32 %v1646, 0.0
        %v1663 = vmax.f32 %v1647, 0.0
        %v1664 = vmax.f32 %v1648, 0.0
        %v1665 = vmax.f32 %v1649, 0.0
        %v1666 = vmax.f32 %v1650, 0.0
        %v1667 = vmax.f32 %v1651, 0.0
        %v1668 = vmax.f32 %v1652, 0.0
        %v1669 = vmax.f32 %v1653, 0.0
        %v1670 = vmax.f32 %v1654, 0.0
        %v1671 = vmax.f32 %v1655, 0.0
        %v1672 = vmul.f32 %v1656, %v1179
        %v1673 = vmul.f32 %v1657, %v1179
        %v1674 = vmul.f32 %v1658, %v1179
        %v1675 = vmul.f32 %v1659, %v1179
        %v1676 = vmul.f32 %v1660, %v1179
        %v1677 = vmul.f32 %v1661, %v1179
        %v1678 = vmul.f32 %v1662, %v1179
        %v1679 = vmul.f32 %v1663, %v1179
        %v1680 = vmul.f32 %v1664, %v1179
        %v1681 = vmul.f32 %v1665, %v1179
        %v1682 = vmul.f32 %v1666, %v1179
        %v1683 = vmul.f32 %v1667, %v1179
        %v1684 = vmul.f32 %v1668, %v1179
        %v1685 = vmul.f32 %v1669, %v1179
        %v1686 = vmul.f32 %v1670, %v1179
        %v1687 = vmul.f32 %v1671, %v1179
        %1688 = vadd.xlane.f32.xlu0 %v1672
        %v1689 = vpop.xlane.xlu0 %1688
        %1690 = vadd.xlane.f32.xlu0 %v1673
        %v1691 = vpop.xlane.xlu0 %1690
        %1692 = vadd.xlane.f32.xlu0 %v1674
        %v1693 = vpop.xlane.xlu0 %1692
        %1694 = vadd.xlane.f32.xlu0 %v1675
        %v1695 = vpop.xlane.xlu0 %1694
        %1696 = vadd.xlane.f32.xlu0 %v1676
        %v1697 = vpop.xlane.xlu0 %1696
        %1698 = vadd.xlane.f32.xlu0 %v1677
        %v1699 = vpop.xlane.xlu0 %1698
        %1700 = vadd.xlane.f32.xlu0 %v1678
        %v1701 = vpop.xlane.xlu0 %1700
        %1702 = vadd.xlane.f32.xlu0 %v1679
        %v1703 = vpop.xlane.xlu0 %1702
        %1704 = vadd.xlane.f32.xlu0 %v1680
        %v1705 = vpop.xlane.xlu0 %1704
        %1706 = vadd.xlane.f32.xlu0 %v1681
        %v1707 = vpop.xlane.xlu0 %1706
        %1708 = vadd.xlane.f32.xlu0 %v1682
        %v1709 = vpop.xlane.xlu0 %1708
        %1710 = vadd.xlane.f32.xlu0 %v1683
        %v1711 = vpop.xlane.xlu0 %1710
        %1712 = vadd.xlane.f32.xlu0 %v1684
        %v1713 = vpop.xlane.xlu0 %1712
        %1714 = vadd.xlane.f32.xlu0 %v1685
        %v1715 = vpop.xlane.xlu0 %1714
        %1716 = vadd.xlane.f32.xlu0 %v1686
        %v1717 = vpop.xlane.xlu0 %1716
        %1718 = vadd.xlane.f32.xlu0 %v1687
        %v1719 = vpop.xlane.xlu0 %1718
        %v1720 = vadd.f32 %v1585, %v1689
        %v1721 = vadd.f32 %v1587, %v1691
        %v1722 = vadd.f32 %v1589, %v1693
        %v1723 = vadd.f32 %v1591, %v1695
        %v1724 = vadd.f32 %v1593, %v1697
        %v1725 = vadd.f32 %v1595, %v1699
        %v1726 = vadd.f32 %v1597, %v1701
        %v1727 = vadd.f32 %v1599, %v1703
        %v1728 = vadd.f32 %v1601, %v1705
        %v1729 = vadd.f32 %v1603, %v1707
        %v1730 = vadd.f32 %v1605, %v1709
        %v1731 = vadd.f32 %v1607, %v1711
        %v1732 = vadd.f32 %v1609, %v1713
        %v1733 = vadd.f32 %v1611, %v1715
        %v1734 = vadd.f32 %v1613, %v1717
        %v1735 = vadd.f32 %v1615, %v1719
        %v1736 = vadd.f32 %v1720, %v1249
        %v1737 = vadd.f32 %v1721, %v1249
        %v1738 = vadd.f32 %v1722, %v1249
        %v1739 = vadd.f32 %v1723, %v1249
        %v1740 = vadd.f32 %v1724, %v1249
        %v1741 = vadd.f32 %v1725, %v1249
        %v1742 = vadd.f32 %v1726, %v1249
        %v1743 = vadd.f32 %v1727, %v1249
        %v1744 = vadd.f32 %v1728, %v1249
        %v1745 = vadd.f32 %v1729, %v1249
        %v1746 = vadd.f32 %v1730, %v1249
        %v1747 = vadd.f32 %v1731, %v1249
        %v1748 = vadd.f32 %v1732, %v1249
        %v1749 = vadd.f32 %v1733, %v1249
        %v1750 = vadd.f32 %v1734, %v1249
        %v1751 = vadd.f32 %v1735, %v1249
        %v1753 = vperm.slane %v1008, 0
        %v1754 = vlaneseq
        %v1755 = vshrl.u32 %v1754, 7
        %1757 = vset.pattern.permute.xlu0 %v1755
        %1758 = vperm.xlu0 %1757, %v1753
        %v1759 = vpop.permute.xlu0 %1758
        %v1760 = vlaneseq
        %v1761 = vshrl.u32 %v1760, 7
        %v1762 = vadd.s32 %v1761, 8
        %1763 = vset.pattern.permute.xlu0 %v1762
        %1764 = vperm.xlu0 %1763, %v1753
        %v1765 = vpop.permute.xlu0 %1764
        %v1766 = vperm.slane %v1008, 1
        %v1767 = vlaneseq
        %v1768 = vshrl.u32 %v1767, 7
        %1770 = vset.pattern.permute.xlu0 %v1768
        %1771 = vperm.xlu0 %1770, %v1766
        %v1772 = vpop.permute.xlu0 %1771
        %v1773 = vlaneseq
        %v1774 = vshrl.u32 %v1773, 7
        %v1775 = vadd.s32 %v1774, 8
        %1776 = vset.pattern.permute.xlu0 %v1775
        %1777 = vperm.xlu0 %1776, %v1766
        %v1778 = vpop.permute.xlu0 %1777
        %v1779 = vperm.slane %v1008, 2
        %v1780 = vlaneseq
        %v1781 = vshrl.u32 %v1780, 7
        %1783 = vset.pattern.permute.xlu0 %v1781
        %1784 = vperm.xlu0 %1783, %v1779
        %v1785 = vpop.permute.xlu0 %1784
        %v1786 = vlaneseq
        %v1787 = vshrl.u32 %v1786, 7
        %v1788 = vadd.s32 %v1787, 8
        %1789 = vset.pattern.permute.xlu0 %v1788
        %1790 = vperm.xlu0 %1789, %v1779
        %v1791 = vpop.permute.xlu0 %1790
        %v1792 = vperm.slane %v1008, 3
        %v1793 = vlaneseq
        %v1794 = vshrl.u32 %v1793, 7
        %1796 = vset.pattern.permute.xlu0 %v1794
        %1797 = vperm.xlu0 %1796, %v1792
        %v1798 = vpop.permute.xlu0 %1797
        %v1799 = vlaneseq
        %v1800 = vshrl.u32 %v1799, 7
        %v1801 = vadd.s32 %v1800, 8
        %1802 = vset.pattern.permute.xlu0 %v1801
        %1803 = vperm.xlu0 %1802, %v1792
        %v1804 = vpop.permute.xlu0 %1803
        %v1805 = vperm.slane %v1008, 4
        %v1806 = vlaneseq
        %v1807 = vshrl.u32 %v1806, 7
        %1809 = vset.pattern.permute.xlu0 %v1807
        %1810 = vperm.xlu0 %1809, %v1805
        %v1811 = vpop.permute.xlu0 %1810
        %v1812 = vlaneseq
        %v1813 = vshrl.u32 %v1812, 7
        %v1814 = vadd.s32 %v1813, 8
        %1815 = vset.pattern.permute.xlu0 %v1814
        %1816 = vperm.xlu0 %1815, %v1805
        %v1817 = vpop.permute.xlu0 %1816
        %v1818 = vperm.slane %v1008, 5
        %v1819 = vlaneseq
        %v1820 = vshrl.u32 %v1819, 7
        %1822 = vset.pattern.permute.xlu0 %v1820
        %1823 = vperm.xlu0 %1822, %v1818
        %v1824 = vpop.permute.xlu0 %1823
        %v1825 = vlaneseq
        %v1826 = vshrl.u32 %v1825, 7
        %v1827 = vadd.s32 %v1826, 8
        %1828 = vset.pattern.permute.xlu0 %v1827
        %1829 = vperm.xlu0 %1828, %v1818
        %v1830 = vpop.permute.xlu0 %1829
        %v1831 = vperm.slane %v1008, 6
        %v1832 = vlaneseq
        %v1833 = vshrl.u32 %v1832, 7
        %1835 = vset.pattern.permute.xlu0 %v1833
        %1836 = vperm.xlu0 %1835, %v1831
        %v1837 = vpop.permute.xlu0 %1836
        %v1838 = vlaneseq
        %v1839 = vshrl.u32 %v1838, 7
        %v1840 = vadd.s32 %v1839, 8
        %1841 = vset.pattern.permute.xlu0 %v1840
        %1842 = vperm.xlu0 %1841, %v1831
        %v1843 = vpop.permute.xlu0 %1842
        %v1844 = vperm.slane %v1008, 7
        %v1845 = vlaneseq
        %v1846 = vshrl.u32 %v1845, 7
        %1848 = vset.pattern.permute.xlu0 %v1846
        %1849 = vperm.xlu0 %1848, %v1844
        %v1850 = vpop.permute.xlu0 %1849
        %v1851 = vlaneseq
        %v1852 = vshrl.u32 %v1851, 7
        %v1853 = vadd.s32 %v1852, 8
        %1854 = vset.pattern.permute.xlu0 %v1853
        %1855 = vperm.xlu0 %1854, %v1844
        %v1856 = vpop.permute.xlu0 %1855
        %v1873 = vmul.f32 %v1736, %v1759
        %v1874 = vmul.f32 %v1737, %v1765
        %v1875 = vmul.f32 %v1738, %v1772
        %v1876 = vmul.f32 %v1739, %v1778
        %v1877 = vmul.f32 %v1740, %v1785
        %v1878 = vmul.f32 %v1741, %v1791
        %v1879 = vmul.f32 %v1742, %v1798
        %v1880 = vmul.f32 %v1743, %v1804
        %v1881 = vmul.f32 %v1744, %v1811
        %v1882 = vmul.f32 %v1745, %v1817
        %v1883 = vmul.f32 %v1746, %v1824
        %v1884 = vmul.f32 %v1747, %v1830
        %v1885 = vmul.f32 %v1748, %v1837
        %v1886 = vmul.f32 %v1749, %v1843
        %v1887 = vmul.f32 %v1750, %v1850
        %v1888 = vmul.f32 %v1751, %v1856
        %1905 = vset.pattern.permute.xlu0 0
        %1906 = vperm.xlu0 %1905, %v1873
        %v1907 = vpop.permute.xlu0 %1906
        %1908 = vset.pattern.permute.xlu0 0
        %1909 = vperm.xlu0 %1908, %v1874
        %v1910 = vpop.permute.xlu0 %1909
        %1911 = vset.pattern.permute.xlu0 0
        %1912 = vperm.xlu0 %1911, %v1875
        %v1913 = vpop.permute.xlu0 %1912
        %1914 = vset.pattern.permute.xlu0 0
        %1915 = vperm.xlu0 %1914, %v1876
        %v1916 = vpop.permute.xlu0 %1915
        %1917 = vset.pattern.permute.xlu0 0
        %1918 = vperm.xlu0 %1917, %v1877
        %v1919 = vpop.permute.xlu0 %1918
        %1920 = vset.pattern.permute.xlu0 0
        %1921 = vperm.xlu0 %1920, %v1878
        %v1922 = vpop.permute.xlu0 %1921
        %1923 = vset.pattern.permute.xlu0 0
        %1924 = vperm.xlu0 %1923, %v1879
        %v1925 = vpop.permute.xlu0 %1924
        %1926 = vset.pattern.permute.xlu0 0
        %1927 = vperm.xlu0 %1926, %v1880
        %v1928 = vpop.permute.xlu0 %1927
        %1929 = vset.pattern.permute.xlu0 0
        %1930 = vperm.xlu0 %1929, %v1881
        %v1931 = vpop.permute.xlu0 %1930
        %1932 = vset.pattern.permute.xlu0 0
        %1933 = vperm.xlu0 %1932, %v1882
        %v1934 = vpop.permute.xlu0 %1933
        %1935 = vset.pattern.permute.xlu0 0
        %1936 = vperm.xlu0 %1935, %v1883
        %v1937 = vpop.permute.xlu0 %1936
        %1938 = vset.pattern.permute.xlu0 0
        %1939 = vperm.xlu0 %1938, %v1884
        %v1940 = vpop.permute.xlu0 %1939
        %1941 = vset.pattern.permute.xlu0 0
        %1942 = vperm.xlu0 %1941, %v1885
        %v1943 = vpop.permute.xlu0 %1942
        %1944 = vset.pattern.permute.xlu0 0
        %1945 = vperm.xlu0 %1944, %v1886
        %v1946 = vpop.permute.xlu0 %1945
        %1947 = vset.pattern.permute.xlu0 0
        %1948 = vperm.xlu0 %1947, %v1887
        %v1949 = vpop.permute.xlu0 %1948
        %1950 = vset.pattern.permute.xlu0 0
        %1951 = vperm.xlu0 %1950, %v1888
        %v1952 = vpop.permute.xlu0 %1951
        %v1953 = vperm.slane %v1907, %v946
        %v1954 = vperm.slane %v1910, %v1469
        %v1955 = vsel %vm1471, %v1954, %v1953
        %v1956 = vperm.slane %v1913, %v946
        %v1957 = vperm.slane %v1916, %v1469
        %v1958 = vsel %vm1471, %v1957, %v1956
        %v1959 = vperm.slane %v1919, %v946
        %v1960 = vperm.slane %v1922, %v1469
        %v1961 = vsel %vm1471, %v1960, %v1959
        %v1962 = vperm.slane %v1925, %v946
        %v1963 = vperm.slane %v1928, %v1469
        %v1964 = vsel %vm1471, %v1963, %v1962
        %v1965 = vperm.slane %v1931, %v946
        %v1966 = vperm.slane %v1934, %v1469
        %v1967 = vsel %vm1471, %v1966, %v1965
        %v1968 = vperm.slane %v1937, %v946
        %v1969 = vperm.slane %v1940, %v1469
        %v1970 = vsel %vm1471, %v1969, %v1968
        %v1971 = vperm.slane %v1943, %v946
        %v1972 = vperm.slane %v1946, %v1469
        %v1973 = vsel %vm1471, %v1972, %v1971
        %v1974 = vperm.slane %v1949, %v946
        %v1975 = vperm.slane %v1952, %v1469
        %v1976 = vsel %vm1471, %v1975, %v1974
        %v1977 = vsel %vm1494, %v1958, %v1955
        %v1978 = vsel %vm1496, %v1961, %v1977
        %v1979 = vsel %vm1498, %v1964, %v1978
        %v1980 = vsel %vm1500, %v1967, %v1979
        %v1981 = vsel %vm1502, %v1970, %v1980
        %v1982 = vsel %vm1504, %v1973, %v1981
        %v1983 = vsel %vm1506, %v1976, %v1982
        %1985 = vst.msk [vmem:[#allocation3 + $0x8] sm:$0xff] %vm651, %v1983
        %vm1986 = vcmp.lt.s32.totalorder %v946, %v958
        %vm1987 = vmand %vm959, %vm1986
        %vm1988 = vmand %vm960, %vm1986
        %v1989 = vld [vmem:[%s495] sm:$0xff]
        %v1990 = vld [vmem:[%s495 + $0x8] sm:$0xff]
        %v1991 = vsel %vm1987, %v1989, 0.0
        %v1992 = vsel %vm1988, %v1990, 0.0
        %v1993 = vld [vmem:[#allocation2 + $0x48] sm:$0xff]
        %v1994 = vld [vmem:[#allocation2 + $0x68] sm:$0xff]
        %v1995 = vld [vmem:[#allocation2 + $0x50] sm:$0xff]
        %v1996 = vld [vmem:[#allocation2 + $0x70] sm:$0xff]
        %v1997 = vld [vmem:[#allocation2 + $0x40] sm:$0xff]
        %v1998 = vld [vmem:[#allocation2 + $0x58] sm:$0xff]
        %v2000 = vrot.slane %v1997, 1
        %v2001 = vrot.slane %v1997, 2
        %v2002 = vrot.slane %v1997, 3
        %v2003 = vrot.slane %v1997, 4
        %v2004 = vrot.slane %v1997, 5
        %v2005 = vrot.slane %v1997, 6
        %v2006 = vrot.slane %v1997, 7
        %v2007 = vperm.slane %v1997, 0
        %v2008 = vperm.slane %v2000, 0
        %v2009 = vperm.slane %v2001, 0
        %v2010 = vperm.slane %v2002, 0
        %v2011 = vperm.slane %v2003, 0
        %v2012 = vperm.slane %v2004, 0
        %v2013 = vperm.slane %v2005, 0
        %v2014 = vperm.slane %v2006, 0
        %v2023 = vadd.f32 %v2007, %v1993
        %v2024 = vadd.f32 %v2007, %v1994
        %v2025 = vadd.f32 %v2008, %v1993
        %v2026 = vadd.f32 %v2008, %v1994
        %v2027 = vadd.f32 %v2009, %v1993
        %v2028 = vadd.f32 %v2009, %v1994
        %v2029 = vadd.f32 %v2010, %v1993
        %v2030 = vadd.f32 %v2010, %v1994
        %v2031 = vadd.f32 %v2011, %v1993
        %v2032 = vadd.f32 %v2011, %v1994
        %v2033 = vadd.f32 %v2012, %v1993
        %v2034 = vadd.f32 %v2012, %v1994
        %v2035 = vadd.f32 %v2013, %v1993
        %v2036 = vadd.f32 %v2013, %v1994
        %v2037 = vadd.f32 %v2014, %v1993
        %v2038 = vadd.f32 %v2014, %v1994
        %v2039 = vmax.f32 %v2023, 0.0
        %v2040 = vmax.f32 %v2024, 0.0
        %v2041 = vmax.f32 %v2025, 0.0
        %v2042 = vmax.f32 %v2026, 0.0
        %v2043 = vmax.f32 %v2027, 0.0
        %v2044 = vmax.f32 %v2028, 0.0
        %v2045 = vmax.f32 %v2029, 0.0
        %v2046 = vmax.f32 %v2030, 0.0
        %v2047 = vmax.f32 %v2031, 0.0
        %v2048 = vmax.f32 %v2032, 0.0
        %v2049 = vmax.f32 %v2033, 0.0
        %v2050 = vmax.f32 %v2034, 0.0
        %v2051 = vmax.f32 %v2035, 0.0
        %v2052 = vmax.f32 %v2036, 0.0
        %v2053 = vmax.f32 %v2037, 0.0
        %v2054 = vmax.f32 %v2038, 0.0
        %v2055 = vmul.f32 %v2039, %v1072
        %v2056 = vmul.f32 %v2040, %v1072
        %v2057 = vmul.f32 %v2041, %v1072
        %v2058 = vmul.f32 %v2042, %v1072
        %v2059 = vmul.f32 %v2043, %v1072
        %v2060 = vmul.f32 %v2044, %v1072
        %v2061 = vmul.f32 %v2045, %v1072
        %v2062 = vmul.f32 %v2046, %v1072
        %v2063 = vmul.f32 %v2047, %v1072
        %v2064 = vmul.f32 %v2048, %v1072
        %v2065 = vmul.f32 %v2049, %v1072
        %v2066 = vmul.f32 %v2050, %v1072
        %v2067 = vmul.f32 %v2051, %v1072
        %v2068 = vmul.f32 %v2052, %v1072
        %v2069 = vmul.f32 %v2053, %v1072
        %v2070 = vmul.f32 %v2054, %v1072
        %2071 = vadd.xlane.f32.xlu0 %v2055
        %v2072 = vpop.xlane.xlu0 %2071
        %2073 = vadd.xlane.f32.xlu0 %v2056
        %v2074 = vpop.xlane.xlu0 %2073
        %2075 = vadd.xlane.f32.xlu0 %v2057
        %v2076 = vpop.xlane.xlu0 %2075
        %2077 = vadd.xlane.f32.xlu0 %v2058
        %v2078 = vpop.xlane.xlu0 %2077
        %2079 = vadd.xlane.f32.xlu0 %v2059
        %v2080 = vpop.xlane.xlu0 %2079
        %2081 = vadd.xlane.f32.xlu0 %v2060
        %v2082 = vpop.xlane.xlu0 %2081
        %2083 = vadd.xlane.f32.xlu0 %v2061
        %v2084 = vpop.xlane.xlu0 %2083
        %2085 = vadd.xlane.f32.xlu0 %v2062
        %v2086 = vpop.xlane.xlu0 %2085
        %2087 = vadd.xlane.f32.xlu0 %v2063
        %v2088 = vpop.xlane.xlu0 %2087
        %2089 = vadd.xlane.f32.xlu0 %v2064
        %v2090 = vpop.xlane.xlu0 %2089
        %2091 = vadd.xlane.f32.xlu0 %v2065
        %v2092 = vpop.xlane.xlu0 %2091
        %2093 = vadd.xlane.f32.xlu0 %v2066
        %v2094 = vpop.xlane.xlu0 %2093
        %2095 = vadd.xlane.f32.xlu0 %v2067
        %v2096 = vpop.xlane.xlu0 %2095
        %2097 = vadd.xlane.f32.xlu0 %v2068
        %v2098 = vpop.xlane.xlu0 %2097
        %2099 = vadd.xlane.f32.xlu0 %v2069
        %v2100 = vpop.xlane.xlu0 %2099
        %2101 = vadd.xlane.f32.xlu0 %v2070
        %v2102 = vpop.xlane.xlu0 %2101
        %v2104 = vrot.slane %v1998, 1
        %v2105 = vrot.slane %v1998, 2
        %v2106 = vrot.slane %v1998, 3
        %v2107 = vrot.slane %v1998, 4
        %v2108 = vrot.slane %v1998, 5
        %v2109 = vrot.slane %v1998, 6
        %v2110 = vrot.slane %v1998, 7
        %v2111 = vperm.slane %v1998, 0
        %v2112 = vperm.slane %v2104, 0
        %v2113 = vperm.slane %v2105, 0
        %v2114 = vperm.slane %v2106, 0
        %v2115 = vperm.slane %v2107, 0
        %v2116 = vperm.slane %v2108, 0
        %v2117 = vperm.slane %v2109, 0
        %v2118 = vperm.slane %v2110, 0
        %v2127 = vadd.f32 %v2111, %v1995
        %v2128 = vadd.f32 %v2111, %v1996
        %v2129 = vadd.f32 %v2112, %v1995
        %v2130 = vadd.f32 %v2112, %v1996
        %v2131 = vadd.f32 %v2113, %v1995
        %v2132 = vadd.f32 %v2113, %v1996
        %v2133 = vadd.f32 %v2114, %v1995
        %v2134 = vadd.f32 %v2114, %v1996
        %v2135 = vadd.f32 %v2115, %v1995
        %v2136 = vadd.f32 %v2115, %v1996
        %v2137 = vadd.f32 %v2116, %v1995
        %v2138 = vadd.f32 %v2116, %v1996
        %v2139 = vadd.f32 %v2117, %v1995
        %v2140 = vadd.f32 %v2117, %v1996
        %v2141 = vadd.f32 %v2118, %v1995
        %v2142 = vadd.f32 %v2118, %v1996
        %v2143 = vmax.f32 %v2127, 0.0
        %v2144 = vmax.f32 %v2128, 0.0
        %v2145 = vmax.f32 %v2129, 0.0
        %v2146 = vmax.f32 %v2130, 0.0
        %v2147 = vmax.f32 %v2131, 0.0
        %v2148 = vmax.f32 %v2132, 0.0
        %v2149 = vmax.f32 %v2133, 0.0
        %v2150 = vmax.f32 %v2134, 0.0
        %v2151 = vmax.f32 %v2135, 0.0
        %v2152 = vmax.f32 %v2136, 0.0
        %v2153 = vmax.f32 %v2137, 0.0
        %v2154 = vmax.f32 %v2138, 0.0
        %v2155 = vmax.f32 %v2139, 0.0
        %v2156 = vmax.f32 %v2140, 0.0
        %v2157 = vmax.f32 %v2141, 0.0
        %v2158 = vmax.f32 %v2142, 0.0
        %v2159 = vmul.f32 %v2143, %v1179
        %v2160 = vmul.f32 %v2144, %v1179
        %v2161 = vmul.f32 %v2145, %v1179
        %v2162 = vmul.f32 %v2146, %v1179
        %v2163 = vmul.f32 %v2147, %v1179
        %v2164 = vmul.f32 %v2148, %v1179
        %v2165 = vmul.f32 %v2149, %v1179
        %v2166 = vmul.f32 %v2150, %v1179
        %v2167 = vmul.f32 %v2151, %v1179
        %v2168 = vmul.f32 %v2152, %v1179
        %v2169 = vmul.f32 %v2153, %v1179
        %v2170 = vmul.f32 %v2154, %v1179
        %v2171 = vmul.f32 %v2155, %v1179
        %v2172 = vmul.f32 %v2156, %v1179
        %v2173 = vmul.f32 %v2157, %v1179
        %v2174 = vmul.f32 %v2158, %v1179
        %2175 = vadd.xlane.f32.xlu0 %v2159
        %v2176 = vpop.xlane.xlu0 %2175
        %2177 = vadd.xlane.f32.xlu0 %v2160
        %v2178 = vpop.xlane.xlu0 %2177
        %2179 = vadd.xlane.f32.xlu0 %v2161
        %v2180 = vpop.xlane.xlu0 %2179
        %2181 = vadd.xlane.f32.xlu0 %v2162
        %v2182 = vpop.xlane.xlu0 %2181
        %2183 = vadd.xlane.f32.xlu0 %v2163
        %v2184 = vpop.xlane.xlu0 %2183
        %2185 = vadd.xlane.f32.xlu0 %v2164
        %v2186 = vpop.xlane.xlu0 %2185
        %2187 = vadd.xlane.f32.xlu0 %v2165
        %v2188 = vpop.xlane.xlu0 %2187
        %2189 = vadd.xlane.f32.xlu0 %v2166
        %v2190 = vpop.xlane.xlu0 %2189
        %2191 = vadd.xlane.f32.xlu0 %v2167
        %v2192 = vpop.xlane.xlu0 %2191
        %2193 = vadd.xlane.f32.xlu0 %v2168
        %v2194 = vpop.xlane.xlu0 %2193
        %2195 = vadd.xlane.f32.xlu0 %v2169
        %v2196 = vpop.xlane.xlu0 %2195
        %2197 = vadd.xlane.f32.xlu0 %v2170
        %v2198 = vpop.xlane.xlu0 %2197
        %2199 = vadd.xlane.f32.xlu0 %v2171
        %v2200 = vpop.xlane.xlu0 %2199
        %2201 = vadd.xlane.f32.xlu0 %v2172
        %v2202 = vpop.xlane.xlu0 %2201
        %2203 = vadd.xlane.f32.xlu0 %v2173
        %v2204 = vpop.xlane.xlu0 %2203
        %2205 = vadd.xlane.f32.xlu0 %v2174
        %v2206 = vpop.xlane.xlu0 %2205
        %v2207 = vadd.f32 %v2072, %v2176
        %v2208 = vadd.f32 %v2074, %v2178
        %v2209 = vadd.f32 %v2076, %v2180
        %v2210 = vadd.f32 %v2078, %v2182
        %v2211 = vadd.f32 %v2080, %v2184
        %v2212 = vadd.f32 %v2082, %v2186
        %v2213 = vadd.f32 %v2084, %v2188
        %v2214 = vadd.f32 %v2086, %v2190
        %v2215 = vadd.f32 %v2088, %v2192
        %v2216 = vadd.f32 %v2090, %v2194
        %v2217 = vadd.f32 %v2092, %v2196
        %v2218 = vadd.f32 %v2094, %v2198
        %v2219 = vadd.f32 %v2096, %v2200
        %v2220 = vadd.f32 %v2098, %v2202
        %v2221 = vadd.f32 %v2100, %v2204
        %v2222 = vadd.f32 %v2102, %v2206
        %v2223 = vadd.f32 %v2207, %v1249
        %v2224 = vadd.f32 %v2208, %v1249
        %v2225 = vadd.f32 %v2209, %v1249
        %v2226 = vadd.f32 %v2210, %v1249
        %v2227 = vadd.f32 %v2211, %v1249
        %v2228 = vadd.f32 %v2212, %v1249
        %v2229 = vadd.f32 %v2213, %v1249
        %v2230 = vadd.f32 %v2214, %v1249
        %v2231 = vadd.f32 %v2215, %v1249
        %v2232 = vadd.f32 %v2216, %v1249
        %v2233 = vadd.f32 %v2217, %v1249
        %v2234 = vadd.f32 %v2218, %v1249
        %v2235 = vadd.f32 %v2219, %v1249
        %v2236 = vadd.f32 %v2220, %v1249
        %v2237 = vadd.f32 %v2221, %v1249
        %v2238 = vadd.f32 %v2222, %v1249
        %v2240 = vperm.slane %v1991, 0
        %v2241 = vlaneseq
        %v2242 = vshrl.u32 %v2241, 7
        %2244 = vset.pattern.permute.xlu0 %v2242
        %2245 = vperm.xlu0 %2244, %v2240
        %v2246 = vpop.permute.xlu0 %2245
        %v2247 = vlaneseq
        %v2248 = vshrl.u32 %v2247, 7
        %v2249 = vadd.s32 %v2248, 8
        %2250 = vset.pattern.permute.xlu0 %v2249
        %2251 = vperm.xlu0 %2250, %v2240
        %v2252 = vpop.permute.xlu0 %2251
        %v2253 = vperm.slane %v1991, 1
        %v2254 = vlaneseq
        %v2255 = vshrl.u32 %v2254, 7
        %2257 = vset.pattern.permute.xlu0 %v2255
        %2258 = vperm.xlu0 %2257, %v2253
        %v2259 = vpop.permute.xlu0 %2258
        %v2260 = vlaneseq
        %v2261 = vshrl.u32 %v2260, 7
        %v2262 = vadd.s32 %v2261, 8
        %2263 = vset.pattern.permute.xlu0 %v2262
        %2264 = vperm.xlu0 %2263, %v2253
        %v2265 = vpop.permute.xlu0 %2264
        %v2266 = vperm.slane %v1991, 2
        %v2267 = vlaneseq
        %v2268 = vshrl.u32 %v2267, 7
        %2270 = vset.pattern.permute.xlu0 %v2268
        %2271 = vperm.xlu0 %2270, %v2266
        %v2272 = vpop.permute.xlu0 %2271
        %v2273 = vlaneseq
        %v2274 = vshrl.u32 %v2273, 7
        %v2275 = vadd.s32 %v2274, 8
        %2276 = vset.pattern.permute.xlu0 %v2275
        %2277 = vperm.xlu0 %2276, %v2266
        %v2278 = vpop.permute.xlu0 %2277
        %v2279 = vperm.slane %v1991, 3
        %v2280 = vlaneseq
        %v2281 = vshrl.u32 %v2280, 7
        %2283 = vset.pattern.permute.xlu0 %v2281
        %2284 = vperm.xlu0 %2283, %v2279
        %v2285 = vpop.permute.xlu0 %2284
        %v2286 = vlaneseq
        %v2287 = vshrl.u32 %v2286, 7
        %v2288 = vadd.s32 %v2287, 8
        %2289 = vset.pattern.permute.xlu0 %v2288
        %2290 = vperm.xlu0 %2289, %v2279
        %v2291 = vpop.permute.xlu0 %2290
        %v2292 = vperm.slane %v1991, 4
        %v2293 = vlaneseq
        %v2294 = vshrl.u32 %v2293, 7
        %2296 = vset.pattern.permute.xlu0 %v2294
        %2297 = vperm.xlu0 %2296, %v2292
        %v2298 = vpop.permute.xlu0 %2297
        %v2299 = vlaneseq
        %v2300 = vshrl.u32 %v2299, 7
        %v2301 = vadd.s32 %v2300, 8
        %2302 = vset.pattern.permute.xlu0 %v2301
        %2303 = vperm.xlu0 %2302, %v2292
        %v2304 = vpop.permute.xlu0 %2303
        %v2305 = vperm.slane %v1991, 5
        %v2306 = vlaneseq
        %v2307 = vshrl.u32 %v2306, 7
        %2309 = vset.pattern.permute.xlu0 %v2307
        %2310 = vperm.xlu0 %2309, %v2305
        %v2311 = vpop.permute.xlu0 %2310
        %v2312 = vlaneseq
        %v2313 = vshrl.u32 %v2312, 7
        %v2314 = vadd.s32 %v2313, 8
        %2315 = vset.pattern.permute.xlu0 %v2314
        %2316 = vperm.xlu0 %2315, %v2305
        %v2317 = vpop.permute.xlu0 %2316
        %v2318 = vperm.slane %v1991, 6
        %v2319 = vlaneseq
        %v2320 = vshrl.u32 %v2319, 7
        %2322 = vset.pattern.permute.xlu0 %v2320
        %2323 = vperm.xlu0 %2322, %v2318
        %v2324 = vpop.permute.xlu0 %2323
        %v2325 = vlaneseq
        %v2326 = vshrl.u32 %v2325, 7
        %v2327 = vadd.s32 %v2326, 8
        %2328 = vset.pattern.permute.xlu0 %v2327
        %2329 = vperm.xlu0 %2328, %v2318
        %v2330 = vpop.permute.xlu0 %2329
        %v2331 = vperm.slane %v1991, 7
        %v2332 = vlaneseq
        %v2333 = vshrl.u32 %v2332, 7
        %2335 = vset.pattern.permute.xlu0 %v2333
        %2336 = vperm.xlu0 %2335, %v2331
        %v2337 = vpop.permute.xlu0 %2336
        %v2338 = vlaneseq
        %v2339 = vshrl.u32 %v2338, 7
        %v2340 = vadd.s32 %v2339, 8
        %2341 = vset.pattern.permute.xlu0 %v2340
        %2342 = vperm.xlu0 %2341, %v2331
        %v2343 = vpop.permute.xlu0 %2342
        %v2360 = vmul.f32 %v2223, %v2246
        %v2361 = vmul.f32 %v2224, %v2252
        %v2362 = vmul.f32 %v2225, %v2259
        %v2363 = vmul.f32 %v2226, %v2265
        %v2364 = vmul.f32 %v2227, %v2272
        %v2365 = vmul.f32 %v2228, %v2278
        %v2366 = vmul.f32 %v2229, %v2285
        %v2367 = vmul.f32 %v2230, %v2291
        %v2368 = vmul.f32 %v2231, %v2298
        %v2369 = vmul.f32 %v2232, %v2304
        %v2370 = vmul.f32 %v2233, %v2311
        %v2371 = vmul.f32 %v2234, %v2317
        %v2372 = vmul.f32 %v2235, %v2324
        %v2373 = vmul.f32 %v2236, %v2330
        %v2374 = vmul.f32 %v2237, %v2337
        %v2375 = vmul.f32 %v2238, %v2343
        %2392 = vset.pattern.permute.xlu0 0
        %2393 = vperm.xlu0 %2392, %v2360
        %v2394 = vpop.permute.xlu0 %2393
        %2395 = vset.pattern.permute.xlu0 0
        %2396 = vperm.xlu0 %2395, %v2361
        %v2397 = vpop.permute.xlu0 %2396
        %2398 = vset.pattern.permute.xlu0 0
        %2399 = vperm.xlu0 %2398, %v2362
        %v2400 = vpop.permute.xlu0 %2399
        %2401 = vset.pattern.permute.xlu0 0
        %2402 = vperm.xlu0 %2401, %v2363
        %v2403 = vpop.permute.xlu0 %2402
        %2404 = vset.pattern.permute.xlu0 0
        %2405 = vperm.xlu0 %2404, %v2364
        %v2406 = vpop.permute.xlu0 %2405
        %2407 = vset.pattern.permute.xlu0 0
        %2408 = vperm.xlu0 %2407, %v2365
        %v2409 = vpop.permute.xlu0 %2408
        %2410 = vset.pattern.permute.xlu0 0
        %2411 = vperm.xlu0 %2410, %v2366
        %v2412 = vpop.permute.xlu0 %2411
        %2413 = vset.pattern.permute.xlu0 0
        %2414 = vperm.xlu0 %2413, %v2367
        %v2415 = vpop.permute.xlu0 %2414
        %2416 = vset.pattern.permute.xlu0 0
        %2417 = vperm.xlu0 %2416, %v2368
        %v2418 = vpop.permute.xlu0 %2417
        %2419 = vset.pattern.permute.xlu0 0
        %2420 = vperm.xlu0 %2419, %v2369
        %v2421 = vpop.permute.xlu0 %2420
        %2422 = vset.pattern.permute.xlu0 0
        %2423 = vperm.xlu0 %2422, %v2370
        %v2424 = vpop.permute.xlu0 %2423
        %2425 = vset.pattern.permute.xlu0 0
        %2426 = vperm.xlu0 %2425, %v2371
        %v2427 = vpop.permute.xlu0 %2426
        %2428 = vset.pattern.permute.xlu0 0
        %2429 = vperm.xlu0 %2428, %v2372
        %v2430 = vpop.permute.xlu0 %2429
        %2431 = vset.pattern.permute.xlu0 0
        %2432 = vperm.xlu0 %2431, %v2373
        %v2433 = vpop.permute.xlu0 %2432
        %2434 = vset.pattern.permute.xlu0 0
        %2435 = vperm.xlu0 %2434, %v2374
        %v2436 = vpop.permute.xlu0 %2435
        %2437 = vset.pattern.permute.xlu0 0
        %2438 = vperm.xlu0 %2437, %v2375
        %v2439 = vpop.permute.xlu0 %2438
        %v2440 = vperm.slane %v2394, %v946
        %v2441 = vperm.slane %v2397, %v1469
        %v2442 = vsel %vm1471, %v2441, %v2440
        %v2443 = vperm.slane %v2400, %v946
        %v2444 = vperm.slane %v2403, %v1469
        %v2445 = vsel %vm1471, %v2444, %v2443
        %v2446 = vperm.slane %v2406, %v946
        %v2447 = vperm.slane %v2409, %v1469
        %v2448 = vsel %vm1471, %v2447, %v2446
        %v2449 = vperm.slane %v2412, %v946
        %v2450 = vperm.slane %v2415, %v1469
        %v2451 = vsel %vm1471, %v2450, %v2449
        %v2452 = vperm.slane %v2418, %v946
        %v2453 = vperm.slane %v2421, %v1469
        %v2454 = vsel %vm1471, %v2453, %v2452
        %v2455 = vperm.slane %v2424, %v946
        %v2456 = vperm.slane %v2427, %v1469
        %v2457 = vsel %vm1471, %v2456, %v2455
        %v2458 = vperm.slane %v2430, %v946
        %v2459 = vperm.slane %v2433, %v1469
        %v2460 = vsel %vm1471, %v2459, %v2458
        %v2461 = vperm.slane %v2436, %v946
        %v2462 = vperm.slane %v2439, %v1469
        %v2463 = vsel %vm1471, %v2462, %v2461
        %v2464 = vsel %vm1494, %v2445, %v2442
        %v2465 = vsel %vm1496, %v2448, %v2464
        %v2466 = vsel %vm1498, %v2451, %v2465
        %v2467 = vsel %vm1500, %v2454, %v2466
        %v2468 = vsel %vm1502, %v2457, %v2467
        %v2469 = vsel %vm1504, %v2460, %v2468
        %v2470 = vsel %vm1506, %v2463, %v2469
        %2472 = vst.msk [vmem:[#allocation4] sm:$0xff] %vm651, %v2470
        %v2473 = vld [vmem:[#allocation2 + $0x60] sm:$0xff]
        %v2474 = vld [vmem:[#allocation2 + $0x78] sm:$0xff]
        %v2476 = vrot.slane %v2473, 1
        %v2477 = vrot.slane %v2473, 2
        %v2478 = vrot.slane %v2473, 3
        %v2479 = vrot.slane %v2473, 4
        %v2480 = vrot.slane %v2473, 5
        %v2481 = vrot.slane %v2473, 6
        %v2482 = vrot.slane %v2473, 7
        %v2483 = vperm.slane %v2473, 0
        %v2484 = vperm.slane %v2476, 0
        %v2485 = vperm.slane %v2477, 0
        %v2486 = vperm.slane %v2478, 0
        %v2487 = vperm.slane %v2479, 0
        %v2488 = vperm.slane %v2480, 0
        %v2489 = vperm.slane %v2481, 0
        %v2490 = vperm.slane %v2482, 0
        %v2499 = vadd.f32 %v2483, %v1993
        %v2500 = vadd.f32 %v2483, %v1994
        %v2501 = vadd.f32 %v2484, %v1993
        %v2502 = vadd.f32 %v2484, %v1994
        %v2503 = vadd.f32 %v2485, %v1993
        %v2504 = vadd.f32 %v2485, %v1994
        %v2505 = vadd.f32 %v2486, %v1993
        %v2506 = vadd.f32 %v2486, %v1994
        %v2507 = vadd.f32 %v2487, %v1993
        %v2508 = vadd.f32 %v2487, %v1994
        %v2509 = vadd.f32 %v2488, %v1993
        %v2510 = vadd.f32 %v2488, %v1994
        %v2511 = vadd.f32 %v2489, %v1993
        %v2512 = vadd.f32 %v2489, %v1994
        %v2513 = vadd.f32 %v2490, %v1993
        %v2514 = vadd.f32 %v2490, %v1994
        %v2515 = vmax.f32 %v2499, 0.0
        %v2516 = vmax.f32 %v2500, 0.0
        %v2517 = vmax.f32 %v2501, 0.0
        %v2518 = vmax.f32 %v2502, 0.0
        %v2519 = vmax.f32 %v2503, 0.0
        %v2520 = vmax.f32 %v2504, 0.0
        %v2521 = vmax.f32 %v2505, 0.0
        %v2522 = vmax.f32 %v2506, 0.0
        %v2523 = vmax.f32 %v2507, 0.0
        %v2524 = vmax.f32 %v2508, 0.0
        %v2525 = vmax.f32 %v2509, 0.0
        %v2526 = vmax.f32 %v2510, 0.0
        %v2527 = vmax.f32 %v2511, 0.0
        %v2528 = vmax.f32 %v2512, 0.0
        %v2529 = vmax.f32 %v2513, 0.0
        %v2530 = vmax.f32 %v2514, 0.0
        %v2531 = vmul.f32 %v2515, %v1072
        %v2532 = vmul.f32 %v2516, %v1072
        %v2533 = vmul.f32 %v2517, %v1072
        %v2534 = vmul.f32 %v2518, %v1072
        %v2535 = vmul.f32 %v2519, %v1072
        %v2536 = vmul.f32 %v2520, %v1072
        %v2537 = vmul.f32 %v2521, %v1072
        %v2538 = vmul.f32 %v2522, %v1072
        %v2539 = vmul.f32 %v2523, %v1072
        %v2540 = vmul.f32 %v2524, %v1072
        %v2541 = vmul.f32 %v2525, %v1072
        %v2542 = vmul.f32 %v2526, %v1072
        %v2543 = vmul.f32 %v2527, %v1072
        %v2544 = vmul.f32 %v2528, %v1072
        %v2545 = vmul.f32 %v2529, %v1072
        %v2546 = vmul.f32 %v2530, %v1072
        %2547 = vadd.xlane.f32.xlu0 %v2531
        %v2548 = vpop.xlane.xlu0 %2547
        %2549 = vadd.xlane.f32.xlu0 %v2532
        %v2550 = vpop.xlane.xlu0 %2549
        %2551 = vadd.xlane.f32.xlu0 %v2533
        %v2552 = vpop.xlane.xlu0 %2551
        %2553 = vadd.xlane.f32.xlu0 %v2534
        %v2554 = vpop.xlane.xlu0 %2553
        %2555 = vadd.xlane.f32.xlu0 %v2535
        %v2556 = vpop.xlane.xlu0 %2555
        %2557 = vadd.xlane.f32.xlu0 %v2536
        %v2558 = vpop.xlane.xlu0 %2557
        %2559 = vadd.xlane.f32.xlu0 %v2537
        %v2560 = vpop.xlane.xlu0 %2559
        %2561 = vadd.xlane.f32.xlu0 %v2538
        %v2562 = vpop.xlane.xlu0 %2561
        %2563 = vadd.xlane.f32.xlu0 %v2539
        %v2564 = vpop.xlane.xlu0 %2563
        %2565 = vadd.xlane.f32.xlu0 %v2540
        %v2566 = vpop.xlane.xlu0 %2565
        %2567 = vadd.xlane.f32.xlu0 %v2541
        %v2568 = vpop.xlane.xlu0 %2567
        %2569 = vadd.xlane.f32.xlu0 %v2542
        %v2570 = vpop.xlane.xlu0 %2569
        %2571 = vadd.xlane.f32.xlu0 %v2543
        %v2572 = vpop.xlane.xlu0 %2571
        %2573 = vadd.xlane.f32.xlu0 %v2544
        %v2574 = vpop.xlane.xlu0 %2573
        %2575 = vadd.xlane.f32.xlu0 %v2545
        %v2576 = vpop.xlane.xlu0 %2575
        %2577 = vadd.xlane.f32.xlu0 %v2546
        %v2578 = vpop.xlane.xlu0 %2577
        %v2580 = vrot.slane %v2474, 1
        %v2581 = vrot.slane %v2474, 2
        %v2582 = vrot.slane %v2474, 3
        %v2583 = vrot.slane %v2474, 4
        %v2584 = vrot.slane %v2474, 5
        %v2585 = vrot.slane %v2474, 6
        %v2586 = vrot.slane %v2474, 7
        %v2587 = vperm.slane %v2474, 0
        %v2588 = vperm.slane %v2580, 0
        %v2589 = vperm.slane %v2581, 0
        %v2590 = vperm.slane %v2582, 0
        %v2591 = vperm.slane %v2583, 0
        %v2592 = vperm.slane %v2584, 0
        %v2593 = vperm.slane %v2585, 0
        %v2594 = vperm.slane %v2586, 0
        %v2603 = vadd.f32 %v2587, %v1995
        %v2604 = vadd.f32 %v2587, %v1996
        %v2605 = vadd.f32 %v2588, %v1995
        %v2606 = vadd.f32 %v2588, %v1996
        %v2607 = vadd.f32 %v2589, %v1995
        %v2608 = vadd.f32 %v2589, %v1996
        %v2609 = vadd.f32 %v2590, %v1995
        %v2610 = vadd.f32 %v2590, %v1996
        %v2611 = vadd.f32 %v2591, %v1995
        %v2612 = vadd.f32 %v2591, %v1996
        %v2613 = vadd.f32 %v2592, %v1995
        %v2614 = vadd.f32 %v2592, %v1996
        %v2615 = vadd.f32 %v2593, %v1995
        %v2616 = vadd.f32 %v2593, %v1996
        %v2617 = vadd.f32 %v2594, %v1995
        %v2618 = vadd.f32 %v2594, %v1996
        %v2619 = vmax.f32 %v2603, 0.0
        %v2620 = vmax.f32 %v2604, 0.0
        %v2621 = vmax.f32 %v2605, 0.0
        %v2622 = vmax.f32 %v2606, 0.0
        %v2623 = vmax.f32 %v2607, 0.0
        %v2624 = vmax.f32 %v2608, 0.0
        %v2625 = vmax.f32 %v2609, 0.0
        %v2626 = vmax.f32 %v2610, 0.0
        %v2627 = vmax.f32 %v2611, 0.0
        %v2628 = vmax.f32 %v2612, 0.0
        %v2629 = vmax.f32 %v2613, 0.0
        %v2630 = vmax.f32 %v2614, 0.0
        %v2631 = vmax.f32 %v2615, 0.0
        %v2632 = vmax.f32 %v2616, 0.0
        %v2633 = vmax.f32 %v2617, 0.0
        %v2634 = vmax.f32 %v2618, 0.0
        %v2635 = vmul.f32 %v2619, %v1179
        %v2636 = vmul.f32 %v2620, %v1179
        %v2637 = vmul.f32 %v2621, %v1179
        %v2638 = vmul.f32 %v2622, %v1179
        %v2639 = vmul.f32 %v2623, %v1179
        %v2640 = vmul.f32 %v2624, %v1179
        %v2641 = vmul.f32 %v2625, %v1179
        %v2642 = vmul.f32 %v2626, %v1179
        %v2643 = vmul.f32 %v2627, %v1179
        %v2644 = vmul.f32 %v2628, %v1179
        %v2645 = vmul.f32 %v2629, %v1179
        %v2646 = vmul.f32 %v2630, %v1179
        %v2647 = vmul.f32 %v2631, %v1179
        %v2648 = vmul.f32 %v2632, %v1179
        %v2649 = vmul.f32 %v2633, %v1179
        %v2650 = vmul.f32 %v2634, %v1179
        %2651 = vadd.xlane.f32.xlu0 %v2635
        %v2652 = vpop.xlane.xlu0 %2651
        %2653 = vadd.xlane.f32.xlu0 %v2636
        %v2654 = vpop.xlane.xlu0 %2653
        %2655 = vadd.xlane.f32.xlu0 %v2637
        %v2656 = vpop.xlane.xlu0 %2655
        %2657 = vadd.xlane.f32.xlu0 %v2638
        %v2658 = vpop.xlane.xlu0 %2657
        %2659 = vadd.xlane.f32.xlu0 %v2639
        %v2660 = vpop.xlane.xlu0 %2659
        %2661 = vadd.xlane.f32.xlu0 %v2640
        %v2662 = vpop.xlane.xlu0 %2661
        %2663 = vadd.xlane.f32.xlu0 %v2641
        %v2664 = vpop.xlane.xlu0 %2663
        %2665 = vadd.xlane.f32.xlu0 %v2642
        %v2666 = vpop.xlane.xlu0 %2665
        %2667 = vadd.xlane.f32.xlu0 %v2643
        %v2668 = vpop.xlane.xlu0 %2667
        %2669 = vadd.xlane.f32.xlu0 %v2644
        %v2670 = vpop.xlane.xlu0 %2669
        %2671 = vadd.xlane.f32.xlu0 %v2645
        %v2672 = vpop.xlane.xlu0 %2671
        %2673 = vadd.xlane.f32.xlu0 %v2646
        %v2674 = vpop.xlane.xlu0 %2673
        %2675 = vadd.xlane.f32.xlu0 %v2647
        %v2676 = vpop.xlane.xlu0 %2675
        %2677 = vadd.xlane.f32.xlu0 %v2648
        %v2678 = vpop.xlane.xlu0 %2677
        %2679 = vadd.xlane.f32.xlu0 %v2649
        %v2680 = vpop.xlane.xlu0 %2679
        %2681 = vadd.xlane.f32.xlu0 %v2650
        %v2682 = vpop.xlane.xlu0 %2681
        %v2683 = vadd.f32 %v2548, %v2652
        %v2684 = vadd.f32 %v2550, %v2654
        %v2685 = vadd.f32 %v2552, %v2656
        %v2686 = vadd.f32 %v2554, %v2658
        %v2687 = vadd.f32 %v2556, %v2660
        %v2688 = vadd.f32 %v2558, %v2662
        %v2689 = vadd.f32 %v2560, %v2664
        %v2690 = vadd.f32 %v2562, %v2666
        %v2691 = vadd.f32 %v2564, %v2668
        %v2692 = vadd.f32 %v2566, %v2670
        %v2693 = vadd.f32 %v2568, %v2672
        %v2694 = vadd.f32 %v2570, %v2674
        %v2695 = vadd.f32 %v2572, %v2676
        %v2696 = vadd.f32 %v2574, %v2678
        %v2697 = vadd.f32 %v2576, %v2680
        %v2698 = vadd.f32 %v2578, %v2682
        %v2699 = vadd.f32 %v2683, %v1249
        %v2700 = vadd.f32 %v2684, %v1249
        %v2701 = vadd.f32 %v2685, %v1249
        %v2702 = vadd.f32 %v2686, %v1249
        %v2703 = vadd.f32 %v2687, %v1249
        %v2704 = vadd.f32 %v2688, %v1249
        %v2705 = vadd.f32 %v2689, %v1249
        %v2706 = vadd.f32 %v2690, %v1249
        %v2707 = vadd.f32 %v2691, %v1249
        %v2708 = vadd.f32 %v2692, %v1249
        %v2709 = vadd.f32 %v2693, %v1249
        %v2710 = vadd.f32 %v2694, %v1249
        %v2711 = vadd.f32 %v2695, %v1249
        %v2712 = vadd.f32 %v2696, %v1249
        %v2713 = vadd.f32 %v2697, %v1249
        %v2714 = vadd.f32 %v2698, %v1249
        %v2716 = vperm.slane %v1992, 0
        %v2717 = vlaneseq
        %v2718 = vshrl.u32 %v2717, 7
        %2720 = vset.pattern.permute.xlu0 %v2718
        %2721 = vperm.xlu0 %2720, %v2716
        %v2722 = vpop.permute.xlu0 %2721
        %v2723 = vlaneseq
        %v2724 = vshrl.u32 %v2723, 7
        %v2725 = vadd.s32 %v2724, 8
        %2726 = vset.pattern.permute.xlu0 %v2725
        %2727 = vperm.xlu0 %2726, %v2716
        %v2728 = vpop.permute.xlu0 %2727
        %v2729 = vperm.slane %v1992, 1
        %v2730 = vlaneseq
        %v2731 = vshrl.u32 %v2730, 7
        %2733 = vset.pattern.permute.xlu0 %v2731
        %2734 = vperm.xlu0 %2733, %v2729
        %v2735 = vpop.permute.xlu0 %2734
        %v2736 = vlaneseq
        %v2737 = vshrl.u32 %v2736, 7
        %v2738 = vadd.s32 %v2737, 8
        %2739 = vset.pattern.permute.xlu0 %v2738
        %2740 = vperm.xlu0 %2739, %v2729
        %v2741 = vpop.permute.xlu0 %2740
        %v2742 = vperm.slane %v1992, 2
        %v2743 = vlaneseq
        %v2744 = vshrl.u32 %v2743, 7
        %2746 = vset.pattern.permute.xlu0 %v2744
        %2747 = vperm.xlu0 %2746, %v2742
        %v2748 = vpop.permute.xlu0 %2747
        %v2749 = vlaneseq
        %v2750 = vshrl.u32 %v2749, 7
        %v2751 = vadd.s32 %v2750, 8
        %2752 = vset.pattern.permute.xlu0 %v2751
        %2753 = vperm.xlu0 %2752, %v2742
        %v2754 = vpop.permute.xlu0 %2753
        %v2755 = vperm.slane %v1992, 3
        %v2756 = vlaneseq
        %v2757 = vshrl.u32 %v2756, 7
        %2759 = vset.pattern.permute.xlu0 %v2757
        %2760 = vperm.xlu0 %2759, %v2755
        %v2761 = vpop.permute.xlu0 %2760
        %v2762 = vlaneseq
        %v2763 = vshrl.u32 %v2762, 7
        %v2764 = vadd.s32 %v2763, 8
        %2765 = vset.pattern.permute.xlu0 %v2764
        %2766 = vperm.xlu0 %2765, %v2755
        %v2767 = vpop.permute.xlu0 %2766
        %v2768 = vperm.slane %v1992, 4
        %v2769 = vlaneseq
        %v2770 = vshrl.u32 %v2769, 7
        %2772 = vset.pattern.permute.xlu0 %v2770
        %2773 = vperm.xlu0 %2772, %v2768
        %v2774 = vpop.permute.xlu0 %2773
        %v2775 = vlaneseq
        %v2776 = vshrl.u32 %v2775, 7
        %v2777 = vadd.s32 %v2776, 8
        %2778 = vset.pattern.permute.xlu0 %v2777
        %2779 = vperm.xlu0 %2778, %v2768
        %v2780 = vpop.permute.xlu0 %2779
        %v2781 = vperm.slane %v1992, 5
        %v2782 = vlaneseq
        %v2783 = vshrl.u32 %v2782, 7
        %2785 = vset.pattern.permute.xlu0 %v2783
        %2786 = vperm.xlu0 %2785, %v2781
        %v2787 = vpop.permute.xlu0 %2786
        %v2788 = vlaneseq
        %v2789 = vshrl.u32 %v2788, 7
        %v2790 = vadd.s32 %v2789, 8
        %2791 = vset.pattern.permute.xlu0 %v2790
        %2792 = vperm.xlu0 %2791, %v2781
        %v2793 = vpop.permute.xlu0 %2792
        %v2794 = vperm.slane %v1992, 6
        %v2795 = vlaneseq
        %v2796 = vshrl.u32 %v2795, 7
        %2798 = vset.pattern.permute.xlu0 %v2796
        %2799 = vperm.xlu0 %2798, %v2794
        %v2800 = vpop.permute.xlu0 %2799
        %v2801 = vlaneseq
        %v2802 = vshrl.u32 %v2801, 7
        %v2803 = vadd.s32 %v2802, 8
        %2804 = vset.pattern.permute.xlu0 %v2803
        %2805 = vperm.xlu0 %2804, %v2794
        %v2806 = vpop.permute.xlu0 %2805
        %v2807 = vperm.slane %v1992, 7
        %v2808 = vlaneseq
        %v2809 = vshrl.u32 %v2808, 7
        %2811 = vset.pattern.permute.xlu0 %v2809
        %2812 = vperm.xlu0 %2811, %v2807
        %v2813 = vpop.permute.xlu0 %2812
        %v2814 = vlaneseq
        %v2815 = vshrl.u32 %v2814, 7
        %v2816 = vadd.s32 %v2815, 8
        %2817 = vset.pattern.permute.xlu0 %v2816
        %2818 = vperm.xlu0 %2817, %v2807
        %v2819 = vpop.permute.xlu0 %2818
        %v2836 = vmul.f32 %v2699, %v2722
        %v2837 = vmul.f32 %v2700, %v2728
        %v2838 = vmul.f32 %v2701, %v2735
        %v2839 = vmul.f32 %v2702, %v2741
        %v2840 = vmul.f32 %v2703, %v2748
        %v2841 = vmul.f32 %v2704, %v2754
        %v2842 = vmul.f32 %v2705, %v2761
        %v2843 = vmul.f32 %v2706, %v2767
        %v2844 = vmul.f32 %v2707, %v2774
        %v2845 = vmul.f32 %v2708, %v2780
        %v2846 = vmul.f32 %v2709, %v2787
        %v2847 = vmul.f32 %v2710, %v2793
        %v2848 = vmul.f32 %v2711, %v2800
        %v2849 = vmul.f32 %v2712, %v2806
        %v2850 = vmul.f32 %v2713, %v2813
        %v2851 = vmul.f32 %v2714, %v2819
        %2868 = vset.pattern.permute.xlu0 0
        %2869 = vperm.xlu0 %2868, %v2836
        %v2870 = vpop.permute.xlu0 %2869
        %2871 = vset.pattern.permute.xlu0 0
        %2872 = vperm.xlu0 %2871, %v2837
        %v2873 = vpop.permute.xlu0 %2872
        %2874 = vset.pattern.permute.xlu0 0
        %2875 = vperm.xlu0 %2874, %v2838
        %v2876 = vpop.permute.xlu0 %2875
        %2877 = vset.pattern.permute.xlu0 0
        %2878 = vperm.xlu0 %2877, %v2839
        %v2879 = vpop.permute.xlu0 %2878
        %2880 = vset.pattern.permute.xlu0 0
        %2881 = vperm.xlu0 %2880, %v2840
        %v2882 = vpop.permute.xlu0 %2881
        %2883 = vset.pattern.permute.xlu0 0
        %2884 = vperm.xlu0 %2883, %v2841
        %v2885 = vpop.permute.xlu0 %2884
        %2886 = vset.pattern.permute.xlu0 0
        %2887 = vperm.xlu0 %2886, %v2842
        %v2888 = vpop.permute.xlu0 %2887
        %2889 = vset.pattern.permute.xlu0 0
        %2890 = vperm.xlu0 %2889, %v2843
        %v2891 = vpop.permute.xlu0 %2890
        %2892 = vset.pattern.permute.xlu0 0
        %2893 = vperm.xlu0 %2892, %v2844
        %v2894 = vpop.permute.xlu0 %2893
        %2895 = vset.pattern.permute.xlu0 0
        %2896 = vperm.xlu0 %2895, %v2845
        %v2897 = vpop.permute.xlu0 %2896
        %2898 = vset.pattern.permute.xlu0 0
        %2899 = vperm.xlu0 %2898, %v2846
        %v2900 = vpop.permute.xlu0 %2899
        %2901 = vset.pattern.permute.xlu0 0
        %2902 = vperm.xlu0 %2901, %v2847
        %v2903 = vpop.permute.xlu0 %2902
        %2904 = vset.pattern.permute.xlu0 0
        %2905 = vperm.xlu0 %2904, %v2848
        %v2906 = vpop.permute.xlu0 %2905
        %2907 = vset.pattern.permute.xlu0 0
        %2908 = vperm.xlu0 %2907, %v2849
        %v2909 = vpop.permute.xlu0 %2908
        %2910 = vset.pattern.permute.xlu0 0
        %2911 = vperm.xlu0 %2910, %v2850
        %v2912 = vpop.permute.xlu0 %2911
        %2913 = vset.pattern.permute.xlu0 0
        %2914 = vperm.xlu0 %2913, %v2851
        %v2915 = vpop.permute.xlu0 %2914
        %v2916 = vperm.slane %v2870, %v946
        %v2917 = vperm.slane %v2873, %v1469
        %v2918 = vsel %vm1471, %v2917, %v2916
        %v2919 = vperm.slane %v2876, %v946
        %v2920 = vperm.slane %v2879, %v1469
        %v2921 = vsel %vm1471, %v2920, %v2919
        %v2922 = vperm.slane %v2882, %v946
        %v2923 = vperm.slane %v2885, %v1469
        %v2924 = vsel %vm1471, %v2923, %v2922
        %v2925 = vperm.slane %v2888, %v946
        %v2926 = vperm.slane %v2891, %v1469
        %v2927 = vsel %vm1471, %v2926, %v2925
        %v2928 = vperm.slane %v2894, %v946
        %v2929 = vperm.slane %v2897, %v1469
        %v2930 = vsel %vm1471, %v2929, %v2928
        %v2931 = vperm.slane %v2900, %v946
        %v2932 = vperm.slane %v2903, %v1469
        %v2933 = vsel %vm1471, %v2932, %v2931
        %v2934 = vperm.slane %v2906, %v946
        %v2935 = vperm.slane %v2909, %v1469
        %v2936 = vsel %vm1471, %v2935, %v2934
        %v2937 = vperm.slane %v2912, %v946
        %v2938 = vperm.slane %v2915, %v1469
        %v2939 = vsel %vm1471, %v2938, %v2937
        %v2940 = vsel %vm1494, %v2921, %v2918
        %v2941 = vsel %vm1496, %v2924, %v2940
        %v2942 = vsel %vm1498, %v2927, %v2941
        %v2943 = vsel %vm1500, %v2930, %v2942
        %v2944 = vsel %vm1502, %v2933, %v2943
        %v2945 = vsel %vm1504, %v2936, %v2944
        %v2946 = vsel %vm1506, %v2939, %v2945
        %2948 = vst.msk [vmem:[#allocation4 + $0x8] sm:$0xff] %vm651, %v2946
        %s2949 = sadd.s32 %s554, 1
        %s2950 = sld [smem:[#allocation6 + %s2949]]
        %s2951 = sld [smem:[#allocation7 + %s2949]]
        %v2952 = vstv %s2950
        %vm2953 = vcmp.lt.s32.totalorder %v943, %v2952
        %vm2954 = vcmp.lt.s32.totalorder %v944, %v2952
        %v2955 = vsel %vm2953, 1, 0
        %v2956 = vsel %vm2954, 1, 0
        %vm2957 = vcmp.eq.s32.totalorder %v2955, 1
        %vm2958 = vcmp.eq.s32.totalorder %v2956, 1
        %v2959 = vsel %vm2957, %v706, 0.0
        %v2960 = vsel %vm2958, %v709, 0.0
        %v2961 = vstv %s2951
        %vm2962 = vcmp.lt.s32.totalorder %v943, %v2961
        %vm2963 = vcmp.lt.s32.totalorder %v944, %v2961
        %v2964 = vsel %vm2962, 1, 0
        %v2965 = vsel %vm2963, 1, 0
        %vm2966 = vcmp.eq.s32.totalorder %v2964, 1
        %vm2967 = vcmp.eq.s32.totalorder %v2965, 1
        %v2968 = vsel %vm2966, %v712, 0.0
        %v2969 = vsel %vm2967, %v715, 0.0
        %v2971 = vsel %vm651, %v2959, 0
        %v2974 = vsel %vm651, %v2960, 0
        %v2977 = vsel %vm651, %v2968, 0
        %v2980 = vsel %vm651, %v2969, 0
        %2982 = vmatpush.xpose.msra.mxu0 0.0
        %2983 = vmatpush.xpose.msra.mxu0 0.0
        %2984 = vmatpush.xpose.msra.mxu0 0.0
        %2985 = vmatpush.xpose.msra.mxu0 0.0
        %2986 = vmatpush.xpose.msra.mxu0 0.0
        %2987 = vmatpush.xpose.msra.mxu0 0.0
        %2988 = vmatpush.xpose.msra.mxu0 0.0
        %2989 = vmatpush.xpose.msra.mxu0 0.0
        %2990 = vmatpush.xpose.msra.mxu0 0.0
        %2991 = vmatpush.xpose.msra.mxu0 0.0
        %2992 = vmatpush.xpose.msra.mxu0 0.0
        %2993 = vmatpush.xpose.msra.mxu0 0.0
        %2994 = vmatpush.xpose.msra.mxu0 0.0
        %2995 = vmatpush.xpose.msra.mxu0 0.0
        %2996 = vmatpush.xpose.msra.mxu0 %v2980
        %2997 = vmatpush.xpose.msra.mxu0 %v2977
        %2998 = vmatmul.f32.gmra.mxu0 %v2971
        %v2999 = vpop.f32.mrf.mxu0
        %v3000 = vadd.f32 0.0, %v2999
        %3001 = vmatmul.f32.gmra.mxu0 %v2974
        %v3002 = vpop.f32.mrf.mxu0
        %v3003 = vadd.f32 0.0, %v3002
        %3004 = vdwg.mxu0
        %vm3005 = vcmp.lt.s32.totalorder %v946, %v2952
        %vm3006 = vmand %vm2953, %vm3005
        %vm3007 = vmand %vm2954, %vm3005
        %s3008 = scalar_lea.vmem %s485, 16 [#allocation12]
        %v3009 = vld [vmem:[%s3008] sm:$0xff]
        %v3010 = vld [vmem:[%s3008 + $0x8] sm:$0xff]
        %v3011 = vsel %vm3006, %v3009, 0.0
        %v3012 = vsel %vm3007, %v3010, 0.0
        %v3013 = vld [vmem:[#allocation2 + $0x88] sm:$0xff]
        %v3014 = vld [vmem:[#allocation2 + $0xa8] sm:$0xff]
        %v3015 = vld [vmem:[#allocation2 + $0x90] sm:$0xff]
        %v3016 = vld [vmem:[#allocation2 + $0xb0] sm:$0xff]
        %v3017 = vld [vmem:[#allocation2 + $0x80] sm:$0xff]
        %v3018 = vld [vmem:[#allocation2 + $0x98] sm:$0xff]
        %v3020 = vrot.slane %v3017, 1
        %v3021 = vrot.slane %v3017, 2
        %v3022 = vrot.slane %v3017, 3
        %v3023 = vrot.slane %v3017, 4
        %v3024 = vrot.slane %v3017, 5
        %v3025 = vrot.slane %v3017, 6
        %v3026 = vrot.slane %v3017, 7
        %v3027 = vperm.slane %v3017, 0
        %v3028 = vperm.slane %v3020, 0
        %v3029 = vperm.slane %v3021, 0
        %v3030 = vperm.slane %v3022, 0
        %v3031 = vperm.slane %v3023, 0
        %v3032 = vperm.slane %v3024, 0
        %v3033 = vperm.slane %v3025, 0
        %v3034 = vperm.slane %v3026, 0
        %v3043 = vadd.f32 %v3027, %v3013
        %v3044 = vadd.f32 %v3027, %v3014
        %v3045 = vadd.f32 %v3028, %v3013
        %v3046 = vadd.f32 %v3028, %v3014
        %v3047 = vadd.f32 %v3029, %v3013
        %v3048 = vadd.f32 %v3029, %v3014
        %v3049 = vadd.f32 %v3030, %v3013
        %v3050 = vadd.f32 %v3030, %v3014
        %v3051 = vadd.f32 %v3031, %v3013
        %v3052 = vadd.f32 %v3031, %v3014
        %v3053 = vadd.f32 %v3032, %v3013
        %v3054 = vadd.f32 %v3032, %v3014
        %v3055 = vadd.f32 %v3033, %v3013
        %v3056 = vadd.f32 %v3033, %v3014
        %v3057 = vadd.f32 %v3034, %v3013
        %v3058 = vadd.f32 %v3034, %v3014
        %v3059 = vmax.f32 %v3043, 0.0
        %v3060 = vmax.f32 %v3044, 0.0
        %v3061 = vmax.f32 %v3045, 0.0
        %v3062 = vmax.f32 %v3046, 0.0
        %v3063 = vmax.f32 %v3047, 0.0
        %v3064 = vmax.f32 %v3048, 0.0
        %v3065 = vmax.f32 %v3049, 0.0
        %v3066 = vmax.f32 %v3050, 0.0
        %v3067 = vmax.f32 %v3051, 0.0
        %v3068 = vmax.f32 %v3052, 0.0
        %v3069 = vmax.f32 %v3053, 0.0
        %v3070 = vmax.f32 %v3054, 0.0
        %v3071 = vmax.f32 %v3055, 0.0
        %v3072 = vmax.f32 %v3056, 0.0
        %v3073 = vmax.f32 %v3057, 0.0
        %v3074 = vmax.f32 %v3058, 0.0
        %v3075 = vmul.f32 %v3059, %v1072
        %v3076 = vmul.f32 %v3060, %v1072
        %v3077 = vmul.f32 %v3061, %v1072
        %v3078 = vmul.f32 %v3062, %v1072
        %v3079 = vmul.f32 %v3063, %v1072
        %v3080 = vmul.f32 %v3064, %v1072
        %v3081 = vmul.f32 %v3065, %v1072
        %v3082 = vmul.f32 %v3066, %v1072
        %v3083 = vmul.f32 %v3067, %v1072
        %v3084 = vmul.f32 %v3068, %v1072
        %v3085 = vmul.f32 %v3069, %v1072
        %v3086 = vmul.f32 %v3070, %v1072
        %v3087 = vmul.f32 %v3071, %v1072
        %v3088 = vmul.f32 %v3072, %v1072
        %v3089 = vmul.f32 %v3073, %v1072
        %v3090 = vmul.f32 %v3074, %v1072
        %3091 = vadd.xlane.f32.xlu0 %v3075
        %v3092 = vpop.xlane.xlu0 %3091
        %3093 = vadd.xlane.f32.xlu0 %v3076
        %v3094 = vpop.xlane.xlu0 %3093
        %3095 = vadd.xlane.f32.xlu0 %v3077
        %v3096 = vpop.xlane.xlu0 %3095
        %3097 = vadd.xlane.f32.xlu0 %v3078
        %v3098 = vpop.xlane.xlu0 %3097
        %3099 = vadd.xlane.f32.xlu0 %v3079
        %v3100 = vpop.xlane.xlu0 %3099
        %3101 = vadd.xlane.f32.xlu0 %v3080
        %v3102 = vpop.xlane.xlu0 %3101
        %3103 = vadd.xlane.f32.xlu0 %v3081
        %v3104 = vpop.xlane.xlu0 %3103
        %3105 = vadd.xlane.f32.xlu0 %v3082
        %v3106 = vpop.xlane.xlu0 %3105
        %3107 = vadd.xlane.f32.xlu0 %v3083
        %v3108 = vpop.xlane.xlu0 %3107
        %3109 = vadd.xlane.f32.xlu0 %v3084
        %v3110 = vpop.xlane.xlu0 %3109
        %3111 = vadd.xlane.f32.xlu0 %v3085
        %v3112 = vpop.xlane.xlu0 %3111
        %3113 = vadd.xlane.f32.xlu0 %v3086
        %v3114 = vpop.xlane.xlu0 %3113
        %3115 = vadd.xlane.f32.xlu0 %v3087
        %v3116 = vpop.xlane.xlu0 %3115
        %3117 = vadd.xlane.f32.xlu0 %v3088
        %v3118 = vpop.xlane.xlu0 %3117
        %3119 = vadd.xlane.f32.xlu0 %v3089
        %v3120 = vpop.xlane.xlu0 %3119
        %3121 = vadd.xlane.f32.xlu0 %v3090
        %v3122 = vpop.xlane.xlu0 %3121
        %v3124 = vrot.slane %v3018, 1
        %v3125 = vrot.slane %v3018, 2
        %v3126 = vrot.slane %v3018, 3
        %v3127 = vrot.slane %v3018, 4
        %v3128 = vrot.slane %v3018, 5
        %v3129 = vrot.slane %v3018, 6
        %v3130 = vrot.slane %v3018, 7
        %v3131 = vperm.slane %v3018, 0
        %v3132 = vperm.slane %v3124, 0
        %v3133 = vperm.slane %v3125, 0
        %v3134 = vperm.slane %v3126, 0
        %v3135 = vperm.slane %v3127, 0
        %v3136 = vperm.slane %v3128, 0
        %v3137 = vperm.slane %v3129, 0
        %v3138 = vperm.slane %v3130, 0
        %v3147 = vadd.f32 %v3131, %v3015
        %v3148 = vadd.f32 %v3131, %v3016
        %v3149 = vadd.f32 %v3132, %v3015
        %v3150 = vadd.f32 %v3132, %v3016
        %v3151 = vadd.f32 %v3133, %v3015
        %v3152 = vadd.f32 %v3133, %v3016
        %v3153 = vadd.f32 %v3134, %v3015
        %v3154 = vadd.f32 %v3134, %v3016
        %v3155 = vadd.f32 %v3135, %v3015
        %v3156 = vadd.f32 %v3135, %v3016
        %v3157 = vadd.f32 %v3136, %v3015
        %v3158 = vadd.f32 %v3136, %v3016
        %v3159 = vadd.f32 %v3137, %v3015
        %v3160 = vadd.f32 %v3137, %v3016
        %v3161 = vadd.f32 %v3138, %v3015
        %v3162 = vadd.f32 %v3138, %v3016
        %v3163 = vmax.f32 %v3147, 0.0
        %v3164 = vmax.f32 %v3148, 0.0
        %v3165 = vmax.f32 %v3149, 0.0
        %v3166 = vmax.f32 %v3150, 0.0
        %v3167 = vmax.f32 %v3151, 0.0
        %v3168 = vmax.f32 %v3152, 0.0
        %v3169 = vmax.f32 %v3153, 0.0
        %v3170 = vmax.f32 %v3154, 0.0
        %v3171 = vmax.f32 %v3155, 0.0
        %v3172 = vmax.f32 %v3156, 0.0
        %v3173 = vmax.f32 %v3157, 0.0
        %v3174 = vmax.f32 %v3158, 0.0
        %v3175 = vmax.f32 %v3159, 0.0
        %v3176 = vmax.f32 %v3160, 0.0
        %v3177 = vmax.f32 %v3161, 0.0
        %v3178 = vmax.f32 %v3162, 0.0
        %v3179 = vmul.f32 %v3163, %v1179
        %v3180 = vmul.f32 %v3164, %v1179
        %v3181 = vmul.f32 %v3165, %v1179
        %v3182 = vmul.f32 %v3166, %v1179
        %v3183 = vmul.f32 %v3167, %v1179
        %v3184 = vmul.f32 %v3168, %v1179
        %v3185 = vmul.f32 %v3169, %v1179
        %v3186 = vmul.f32 %v3170, %v1179
        %v3187 = vmul.f32 %v3171, %v1179
        %v3188 = vmul.f32 %v3172, %v1179
        %v3189 = vmul.f32 %v3173, %v1179
        %v3190 = vmul.f32 %v3174, %v1179
        %v3191 = vmul.f32 %v3175, %v1179
        %v3192 = vmul.f32 %v3176, %v1179
        %v3193 = vmul.f32 %v3177, %v1179
        %v3194 = vmul.f32 %v3178, %v1179
        %3195 = vadd.xlane.f32.xlu0 %v3179
        %v3196 = vpop.xlane.xlu0 %3195
        %3197 = vadd.xlane.f32.xlu0 %v3180
        %v3198 = vpop.xlane.xlu0 %3197
        %3199 = vadd.xlane.f32.xlu0 %v3181
        %v3200 = vpop.xlane.xlu0 %3199
        %3201 = vadd.xlane.f32.xlu0 %v3182
        %v3202 = vpop.xlane.xlu0 %3201
        %3203 = vadd.xlane.f32.xlu0 %v3183
        %v3204 = vpop.xlane.xlu0 %3203
        %3205 = vadd.xlane.f32.xlu0 %v3184
        %v3206 = vpop.xlane.xlu0 %3205
        %3207 = vadd.xlane.f32.xlu0 %v3185
        %v3208 = vpop.xlane.xlu0 %3207
        %3209 = vadd.xlane.f32.xlu0 %v3186
        %v3210 = vpop.xlane.xlu0 %3209
        %3211 = vadd.xlane.f32.xlu0 %v3187
        %v3212 = vpop.xlane.xlu0 %3211
        %3213 = vadd.xlane.f32.xlu0 %v3188
        %v3214 = vpop.xlane.xlu0 %3213
        %3215 = vadd.xlane.f32.xlu0 %v3189
        %v3216 = vpop.xlane.xlu0 %3215
        %3217 = vadd.xlane.f32.xlu0 %v3190
        %v3218 = vpop.xlane.xlu0 %3217
        %3219 = vadd.xlane.f32.xlu0 %v3191
        %v3220 = vpop.xlane.xlu0 %3219
        %3221 = vadd.xlane.f32.xlu0 %v3192
        %v3222 = vpop.xlane.xlu0 %3221
        %3223 = vadd.xlane.f32.xlu0 %v3193
        %v3224 = vpop.xlane.xlu0 %3223
        %3225 = vadd.xlane.f32.xlu0 %v3194
        %v3226 = vpop.xlane.xlu0 %3225
        %v3227 = vadd.f32 %v3092, %v3196
        %v3228 = vadd.f32 %v3094, %v3198
        %v3229 = vadd.f32 %v3096, %v3200
        %v3230 = vadd.f32 %v3098, %v3202
        %v3231 = vadd.f32 %v3100, %v3204
        %v3232 = vadd.f32 %v3102, %v3206
        %v3233 = vadd.f32 %v3104, %v3208
        %v3234 = vadd.f32 %v3106, %v3210
        %v3235 = vadd.f32 %v3108, %v3212
        %v3236 = vadd.f32 %v3110, %v3214
        %v3237 = vadd.f32 %v3112, %v3216
        %v3238 = vadd.f32 %v3114, %v3218
        %v3239 = vadd.f32 %v3116, %v3220
        %v3240 = vadd.f32 %v3118, %v3222
        %v3241 = vadd.f32 %v3120, %v3224
        %v3242 = vadd.f32 %v3122, %v3226
        %v3243 = vadd.f32 %v3227, %v1249
        %v3244 = vadd.f32 %v3228, %v1249
        %v3245 = vadd.f32 %v3229, %v1249
        %v3246 = vadd.f32 %v3230, %v1249
        %v3247 = vadd.f32 %v3231, %v1249
        %v3248 = vadd.f32 %v3232, %v1249
        %v3249 = vadd.f32 %v3233, %v1249
        %v3250 = vadd.f32 %v3234, %v1249
        %v3251 = vadd.f32 %v3235, %v1249
        %v3252 = vadd.f32 %v3236, %v1249
        %v3253 = vadd.f32 %v3237, %v1249
        %v3254 = vadd.f32 %v3238, %v1249
        %v3255 = vadd.f32 %v3239, %v1249
        %v3256 = vadd.f32 %v3240, %v1249
        %v3257 = vadd.f32 %v3241, %v1249
        %v3258 = vadd.f32 %v3242, %v1249
        %v3260 = vperm.slane %v3011, 0
        %v3261 = vlaneseq
        %v3262 = vshrl.u32 %v3261, 7
        %3264 = vset.pattern.permute.xlu0 %v3262
        %3265 = vperm.xlu0 %3264, %v3260
        %v3266 = vpop.permute.xlu0 %3265
        %v3267 = vlaneseq
        %v3268 = vshrl.u32 %v3267, 7
        %v3269 = vadd.s32 %v3268, 8
        %3270 = vset.pattern.permute.xlu0 %v3269
        %3271 = vperm.xlu0 %3270, %v3260
        %v3272 = vpop.permute.xlu0 %3271
        %v3273 = vperm.slane %v3011, 1
        %v3274 = vlaneseq
        %v3275 = vshrl.u32 %v3274, 7
        %3277 = vset.pattern.permute.xlu0 %v3275
        %3278 = vperm.xlu0 %3277, %v3273
        %v3279 = vpop.permute.xlu0 %3278
        %v3280 = vlaneseq
        %v3281 = vshrl.u32 %v3280, 7
        %v3282 = vadd.s32 %v3281, 8
        %3283 = vset.pattern.permute.xlu0 %v3282
        %3284 = vperm.xlu0 %3283, %v3273
        %v3285 = vpop.permute.xlu0 %3284
        %v3286 = vperm.slane %v3011, 2
        %v3287 = vlaneseq
        %v3288 = vshrl.u32 %v3287, 7
        %3290 = vset.pattern.permute.xlu0 %v3288
        %3291 = vperm.xlu0 %3290, %v3286
        %v3292 = vpop.permute.xlu0 %3291
        %v3293 = vlaneseq
        %v3294 = vshrl.u32 %v3293, 7
        %v3295 = vadd.s32 %v3294, 8
        %3296 = vset.pattern.permute.xlu0 %v3295
        %3297 = vperm.xlu0 %3296, %v3286
        %v3298 = vpop.permute.xlu0 %3297
        %v3299 = vperm.slane %v3011, 3
        %v3300 = vlaneseq
        %v3301 = vshrl.u32 %v3300, 7
        %3303 = vset.pattern.permute.xlu0 %v3301
        %3304 = vperm.xlu0 %3303, %v3299
        %v3305 = vpop.permute.xlu0 %3304
        %v3306 = vlaneseq
        %v3307 = vshrl.u32 %v3306, 7
        %v3308 = vadd.s32 %v3307, 8
        %3309 = vset.pattern.permute.xlu0 %v3308
        %3310 = vperm.xlu0 %3309, %v3299
        %v3311 = vpop.permute.xlu0 %3310
        %v3312 = vperm.slane %v3011, 4
        %v3313 = vlaneseq
        %v3314 = vshrl.u32 %v3313, 7
        %3316 = vset.pattern.permute.xlu0 %v3314
        %3317 = vperm.xlu0 %3316, %v3312
        %v3318 = vpop.permute.xlu0 %3317
        %v3319 = vlaneseq
        %v3320 = vshrl.u32 %v3319, 7
        %v3321 = vadd.s32 %v3320, 8
        %3322 = vset.pattern.permute.xlu0 %v3321
        %3323 = vperm.xlu0 %3322, %v3312
        %v3324 = vpop.permute.xlu0 %3323
        %v3325 = vperm.slane %v3011, 5
        %v3326 = vlaneseq
        %v3327 = vshrl.u32 %v3326, 7
        %3329 = vset.pattern.permute.xlu0 %v3327
        %3330 = vperm.xlu0 %3329, %v3325
        %v3331 = vpop.permute.xlu0 %3330
        %v3332 = vlaneseq
        %v3333 = vshrl.u32 %v3332, 7
        %v3334 = vadd.s32 %v3333, 8
        %3335 = vset.pattern.permute.xlu0 %v3334
        %3336 = vperm.xlu0 %3335, %v3325
        %v3337 = vpop.permute.xlu0 %3336
        %v3338 = vperm.slane %v3011, 6
        %v3339 = vlaneseq
        %v3340 = vshrl.u32 %v3339, 7
        %3342 = vset.pattern.permute.xlu0 %v3340
        %3343 = vperm.xlu0 %3342, %v3338
        %v3344 = vpop.permute.xlu0 %3343
        %v3345 = vlaneseq
        %v3346 = vshrl.u32 %v3345, 7
        %v3347 = vadd.s32 %v3346, 8
        %3348 = vset.pattern.permute.xlu0 %v3347
        %3349 = vperm.xlu0 %3348, %v3338
        %v3350 = vpop.permute.xlu0 %3349
        %v3351 = vperm.slane %v3011, 7
        %v3352 = vlaneseq
        %v3353 = vshrl.u32 %v3352, 7
        %3355 = vset.pattern.permute.xlu0 %v3353
        %3356 = vperm.xlu0 %3355, %v3351
        %v3357 = vpop.permute.xlu0 %3356
        %v3358 = vlaneseq
        %v3359 = vshrl.u32 %v3358, 7
        %v3360 = vadd.s32 %v3359, 8
        %3361 = vset.pattern.permute.xlu0 %v3360
        %3362 = vperm.xlu0 %3361, %v3351
        %v3363 = vpop.permute.xlu0 %3362
        %v3380 = vmul.f32 %v3243, %v3266
        %v3381 = vmul.f32 %v3244, %v3272
        %v3382 = vmul.f32 %v3245, %v3279
        %v3383 = vmul.f32 %v3246, %v3285
        %v3384 = vmul.f32 %v3247, %v3292
        %v3385 = vmul.f32 %v3248, %v3298
        %v3386 = vmul.f32 %v3249, %v3305
        %v3387 = vmul.f32 %v3250, %v3311
        %v3388 = vmul.f32 %v3251, %v3318
        %v3389 = vmul.f32 %v3252, %v3324
        %v3390 = vmul.f32 %v3253, %v3331
        %v3391 = vmul.f32 %v3254, %v3337
        %v3392 = vmul.f32 %v3255, %v3344
        %v3393 = vmul.f32 %v3256, %v3350
        %v3394 = vmul.f32 %v3257, %v3357
        %v3395 = vmul.f32 %v3258, %v3363
        %3412 = vset.pattern.permute.xlu0 0
        %3413 = vperm.xlu0 %3412, %v3380
        %v3414 = vpop.permute.xlu0 %3413
        %3415 = vset.pattern.permute.xlu0 0
        %3416 = vperm.xlu0 %3415, %v3381
        %v3417 = vpop.permute.xlu0 %3416
        %3418 = vset.pattern.permute.xlu0 0
        %3419 = vperm.xlu0 %3418, %v3382
        %v3420 = vpop.permute.xlu0 %3419
        %3421 = vset.pattern.permute.xlu0 0
        %3422 = vperm.xlu0 %3421, %v3383
        %v3423 = vpop.permute.xlu0 %3422
        %3424 = vset.pattern.permute.xlu0 0
        %3425 = vperm.xlu0 %3424, %v3384
        %v3426 = vpop.permute.xlu0 %3425
        %3427 = vset.pattern.permute.xlu0 0
        %3428 = vperm.xlu0 %3427, %v3385
        %v3429 = vpop.permute.xlu0 %3428
        %3430 = vset.pattern.permute.xlu0 0
        %3431 = vperm.xlu0 %3430, %v3386
        %v3432 = vpop.permute.xlu0 %3431
        %3433 = vset.pattern.permute.xlu0 0
        %3434 = vperm.xlu0 %3433, %v3387
        %v3435 = vpop.permute.xlu0 %3434
        %3436 = vset.pattern.permute.xlu0 0
        %3437 = vperm.xlu0 %3436, %v3388
        %v3438 = vpop.permute.xlu0 %3437
        %3439 = vset.pattern.permute.xlu0 0
        %3440 = vperm.xlu0 %3439, %v3389
        %v3441 = vpop.permute.xlu0 %3440
        %3442 = vset.pattern.permute.xlu0 0
        %3443 = vperm.xlu0 %3442, %v3390
        %v3444 = vpop.permute.xlu0 %3443
        %3445 = vset.pattern.permute.xlu0 0
        %3446 = vperm.xlu0 %3445, %v3391
        %v3447 = vpop.permute.xlu0 %3446
        %3448 = vset.pattern.permute.xlu0 0
        %3449 = vperm.xlu0 %3448, %v3392
        %v3450 = vpop.permute.xlu0 %3449
        %3451 = vset.pattern.permute.xlu0 0
        %3452 = vperm.xlu0 %3451, %v3393
        %v3453 = vpop.permute.xlu0 %3452
        %3454 = vset.pattern.permute.xlu0 0
        %3455 = vperm.xlu0 %3454, %v3394
        %v3456 = vpop.permute.xlu0 %3455
        %3457 = vset.pattern.permute.xlu0 0
        %3458 = vperm.xlu0 %3457, %v3395
        %v3459 = vpop.permute.xlu0 %3458
        %v3460 = vperm.slane %v3414, %v946
        %v3461 = vperm.slane %v3417, %v1469
        %v3462 = vsel %vm1471, %v3461, %v3460
        %v3463 = vperm.slane %v3420, %v946
        %v3464 = vperm.slane %v3423, %v1469
        %v3465 = vsel %vm1471, %v3464, %v3463
        %v3466 = vperm.slane %v3426, %v946
        %v3467 = vperm.slane %v3429, %v1469
        %v3468 = vsel %vm1471, %v3467, %v3466
        %v3469 = vperm.slane %v3432, %v946
        %v3470 = vperm.slane %v3435, %v1469
        %v3471 = vsel %vm1471, %v3470, %v3469
        %v3472 = vperm.slane %v3438, %v946
        %v3473 = vperm.slane %v3441, %v1469
        %v3474 = vsel %vm1471, %v3473, %v3472
        %v3475 = vperm.slane %v3444, %v946
        %v3476 = vperm.slane %v3447, %v1469
        %v3477 = vsel %vm1471, %v3476, %v3475
        %v3478 = vperm.slane %v3450, %v946
        %v3479 = vperm.slane %v3453, %v1469
        %v3480 = vsel %vm1471, %v3479, %v3478
        %v3481 = vperm.slane %v3456, %v946
        %v3482 = vperm.slane %v3459, %v1469
        %v3483 = vsel %vm1471, %v3482, %v3481
        %v3484 = vsel %vm1494, %v3465, %v3462
        %v3485 = vsel %vm1496, %v3468, %v3484
        %v3486 = vsel %vm1498, %v3471, %v3485
        %v3487 = vsel %vm1500, %v3474, %v3486
        %v3488 = vsel %vm1502, %v3477, %v3487
        %v3489 = vsel %vm1504, %v3480, %v3488
        %v3490 = vsel %vm1506, %v3483, %v3489
        %s3492 = scalar_lea.vmem [#allocation3], 16
        %3493 = vst.msk [vmem:[%s3492] sm:$0xff] %vm651, %v3490
        %v3494 = vld [vmem:[#allocation2 + $0xa0] sm:$0xff]
        %v3495 = vld [vmem:[#allocation2 + $0xb8] sm:$0xff]
        %v3497 = vrot.slane %v3494, 1
        %v3498 = vrot.slane %v3494, 2
        %v3499 = vrot.slane %v3494, 3
        %v3500 = vrot.slane %v3494, 4
        %v3501 = vrot.slane %v3494, 5
        %v3502 = vrot.slane %v3494, 6
        %v3503 = vrot.slane %v3494, 7
        %v3504 = vperm.slane %v3494, 0
        %v3505 = vperm.slane %v3497, 0
        %v3506 = vperm.slane %v3498, 0
        %v3507 = vperm.slane %v3499, 0
        %v3508 = vperm.slane %v3500, 0
        %v3509 = vperm.slane %v3501, 0
        %v3510 = vperm.slane %v3502, 0
        %v3511 = vperm.slane %v3503, 0
        %v3520 = vadd.f32 %v3504, %v3013
        %v3521 = vadd.f32 %v3504, %v3014
        %v3522 = vadd.f32 %v3505, %v3013
        %v3523 = vadd.f32 %v3505, %v3014
        %v3524 = vadd.f32 %v3506, %v3013
        %v3525 = vadd.f32 %v3506, %v3014
        %v3526 = vadd.f32 %v3507, %v3013
        %v3527 = vadd.f32 %v3507, %v3014
        %v3528 = vadd.f32 %v3508, %v3013
        %v3529 = vadd.f32 %v3508, %v3014
        %v3530 = vadd.f32 %v3509, %v3013
        %v3531 = vadd.f32 %v3509, %v3014
        %v3532 = vadd.f32 %v3510, %v3013
        %v3533 = vadd.f32 %v3510, %v3014
        %v3534 = vadd.f32 %v3511, %v3013
        %v3535 = vadd.f32 %v3511, %v3014
        %v3536 = vmax.f32 %v3520, 0.0
        %v3537 = vmax.f32 %v3521, 0.0
        %v3538 = vmax.f32 %v3522, 0.0
        %v3539 = vmax.f32 %v3523, 0.0
        %v3540 = vmax.f32 %v3524, 0.0
        %v3541 = vmax.f32 %v3525, 0.0
        %v3542 = vmax.f32 %v3526, 0.0
        %v3543 = vmax.f32 %v3527, 0.0
        %v3544 = vmax.f32 %v3528, 0.0
        %v3545 = vmax.f32 %v3529, 0.0
        %v3546 = vmax.f32 %v3530, 0.0
        %v3547 = vmax.f32 %v3531, 0.0
        %v3548 = vmax.f32 %v3532, 0.0
        %v3549 = vmax.f32 %v3533, 0.0
        %v3550 = vmax.f32 %v3534, 0.0
        %v3551 = vmax.f32 %v3535, 0.0
        %v3552 = vmul.f32 %v3536, %v1072
        %v3553 = vmul.f32 %v3537, %v1072
        %v3554 = vmul.f32 %v3538, %v1072
        %v3555 = vmul.f32 %v3539, %v1072
        %v3556 = vmul.f32 %v3540, %v1072
        %v3557 = vmul.f32 %v3541, %v1072
        %v3558 = vmul.f32 %v3542, %v1072
        %v3559 = vmul.f32 %v3543, %v1072
        %v3560 = vmul.f32 %v3544, %v1072
        %v3561 = vmul.f32 %v3545, %v1072
        %v3562 = vmul.f32 %v3546, %v1072
        %v3563 = vmul.f32 %v3547, %v1072
        %v3564 = vmul.f32 %v3548, %v1072
        %v3565 = vmul.f32 %v3549, %v1072
        %v3566 = vmul.f32 %v3550, %v1072
        %v3567 = vmul.f32 %v3551, %v1072
        %3568 = vadd.xlane.f32.xlu0 %v3552
        %v3569 = vpop.xlane.xlu0 %3568
        %3570 = vadd.xlane.f32.xlu0 %v3553
        %v3571 = vpop.xlane.xlu0 %3570
        %3572 = vadd.xlane.f32.xlu0 %v3554
        %v3573 = vpop.xlane.xlu0 %3572
        %3574 = vadd.xlane.f32.xlu0 %v3555
        %v3575 = vpop.xlane.xlu0 %3574
        %3576 = vadd.xlane.f32.xlu0 %v3556
        %v3577 = vpop.xlane.xlu0 %3576
        %3578 = vadd.xlane.f32.xlu0 %v3557
        %v3579 = vpop.xlane.xlu0 %3578
        %3580 = vadd.xlane.f32.xlu0 %v3558
        %v3581 = vpop.xlane.xlu0 %3580
        %3582 = vadd.xlane.f32.xlu0 %v3559
        %v3583 = vpop.xlane.xlu0 %3582
        %3584 = vadd.xlane.f32.xlu0 %v3560
        %v3585 = vpop.xlane.xlu0 %3584
        %3586 = vadd.xlane.f32.xlu0 %v3561
        %v3587 = vpop.xlane.xlu0 %3586
        %3588 = vadd.xlane.f32.xlu0 %v3562
        %v3589 = vpop.xlane.xlu0 %3588
        %3590 = vadd.xlane.f32.xlu0 %v3563
        %v3591 = vpop.xlane.xlu0 %3590
        %3592 = vadd.xlane.f32.xlu0 %v3564
        %v3593 = vpop.xlane.xlu0 %3592
        %3594 = vadd.xlane.f32.xlu0 %v3565
        %v3595 = vpop.xlane.xlu0 %3594
        %3596 = vadd.xlane.f32.xlu0 %v3566
        %v3597 = vpop.xlane.xlu0 %3596
        %3598 = vadd.xlane.f32.xlu0 %v3567
        %v3599 = vpop.xlane.xlu0 %3598
        %v3601 = vrot.slane %v3495, 1
        %v3602 = vrot.slane %v3495, 2
        %v3603 = vrot.slane %v3495, 3
        %v3604 = vrot.slane %v3495, 4
        %v3605 = vrot.slane %v3495, 5
        %v3606 = vrot.slane %v3495, 6
        %v3607 = vrot.slane %v3495, 7
        %v3608 = vperm.slane %v3495, 0
        %v3609 = vperm.slane %v3601, 0
        %v3610 = vperm.slane %v3602, 0
        %v3611 = vperm.slane %v3603, 0
        %v3612 = vperm.slane %v3604, 0
        %v3613 = vperm.slane %v3605, 0
        %v3614 = vperm.slane %v3606, 0
        %v3615 = vperm.slane %v3607, 0
        %v3624 = vadd.f32 %v3608, %v3015
        %v3625 = vadd.f32 %v3608, %v3016
        %v3626 = vadd.f32 %v3609, %v3015
        %v3627 = vadd.f32 %v3609, %v3016
        %v3628 = vadd.f32 %v3610, %v3015
        %v3629 = vadd.f32 %v3610, %v3016
        %v3630 = vadd.f32 %v3611, %v3015
        %v3631 = vadd.f32 %v3611, %v3016
        %v3632 = vadd.f32 %v3612, %v3015
        %v3633 = vadd.f32 %v3612, %v3016
        %v3634 = vadd.f32 %v3613, %v3015
        %v3635 = vadd.f32 %v3613, %v3016
        %v3636 = vadd.f32 %v3614, %v3015
        %v3637 = vadd.f32 %v3614, %v3016
        %v3638 = vadd.f32 %v3615, %v3015
        %v3639 = vadd.f32 %v3615, %v3016
        %v3640 = vmax.f32 %v3624, 0.0
        %v3641 = vmax.f32 %v3625, 0.0
        %v3642 = vmax.f32 %v3626, 0.0
        %v3643 = vmax.f32 %v3627, 0.0
        %v3644 = vmax.f32 %v3628, 0.0
        %v3645 = vmax.f32 %v3629, 0.0
        %v3646 = vmax.f32 %v3630, 0.0
        %v3647 = vmax.f32 %v3631, 0.0
        %v3648 = vmax.f32 %v3632, 0.0
        %v3649 = vmax.f32 %v3633, 0.0
        %v3650 = vmax.f32 %v3634, 0.0
        %v3651 = vmax.f32 %v3635, 0.0
        %v3652 = vmax.f32 %v3636, 0.0
        %v3653 = vmax.f32 %v3637, 0.0
        %v3654 = vmax.f32 %v3638, 0.0
        %v3655 = vmax.f32 %v3639, 0.0
        %v3656 = vmul.f32 %v3640, %v1179
        %v3657 = vmul.f32 %v3641, %v1179
        %v3658 = vmul.f32 %v3642, %v1179
        %v3659 = vmul.f32 %v3643, %v1179
        %v3660 = vmul.f32 %v3644, %v1179
        %v3661 = vmul.f32 %v3645, %v1179
        %v3662 = vmul.f32 %v3646, %v1179
        %v3663 = vmul.f32 %v3647, %v1179
        %v3664 = vmul.f32 %v3648, %v1179
        %v3665 = vmul.f32 %v3649, %v1179
        %v3666 = vmul.f32 %v3650, %v1179
        %v3667 = vmul.f32 %v3651, %v1179
        %v3668 = vmul.f32 %v3652, %v1179
        %v3669 = vmul.f32 %v3653, %v1179
        %v3670 = vmul.f32 %v3654, %v1179
        %v3671 = vmul.f32 %v3655, %v1179
        %3672 = vadd.xlane.f32.xlu0 %v3656
        %v3673 = vpop.xlane.xlu0 %3672
        %3674 = vadd.xlane.f32.xlu0 %v3657
        %v3675 = vpop.xlane.xlu0 %3674
        %3676 = vadd.xlane.f32.xlu0 %v3658
        %v3677 = vpop.xlane.xlu0 %3676
        %3678 = vadd.xlane.f32.xlu0 %v3659
        %v3679 = vpop.xlane.xlu0 %3678
        %3680 = vadd.xlane.f32.xlu0 %v3660
        %v3681 = vpop.xlane.xlu0 %3680
        %3682 = vadd.xlane.f32.xlu0 %v3661
        %v3683 = vpop.xlane.xlu0 %3682
        %3684 = vadd.xlane.f32.xlu0 %v3662
        %v3685 = vpop.xlane.xlu0 %3684
        %3686 = vadd.xlane.f32.xlu0 %v3663
        %v3687 = vpop.xlane.xlu0 %3686
        %3688 = vadd.xlane.f32.xlu0 %v3664
        %v3689 = vpop.xlane.xlu0 %3688
        %3690 = vadd.xlane.f32.xlu0 %v3665
        %v3691 = vpop.xlane.xlu0 %3690
        %3692 = vadd.xlane.f32.xlu0 %v3666
        %v3693 = vpop.xlane.xlu0 %3692
        %3694 = vadd.xlane.f32.xlu0 %v3667
        %v3695 = vpop.xlane.xlu0 %3694
        %3696 = vadd.xlane.f32.xlu0 %v3668
        %v3697 = vpop.xlane.xlu0 %3696
        %3698 = vadd.xlane.f32.xlu0 %v3669
        %v3699 = vpop.xlane.xlu0 %3698
        %3700 = vadd.xlane.f32.xlu0 %v3670
        %v3701 = vpop.xlane.xlu0 %3700
        %3702 = vadd.xlane.f32.xlu0 %v3671
        %v3703 = vpop.xlane.xlu0 %3702
        %v3704 = vadd.f32 %v3569, %v3673
        %v3705 = vadd.f32 %v3571, %v3675
        %v3706 = vadd.f32 %v3573, %v3677
        %v3707 = vadd.f32 %v3575, %v3679
        %v3708 = vadd.f32 %v3577, %v3681
        %v3709 = vadd.f32 %v3579, %v3683
        %v3710 = vadd.f32 %v3581, %v3685
        %v3711 = vadd.f32 %v3583, %v3687
        %v3712 = vadd.f32 %v3585, %v3689
        %v3713 = vadd.f32 %v3587, %v3691
        %v3714 = vadd.f32 %v3589, %v3693
        %v3715 = vadd.f32 %v3591, %v3695
        %v3716 = vadd.f32 %v3593, %v3697
        %v3717 = vadd.f32 %v3595, %v3699
        %v3718 = vadd.f32 %v3597, %v3701
        %v3719 = vadd.f32 %v3599, %v3703
        %v3720 = vadd.f32 %v3704, %v1249
        %v3721 = vadd.f32 %v3705, %v1249
        %v3722 = vadd.f32 %v3706, %v1249
        %v3723 = vadd.f32 %v3707, %v1249
        %v3724 = vadd.f32 %v3708, %v1249
        %v3725 = vadd.f32 %v3709, %v1249
        %v3726 = vadd.f32 %v3710, %v1249
        %v3727 = vadd.f32 %v3711, %v1249
        %v3728 = vadd.f32 %v3712, %v1249
        %v3729 = vadd.f32 %v3713, %v1249
        %v3730 = vadd.f32 %v3714, %v1249
        %v3731 = vadd.f32 %v3715, %v1249
        %v3732 = vadd.f32 %v3716, %v1249
        %v3733 = vadd.f32 %v3717, %v1249
        %v3734 = vadd.f32 %v3718, %v1249
        %v3735 = vadd.f32 %v3719, %v1249
        %v3737 = vperm.slane %v3012, 0
        %v3738 = vlaneseq
        %v3739 = vshrl.u32 %v3738, 7
        %3741 = vset.pattern.permute.xlu0 %v3739
        %3742 = vperm.xlu0 %3741, %v3737
        %v3743 = vpop.permute.xlu0 %3742
        %v3744 = vlaneseq
        %v3745 = vshrl.u32 %v3744, 7
        %v3746 = vadd.s32 %v3745, 8
        %3747 = vset.pattern.permute.xlu0 %v3746
        %3748 = vperm.xlu0 %3747, %v3737
        %v3749 = vpop.permute.xlu0 %3748
        %v3750 = vperm.slane %v3012, 1
        %v3751 = vlaneseq
        %v3752 = vshrl.u32 %v3751, 7
        %3754 = vset.pattern.permute.xlu0 %v3752
        %3755 = vperm.xlu0 %3754, %v3750
        %v3756 = vpop.permute.xlu0 %3755
        %v3757 = vlaneseq
        %v3758 = vshrl.u32 %v3757, 7
        %v3759 = vadd.s32 %v3758, 8
        %3760 = vset.pattern.permute.xlu0 %v3759
        %3761 = vperm.xlu0 %3760, %v3750
        %v3762 = vpop.permute.xlu0 %3761
        %v3763 = vperm.slane %v3012, 2
        %v3764 = vlaneseq
        %v3765 = vshrl.u32 %v3764, 7
        %3767 = vset.pattern.permute.xlu0 %v3765
        %3768 = vperm.xlu0 %3767, %v3763
        %v3769 = vpop.permute.xlu0 %3768
        %v3770 = vlaneseq
        %v3771 = vshrl.u32 %v3770, 7
        %v3772 = vadd.s32 %v3771, 8
        %3773 = vset.pattern.permute.xlu0 %v3772
        %3774 = vperm.xlu0 %3773, %v3763
        %v3775 = vpop.permute.xlu0 %3774
        %v3776 = vperm.slane %v3012, 3
        %v3777 = vlaneseq
        %v3778 = vshrl.u32 %v3777, 7
        %3780 = vset.pattern.permute.xlu0 %v3778
        %3781 = vperm.xlu0 %3780, %v3776
        %v3782 = vpop.permute.xlu0 %3781
        %v3783 = vlaneseq
        %v3784 = vshrl.u32 %v3783, 7
        %v3785 = vadd.s32 %v3784, 8
        %3786 = vset.pattern.permute.xlu0 %v3785
        %3787 = vperm.xlu0 %3786, %v3776
        %v3788 = vpop.permute.xlu0 %3787
        %v3789 = vperm.slane %v3012, 4
        %v3790 = vlaneseq
        %v3791 = vshrl.u32 %v3790, 7
        %3793 = vset.pattern.permute.xlu0 %v3791
        %3794 = vperm.xlu0 %3793, %v3789
        %v3795 = vpop.permute.xlu0 %3794
        %v3796 = vlaneseq
        %v3797 = vshrl.u32 %v3796, 7
        %v3798 = vadd.s32 %v3797, 8
        %3799 = vset.pattern.permute.xlu0 %v3798
        %3800 = vperm.xlu0 %3799, %v3789
        %v3801 = vpop.permute.xlu0 %3800
        %v3802 = vperm.slane %v3012, 5
        %v3803 = vlaneseq
        %v3804 = vshrl.u32 %v3803, 7
        %3806 = vset.pattern.permute.xlu0 %v3804
        %3807 = vperm.xlu0 %3806, %v3802
        %v3808 = vpop.permute.xlu0 %3807
        %v3809 = vlaneseq
        %v3810 = vshrl.u32 %v3809, 7
        %v3811 = vadd.s32 %v3810, 8
        %3812 = vset.pattern.permute.xlu0 %v3811
        %3813 = vperm.xlu0 %3812, %v3802
        %v3814 = vpop.permute.xlu0 %3813
        %v3815 = vperm.slane %v3012, 6
        %v3816 = vlaneseq
        %v3817 = vshrl.u32 %v3816, 7
        %3819 = vset.pattern.permute.xlu0 %v3817
        %3820 = vperm.xlu0 %3819, %v3815
        %v3821 = vpop.permute.xlu0 %3820
        %v3822 = vlaneseq
        %v3823 = vshrl.u32 %v3822, 7
        %v3824 = vadd.s32 %v3823, 8
        %3825 = vset.pattern.permute.xlu0 %v3824
        %3826 = vperm.xlu0 %3825, %v3815
        %v3827 = vpop.permute.xlu0 %3826
        %v3828 = vperm.slane %v3012, 7
        %v3829 = vlaneseq
        %v3830 = vshrl.u32 %v3829, 7
        %3832 = vset.pattern.permute.xlu0 %v3830
        %3833 = vperm.xlu0 %3832, %v3828
        %v3834 = vpop.permute.xlu0 %3833
        %v3835 = vlaneseq
        %v3836 = vshrl.u32 %v3835, 7
        %v3837 = vadd.s32 %v3836, 8
        %3838 = vset.pattern.permute.xlu0 %v3837
        %3839 = vperm.xlu0 %3838, %v3828
        %v3840 = vpop.permute.xlu0 %3839
        %v3857 = vmul.f32 %v3720, %v3743
        %v3858 = vmul.f32 %v3721, %v3749
        %v3859 = vmul.f32 %v3722, %v3756
        %v3860 = vmul.f32 %v3723, %v3762
        %v3861 = vmul.f32 %v3724, %v3769
        %v3862 = vmul.f32 %v3725, %v3775
        %v3863 = vmul.f32 %v3726, %v3782
        %v3864 = vmul.f32 %v3727, %v3788
        %v3865 = vmul.f32 %v3728, %v3795
        %v3866 = vmul.f32 %v3729, %v3801
        %v3867 = vmul.f32 %v3730, %v3808
        %v3868 = vmul.f32 %v3731, %v3814
        %v3869 = vmul.f32 %v3732, %v3821
        %v3870 = vmul.f32 %v3733, %v3827
        %v3871 = vmul.f32 %v3734, %v3834
        %v3872 = vmul.f32 %v3735, %v3840
        %3889 = vset.pattern.permute.xlu0 0
        %3890 = vperm.xlu0 %3889, %v3857
        %v3891 = vpop.permute.xlu0 %3890
        %3892 = vset.pattern.permute.xlu0 0
        %3893 = vperm.xlu0 %3892, %v3858
        %v3894 = vpop.permute.xlu0 %3893
        %3895 = vset.pattern.permute.xlu0 0
        %3896 = vperm.xlu0 %3895, %v3859
        %v3897 = vpop.permute.xlu0 %3896
        %3898 = vset.pattern.permute.xlu0 0
        %3899 = vperm.xlu0 %3898, %v3860
        %v3900 = vpop.permute.xlu0 %3899
        %3901 = vset.pattern.permute.xlu0 0
        %3902 = vperm.xlu0 %3901, %v3861
        %v3903 = vpop.permute.xlu0 %3902
        %3904 = vset.pattern.permute.xlu0 0
        %3905 = vperm.xlu0 %3904, %v3862
        %v3906 = vpop.permute.xlu0 %3905
        %3907 = vset.pattern.permute.xlu0 0
        %3908 = vperm.xlu0 %3907, %v3863
        %v3909 = vpop.permute.xlu0 %3908
        %3910 = vset.pattern.permute.xlu0 0
        %3911 = vperm.xlu0 %3910, %v3864
        %v3912 = vpop.permute.xlu0 %3911
        %3913 = vset.pattern.permute.xlu0 0
        %3914 = vperm.xlu0 %3913, %v3865
        %v3915 = vpop.permute.xlu0 %3914
        %3916 = vset.pattern.permute.xlu0 0
        %3917 = vperm.xlu0 %3916, %v3866
        %v3918 = vpop.permute.xlu0 %3917
        %3919 = vset.pattern.permute.xlu0 0
        %3920 = vperm.xlu0 %3919, %v3867
        %v3921 = vpop.permute.xlu0 %3920
        %3922 = vset.pattern.permute.xlu0 0
        %3923 = vperm.xlu0 %3922, %v3868
        %v3924 = vpop.permute.xlu0 %3923
        %3925 = vset.pattern.permute.xlu0 0
        %3926 = vperm.xlu0 %3925, %v3869
        %v3927 = vpop.permute.xlu0 %3926
        %3928 = vset.pattern.permute.xlu0 0
        %3929 = vperm.xlu0 %3928, %v3870
        %v3930 = vpop.permute.xlu0 %3929
        %3931 = vset.pattern.permute.xlu0 0
        %3932 = vperm.xlu0 %3931, %v3871
        %v3933 = vpop.permute.xlu0 %3932
        %3934 = vset.pattern.permute.xlu0 0
        %3935 = vperm.xlu0 %3934, %v3872
        %v3936 = vpop.permute.xlu0 %3935
        %v3937 = vperm.slane %v3891, %v946
        %v3938 = vperm.slane %v3894, %v1469
        %v3939 = vsel %vm1471, %v3938, %v3937
        %v3940 = vperm.slane %v3897, %v946
        %v3941 = vperm.slane %v3900, %v1469
        %v3942 = vsel %vm1471, %v3941, %v3940
        %v3943 = vperm.slane %v3903, %v946
        %v3944 = vperm.slane %v3906, %v1469
        %v3945 = vsel %vm1471, %v3944, %v3943
        %v3946 = vperm.slane %v3909, %v946
        %v3947 = vperm.slane %v3912, %v1469
        %v3948 = vsel %vm1471, %v3947, %v3946
        %v3949 = vperm.slane %v3915, %v946
        %v3950 = vperm.slane %v3918, %v1469
        %v3951 = vsel %vm1471, %v3950, %v3949
        %v3952 = vperm.slane %v3921, %v946
        %v3953 = vperm.slane %v3924, %v1469
        %v3954 = vsel %vm1471, %v3953, %v3952
        %v3955 = vperm.slane %v3927, %v946
        %v3956 = vperm.slane %v3930, %v1469
        %v3957 = vsel %vm1471, %v3956, %v3955
        %v3958 = vperm.slane %v3933, %v946
        %v3959 = vperm.slane %v3936, %v1469
        %v3960 = vsel %vm1471, %v3959, %v3958
        %v3961 = vsel %vm1494, %v3942, %v3939
        %v3962 = vsel %vm1496, %v3945, %v3961
        %v3963 = vsel %vm1498, %v3948, %v3962
        %v3964 = vsel %vm1500, %v3951, %v3963
        %v3965 = vsel %vm1502, %v3954, %v3964
        %v3966 = vsel %vm1504, %v3957, %v3965
        %v3967 = vsel %vm1506, %v3960, %v3966
        %3969 = vst.msk [vmem:[%s3492 + $0x8] sm:$0xff] %vm651, %v3967
        %vm3970 = vcmp.lt.s32.totalorder %v946, %v2961
        %vm3971 = vmand %vm2962, %vm3970
        %vm3972 = vmand %vm2963, %vm3970
        %s3973 = scalar_lea.vmem %s495, 16 [#allocation14]
        %v3974 = vld [vmem:[%s3973] sm:$0xff]
        %v3975 = vld [vmem:[%s3973 + $0x8] sm:$0xff]
        %v3976 = vsel %vm3971, %v3974, 0.0
        %v3977 = vsel %vm3972, %v3975, 0.0
        %v3978 = vld [vmem:[#allocation2 + $0xc8] sm:$0xff]
        %v3979 = vld [vmem:[#allocation2 + $0xe8] sm:$0xff]
        %v3980 = vld [vmem:[#allocation2 + $0xd0] sm:$0xff]
        %v3981 = vld [vmem:[#allocation2 + $0xf0] sm:$0xff]
        %v3982 = vld [vmem:[#allocation2 + $0xc0] sm:$0xff]
        %v3983 = vld [vmem:[#allocation2 + $0xd8] sm:$0xff]
        %v3985 = vrot.slane %v3982, 1
        %v3986 = vrot.slane %v3982, 2
        %v3987 = vrot.slane %v3982, 3
        %v3988 = vrot.slane %v3982, 4
        %v3989 = vrot.slane %v3982, 5
        %v3990 = vrot.slane %v3982, 6
        %v3991 = vrot.slane %v3982, 7
        %v3992 = vperm.slane %v3982, 0
        %v3993 = vperm.slane %v3985, 0
        %v3994 = vperm.slane %v3986, 0
        %v3995 = vperm.slane %v3987, 0
        %v3996 = vperm.slane %v3988, 0
        %v3997 = vperm.slane %v3989, 0
        %v3998 = vperm.slane %v3990, 0
        %v3999 = vperm.slane %v3991, 0
        %v4008 = vadd.f32 %v3992, %v3978
        %v4009 = vadd.f32 %v3992, %v3979
        %v4010 = vadd.f32 %v3993, %v3978
        %v4011 = vadd.f32 %v3993, %v3979
        %v4012 = vadd.f32 %v3994, %v3978
        %v4013 = vadd.f32 %v3994, %v3979
        %v4014 = vadd.f32 %v3995, %v3978
        %v4015 = vadd.f32 %v3995, %v3979
        %v4016 = vadd.f32 %v3996, %v3978
        %v4017 = vadd.f32 %v3996, %v3979
        %v4018 = vadd.f32 %v3997, %v3978
        %v4019 = vadd.f32 %v3997, %v3979
        %v4020 = vadd.f32 %v3998, %v3978
        %v4021 = vadd.f32 %v3998, %v3979
        %v4022 = vadd.f32 %v3999, %v3978
        %v4023 = vadd.f32 %v3999, %v3979
        %v4024 = vmax.f32 %v4008, 0.0
        %v4025 = vmax.f32 %v4009, 0.0
        %v4026 = vmax.f32 %v4010, 0.0
        %v4027 = vmax.f32 %v4011, 0.0
        %v4028 = vmax.f32 %v4012, 0.0
        %v4029 = vmax.f32 %v4013, 0.0
        %v4030 = vmax.f32 %v4014, 0.0
        %v4031 = vmax.f32 %v4015, 0.0
        %v4032 = vmax.f32 %v4016, 0.0
        %v4033 = vmax.f32 %v4017, 0.0
        %v4034 = vmax.f32 %v4018, 0.0
        %v4035 = vmax.f32 %v4019, 0.0
        %v4036 = vmax.f32 %v4020, 0.0
        %v4037 = vmax.f32 %v4021, 0.0
        %v4038 = vmax.f32 %v4022, 0.0
        %v4039 = vmax.f32 %v4023, 0.0
        %v4040 = vmul.f32 %v4024, %v1072
        %v4041 = vmul.f32 %v4025, %v1072
        %v4042 = vmul.f32 %v4026, %v1072
        %v4043 = vmul.f32 %v4027, %v1072
        %v4044 = vmul.f32 %v4028, %v1072
        %v4045 = vmul.f32 %v4029, %v1072
        %v4046 = vmul.f32 %v4030, %v1072
        %v4047 = vmul.f32 %v4031, %v1072
        %v4048 = vmul.f32 %v4032, %v1072
        %v4049 = vmul.f32 %v4033, %v1072
        %v4050 = vmul.f32 %v4034, %v1072
        %v4051 = vmul.f32 %v4035, %v1072
        %v4052 = vmul.f32 %v4036, %v1072
        %v4053 = vmul.f32 %v4037, %v1072
        %v4054 = vmul.f32 %v4038, %v1072
        %v4055 = vmul.f32 %v4039, %v1072
        %4056 = vadd.xlane.f32.xlu0 %v4040
        %v4057 = vpop.xlane.xlu0 %4056
        %4058 = vadd.xlane.f32.xlu0 %v4041
        %v4059 = vpop.xlane.xlu0 %4058
        %4060 = vadd.xlane.f32.xlu0 %v4042
        %v4061 = vpop.xlane.xlu0 %4060
        %4062 = vadd.xlane.f32.xlu0 %v4043
        %v4063 = vpop.xlane.xlu0 %4062
        %4064 = vadd.xlane.f32.xlu0 %v4044
        %v4065 = vpop.xlane.xlu0 %4064
        %4066 = vadd.xlane.f32.xlu0 %v4045
        %v4067 = vpop.xlane.xlu0 %4066
        %4068 = vadd.xlane.f32.xlu0 %v4046
        %v4069 = vpop.xlane.xlu0 %4068
        %4070 = vadd.xlane.f32.xlu0 %v4047
        %v4071 = vpop.xlane.xlu0 %4070
        %4072 = vadd.xlane.f32.xlu0 %v4048
        %v4073 = vpop.xlane.xlu0 %4072
        %4074 = vadd.xlane.f32.xlu0 %v4049
        %v4075 = vpop.xlane.xlu0 %4074
        %4076 = vadd.xlane.f32.xlu0 %v4050
        %v4077 = vpop.xlane.xlu0 %4076
        %4078 = vadd.xlane.f32.xlu0 %v4051
        %v4079 = vpop.xlane.xlu0 %4078
        %4080 = vadd.xlane.f32.xlu0 %v4052
        %v4081 = vpop.xlane.xlu0 %4080
        %4082 = vadd.xlane.f32.xlu0 %v4053
        %v4083 = vpop.xlane.xlu0 %4082
        %4084 = vadd.xlane.f32.xlu0 %v4054
        %v4085 = vpop.xlane.xlu0 %4084
        %4086 = vadd.xlane.f32.xlu0 %v4055
        %v4087 = vpop.xlane.xlu0 %4086
        %v4089 = vrot.slane %v3983, 1
        %v4090 = vrot.slane %v3983, 2
        %v4091 = vrot.slane %v3983, 3
        %v4092 = vrot.slane %v3983, 4
        %v4093 = vrot.slane %v3983, 5
        %v4094 = vrot.slane %v3983, 6
        %v4095 = vrot.slane %v3983, 7
        %v4096 = vperm.slane %v3983, 0
        %v4097 = vperm.slane %v4089, 0
        %v4098 = vperm.slane %v4090, 0
        %v4099 = vperm.slane %v4091, 0
        %v4100 = vperm.slane %v4092, 0
        %v4101 = vperm.slane %v4093, 0
        %v4102 = vperm.slane %v4094, 0
        %v4103 = vperm.slane %v4095, 0
        %v4112 = vadd.f32 %v4096, %v3980
        %v4113 = vadd.f32 %v4096, %v3981
        %v4114 = vadd.f32 %v4097, %v3980
        %v4115 = vadd.f32 %v4097, %v3981
        %v4116 = vadd.f32 %v4098, %v3980
        %v4117 = vadd.f32 %v4098, %v3981
        %v4118 = vadd.f32 %v4099, %v3980
        %v4119 = vadd.f32 %v4099, %v3981
        %v4120 = vadd.f32 %v4100, %v3980
        %v4121 = vadd.f32 %v4100, %v3981
        %v4122 = vadd.f32 %v4101, %v3980
        %v4123 = vadd.f32 %v4101, %v3981
        %v4124 = vadd.f32 %v4102, %v3980
        %v4125 = vadd.f32 %v4102, %v3981
        %v4126 = vadd.f32 %v4103, %v3980
        %v4127 = vadd.f32 %v4103, %v3981
        %v4128 = vmax.f32 %v4112, 0.0
        %v4129 = vmax.f32 %v4113, 0.0
        %v4130 = vmax.f32 %v4114, 0.0
        %v4131 = vmax.f32 %v4115, 0.0
        %v4132 = vmax.f32 %v4116, 0.0
        %v4133 = vmax.f32 %v4117, 0.0
        %v4134 = vmax.f32 %v4118, 0.0
        %v4135 = vmax.f32 %v4119, 0.0
        %v4136 = vmax.f32 %v4120, 0.0
        %v4137 = vmax.f32 %v4121, 0.0
        %v4138 = vmax.f32 %v4122, 0.0
        %v4139 = vmax.f32 %v4123, 0.0
        %v4140 = vmax.f32 %v4124, 0.0
        %v4141 = vmax.f32 %v4125, 0.0
        %v4142 = vmax.f32 %v4126, 0.0
        %v4143 = vmax.f32 %v4127, 0.0
        %v4144 = vmul.f32 %v4128, %v1179
        %v4145 = vmul.f32 %v4129, %v1179
        %v4146 = vmul.f32 %v4130, %v1179
        %v4147 = vmul.f32 %v4131, %v1179
        %v4148 = vmul.f32 %v4132, %v1179
        %v4149 = vmul.f32 %v4133, %v1179
        %v4150 = vmul.f32 %v4134, %v1179
        %v4151 = vmul.f32 %v4135, %v1179
        %v4152 = vmul.f32 %v4136, %v1179
        %v4153 = vmul.f32 %v4137, %v1179
        %v4154 = vmul.f32 %v4138, %v1179
        %v4155 = vmul.f32 %v4139, %v1179
        %v4156 = vmul.f32 %v4140, %v1179
        %v4157 = vmul.f32 %v4141, %v1179
        %v4158 = vmul.f32 %v4142, %v1179
        %v4159 = vmul.f32 %v4143, %v1179
        %4160 = vadd.xlane.f32.xlu0 %v4144
        %v4161 = vpop.xlane.xlu0 %4160
        %4162 = vadd.xlane.f32.xlu0 %v4145
        %v4163 = vpop.xlane.xlu0 %4162
        %4164 = vadd.xlane.f32.xlu0 %v4146
        %v4165 = vpop.xlane.xlu0 %4164
        %4166 = vadd.xlane.f32.xlu0 %v4147
        %v4167 = vpop.xlane.xlu0 %4166
        %4168 = vadd.xlane.f32.xlu0 %v4148
        %v4169 = vpop.xlane.xlu0 %4168
        %4170 = vadd.xlane.f32.xlu0 %v4149
        %v4171 = vpop.xlane.xlu0 %4170
        %4172 = vadd.xlane.f32.xlu0 %v4150
        %v4173 = vpop.xlane.xlu0 %4172
        %4174 = vadd.xlane.f32.xlu0 %v4151
        %v4175 = vpop.xlane.xlu0 %4174
        %4176 = vadd.xlane.f32.xlu0 %v4152
        %v4177 = vpop.xlane.xlu0 %4176
        %4178 = vadd.xlane.f32.xlu0 %v4153
        %v4179 = vpop.xlane.xlu0 %4178
        %4180 = vadd.xlane.f32.xlu0 %v4154
        %v4181 = vpop.xlane.xlu0 %4180
        %4182 = vadd.xlane.f32.xlu0 %v4155
        %v4183 = vpop.xlane.xlu0 %4182
        %4184 = vadd.xlane.f32.xlu0 %v4156
        %v4185 = vpop.xlane.xlu0 %4184
        %4186 = vadd.xlane.f32.xlu0 %v4157
        %v4187 = vpop.xlane.xlu0 %4186
        %4188 = vadd.xlane.f32.xlu0 %v4158
        %v4189 = vpop.xlane.xlu0 %4188
        %4190 = vadd.xlane.f32.xlu0 %v4159
        %v4191 = vpop.xlane.xlu0 %4190
        %v4192 = vadd.f32 %v4057, %v4161
        %v4193 = vadd.f32 %v4059, %v4163
        %v4194 = vadd.f32 %v4061, %v4165
        %v4195 = vadd.f32 %v4063, %v4167
        %v4196 = vadd.f32 %v4065, %v4169
        %v4197 = vadd.f32 %v4067, %v4171
        %v4198 = vadd.f32 %v4069, %v4173
        %v4199 = vadd.f32 %v4071, %v4175
        %v4200 = vadd.f32 %v4073, %v4177
        %v4201 = vadd.f32 %v4075, %v4179
        %v4202 = vadd.f32 %v4077, %v4181
        %v4203 = vadd.f32 %v4079, %v4183
        %v4204 = vadd.f32 %v4081, %v4185
        %v4205 = vadd.f32 %v4083, %v4187
        %v4206 = vadd.f32 %v4085, %v4189
        %v4207 = vadd.f32 %v4087, %v4191
        %v4208 = vadd.f32 %v4192, %v1249
        %v4209 = vadd.f32 %v4193, %v1249
        %v4210 = vadd.f32 %v4194, %v1249
        %v4211 = vadd.f32 %v4195, %v1249
        %v4212 = vadd.f32 %v4196, %v1249
        %v4213 = vadd.f32 %v4197, %v1249
        %v4214 = vadd.f32 %v4198, %v1249
        %v4215 = vadd.f32 %v4199, %v1249
        %v4216 = vadd.f32 %v4200, %v1249
        %v4217 = vadd.f32 %v4201, %v1249
        %v4218 = vadd.f32 %v4202, %v1249
        %v4219 = vadd.f32 %v4203, %v1249
        %v4220 = vadd.f32 %v4204, %v1249
        %v4221 = vadd.f32 %v4205, %v1249
        %v4222 = vadd.f32 %v4206, %v1249
        %v4223 = vadd.f32 %v4207, %v1249
        %v4225 = vperm.slane %v3976, 0
        %v4226 = vlaneseq
        %v4227 = vshrl.u32 %v4226, 7
        %4229 = vset.pattern.permute.xlu0 %v4227
        %4230 = vperm.xlu0 %4229, %v4225
        %v4231 = vpop.permute.xlu0 %4230
        %v4232 = vlaneseq
        %v4233 = vshrl.u32 %v4232, 7
        %v4234 = vadd.s32 %v4233, 8
        %4235 = vset.pattern.permute.xlu0 %v4234
        %4236 = vperm.xlu0 %4235, %v4225
        %v4237 = vpop.permute.xlu0 %4236
        %v4238 = vperm.slane %v3976, 1
        %v4239 = vlaneseq
        %v4240 = vshrl.u32 %v4239, 7
        %4242 = vset.pattern.permute.xlu0 %v4240
        %4243 = vperm.xlu0 %4242, %v4238
        %v4244 = vpop.permute.xlu0 %4243
        %v4245 = vlaneseq
        %v4246 = vshrl.u32 %v4245, 7
        %v4247 = vadd.s32 %v4246, 8
        %4248 = vset.pattern.permute.xlu0 %v4247
        %4249 = vperm.xlu0 %4248, %v4238
        %v4250 = vpop.permute.xlu0 %4249
        %v4251 = vperm.slane %v3976, 2
        %v4252 = vlaneseq
        %v4253 = vshrl.u32 %v4252, 7
        %4255 = vset.pattern.permute.xlu0 %v4253
        %4256 = vperm.xlu0 %4255, %v4251
        %v4257 = vpop.permute.xlu0 %4256
        %v4258 = vlaneseq
        %v4259 = vshrl.u32 %v4258, 7
        %v4260 = vadd.s32 %v4259, 8
        %4261 = vset.pattern.permute.xlu0 %v4260
        %4262 = vperm.xlu0 %4261, %v4251
        %v4263 = vpop.permute.xlu0 %4262
        %v4264 = vperm.slane %v3976, 3
        %v4265 = vlaneseq
        %v4266 = vshrl.u32 %v4265, 7
        %4268 = vset.pattern.permute.xlu0 %v4266
        %4269 = vperm.xlu0 %4268, %v4264
        %v4270 = vpop.permute.xlu0 %4269
        %v4271 = vlaneseq
        %v4272 = vshrl.u32 %v4271, 7
        %v4273 = vadd.s32 %v4272, 8
        %4274 = vset.pattern.permute.xlu0 %v4273
        %4275 = vperm.xlu0 %4274, %v4264
        %v4276 = vpop.permute.xlu0 %4275
        %v4277 = vperm.slane %v3976, 4
        %v4278 = vlaneseq
        %v4279 = vshrl.u32 %v4278, 7
        %4281 = vset.pattern.permute.xlu0 %v4279
        %4282 = vperm.xlu0 %4281, %v4277
        %v4283 = vpop.permute.xlu0 %4282
        %v4284 = vlaneseq
        %v4285 = vshrl.u32 %v4284, 7
        %v4286 = vadd.s32 %v4285, 8
        %4287 = vset.pattern.permute.xlu0 %v4286
        %4288 = vperm.xlu0 %4287, %v4277
        %v4289 = vpop.permute.xlu0 %4288
        %v4290 = vperm.slane %v3976, 5
        %v4291 = vlaneseq
        %v4292 = vshrl.u32 %v4291, 7
        %4294 = vset.pattern.permute.xlu0 %v4292
        %4295 = vperm.xlu0 %4294, %v4290
        %v4296 = vpop.permute.xlu0 %4295
        %v4297 = vlaneseq
        %v4298 = vshrl.u32 %v4297, 7
        %v4299 = vadd.s32 %v4298, 8
        %4300 = vset.pattern.permute.xlu0 %v4299
        %4301 = vperm.xlu0 %4300, %v4290
        %v4302 = vpop.permute.xlu0 %4301
        %v4303 = vperm.slane %v3976, 6
        %v4304 = vlaneseq
        %v4305 = vshrl.u32 %v4304, 7
        %4307 = vset.pattern.permute.xlu0 %v4305
        %4308 = vperm.xlu0 %4307, %v4303
        %v4309 = vpop.permute.xlu0 %4308
        %v4310 = vlaneseq
        %v4311 = vshrl.u32 %v4310, 7
        %v4312 = vadd.s32 %v4311, 8
        %4313 = vset.pattern.permute.xlu0 %v4312
        %4314 = vperm.xlu0 %4313, %v4303
        %v4315 = vpop.permute.xlu0 %4314
        %v4316 = vperm.slane %v3976, 7
        %v4317 = vlaneseq
        %v4318 = vshrl.u32 %v4317, 7
        %4320 = vset.pattern.permute.xlu0 %v4318
        %4321 = vperm.xlu0 %4320, %v4316
        %v4322 = vpop.permute.xlu0 %4321
        %v4323 = vlaneseq
        %v4324 = vshrl.u32 %v4323, 7
        %v4325 = vadd.s32 %v4324, 8
        %4326 = vset.pattern.permute.xlu0 %v4325
        %4327 = vperm.xlu0 %4326, %v4316
        %v4328 = vpop.permute.xlu0 %4327
        %v4345 = vmul.f32 %v4208, %v4231
        %v4346 = vmul.f32 %v4209, %v4237
        %v4347 = vmul.f32 %v4210, %v4244
        %v4348 = vmul.f32 %v4211, %v4250
        %v4349 = vmul.f32 %v4212, %v4257
        %v4350 = vmul.f32 %v4213, %v4263
        %v4351 = vmul.f32 %v4214, %v4270
        %v4352 = vmul.f32 %v4215, %v4276
        %v4353 = vmul.f32 %v4216, %v4283
        %v4354 = vmul.f32 %v4217, %v4289
        %v4355 = vmul.f32 %v4218, %v4296
        %v4356 = vmul.f32 %v4219, %v4302
        %v4357 = vmul.f32 %v4220, %v4309
        %v4358 = vmul.f32 %v4221, %v4315
        %v4359 = vmul.f32 %v4222, %v4322
        %v4360 = vmul.f32 %v4223, %v4328
        %4377 = vset.pattern.permute.xlu0 0
        %4378 = vperm.xlu0 %4377, %v4345
        %v4379 = vpop.permute.xlu0 %4378
        %4380 = vset.pattern.permute.xlu0 0
        %4381 = vperm.xlu0 %4380, %v4346
        %v4382 = vpop.permute.xlu0 %4381
        %4383 = vset.pattern.permute.xlu0 0
        %4384 = vperm.xlu0 %4383, %v4347
        %v4385 = vpop.permute.xlu0 %4384
        %4386 = vset.pattern.permute.xlu0 0
        %4387 = vperm.xlu0 %4386, %v4348
        %v4388 = vpop.permute.xlu0 %4387
        %4389 = vset.pattern.permute.xlu0 0
        %4390 = vperm.xlu0 %4389, %v4349
        %v4391 = vpop.permute.xlu0 %4390
        %4392 = vset.pattern.permute.xlu0 0
        %4393 = vperm.xlu0 %4392, %v4350
        %v4394 = vpop.permute.xlu0 %4393
        %4395 = vset.pattern.permute.xlu0 0
        %4396 = vperm.xlu0 %4395, %v4351
        %v4397 = vpop.permute.xlu0 %4396
        %4398 = vset.pattern.permute.xlu0 0
        %4399 = vperm.xlu0 %4398, %v4352
        %v4400 = vpop.permute.xlu0 %4399
        %4401 = vset.pattern.permute.xlu0 0
        %4402 = vperm.xlu0 %4401, %v4353
        %v4403 = vpop.permute.xlu0 %4402
        %4404 = vset.pattern.permute.xlu0 0
        %4405 = vperm.xlu0 %4404, %v4354
        %v4406 = vpop.permute.xlu0 %4405
        %4407 = vset.pattern.permute.xlu0 0
        %4408 = vperm.xlu0 %4407, %v4355
        %v4409 = vpop.permute.xlu0 %4408
        %4410 = vset.pattern.permute.xlu0 0
        %4411 = vperm.xlu0 %4410, %v4356
        %v4412 = vpop.permute.xlu0 %4411
        %4413 = vset.pattern.permute.xlu0 0
        %4414 = vperm.xlu0 %4413, %v4357
        %v4415 = vpop.permute.xlu0 %4414
        %4416 = vset.pattern.permute.xlu0 0
        %4417 = vperm.xlu0 %4416, %v4358
        %v4418 = vpop.permute.xlu0 %4417
        %4419 = vset.pattern.permute.xlu0 0
        %4420 = vperm.xlu0 %4419, %v4359
        %v4421 = vpop.permute.xlu0 %4420
        %4422 = vset.pattern.permute.xlu0 0
        %4423 = vperm.xlu0 %4422, %v4360
        %v4424 = vpop.permute.xlu0 %4423
        %v4425 = vperm.slane %v4379, %v946
        %v4426 = vperm.slane %v4382, %v1469
        %v4427 = vsel %vm1471, %v4426, %v4425
        %v4428 = vperm.slane %v4385, %v946
        %v4429 = vperm.slane %v4388, %v1469
        %v4430 = vsel %vm1471, %v4429, %v4428
        %v4431 = vperm.slane %v4391, %v946
        %v4432 = vperm.slane %v4394, %v1469
        %v4433 = vsel %vm1471, %v4432, %v4431
        %v4434 = vperm.slane %v4397, %v946
        %v4435 = vperm.slane %v4400, %v1469
        %v4436 = vsel %vm1471, %v4435, %v4434
        %v4437 = vperm.slane %v4403, %v946
        %v4438 = vperm.slane %v4406, %v1469
        %v4439 = vsel %vm1471, %v4438, %v4437
        %v4440 = vperm.slane %v4409, %v946
        %v4441 = vperm.slane %v4412, %v1469
        %v4442 = vsel %vm1471, %v4441, %v4440
        %v4443 = vperm.slane %v4415, %v946
        %v4444 = vperm.slane %v4418, %v1469
        %v4445 = vsel %vm1471, %v4444, %v4443
        %v4446 = vperm.slane %v4421, %v946
        %v4447 = vperm.slane %v4424, %v1469
        %v4448 = vsel %vm1471, %v4447, %v4446
        %v4449 = vsel %vm1494, %v4430, %v4427
        %v4450 = vsel %vm1496, %v4433, %v4449
        %v4451 = vsel %vm1498, %v4436, %v4450
        %v4452 = vsel %vm1500, %v4439, %v4451
        %v4453 = vsel %vm1502, %v4442, %v4452
        %v4454 = vsel %vm1504, %v4445, %v4453
        %v4455 = vsel %vm1506, %v4448, %v4454
        %s4457 = scalar_lea.vmem [#allocation4], 16
        %4458 = vst.msk [vmem:[%s4457] sm:$0xff] %vm651, %v4455
        %v4459 = vld [vmem:[#allocation2 + $0xe0] sm:$0xff]
        %v4460 = vld [vmem:[#allocation2 + $0xf8] sm:$0xff]
        %v4462 = vrot.slane %v4459, 1
        %v4463 = vrot.slane %v4459, 2
        %v4464 = vrot.slane %v4459, 3
        %v4465 = vrot.slane %v4459, 4
        %v4466 = vrot.slane %v4459, 5
        %v4467 = vrot.slane %v4459, 6
        %v4468 = vrot.slane %v4459, 7
        %v4469 = vperm.slane %v4459, 0
        %v4470 = vperm.slane %v4462, 0
        %v4471 = vperm.slane %v4463, 0
        %v4472 = vperm.slane %v4464, 0
        %v4473 = vperm.slane %v4465, 0
        %v4474 = vperm.slane %v4466, 0
        %v4475 = vperm.slane %v4467, 0
        %v4476 = vperm.slane %v4468, 0
        %v4485 = vadd.f32 %v4469, %v3978
        %v4486 = vadd.f32 %v4469, %v3979
        %v4487 = vadd.f32 %v4470, %v3978
        %v4488 = vadd.f32 %v4470, %v3979
        %v4489 = vadd.f32 %v4471, %v3978
        %v4490 = vadd.f32 %v4471, %v3979
        %v4491 = vadd.f32 %v4472, %v3978
        %v4492 = vadd.f32 %v4472, %v3979
        %v4493 = vadd.f32 %v4473, %v3978
        %v4494 = vadd.f32 %v4473, %v3979
        %v4495 = vadd.f32 %v4474, %v3978
        %v4496 = vadd.f32 %v4474, %v3979
        %v4497 = vadd.f32 %v4475, %v3978
        %v4498 = vadd.f32 %v4475, %v3979
        %v4499 = vadd.f32 %v4476, %v3978
        %v4500 = vadd.f32 %v4476, %v3979
        %v4501 = vmax.f32 %v4485, 0.0
        %v4502 = vmax.f32 %v4486, 0.0
        %v4503 = vmax.f32 %v4487, 0.0
        %v4504 = vmax.f32 %v4488, 0.0
        %v4505 = vmax.f32 %v4489, 0.0
        %v4506 = vmax.f32 %v4490, 0.0
        %v4507 = vmax.f32 %v4491, 0.0
        %v4508 = vmax.f32 %v4492, 0.0
        %v4509 = vmax.f32 %v4493, 0.0
        %v4510 = vmax.f32 %v4494, 0.0
        %v4511 = vmax.f32 %v4495, 0.0
        %v4512 = vmax.f32 %v4496, 0.0
        %v4513 = vmax.f32 %v4497, 0.0
        %v4514 = vmax.f32 %v4498, 0.0
        %v4515 = vmax.f32 %v4499, 0.0
        %v4516 = vmax.f32 %v4500, 0.0
        %v4517 = vmul.f32 %v4501, %v1072
        %v4518 = vmul.f32 %v4502, %v1072
        %v4519 = vmul.f32 %v4503, %v1072
        %v4520 = vmul.f32 %v4504, %v1072
        %v4521 = vmul.f32 %v4505, %v1072
        %v4522 = vmul.f32 %v4506, %v1072
        %v4523 = vmul.f32 %v4507, %v1072
        %v4524 = vmul.f32 %v4508, %v1072
        %v4525 = vmul.f32 %v4509, %v1072
        %v4526 = vmul.f32 %v4510, %v1072
        %v4527 = vmul.f32 %v4511, %v1072
        %v4528 = vmul.f32 %v4512, %v1072
        %v4529 = vmul.f32 %v4513, %v1072
        %v4530 = vmul.f32 %v4514, %v1072
        %v4531 = vmul.f32 %v4515, %v1072
        %v4532 = vmul.f32 %v4516, %v1072
        %4533 = vadd.xlane.f32.xlu0 %v4517
        %v4534 = vpop.xlane.xlu0 %4533
        %4535 = vadd.xlane.f32.xlu0 %v4518
        %v4536 = vpop.xlane.xlu0 %4535
        %4537 = vadd.xlane.f32.xlu0 %v4519
        %v4538 = vpop.xlane.xlu0 %4537
        %4539 = vadd.xlane.f32.xlu0 %v4520
        %v4540 = vpop.xlane.xlu0 %4539
        %4541 = vadd.xlane.f32.xlu0 %v4521
        %v4542 = vpop.xlane.xlu0 %4541
        %4543 = vadd.xlane.f32.xlu0 %v4522
        %v4544 = vpop.xlane.xlu0 %4543
        %4545 = vadd.xlane.f32.xlu0 %v4523
        %v4546 = vpop.xlane.xlu0 %4545
        %4547 = vadd.xlane.f32.xlu0 %v4524
        %v4548 = vpop.xlane.xlu0 %4547
        %4549 = vadd.xlane.f32.xlu0 %v4525
        %v4550 = vpop.xlane.xlu0 %4549
        %4551 = vadd.xlane.f32.xlu0 %v4526
        %v4552 = vpop.xlane.xlu0 %4551
        %4553 = vadd.xlane.f32.xlu0 %v4527
        %v4554 = vpop.xlane.xlu0 %4553
        %4555 = vadd.xlane.f32.xlu0 %v4528
        %v4556 = vpop.xlane.xlu0 %4555
        %4557 = vadd.xlane.f32.xlu0 %v4529
        %v4558 = vpop.xlane.xlu0 %4557
        %4559 = vadd.xlane.f32.xlu0 %v4530
        %v4560 = vpop.xlane.xlu0 %4559
        %4561 = vadd.xlane.f32.xlu0 %v4531
        %v4562 = vpop.xlane.xlu0 %4561
        %4563 = vadd.xlane.f32.xlu0 %v4532
        %v4564 = vpop.xlane.xlu0 %4563
        %v4566 = vrot.slane %v4460, 1
        %v4567 = vrot.slane %v4460, 2
        %v4568 = vrot.slane %v4460, 3
        %v4569 = vrot.slane %v4460, 4
        %v4570 = vrot.slane %v4460, 5
        %v4571 = vrot.slane %v4460, 6
        %v4572 = vrot.slane %v4460, 7
        %v4573 = vperm.slane %v4460, 0
        %v4574 = vperm.slane %v4566, 0
        %v4575 = vperm.slane %v4567, 0
        %v4576 = vperm.slane %v4568, 0
        %v4577 = vperm.slane %v4569, 0
        %v4578 = vperm.slane %v4570, 0
        %v4579 = vperm.slane %v4571, 0
        %v4580 = vperm.slane %v4572, 0
        %v4589 = vadd.f32 %v4573, %v3980
        %v4590 = vadd.f32 %v4573, %v3981
        %v4591 = vadd.f32 %v4574, %v3980
        %v4592 = vadd.f32 %v4574, %v3981
        %v4593 = vadd.f32 %v4575, %v3980
        %v4594 = vadd.f32 %v4575, %v3981
        %v4595 = vadd.f32 %v4576, %v3980
        %v4596 = vadd.f32 %v4576, %v3981
        %v4597 = vadd.f32 %v4577, %v3980
        %v4598 = vadd.f32 %v4577, %v3981
        %v4599 = vadd.f32 %v4578, %v3980
        %v4600 = vadd.f32 %v4578, %v3981
        %v4601 = vadd.f32 %v4579, %v3980
        %v4602 = vadd.f32 %v4579, %v3981
        %v4603 = vadd.f32 %v4580, %v3980
        %v4604 = vadd.f32 %v4580, %v3981
        %v4605 = vmax.f32 %v4589, 0.0
        %v4606 = vmax.f32 %v4590, 0.0
        %v4607 = vmax.f32 %v4591, 0.0
        %v4608 = vmax.f32 %v4592, 0.0
        %v4609 = vmax.f32 %v4593, 0.0
        %v4610 = vmax.f32 %v4594, 0.0
        %v4611 = vmax.f32 %v4595, 0.0
        %v4612 = vmax.f32 %v4596, 0.0
        %v4613 = vmax.f32 %v4597, 0.0
        %v4614 = vmax.f32 %v4598, 0.0
        %v4615 = vmax.f32 %v4599, 0.0
        %v4616 = vmax.f32 %v4600, 0.0
        %v4617 = vmax.f32 %v4601, 0.0
        %v4618 = vmax.f32 %v4602, 0.0
        %v4619 = vmax.f32 %v4603, 0.0
        %v4620 = vmax.f32 %v4604, 0.0
        %v4621 = vmul.f32 %v4605, %v1179
        %v4622 = vmul.f32 %v4606, %v1179
        %v4623 = vmul.f32 %v4607, %v1179
        %v4624 = vmul.f32 %v4608, %v1179
        %v4625 = vmul.f32 %v4609, %v1179
        %v4626 = vmul.f32 %v4610, %v1179
        %v4627 = vmul.f32 %v4611, %v1179
        %v4628 = vmul.f32 %v4612, %v1179
        %v4629 = vmul.f32 %v4613, %v1179
        %v4630 = vmul.f32 %v4614, %v1179
        %v4631 = vmul.f32 %v4615, %v1179
        %v4632 = vmul.f32 %v4616, %v1179
        %v4633 = vmul.f32 %v4617, %v1179
        %v4634 = vmul.f32 %v4618, %v1179
        %v4635 = vmul.f32 %v4619, %v1179
        %v4636 = vmul.f32 %v4620, %v1179
        %4637 = vadd.xlane.f32.xlu0 %v4621
        %v4638 = vpop.xlane.xlu0 %4637
        %4639 = vadd.xlane.f32.xlu0 %v4622
        %v4640 = vpop.xlane.xlu0 %4639
        %4641 = vadd.xlane.f32.xlu0 %v4623
        %v4642 = vpop.xlane.xlu0 %4641
        %4643 = vadd.xlane.f32.xlu0 %v4624
        %v4644 = vpop.xlane.xlu0 %4643
        %4645 = vadd.xlane.f32.xlu0 %v4625
        %v4646 = vpop.xlane.xlu0 %4645
        %4647 = vadd.xlane.f32.xlu0 %v4626
        %v4648 = vpop.xlane.xlu0 %4647
        %4649 = vadd.xlane.f32.xlu0 %v4627
        %v4650 = vpop.xlane.xlu0 %4649
        %4651 = vadd.xlane.f32.xlu0 %v4628
        %v4652 = vpop.xlane.xlu0 %4651
        %4653 = vadd.xlane.f32.xlu0 %v4629
        %v4654 = vpop.xlane.xlu0 %4653
        %4655 = vadd.xlane.f32.xlu0 %v4630
        %v4656 = vpop.xlane.xlu0 %4655
        %4657 = vadd.xlane.f32.xlu0 %v4631
        %v4658 = vpop.xlane.xlu0 %4657
        %4659 = vadd.xlane.f32.xlu0 %v4632
        %v4660 = vpop.xlane.xlu0 %4659
        %4661 = vadd.xlane.f32.xlu0 %v4633
        %v4662 = vpop.xlane.xlu0 %4661
        %4663 = vadd.xlane.f32.xlu0 %v4634
        %v4664 = vpop.xlane.xlu0 %4663
        %4665 = vadd.xlane.f32.xlu0 %v4635
        %v4666 = vpop.xlane.xlu0 %4665
        %4667 = vadd.xlane.f32.xlu0 %v4636
        %v4668 = vpop.xlane.xlu0 %4667
        %v4669 = vadd.f32 %v4534, %v4638
        %v4670 = vadd.f32 %v4536, %v4640
        %v4671 = vadd.f32 %v4538, %v4642
        %v4672 = vadd.f32 %v4540, %v4644
        %v4673 = vadd.f32 %v4542, %v4646
        %v4674 = vadd.f32 %v4544, %v4648
        %v4675 = vadd.f32 %v4546, %v4650
        %v4676 = vadd.f32 %v4548, %v4652
        %v4677 = vadd.f32 %v4550, %v4654
        %v4678 = vadd.f32 %v4552, %v4656
        %v4679 = vadd.f32 %v4554, %v4658
        %v4680 = vadd.f32 %v4556, %v4660
        %v4681 = vadd.f32 %v4558, %v4662
        %v4682 = vadd.f32 %v4560, %v4664
        %v4683 = vadd.f32 %v4562, %v4666
        %v4684 = vadd.f32 %v4564, %v4668
        %v4685 = vadd.f32 %v4669, %v1249
        %v4686 = vadd.f32 %v4670, %v1249
        %v4687 = vadd.f32 %v4671, %v1249
        %v4688 = vadd.f32 %v4672, %v1249
        %v4689 = vadd.f32 %v4673, %v1249
        %v4690 = vadd.f32 %v4674, %v1249
        %v4691 = vadd.f32 %v4675, %v1249
        %v4692 = vadd.f32 %v4676, %v1249
        %v4693 = vadd.f32 %v4677, %v1249
        %v4694 = vadd.f32 %v4678, %v1249
        %v4695 = vadd.f32 %v4679, %v1249
        %v4696 = vadd.f32 %v4680, %v1249
        %v4697 = vadd.f32 %v4681, %v1249
        %v4698 = vadd.f32 %v4682, %v1249
        %v4699 = vadd.f32 %v4683, %v1249
        %v4700 = vadd.f32 %v4684, %v1249
        %v4702 = vperm.slane %v3977, 0
        %v4703 = vlaneseq
        %v4704 = vshrl.u32 %v4703, 7
        %4706 = vset.pattern.permute.xlu0 %v4704
        %4707 = vperm.xlu0 %4706, %v4702
        %v4708 = vpop.permute.xlu0 %4707
        %v4709 = vlaneseq
        %v4710 = vshrl.u32 %v4709, 7
        %v4711 = vadd.s32 %v4710, 8
        %4712 = vset.pattern.permute.xlu0 %v4711
        %4713 = vperm.xlu0 %4712, %v4702
        %v4714 = vpop.permute.xlu0 %4713
        %v4715 = vperm.slane %v3977, 1
        %v4716 = vlaneseq
        %v4717 = vshrl.u32 %v4716, 7
        %4719 = vset.pattern.permute.xlu0 %v4717
        %4720 = vperm.xlu0 %4719, %v4715
        %v4721 = vpop.permute.xlu0 %4720
        %v4722 = vlaneseq
        %v4723 = vshrl.u32 %v4722, 7
        %v4724 = vadd.s32 %v4723, 8
        %4725 = vset.pattern.permute.xlu0 %v4724
        %4726 = vperm.xlu0 %4725, %v4715
        %v4727 = vpop.permute.xlu0 %4726
        %v4728 = vperm.slane %v3977, 2
        %v4729 = vlaneseq
        %v4730 = vshrl.u32 %v4729, 7
        %4732 = vset.pattern.permute.xlu0 %v4730
        %4733 = vperm.xlu0 %4732, %v4728
        %v4734 = vpop.permute.xlu0 %4733
        %v4735 = vlaneseq
        %v4736 = vshrl.u32 %v4735, 7
        %v4737 = vadd.s32 %v4736, 8
        %4738 = vset.pattern.permute.xlu0 %v4737
        %4739 = vperm.xlu0 %4738, %v4728
        %v4740 = vpop.permute.xlu0 %4739
        %v4741 = vperm.slane %v3977, 3
        %v4742 = vlaneseq
        %v4743 = vshrl.u32 %v4742, 7
        %4745 = vset.pattern.permute.xlu0 %v4743
        %4746 = vperm.xlu0 %4745, %v4741
        %v4747 = vpop.permute.xlu0 %4746
        %v4748 = vlaneseq
        %v4749 = vshrl.u32 %v4748, 7
        %v4750 = vadd.s32 %v4749, 8
        %4751 = vset.pattern.permute.xlu0 %v4750
        %4752 = vperm.xlu0 %4751, %v4741
        %v4753 = vpop.permute.xlu0 %4752
        %v4754 = vperm.slane %v3977, 4
        %v4755 = vlaneseq
        %v4756 = vshrl.u32 %v4755, 7
        %4758 = vset.pattern.permute.xlu0 %v4756
        %4759 = vperm.xlu0 %4758, %v4754
        %v4760 = vpop.permute.xlu0 %4759
        %v4761 = vlaneseq
        %v4762 = vshrl.u32 %v4761, 7
        %v4763 = vadd.s32 %v4762, 8
        %4764 = vset.pattern.permute.xlu0 %v4763
        %4765 = vperm.xlu0 %4764, %v4754
        %v4766 = vpop.permute.xlu0 %4765
        %v4767 = vperm.slane %v3977, 5
        %v4768 = vlaneseq
        %v4769 = vshrl.u32 %v4768, 7
        %4771 = vset.pattern.permute.xlu0 %v4769
        %4772 = vperm.xlu0 %4771, %v4767
        %v4773 = vpop.permute.xlu0 %4772
        %v4774 = vlaneseq
        %v4775 = vshrl.u32 %v4774, 7
        %v4776 = vadd.s32 %v4775, 8
        %4777 = vset.pattern.permute.xlu0 %v4776
        %4778 = vperm.xlu0 %4777, %v4767
        %v4779 = vpop.permute.xlu0 %4778
        %v4780 = vperm.slane %v3977, 6
        %v4781 = vlaneseq
        %v4782 = vshrl.u32 %v4781, 7
        %4784 = vset.pattern.permute.xlu0 %v4782
        %4785 = vperm.xlu0 %4784, %v4780
        %v4786 = vpop.permute.xlu0 %4785
        %v4787 = vlaneseq
        %v4788 = vshrl.u32 %v4787, 7
        %v4789 = vadd.s32 %v4788, 8
        %4790 = vset.pattern.permute.xlu0 %v4789
        %4791 = vperm.xlu0 %4790, %v4780
        %v4792 = vpop.permute.xlu0 %4791
        %v4793 = vperm.slane %v3977, 7
        %v4794 = vlaneseq
        %v4795 = vshrl.u32 %v4794, 7
        %4797 = vset.pattern.permute.xlu0 %v4795
        %4798 = vperm.xlu0 %4797, %v4793
        %v4799 = vpop.permute.xlu0 %4798
        %v4800 = vlaneseq
        %v4801 = vshrl.u32 %v4800, 7
        %v4802 = vadd.s32 %v4801, 8
        %4803 = vset.pattern.permute.xlu0 %v4802
        %4804 = vperm.xlu0 %4803, %v4793
        %v4805 = vpop.permute.xlu0 %4804
        %v4822 = vmul.f32 %v4685, %v4708
        %v4823 = vmul.f32 %v4686, %v4714
        %v4824 = vmul.f32 %v4687, %v4721
        %v4825 = vmul.f32 %v4688, %v4727
        %v4826 = vmul.f32 %v4689, %v4734
        %v4827 = vmul.f32 %v4690, %v4740
        %v4828 = vmul.f32 %v4691, %v4747
        %v4829 = vmul.f32 %v4692, %v4753
        %v4830 = vmul.f32 %v4693, %v4760
        %v4831 = vmul.f32 %v4694, %v4766
        %v4832 = vmul.f32 %v4695, %v4773
        %v4833 = vmul.f32 %v4696, %v4779
        %v4834 = vmul.f32 %v4697, %v4786
        %v4835 = vmul.f32 %v4698, %v4792
        %v4836 = vmul.f32 %v4699, %v4799
        %v4837 = vmul.f32 %v4700, %v4805
        %4854 = vset.pattern.permute.xlu0 0
        %4855 = vperm.xlu0 %4854, %v4822
        %v4856 = vpop.permute.xlu0 %4855
        %4857 = vset.pattern.permute.xlu0 0
        %4858 = vperm.xlu0 %4857, %v4823
        %v4859 = vpop.permute.xlu0 %4858
        %4860 = vset.pattern.permute.xlu0 0
        %4861 = vperm.xlu0 %4860, %v4824
        %v4862 = vpop.permute.xlu0 %4861
        %4863 = vset.pattern.permute.xlu0 0
        %4864 = vperm.xlu0 %4863, %v4825
        %v4865 = vpop.permute.xlu0 %4864
        %4866 = vset.pattern.permute.xlu0 0
        %4867 = vperm.xlu0 %4866, %v4826
        %v4868 = vpop.permute.xlu0 %4867
        %4869 = vset.pattern.permute.xlu0 0
        %4870 = vperm.xlu0 %4869, %v4827
        %v4871 = vpop.permute.xlu0 %4870
        %4872 = vset.pattern.permute.xlu0 0
        %4873 = vperm.xlu0 %4872, %v4828
        %v4874 = vpop.permute.xlu0 %4873
        %4875 = vset.pattern.permute.xlu0 0
        %4876 = vperm.xlu0 %4875, %v4829
        %v4877 = vpop.permute.xlu0 %4876
        %4878 = vset.pattern.permute.xlu0 0
        %4879 = vperm.xlu0 %4878, %v4830
        %v4880 = vpop.permute.xlu0 %4879
        %4881 = vset.pattern.permute.xlu0 0
        %4882 = vperm.xlu0 %4881, %v4831
        %v4883 = vpop.permute.xlu0 %4882
        %4884 = vset.pattern.permute.xlu0 0
        %4885 = vperm.xlu0 %4884, %v4832
        %v4886 = vpop.permute.xlu0 %4885
        %4887 = vset.pattern.permute.xlu0 0
        %4888 = vperm.xlu0 %4887, %v4833
        %v4889 = vpop.permute.xlu0 %4888
        %4890 = vset.pattern.permute.xlu0 0
        %4891 = vperm.xlu0 %4890, %v4834
        %v4892 = vpop.permute.xlu0 %4891
        %4893 = vset.pattern.permute.xlu0 0
        %4894 = vperm.xlu0 %4893, %v4835
        %v4895 = vpop.permute.xlu0 %4894
        %4896 = vset.pattern.permute.xlu0 0
        %4897 = vperm.xlu0 %4896, %v4836
        %v4898 = vpop.permute.xlu0 %4897
        %4899 = vset.pattern.permute.xlu0 0
        %4900 = vperm.xlu0 %4899, %v4837
        %v4901 = vpop.permute.xlu0 %4900
        %v4902 = vperm.slane %v4856, %v946
        %v4903 = vperm.slane %v4859, %v1469
        %v4904 = vsel %vm1471, %v4903, %v4902
        %v4905 = vperm.slane %v4862, %v946
        %v4906 = vperm.slane %v4865, %v1469
        %v4907 = vsel %vm1471, %v4906, %v4905
        %v4908 = vperm.slane %v4868, %v946
        %v4909 = vperm.slane %v4871, %v1469
        %v4910 = vsel %vm1471, %v4909, %v4908
        %v4911 = vperm.slane %v4874, %v946
        %v4912 = vperm.slane %v4877, %v1469
        %v4913 = vsel %vm1471, %v4912, %v4911
        %v4914 = vperm.slane %v4880, %v946
        %v4915 = vperm.slane %v4883, %v1469
        %v4916 = vsel %vm1471, %v4915, %v4914
        %v4917 = vperm.slane %v4886, %v946
        %v4918 = vperm.slane %v4889, %v1469
        %v4919 = vsel %vm1471, %v4918, %v4917
        %v4920 = vperm.slane %v4892, %v946
        %v4921 = vperm.slane %v4895, %v1469
        %v4922 = vsel %vm1471, %v4921, %v4920
        %v4923 = vperm.slane %v4898, %v946
        %v4924 = vperm.slane %v4901, %v1469
        %v4925 = vsel %vm1471, %v4924, %v4923
        %v4926 = vsel %vm1494, %v4907, %v4904
        %v4927 = vsel %vm1496, %v4910, %v4926
        %v4928 = vsel %vm1498, %v4913, %v4927
        %v4929 = vsel %vm1500, %v4916, %v4928
        %v4930 = vsel %vm1502, %v4919, %v4929
        %v4931 = vsel %vm1504, %v4922, %v4930
        %v4932 = vsel %vm1506, %v4925, %v4931
        %4934 = vst.msk [vmem:[%s4457 + $0x8] sm:$0xff] %vm651, %v4932
        %v4935 = vmul.f32 %v997, 10.0
        %v4936 = vmul.f32 %v1000, 10.0
        %v4937 = vmul.f32 %v3000, 10.0
        %v4938 = vmul.f32 %v3003, 10.0
        %v4939 = vsel %vm651, %v4935, -inf
        %4940 = vmax.xlane.f32.xlu0 %v4939
        %v4941 = vpop.xlane.xlu0 %4940
        %v4942 = vsel %vm651, %v4936, -inf
        %4943 = vmax.xlane.f32.xlu0 %v4942
        %v4944 = vpop.xlane.xlu0 %4943
        %v4945 = vsel %vm651, %v4937, -inf
        %4946 = vmax.xlane.f32.xlu0 %v4945
        %v4947 = vpop.xlane.xlu0 %4946
        %v4948 = vsel %vm651, %v4938, -inf
        %4949 = vmax.xlane.f32.xlu0 %v4948
        %v4950 = vpop.xlane.xlu0 %4949
        %v4951 = vsub.f32 %v4935, %v4941
        %v4952 = vsub.f32 %v4936, %v4944
        %v4953 = vsub.f32 %v4937, %v4947
        %v4954 = vsub.f32 %v4938, %v4950
        %v4955 = vmul.f32 %v4951, 1.442695
        %v4956 = vpow.pop %v4955
        %v4957 = vmul.f32 %v4952, 1.442695
        %v4958 = vpow.pop %v4957
        %v4959 = vmul.f32 %v4953, 1.442695
        %v4960 = vpow.pop %v4959
        %v4961 = vmul.f32 %v4954, 1.442695
        %v4962 = vpow.pop %v4961
        %v4963 = vsel %vm651, %v4956, 0.0
        %4964 = vadd.xlane.f32.xlu0 %v4963
        %v4965 = vpop.xlane.xlu0 %4964
        %v4966 = vsel %vm651, %v4958, 0.0
        %4967 = vadd.xlane.f32.xlu0 %v4966
        %v4968 = vpop.xlane.xlu0 %4967
        %v4969 = vsel %vm651, %v4960, 0.0
        %4970 = vadd.xlane.f32.xlu0 %v4969
        %v4971 = vpop.xlane.xlu0 %4970
        %v4972 = vsel %vm651, %v4962, 0.0
        %4973 = vadd.xlane.f32.xlu0 %v4972
        %v4974 = vpop.xlane.xlu0 %4973
        %v4975 = vlog2.pop %v4965
        %v4976 = vmul.f32 %v4975, 0.6931472
        %v4977 = vlog2.pop %v4968
        %v4978 = vmul.f32 %v4977, 0.6931472
        %v4979 = vlog2.pop %v4971
        %v4980 = vmul.f32 %v4979, 0.6931472
        %v4981 = vlog2.pop %v4974
        %v4982 = vmul.f32 %v4981, 0.6931472
        %v4983 = vadd.f32 %v4941, %v4976
        %v4984 = vadd.f32 %v4944, %v4978
        %v4985 = vadd.f32 %v4947, %v4980
        %v4986 = vadd.f32 %v4950, %v4982
        %v4987 = vsub.f32 %v4935, %v4983
        %v4988 = vsub.f32 %v4936, %v4984
        %v4989 = vsub.f32 %v4937, %v4985
        %v4990 = vsub.f32 %v4938, %v4986
        %v4991 = vsel %vm651, %v4987, -inf
        %v4992 = vsel %vm651, %v4988, -inf
        %v4993 = vmax.f32 %v4991, %v4992
        %v4994 = vrot.slane %v4993, 4
        %v4995 = vmax.f32 %v4993, %v4994
        %v4996 = vrot.slane %v4995, 2
        %v4997 = vmax.f32 %v4995, %v4996
        %v4998 = vrot.slane %v4997, 1
        %v4999 = vmax.f32 %v4997, %v4998
        %v5000 = vsel %vm651, %v4989, -inf
        %v5001 = vsel %vm651, %v4990, -inf
        %v5002 = vmax.f32 %v5000, %v5001
        %v5003 = vrot.slane %v5002, 4
        %v5004 = vmax.f32 %v5002, %v5003
        %v5005 = vrot.slane %v5004, 2
        %v5006 = vmax.f32 %v5004, %v5005
        %v5007 = vrot.slane %v5006, 1
        %v5008 = vmax.f32 %v5006, %v5007
        %v5009 = vsub.f32 %v4987, %v4999
        %v5010 = vsub.f32 %v4988, %v4999
        %v5011 = vsub.f32 %v4989, %v5008
        %v5012 = vsub.f32 %v4990, %v5008
        %v5013 = vmul.f32 %v5009, 1.442695
        %v5014 = vpow.pop %v5013
        %v5015 = vmul.f32 %v5010, 1.442695
        %v5016 = vpow.pop %v5015
        %v5017 = vmul.f32 %v5011, 1.442695
        %v5018 = vpow.pop %v5017
        %v5019 = vmul.f32 %v5012, 1.442695
        %v5020 = vpow.pop %v5019
        %v5021 = vsel %vm651, %v5014, 0.0
        %v5022 = vsel %vm651, %v5016, 0.0
        %v5023 = vadd.f32 %v5021, %v5022
        %v5024 = vrot.slane %v5023, 4
        %v5025 = vadd.f32 %v5023, %v5024
        %v5026 = vrot.slane %v5025, 2
        %v5027 = vadd.f32 %v5025, %v5026
        %v5028 = vrot.slane %v5027, 1
        %v5029 = vadd.f32 %v5027, %v5028
        %v5030 = vsel %vm651, %v5018, 0.0
        %v5031 = vsel %vm651, %v5020, 0.0
        %v5032 = vadd.f32 %v5030, %v5031
        %v5033 = vrot.slane %v5032, 4
        %v5034 = vadd.f32 %v5032, %v5033
        %v5035 = vrot.slane %v5034, 2
        %v5036 = vadd.f32 %v5034, %v5035
        %v5037 = vrot.slane %v5036, 1
        %v5038 = vadd.f32 %v5036, %v5037
        %v5039 = vlog2.pop %v5029
        %v5040 = vmul.f32 %v5039, 0.6931472
        %v5041 = vlog2.pop %v5038
        %v5042 = vmul.f32 %v5041, 0.6931472
        %v5043 = vadd.f32 %v4999, %v5040
        %v5044 = vadd.f32 %v5008, %v5042
        %v5045 = vsub.f32 %v4987, %v5043
        %v5046 = vsub.f32 %v4988, %v5043
        %v5047 = vsub.f32 %v4989, %v5044
        %v5048 = vsub.f32 %v4990, %v5044
        %v5049 = vsel %vm651, %v5045, -inf
        %5050 = vmax.xlane.f32.xlu0 %v5049
        %v5051 = vpop.xlane.xlu0 %5050
        %v5052 = vsel %vm651, %v5046, -inf
        %5053 = vmax.xlane.f32.xlu0 %v5052
        %v5054 = vpop.xlane.xlu0 %5053
        %v5055 = vsel %vm651, %v5047, -inf
        %5056 = vmax.xlane.f32.xlu0 %v5055
        %v5057 = vpop.xlane.xlu0 %5056
        %v5058 = vsel %vm651, %v5048, -inf
        %5059 = vmax.xlane.f32.xlu0 %v5058
        %v5060 = vpop.xlane.xlu0 %5059
        %v5061 = vsub.f32 %v5045, %v5051
        %v5062 = vsub.f32 %v5046, %v5054
        %v5063 = vsub.f32 %v5047, %v5057
        %v5064 = vsub.f32 %v5048, %v5060
        %v5065 = vmul.f32 %v5061, 1.442695
        %v5066 = vpow.pop %v5065
        %v5067 = vmul.f32 %v5062, 1.442695
        %v5068 = vpow.pop %v5067
        %v5069 = vmul.f32 %v5063, 1.442695
        %v5070 = vpow.pop %v5069
        %v5071 = vmul.f32 %v5064, 1.442695
        %v5072 = vpow.pop %v5071
        %v5073 = vsel %vm651, %v5066, 0.0
        %5074 = vadd.xlane.f32.xlu0 %v5073
        %v5075 = vpop.xlane.xlu0 %5074
        %v5076 = vsel %vm651, %v5068, 0.0
        %5077 = vadd.xlane.f32.xlu0 %v5076
        %v5078 = vpop.xlane.xlu0 %5077
        %v5079 = vsel %vm651, %v5070, 0.0
        %5080 = vadd.xlane.f32.xlu0 %v5079
        %v5081 = vpop.xlane.xlu0 %5080
        %v5082 = vsel %vm651, %v5072, 0.0
        %5083 = vadd.xlane.f32.xlu0 %v5082
        %v5084 = vpop.xlane.xlu0 %5083
        %v5085 = vlog2.pop %v5075
        %v5086 = vmul.f32 %v5085, 0.6931472
        %v5087 = vlog2.pop %v5078
        %v5088 = vmul.f32 %v5087, 0.6931472
        %v5089 = vlog2.pop %v5081
        %v5090 = vmul.f32 %v5089, 0.6931472
        %v5091 = vlog2.pop %v5084
        %v5092 = vmul.f32 %v5091, 0.6931472
        %v5093 = vadd.f32 %v5051, %v5086
        %v5094 = vadd.f32 %v5054, %v5088
        %v5095 = vadd.f32 %v5057, %v5090
        %v5096 = vadd.f32 %v5060, %v5092
        %v5097 = vsub.f32 %v5045, %v5093
        %v5098 = vsub.f32 %v5046, %v5094
        %v5099 = vsub.f32 %v5047, %v5095
        %v5100 = vsub.f32 %v5048, %v5096
        %v5101 = vsel %vm651, %v5097, -inf
        %v5102 = vsel %vm651, %v5098, -inf
        %v5103 = vmax.f32 %v5101, %v5102
        %v5104 = vrot.slane %v5103, 4
        %v5105 = vmax.f32 %v5103, %v5104
        %v5106 = vrot.slane %v5105, 2
        %v5107 = vmax.f32 %v5105, %v5106
        %v5108 = vrot.slane %v5107, 1
        %v5109 = vmax.f32 %v5107, %v5108
        %v5110 = vsel %vm651, %v5099, -inf
        %v5111 = vsel %vm651, %v5100, -inf
        %v5112 = vmax.f32 %v5110, %v5111
        %v5113 = vrot.slane %v5112, 4
        %v5114 = vmax.f32 %v5112, %v5113
        %v5115 = vrot.slane %v5114, 2
        %v5116 = vmax.f32 %v5114, %v5115
        %v5117 = vrot.slane %v5116, 1
        %v5118 = vmax.f32 %v5116, %v5117
        %v5119 = vsub.f32 %v5097, %v5109
        %v5120 = vsub.f32 %v5098, %v5109
        %v5121 = vsub.f32 %v5099, %v5118
        %v5122 = vsub.f32 %v5100, %v5118
        %v5123 = vmul.f32 %v5119, 1.442695
        %v5124 = vpow.pop %v5123
        %v5125 = vmul.f32 %v5120, 1.442695
        %v5126 = vpow.pop %v5125
        %v5127 = vmul.f32 %v5121, 1.442695
        %v5128 = vpow.pop %v5127
        %v5129 = vmul.f32 %v5122, 1.442695
        %v5130 = vpow.pop %v5129
        %v5131 = vsel %vm651, %v5124, 0.0
        %v5132 = vsel %vm651, %v5126, 0.0
        %v5133 = vadd.f32 %v5131, %v5132
        %v5134 = vrot.slane %v5133, 4
        %v5135 = vadd.f32 %v5133, %v5134
        %v5136 = vrot.slane %v5135, 2
        %v5137 = vadd.f32 %v5135, %v5136
        %v5138 = vrot.slane %v5137, 1
        %v5139 = vadd.f32 %v5137, %v5138
        %v5140 = vsel %vm651, %v5128, 0.0
        %v5141 = vsel %vm651, %v5130, 0.0
        %v5142 = vadd.f32 %v5140, %v5141
        %v5143 = vrot.slane %v5142, 4
        %v5144 = vadd.f32 %v5142, %v5143
        %v5145 = vrot.slane %v5144, 2
        %v5146 = vadd.f32 %v5144, %v5145
        %v5147 = vrot.slane %v5146, 1
        %v5148 = vadd.f32 %v5146, %v5147
        %v5149 = vlog2.pop %v5139
        %v5150 = vmul.f32 %v5149, 0.6931472
        %v5151 = vlog2.pop %v5148
        %v5152 = vmul.f32 %v5151, 0.6931472
        %v5153 = vadd.f32 %v5109, %v5150
        %v5154 = vadd.f32 %v5118, %v5152
        %v5155 = vsub.f32 %v5097, %v5153
        %v5156 = vsub.f32 %v5098, %v5153
        %v5157 = vsub.f32 %v5099, %v5154
        %v5158 = vsub.f32 %v5100, %v5154
        %v5159 = vsel %vm651, %v5155, -inf
        %5160 = vmax.xlane.f32.xlu0 %v5159
        %v5161 = vpop.xlane.xlu0 %5160
        %v5162 = vsel %vm651, %v5156, -inf
        %5163 = vmax.xlane.f32.xlu0 %v5162
        %v5164 = vpop.xlane.xlu0 %5163
        %v5165 = vsel %vm651, %v5157, -inf
        %5166 = vmax.xlane.f32.xlu0 %v5165
        %v5167 = vpop.xlane.xlu0 %5166
        %v5168 = vsel %vm651, %v5158, -inf
        %5169 = vmax.xlane.f32.xlu0 %v5168
        %v5170 = vpop.xlane.xlu0 %5169
        %v5171 = vsub.f32 %v5155, %v5161
        %v5172 = vsub.f32 %v5156, %v5164
        %v5173 = vsub.f32 %v5157, %v5167
        %v5174 = vsub.f32 %v5158, %v5170
        %v5175 = vmul.f32 %v5171, 1.442695
        %v5176 = vpow.pop %v5175
        %v5177 = vmul.f32 %v5172, 1.442695
        %v5178 = vpow.pop %v5177
        %v5179 = vmul.f32 %v5173, 1.442695
        %v5180 = vpow.pop %v5179
        %v5181 = vmul.f32 %v5174, 1.442695
        %v5182 = vpow.pop %v5181
        %v5183 = vsel %vm651, %v5176, 0.0
        %5184 = vadd.xlane.f32.xlu0 %v5183
        %v5185 = vpop.xlane.xlu0 %5184
        %v5186 = vsel %vm651, %v5178, 0.0
        %5187 = vadd.xlane.f32.xlu0 %v5186
        %v5188 = vpop.xlane.xlu0 %5187
        %v5189 = vsel %vm651, %v5180, 0.0
        %5190 = vadd.xlane.f32.xlu0 %v5189
        %v5191 = vpop.xlane.xlu0 %5190
        %v5192 = vsel %vm651, %v5182, 0.0
        %5193 = vadd.xlane.f32.xlu0 %v5192
        %v5194 = vpop.xlane.xlu0 %5193
        %v5195 = vlog2.pop %v5185
        %v5196 = vmul.f32 %v5195, 0.6931472
        %v5197 = vlog2.pop %v5188
        %v5198 = vmul.f32 %v5197, 0.6931472
        %v5199 = vlog2.pop %v5191
        %v5200 = vmul.f32 %v5199, 0.6931472
        %v5201 = vlog2.pop %v5194
        %v5202 = vmul.f32 %v5201, 0.6931472
        %v5203 = vadd.f32 %v5161, %v5196
        %v5204 = vadd.f32 %v5164, %v5198
        %v5205 = vadd.f32 %v5167, %v5200
        %v5206 = vadd.f32 %v5170, %v5202
        %v5207 = vsub.f32 %v5155, %v5203
        %v5208 = vsub.f32 %v5156, %v5204
        %v5209 = vsub.f32 %v5157, %v5205
        %v5210 = vsub.f32 %v5158, %v5206
        %v5211 = vsel %vm651, %v5207, -inf
        %v5212 = vsel %vm651, %v5208, -inf
        %v5213 = vmax.f32 %v5211, %v5212
        %v5214 = vrot.slane %v5213, 4
        %v5215 = vmax.f32 %v5213, %v5214
        %v5216 = vrot.slane %v5215, 2
        %v5217 = vmax.f32 %v5215, %v5216
        %v5218 = vrot.slane %v5217, 1
        %v5219 = vmax.f32 %v5217, %v5218
        %v5220 = vsel %vm651, %v5209, -inf
        %v5221 = vsel %vm651, %v5210, -inf
        %v5222 = vmax.f32 %v5220, %v5221
        %v5223 = vrot.slane %v5222, 4
        %v5224 = vmax.f32 %v5222, %v5223
        %v5225 = vrot.slane %v5224, 2
        %v5226 = vmax.f32 %v5224, %v5225
        %v5227 = vrot.slane %v5226, 1
        %v5228 = vmax.f32 %v5226, %v5227
        %v5229 = vsub.f32 %v5207, %v5219
        %v5230 = vsub.f32 %v5208, %v5219
        %v5231 = vsub.f32 %v5209, %v5228
        %v5232 = vsub.f32 %v5210, %v5228
        %v5233 = vmul.f32 %v5229, 1.442695
        %v5234 = vpow.pop %v5233
        %v5235 = vmul.f32 %v5230, 1.442695
        %v5236 = vpow.pop %v5235
        %v5237 = vmul.f32 %v5231, 1.442695
        %v5238 = vpow.pop %v5237
        %v5239 = vmul.f32 %v5232, 1.442695
        %v5240 = vpow.pop %v5239
        %v5241 = vsel %vm651, %v5234, 0.0
        %v5242 = vsel %vm651, %v5236, 0.0
        %v5243 = vadd.f32 %v5241, %v5242
        %v5244 = vrot.slane %v5243, 4
        %v5245 = vadd.f32 %v5243, %v5244
        %v5246 = vrot.slane %v5245, 2
        %v5247 = vadd.f32 %v5245, %v5246
        %v5248 = vrot.slane %v5247, 1
        %v5249 = vadd.f32 %v5247, %v5248
        %v5250 = vsel %vm651, %v5238, 0.0
        %v5251 = vsel %vm651, %v5240, 0.0
        %v5252 = vadd.f32 %v5250, %v5251
        %v5253 = vrot.slane %v5252, 4
        %v5254 = vadd.f32 %v5252, %v5253
        %v5255 = vrot.slane %v5254, 2
        %v5256 = vadd.f32 %v5254, %v5255
        %v5257 = vrot.slane %v5256, 1
        %v5258 = vadd.f32 %v5256, %v5257
        %v5259 = vlog2.pop %v5249
        %v5260 = vmul.f32 %v5259, 0.6931472
        %v5261 = vlog2.pop %v5258
        %v5262 = vmul.f32 %v5261, 0.6931472
        %v5263 = vadd.f32 %v5219, %v5260
        %v5264 = vadd.f32 %v5228, %v5262
        %v5265 = vsub.f32 %v5207, %v5263
        %v5266 = vsub.f32 %v5208, %v5263
        %v5267 = vsub.f32 %v5209, %v5264
        %v5268 = vsub.f32 %v5210, %v5264
        %v5269 = vsel %vm651, %v5265, -inf
        %5270 = vmax.xlane.f32.xlu0 %v5269
        %v5271 = vpop.xlane.xlu0 %5270
        %v5272 = vsel %vm651, %v5266, -inf
        %5273 = vmax.xlane.f32.xlu0 %v5272
        %v5274 = vpop.xlane.xlu0 %5273
        %v5275 = vsel %vm651, %v5267, -inf
        %5276 = vmax.xlane.f32.xlu0 %v5275
        %v5277 = vpop.xlane.xlu0 %5276
        %v5278 = vsel %vm651, %v5268, -inf
        %5279 = vmax.xlane.f32.xlu0 %v5278
        %v5280 = vpop.xlane.xlu0 %5279
        %v5281 = vsub.f32 %v5265, %v5271
        %v5282 = vsub.f32 %v5266, %v5274
        %v5283 = vsub.f32 %v5267, %v5277
        %v5284 = vsub.f32 %v5268, %v5280
        %v5285 = vmul.f32 %v5281, 1.442695
        %v5286 = vpow.pop %v5285
        %v5287 = vmul.f32 %v5282, 1.442695
        %v5288 = vpow.pop %v5287
        %v5289 = vmul.f32 %v5283, 1.442695
        %v5290 = vpow.pop %v5289
        %v5291 = vmul.f32 %v5284, 1.442695
        %v5292 = vpow.pop %v5291
        %v5293 = vsel %vm651, %v5286, 0.0
        %5294 = vadd.xlane.f32.xlu0 %v5293
        %v5295 = vpop.xlane.xlu0 %5294
        %v5296 = vsel %vm651, %v5288, 0.0
        %5297 = vadd.xlane.f32.xlu0 %v5296
        %v5298 = vpop.xlane.xlu0 %5297
        %v5299 = vsel %vm651, %v5290, 0.0
        %5300 = vadd.xlane.f32.xlu0 %v5299
        %v5301 = vpop.xlane.xlu0 %5300
        %v5302 = vsel %vm651, %v5292, 0.0
        %5303 = vadd.xlane.f32.xlu0 %v5302
        %v5304 = vpop.xlane.xlu0 %5303
        %v5305 = vlog2.pop %v5295
        %v5306 = vmul.f32 %v5305, 0.6931472
        %v5307 = vlog2.pop %v5298
        %v5308 = vmul.f32 %v5307, 0.6931472
        %v5309 = vlog2.pop %v5301
        %v5310 = vmul.f32 %v5309, 0.6931472
        %v5311 = vlog2.pop %v5304
        %v5312 = vmul.f32 %v5311, 0.6931472
        %v5313 = vadd.f32 %v5271, %v5306
        %v5314 = vadd.f32 %v5274, %v5308
        %v5315 = vadd.f32 %v5277, %v5310
        %v5316 = vadd.f32 %v5280, %v5312
        %v5317 = vsub.f32 %v5265, %v5313
        %v5318 = vsub.f32 %v5266, %v5314
        %v5319 = vsub.f32 %v5267, %v5315
        %v5320 = vsub.f32 %v5268, %v5316
        %v5321 = vsel %vm651, %v5317, -inf
        %v5322 = vsel %vm651, %v5318, -inf
        %v5323 = vmax.f32 %v5321, %v5322
        %v5324 = vrot.slane %v5323, 4
        %v5325 = vmax.f32 %v5323, %v5324
        %v5326 = vrot.slane %v5325, 2
        %v5327 = vmax.f32 %v5325, %v5326
        %v5328 = vrot.slane %v5327, 1
        %v5329 = vmax.f32 %v5327, %v5328
        %v5330 = vsel %vm651, %v5319, -inf
        %v5331 = vsel %vm651, %v5320, -inf
        %v5332 = vmax.f32 %v5330, %v5331
        %v5333 = vrot.slane %v5332, 4
        %v5334 = vmax.f32 %v5332, %v5333
        %v5335 = vrot.slane %v5334, 2
        %v5336 = vmax.f32 %v5334, %v5335
        %v5337 = vrot.slane %v5336, 1
        %v5338 = vmax.f32 %v5336, %v5337
        %v5339 = vsub.f32 %v5317, %v5329
        %v5340 = vsub.f32 %v5318, %v5329
        %v5341 = vsub.f32 %v5319, %v5338
        %v5342 = vsub.f32 %v5320, %v5338
        %v5343 = vmul.f32 %v5339, 1.442695
        %v5344 = vpow.pop %v5343
        %v5345 = vmul.f32 %v5340, 1.442695
        %v5346 = vpow.pop %v5345
        %v5347 = vmul.f32 %v5341, 1.442695
        %v5348 = vpow.pop %v5347
        %v5349 = vmul.f32 %v5342, 1.442695
        %v5350 = vpow.pop %v5349
        %v5351 = vsel %vm651, %v5344, 0.0
        %v5352 = vsel %vm651, %v5346, 0.0
        %v5353 = vadd.f32 %v5351, %v5352
        %v5354 = vrot.slane %v5353, 4
        %v5355 = vadd.f32 %v5353, %v5354
        %v5356 = vrot.slane %v5355, 2
        %v5357 = vadd.f32 %v5355, %v5356
        %v5358 = vrot.slane %v5357, 1
        %v5359 = vadd.f32 %v5357, %v5358
        %v5360 = vsel %vm651, %v5348, 0.0
        %v5361 = vsel %vm651, %v5350, 0.0
        %v5362 = vadd.f32 %v5360, %v5361
        %v5363 = vrot.slane %v5362, 4
        %v5364 = vadd.f32 %v5362, %v5363
        %v5365 = vrot.slane %v5364, 2
        %v5366 = vadd.f32 %v5364, %v5365
        %v5367 = vrot.slane %v5366, 1
        %v5368 = vadd.f32 %v5366, %v5367
        %v5369 = vlog2.pop %v5359
        %v5370 = vmul.f32 %v5369, 0.6931472
        %v5371 = vlog2.pop %v5368
        %v5372 = vmul.f32 %v5371, 0.6931472
        %v5373 = vadd.f32 %v5329, %v5370
        %v5374 = vadd.f32 %v5338, %v5372
        %v5375 = vsub.f32 %v5317, %v5373
        %v5376 = vsub.f32 %v5318, %v5373
        %v5377 = vsub.f32 %v5319, %v5374
        %v5378 = vsub.f32 %v5320, %v5374
        %v5379 = vsel %vm651, %v5375, -inf
        %5380 = vmax.xlane.f32.xlu0 %v5379
        %v5381 = vpop.xlane.xlu0 %5380
        %v5382 = vsel %vm651, %v5376, -inf
        %5383 = vmax.xlane.f32.xlu0 %v5382
        %v5384 = vpop.xlane.xlu0 %5383
        %v5385 = vsel %vm651, %v5377, -inf
        %5386 = vmax.xlane.f32.xlu0 %v5385
        %v5387 = vpop.xlane.xlu0 %5386
        %v5388 = vsel %vm651, %v5378, -inf
        %5389 = vmax.xlane.f32.xlu0 %v5388
        %v5390 = vpop.xlane.xlu0 %5389
        %v5391 = vsub.f32 %v5375, %v5381
        %v5392 = vsub.f32 %v5376, %v5384
        %v5393 = vsub.f32 %v5377, %v5387
        %v5394 = vsub.f32 %v5378, %v5390
        %v5395 = vmul.f32 %v5391, 1.442695
        %v5396 = vpow.pop %v5395
        %v5397 = vmul.f32 %v5392, 1.442695
        %v5398 = vpow.pop %v5397
        %v5399 = vmul.f32 %v5393, 1.442695
        %v5400 = vpow.pop %v5399
        %v5401 = vmul.f32 %v5394, 1.442695
        %v5402 = vpow.pop %v5401
        %v5403 = vsel %vm651, %v5396, 0.0
        %5404 = vadd.xlane.f32.xlu0 %v5403
        %v5405 = vpop.xlane.xlu0 %5404
        %v5406 = vsel %vm651, %v5398, 0.0
        %5407 = vadd.xlane.f32.xlu0 %v5406
        %v5408 = vpop.xlane.xlu0 %5407
        %v5409 = vsel %vm651, %v5400, 0.0
        %5410 = vadd.xlane.f32.xlu0 %v5409
        %v5411 = vpop.xlane.xlu0 %5410
        %v5412 = vsel %vm651, %v5402, 0.0
        %5413 = vadd.xlane.f32.xlu0 %v5412
        %v5414 = vpop.xlane.xlu0 %5413
        %v5415 = vlog2.pop %v5405
        %v5416 = vmul.f32 %v5415, 0.6931472
        %v5417 = vlog2.pop %v5408
        %v5418 = vmul.f32 %v5417, 0.6931472
        %v5419 = vlog2.pop %v5411
        %v5420 = vmul.f32 %v5419, 0.6931472
        %v5421 = vlog2.pop %v5414
        %v5422 = vmul.f32 %v5421, 0.6931472
        %v5423 = vadd.f32 %v5381, %v5416
        %v5424 = vadd.f32 %v5384, %v5418
        %v5425 = vadd.f32 %v5387, %v5420
        %v5426 = vadd.f32 %v5390, %v5422
        %v5427 = vsub.f32 %v5375, %v5423
        %v5428 = vsub.f32 %v5376, %v5424
        %v5429 = vsub.f32 %v5377, %v5425
        %v5430 = vsub.f32 %v5378, %v5426
        %v5431 = vsel %vm651, %v5427, -inf
        %v5432 = vsel %vm651, %v5428, -inf
        %v5433 = vmax.f32 %v5431, %v5432
        %v5434 = vrot.slane %v5433, 4
        %v5435 = vmax.f32 %v5433, %v5434
        %v5436 = vrot.slane %v5435, 2
        %v5437 = vmax.f32 %v5435, %v5436
        %v5438 = vrot.slane %v5437, 1
        %v5439 = vmax.f32 %v5437, %v5438
        %v5440 = vsel %vm651, %v5429, -inf
        %v5441 = vsel %vm651, %v5430, -inf
        %v5442 = vmax.f32 %v5440, %v5441
        %v5443 = vrot.slane %v5442, 4
        %v5444 = vmax.f32 %v5442, %v5443
        %v5445 = vrot.slane %v5444, 2
        %v5446 = vmax.f32 %v5444, %v5445
        %v5447 = vrot.slane %v5446, 1
        %v5448 = vmax.f32 %v5446, %v5447
        %v5449 = vsub.f32 %v5427, %v5439
        %v5450 = vsub.f32 %v5428, %v5439
        %v5451 = vsub.f32 %v5429, %v5448
        %v5452 = vsub.f32 %v5430, %v5448
        %v5453 = vmul.f32 %v5449, 1.442695
        %v5454 = vpow.pop %v5453
        %v5455 = vmul.f32 %v5450, 1.442695
        %v5456 = vpow.pop %v5455
        %v5457 = vmul.f32 %v5451, 1.442695
        %v5458 = vpow.pop %v5457
        %v5459 = vmul.f32 %v5452, 1.442695
        %v5460 = vpow.pop %v5459
        %v5461 = vsel %vm651, %v5454, 0.0
        %v5462 = vsel %vm651, %v5456, 0.0
        %v5463 = vadd.f32 %v5461, %v5462
        %v5464 = vrot.slane %v5463, 4
        %v5465 = vadd.f32 %v5463, %v5464
        %v5466 = vrot.slane %v5465, 2
        %v5467 = vadd.f32 %v5465, %v5466
        %v5468 = vrot.slane %v5467, 1
        %v5469 = vadd.f32 %v5467, %v5468
        %v5470 = vsel %vm651, %v5458, 0.0
        %v5471 = vsel %vm651, %v5460, 0.0
        %v5472 = vadd.f32 %v5470, %v5471
        %v5473 = vrot.slane %v5472, 4
        %v5474 = vadd.f32 %v5472, %v5473
        %v5475 = vrot.slane %v5474, 2
        %v5476 = vadd.f32 %v5474, %v5475
        %v5477 = vrot.slane %v5476, 1
        %v5478 = vadd.f32 %v5476, %v5477
        %v5479 = vlog2.pop %v5469
        %v5480 = vmul.f32 %v5479, 0.6931472
        %v5481 = vlog2.pop %v5478
        %v5482 = vmul.f32 %v5481, 0.6931472
        %v5483 = vadd.f32 %v5439, %v5480
        %v5484 = vadd.f32 %v5448, %v5482
        %v5485 = vsub.f32 %v5427, %v5483
        %v5486 = vsub.f32 %v5428, %v5483
        %v5487 = vsub.f32 %v5429, %v5484
        %v5488 = vsub.f32 %v5430, %v5484
        %v5489 = vsel %vm651, %v5485, -inf
        %5490 = vmax.xlane.f32.xlu0 %v5489
        %v5491 = vpop.xlane.xlu0 %5490
        %v5492 = vsel %vm651, %v5486, -inf
        %5493 = vmax.xlane.f32.xlu0 %v5492
        %v5494 = vpop.xlane.xlu0 %5493
        %v5495 = vsel %vm651, %v5487, -inf
        %5496 = vmax.xlane.f32.xlu0 %v5495
        %v5497 = vpop.xlane.xlu0 %5496
        %v5498 = vsel %vm651, %v5488, -inf
        %5499 = vmax.xlane.f32.xlu0 %v5498
        %v5500 = vpop.xlane.xlu0 %5499
        %v5501 = vsub.f32 %v5485, %v5491
        %v5502 = vsub.f32 %v5486, %v5494
        %v5503 = vsub.f32 %v5487, %v5497
        %v5504 = vsub.f32 %v5488, %v5500
        %v5505 = vmul.f32 %v5501, 1.442695
        %v5506 = vpow.pop %v5505
        %v5507 = vmul.f32 %v5502, 1.442695
        %v5508 = vpow.pop %v5507
        %v5509 = vmul.f32 %v5503, 1.442695
        %v5510 = vpow.pop %v5509
        %v5511 = vmul.f32 %v5504, 1.442695
        %v5512 = vpow.pop %v5511
        %v5513 = vsel %vm651, %v5506, 0.0
        %5514 = vadd.xlane.f32.xlu0 %v5513
        %v5515 = vpop.xlane.xlu0 %5514
        %v5516 = vsel %vm651, %v5508, 0.0
        %5517 = vadd.xlane.f32.xlu0 %v5516
        %v5518 = vpop.xlane.xlu0 %5517
        %v5519 = vsel %vm651, %v5510, 0.0
        %5520 = vadd.xlane.f32.xlu0 %v5519
        %v5521 = vpop.xlane.xlu0 %5520
        %v5522 = vsel %vm651, %v5512, 0.0
        %5523 = vadd.xlane.f32.xlu0 %v5522
        %v5524 = vpop.xlane.xlu0 %5523
        %v5525 = vlog2.pop %v5515
        %v5526 = vmul.f32 %v5525, 0.6931472
        %v5527 = vlog2.pop %v5518
        %v5528 = vmul.f32 %v5527, 0.6931472
        %v5529 = vlog2.pop %v5521
        %v5530 = vmul.f32 %v5529, 0.6931472
        %v5531 = vlog2.pop %v5524
        %v5532 = vmul.f32 %v5531, 0.6931472
        %v5533 = vadd.f32 %v5491, %v5526
        %v5534 = vadd.f32 %v5494, %v5528
        %v5535 = vadd.f32 %v5497, %v5530
        %v5536 = vadd.f32 %v5500, %v5532
        %v5537 = vsub.f32 %v5485, %v5533
        %v5538 = vsub.f32 %v5486, %v5534
        %v5539 = vsub.f32 %v5487, %v5535
        %v5540 = vsub.f32 %v5488, %v5536
        %v5541 = vsel %vm651, %v5537, -inf
        %v5542 = vsel %vm651, %v5538, -inf
        %v5543 = vmax.f32 %v5541, %v5542
        %v5544 = vrot.slane %v5543, 4
        %v5545 = vmax.f32 %v5543, %v5544
        %v5546 = vrot.slane %v5545, 2
        %v5547 = vmax.f32 %v5545, %v5546
        %v5548 = vrot.slane %v5547, 1
        %v5549 = vmax.f32 %v5547, %v5548
        %v5550 = vsel %vm651, %v5539, -inf
        %v5551 = vsel %vm651, %v5540, -inf
        %v5552 = vmax.f32 %v5550, %v5551
        %v5553 = vrot.slane %v5552, 4
        %v5554 = vmax.f32 %v5552, %v5553
        %v5555 = vrot.slane %v5554, 2
        %v5556 = vmax.f32 %v5554, %v5555
        %v5557 = vrot.slane %v5556, 1
        %v5558 = vmax.f32 %v5556, %v5557
        %v5559 = vsub.f32 %v5537, %v5549
        %v5560 = vsub.f32 %v5538, %v5549
        %v5561 = vsub.f32 %v5539, %v5558
        %v5562 = vsub.f32 %v5540, %v5558
        %v5563 = vmul.f32 %v5559, 1.442695
        %v5564 = vpow.pop %v5563
        %v5565 = vmul.f32 %v5560, 1.442695
        %v5566 = vpow.pop %v5565
        %v5567 = vmul.f32 %v5561, 1.442695
        %v5568 = vpow.pop %v5567
        %v5569 = vmul.f32 %v5562, 1.442695
        %v5570 = vpow.pop %v5569
        %v5571 = vsel %vm651, %v5564, 0.0
        %v5572 = vsel %vm651, %v5566, 0.0
        %v5573 = vadd.f32 %v5571, %v5572
        %v5574 = vrot.slane %v5573, 4
        %v5575 = vadd.f32 %v5573, %v5574
        %v5576 = vrot.slane %v5575, 2
        %v5577 = vadd.f32 %v5575, %v5576
        %v5578 = vrot.slane %v5577, 1
        %v5579 = vadd.f32 %v5577, %v5578
        %v5580 = vsel %vm651, %v5568, 0.0
        %v5581 = vsel %vm651, %v5570, 0.0
        %v5582 = vadd.f32 %v5580, %v5581
        %v5583 = vrot.slane %v5582, 4
        %v5584 = vadd.f32 %v5582, %v5583
        %v5585 = vrot.slane %v5584, 2
        %v5586 = vadd.f32 %v5584, %v5585
        %v5587 = vrot.slane %v5586, 1
        %v5588 = vadd.f32 %v5586, %v5587
        %v5589 = vlog2.pop %v5579
        %v5590 = vmul.f32 %v5589, 0.6931472
        %v5591 = vlog2.pop %v5588
        %v5592 = vmul.f32 %v5591, 0.6931472
        %v5593 = vadd.f32 %v5549, %v5590
        %v5594 = vadd.f32 %v5558, %v5592
        %v5595 = vsub.f32 %v5537, %v5593
        %v5596 = vsub.f32 %v5538, %v5593
        %v5597 = vsub.f32 %v5539, %v5594
        %v5598 = vsub.f32 %v5540, %v5594
        %v5599 = vsel %vm651, %v5595, -inf
        %5600 = vmax.xlane.f32.xlu0 %v5599
        %v5601 = vpop.xlane.xlu0 %5600
        %v5602 = vsel %vm651, %v5596, -inf
        %5603 = vmax.xlane.f32.xlu0 %v5602
        %v5604 = vpop.xlane.xlu0 %5603
        %v5605 = vsel %vm651, %v5597, -inf
        %5606 = vmax.xlane.f32.xlu0 %v5605
        %v5607 = vpop.xlane.xlu0 %5606
        %v5608 = vsel %vm651, %v5598, -inf
        %5609 = vmax.xlane.f32.xlu0 %v5608
        %v5610 = vpop.xlane.xlu0 %5609
        %v5611 = vsub.f32 %v5595, %v5601
        %v5612 = vsub.f32 %v5596, %v5604
        %v5613 = vsub.f32 %v5597, %v5607
        %v5614 = vsub.f32 %v5598, %v5610
        %v5615 = vmul.f32 %v5611, 1.442695
        %v5616 = vpow.pop %v5615
        %v5617 = vmul.f32 %v5612, 1.442695
        %v5618 = vpow.pop %v5617
        %v5619 = vmul.f32 %v5613, 1.442695
        %v5620 = vpow.pop %v5619
        %v5621 = vmul.f32 %v5614, 1.442695
        %v5622 = vpow.pop %v5621
        %v5623 = vsel %vm651, %v5616, 0.0
        %5624 = vadd.xlane.f32.xlu0 %v5623
        %v5625 = vpop.xlane.xlu0 %5624
        %v5626 = vsel %vm651, %v5618, 0.0
        %5627 = vadd.xlane.f32.xlu0 %v5626
        %v5628 = vpop.xlane.xlu0 %5627
        %v5629 = vsel %vm651, %v5620, 0.0
        %5630 = vadd.xlane.f32.xlu0 %v5629
        %v5631 = vpop.xlane.xlu0 %5630
        %v5632 = vsel %vm651, %v5622, 0.0
        %5633 = vadd.xlane.f32.xlu0 %v5632
        %v5634 = vpop.xlane.xlu0 %5633
        %v5635 = vlog2.pop %v5625
        %v5636 = vmul.f32 %v5635, 0.6931472
        %v5637 = vlog2.pop %v5628
        %v5638 = vmul.f32 %v5637, 0.6931472
        %v5639 = vlog2.pop %v5631
        %v5640 = vmul.f32 %v5639, 0.6931472
        %v5641 = vlog2.pop %v5634
        %v5642 = vmul.f32 %v5641, 0.6931472
        %v5643 = vadd.f32 %v5601, %v5636
        %v5644 = vadd.f32 %v5604, %v5638
        %v5645 = vadd.f32 %v5607, %v5640
        %v5646 = vadd.f32 %v5610, %v5642
        %v5647 = vsub.f32 %v5595, %v5643
        %v5648 = vsub.f32 %v5596, %v5644
        %v5649 = vsub.f32 %v5597, %v5645
        %v5650 = vsub.f32 %v5598, %v5646
        %v5651 = vsel %vm651, %v5647, -inf
        %v5652 = vsel %vm651, %v5648, -inf
        %v5653 = vmax.f32 %v5651, %v5652
        %v5654 = vrot.slane %v5653, 4
        %v5655 = vmax.f32 %v5653, %v5654
        %v5656 = vrot.slane %v5655, 2
        %v5657 = vmax.f32 %v5655, %v5656
        %v5658 = vrot.slane %v5657, 1
        %v5659 = vmax.f32 %v5657, %v5658
        %v5660 = vsel %vm651, %v5649, -inf
        %v5661 = vsel %vm651, %v5650, -inf
        %v5662 = vmax.f32 %v5660, %v5661
        %v5663 = vrot.slane %v5662, 4
        %v5664 = vmax.f32 %v5662, %v5663
        %v5665 = vrot.slane %v5664, 2
        %v5666 = vmax.f32 %v5664, %v5665
        %v5667 = vrot.slane %v5666, 1
        %v5668 = vmax.f32 %v5666, %v5667
        %v5669 = vsub.f32 %v5647, %v5659
        %v5670 = vsub.f32 %v5648, %v5659
        %v5671 = vsub.f32 %v5649, %v5668
        %v5672 = vsub.f32 %v5650, %v5668
        %v5673 = vmul.f32 %v5669, 1.442695
        %v5674 = vpow.pop %v5673
        %v5675 = vmul.f32 %v5670, 1.442695
        %v5676 = vpow.pop %v5675
        %v5677 = vmul.f32 %v5671, 1.442695
        %v5678 = vpow.pop %v5677
        %v5679 = vmul.f32 %v5672, 1.442695
        %v5680 = vpow.pop %v5679
        %v5681 = vsel %vm651, %v5674, 0.0
        %v5682 = vsel %vm651, %v5676, 0.0
        %v5683 = vadd.f32 %v5681, %v5682
        %v5684 = vrot.slane %v5683, 4
        %v5685 = vadd.f32 %v5683, %v5684
        %v5686 = vrot.slane %v5685, 2
        %v5687 = vadd.f32 %v5685, %v5686
        %v5688 = vrot.slane %v5687, 1
        %v5689 = vadd.f32 %v5687, %v5688
        %v5690 = vsel %vm651, %v5678, 0.0
        %v5691 = vsel %vm651, %v5680, 0.0
        %v5692 = vadd.f32 %v5690, %v5691
        %v5693 = vrot.slane %v5692, 4
        %v5694 = vadd.f32 %v5692, %v5693
        %v5695 = vrot.slane %v5694, 2
        %v5696 = vadd.f32 %v5694, %v5695
        %v5697 = vrot.slane %v5696, 1
        %v5698 = vadd.f32 %v5696, %v5697
        %v5699 = vlog2.pop %v5689
        %v5700 = vmul.f32 %v5699, 0.6931472
        %v5701 = vlog2.pop %v5698
        %v5702 = vmul.f32 %v5701, 0.6931472
        %v5703 = vadd.f32 %v5659, %v5700
        %v5704 = vadd.f32 %v5668, %v5702
        %v5705 = vsub.f32 %v5647, %v5703
        %v5706 = vsub.f32 %v5648, %v5703
        %v5707 = vsub.f32 %v5649, %v5704
        %v5708 = vsub.f32 %v5650, %v5704
        %v5709 = vsel %vm651, %v5705, -inf
        %5710 = vmax.xlane.f32.xlu0 %v5709
        %v5711 = vpop.xlane.xlu0 %5710
        %v5712 = vsel %vm651, %v5706, -inf
        %5713 = vmax.xlane.f32.xlu0 %v5712
        %v5714 = vpop.xlane.xlu0 %5713
        %v5715 = vsel %vm651, %v5707, -inf
        %5716 = vmax.xlane.f32.xlu0 %v5715
        %v5717 = vpop.xlane.xlu0 %5716
        %v5718 = vsel %vm651, %v5708, -inf
        %5719 = vmax.xlane.f32.xlu0 %v5718
        %v5720 = vpop.xlane.xlu0 %5719
        %v5721 = vsub.f32 %v5705, %v5711
        %v5722 = vsub.f32 %v5706, %v5714
        %v5723 = vsub.f32 %v5707, %v5717
        %v5724 = vsub.f32 %v5708, %v5720
        %v5725 = vmul.f32 %v5721, 1.442695
        %v5726 = vpow.pop %v5725
        %v5727 = vmul.f32 %v5722, 1.442695
        %v5728 = vpow.pop %v5727
        %v5729 = vmul.f32 %v5723, 1.442695
        %v5730 = vpow.pop %v5729
        %v5731 = vmul.f32 %v5724, 1.442695
        %v5732 = vpow.pop %v5731
        %v5733 = vsel %vm651, %v5726, 0.0
        %5734 = vadd.xlane.f32.xlu0 %v5733
        %v5735 = vpop.xlane.xlu0 %5734
        %v5736 = vsel %vm651, %v5728, 0.0
        %5737 = vadd.xlane.f32.xlu0 %v5736
        %v5738 = vpop.xlane.xlu0 %5737
        %v5739 = vsel %vm651, %v5730, 0.0
        %5740 = vadd.xlane.f32.xlu0 %v5739
        %v5741 = vpop.xlane.xlu0 %5740
        %v5742 = vsel %vm651, %v5732, 0.0
        %5743 = vadd.xlane.f32.xlu0 %v5742
        %v5744 = vpop.xlane.xlu0 %5743
        %v5745 = vlog2.pop %v5735
        %v5746 = vmul.f32 %v5745, 0.6931472
        %v5747 = vlog2.pop %v5738
        %v5748 = vmul.f32 %v5747, 0.6931472
        %v5749 = vlog2.pop %v5741
        %v5750 = vmul.f32 %v5749, 0.6931472
        %v5751 = vlog2.pop %v5744
        %v5752 = vmul.f32 %v5751, 0.6931472
        %v5753 = vadd.f32 %v5711, %v5746
        %v5754 = vadd.f32 %v5714, %v5748
        %v5755 = vadd.f32 %v5717, %v5750
        %v5756 = vadd.f32 %v5720, %v5752
        %v5757 = vsub.f32 %v5705, %v5753
        %v5758 = vsub.f32 %v5706, %v5754
        %v5759 = vsub.f32 %v5707, %v5755
        %v5760 = vsub.f32 %v5708, %v5756
        %v5761 = vsel %vm651, %v5757, -inf
        %v5762 = vsel %vm651, %v5758, -inf
        %v5763 = vmax.f32 %v5761, %v5762
        %v5764 = vrot.slane %v5763, 4
        %v5765 = vmax.f32 %v5763, %v5764
        %v5766 = vrot.slane %v5765, 2
        %v5767 = vmax.f32 %v5765, %v5766
        %v5768 = vrot.slane %v5767, 1
        %v5769 = vmax.f32 %v5767, %v5768
        %v5770 = vsel %vm651, %v5759, -inf
        %v5771 = vsel %vm651, %v5760, -inf
        %v5772 = vmax.f32 %v5770, %v5771
        %v5773 = vrot.slane %v5772, 4
        %v5774 = vmax.f32 %v5772, %v5773
        %v5775 = vrot.slane %v5774, 2
        %v5776 = vmax.f32 %v5774, %v5775
        %v5777 = vrot.slane %v5776, 1
        %v5778 = vmax.f32 %v5776, %v5777
        %v5779 = vsub.f32 %v5757, %v5769
        %v5780 = vsub.f32 %v5758, %v5769
        %v5781 = vsub.f32 %v5759, %v5778
        %v5782 = vsub.f32 %v5760, %v5778
        %v5783 = vmul.f32 %v5779, 1.442695
        %v5784 = vpow.pop %v5783
        %v5785 = vmul.f32 %v5780, 1.442695
        %v5786 = vpow.pop %v5785
        %v5787 = vmul.f32 %v5781, 1.442695
        %v5788 = vpow.pop %v5787
        %v5789 = vmul.f32 %v5782, 1.442695
        %v5790 = vpow.pop %v5789
        %v5791 = vsel %vm651, %v5784, 0.0
        %v5792 = vsel %vm651, %v5786, 0.0
        %v5793 = vadd.f32 %v5791, %v5792
        %v5794 = vrot.slane %v5793, 4
        %v5795 = vadd.f32 %v5793, %v5794
        %v5796 = vrot.slane %v5795, 2
        %v5797 = vadd.f32 %v5795, %v5796
        %v5798 = vrot.slane %v5797, 1
        %v5799 = vadd.f32 %v5797, %v5798
        %v5800 = vsel %vm651, %v5788, 0.0
        %v5801 = vsel %vm651, %v5790, 0.0
        %v5802 = vadd.f32 %v5800, %v5801
        %v5803 = vrot.slane %v5802, 4
        %v5804 = vadd.f32 %v5802, %v5803
        %v5805 = vrot.slane %v5804, 2
        %v5806 = vadd.f32 %v5804, %v5805
        %v5807 = vrot.slane %v5806, 1
        %v5808 = vadd.f32 %v5806, %v5807
        %v5809 = vlog2.pop %v5799
        %v5810 = vmul.f32 %v5809, 0.6931472
        %v5811 = vlog2.pop %v5808
        %v5812 = vmul.f32 %v5811, 0.6931472
        %v5813 = vadd.f32 %v5769, %v5810
        %v5814 = vadd.f32 %v5778, %v5812
        %v5815 = vsub.f32 %v5757, %v5813
        %v5816 = vsub.f32 %v5758, %v5813
        %v5817 = vsub.f32 %v5759, %v5814
        %v5818 = vsub.f32 %v5760, %v5814
        %v5819 = vsel %vm651, %v5815, -inf
        %5820 = vmax.xlane.f32.xlu0 %v5819
        %v5821 = vpop.xlane.xlu0 %5820
        %v5822 = vsel %vm651, %v5816, -inf
        %5823 = vmax.xlane.f32.xlu0 %v5822
        %v5824 = vpop.xlane.xlu0 %5823
        %v5825 = vsel %vm651, %v5817, -inf
        %5826 = vmax.xlane.f32.xlu0 %v5825
        %v5827 = vpop.xlane.xlu0 %5826
        %v5828 = vsel %vm651, %v5818, -inf
        %5829 = vmax.xlane.f32.xlu0 %v5828
        %v5830 = vpop.xlane.xlu0 %5829
        %v5831 = vsub.f32 %v5815, %v5821
        %v5832 = vsub.f32 %v5816, %v5824
        %v5833 = vsub.f32 %v5817, %v5827
        %v5834 = vsub.f32 %v5818, %v5830
        %v5835 = vmul.f32 %v5831, 1.442695
        %v5836 = vpow.pop %v5835
        %v5837 = vmul.f32 %v5832, 1.442695
        %v5838 = vpow.pop %v5837
        %v5839 = vmul.f32 %v5833, 1.442695
        %v5840 = vpow.pop %v5839
        %v5841 = vmul.f32 %v5834, 1.442695
        %v5842 = vpow.pop %v5841
        %v5843 = vsel %vm651, %v5836, 0.0
        %5844 = vadd.xlane.f32.xlu0 %v5843
        %v5845 = vpop.xlane.xlu0 %5844
        %v5846 = vsel %vm651, %v5838, 0.0
        %5847 = vadd.xlane.f32.xlu0 %v5846
        %v5848 = vpop.xlane.xlu0 %5847
        %v5849 = vsel %vm651, %v5840, 0.0
        %5850 = vadd.xlane.f32.xlu0 %v5849
        %v5851 = vpop.xlane.xlu0 %5850
        %v5852 = vsel %vm651, %v5842, 0.0
        %5853 = vadd.xlane.f32.xlu0 %v5852
        %v5854 = vpop.xlane.xlu0 %5853
        %v5855 = vlog2.pop %v5845
        %v5856 = vmul.f32 %v5855, 0.6931472
        %v5857 = vlog2.pop %v5848
        %v5858 = vmul.f32 %v5857, 0.6931472
        %v5859 = vlog2.pop %v5851
        %v5860 = vmul.f32 %v5859, 0.6931472
        %v5861 = vlog2.pop %v5854
        %v5862 = vmul.f32 %v5861, 0.6931472
        %v5863 = vadd.f32 %v5821, %v5856
        %v5864 = vadd.f32 %v5824, %v5858
        %v5865 = vadd.f32 %v5827, %v5860
        %v5866 = vadd.f32 %v5830, %v5862
        %v5867 = vsub.f32 %v5815, %v5863
        %v5868 = vsub.f32 %v5816, %v5864
        %v5869 = vsub.f32 %v5817, %v5865
        %v5870 = vsub.f32 %v5818, %v5866
        %v5871 = vsel %vm651, %v5867, -inf
        %v5872 = vsel %vm651, %v5868, -inf
        %v5873 = vmax.f32 %v5871, %v5872
        %v5874 = vrot.slane %v5873, 4
        %v5875 = vmax.f32 %v5873, %v5874
        %v5876 = vrot.slane %v5875, 2
        %v5877 = vmax.f32 %v5875, %v5876
        %v5878 = vrot.slane %v5877, 1
        %v5879 = vmax.f32 %v5877, %v5878
        %v5880 = vsel %vm651, %v5869, -inf
        %v5881 = vsel %vm651, %v5870, -inf
        %v5882 = vmax.f32 %v5880, %v5881
        %v5883 = vrot.slane %v5882, 4
        %v5884 = vmax.f32 %v5882, %v5883
        %v5885 = vrot.slane %v5884, 2
        %v5886 = vmax.f32 %v5884, %v5885
        %v5887 = vrot.slane %v5886, 1
        %v5888 = vmax.f32 %v5886, %v5887
        %v5889 = vsub.f32 %v5867, %v5879
        %v5890 = vsub.f32 %v5868, %v5879
        %v5891 = vsub.f32 %v5869, %v5888
        %v5892 = vsub.f32 %v5870, %v5888
        %v5893 = vmul.f32 %v5889, 1.442695
        %v5894 = vpow.pop %v5893
        %v5895 = vmul.f32 %v5890, 1.442695
        %v5896 = vpow.pop %v5895
        %v5897 = vmul.f32 %v5891, 1.442695
        %v5898 = vpow.pop %v5897
        %v5899 = vmul.f32 %v5892, 1.442695
        %v5900 = vpow.pop %v5899
        %v5901 = vsel %vm651, %v5894, 0.0
        %v5902 = vsel %vm651, %v5896, 0.0
        %v5903 = vadd.f32 %v5901, %v5902
        %v5904 = vrot.slane %v5903, 4
        %v5905 = vadd.f32 %v5903, %v5904
        %v5906 = vrot.slane %v5905, 2
        %v5907 = vadd.f32 %v5905, %v5906
        %v5908 = vrot.slane %v5907, 1
        %v5909 = vadd.f32 %v5907, %v5908
        %v5910 = vsel %vm651, %v5898, 0.0
        %v5911 = vsel %vm651, %v5900, 0.0
        %v5912 = vadd.f32 %v5910, %v5911
        %v5913 = vrot.slane %v5912, 4
        %v5914 = vadd.f32 %v5912, %v5913
        %v5915 = vrot.slane %v5914, 2
        %v5916 = vadd.f32 %v5914, %v5915
        %v5917 = vrot.slane %v5916, 1
        %v5918 = vadd.f32 %v5916, %v5917
        %v5919 = vlog2.pop %v5909
        %v5920 = vmul.f32 %v5919, 0.6931472
        %v5921 = vlog2.pop %v5918
        %v5922 = vmul.f32 %v5921, 0.6931472
        %v5923 = vadd.f32 %v5879, %v5920
        %v5924 = vadd.f32 %v5888, %v5922
        %v5925 = vsub.f32 %v5867, %v5923
        %v5926 = vsub.f32 %v5868, %v5923
        %v5927 = vsub.f32 %v5869, %v5924
        %v5928 = vsub.f32 %v5870, %v5924
        %v5929 = vsel %vm651, %v5925, -inf
        %5930 = vmax.xlane.f32.xlu0 %v5929
        %v5931 = vpop.xlane.xlu0 %5930
        %v5932 = vsel %vm651, %v5926, -inf
        %5933 = vmax.xlane.f32.xlu0 %v5932
        %v5934 = vpop.xlane.xlu0 %5933
        %v5935 = vsel %vm651, %v5927, -inf
        %5936 = vmax.xlane.f32.xlu0 %v5935
        %v5937 = vpop.xlane.xlu0 %5936
        %v5938 = vsel %vm651, %v5928, -inf
        %5939 = vmax.xlane.f32.xlu0 %v5938
        %v5940 = vpop.xlane.xlu0 %5939
        %v5941 = vsub.f32 %v5925, %v5931
        %v5942 = vsub.f32 %v5926, %v5934
        %v5943 = vsub.f32 %v5927, %v5937
        %v5944 = vsub.f32 %v5928, %v5940
        %v5945 = vmul.f32 %v5941, 1.442695
        %v5946 = vpow.pop %v5945
        %v5947 = vmul.f32 %v5942, 1.442695
        %v5948 = vpow.pop %v5947
        %v5949 = vmul.f32 %v5943, 1.442695
        %v5950 = vpow.pop %v5949
        %v5951 = vmul.f32 %v5944, 1.442695
        %v5952 = vpow.pop %v5951
        %v5953 = vsel %vm651, %v5946, 0.0
        %5954 = vadd.xlane.f32.xlu0 %v5953
        %v5955 = vpop.xlane.xlu0 %5954
        %v5956 = vsel %vm651, %v5948, 0.0
        %5957 = vadd.xlane.f32.xlu0 %v5956
        %v5958 = vpop.xlane.xlu0 %5957
        %v5959 = vsel %vm651, %v5950, 0.0
        %5960 = vadd.xlane.f32.xlu0 %v5959
        %v5961 = vpop.xlane.xlu0 %5960
        %v5962 = vsel %vm651, %v5952, 0.0
        %5963 = vadd.xlane.f32.xlu0 %v5962
        %v5964 = vpop.xlane.xlu0 %5963
        %v5965 = vlog2.pop %v5955
        %v5966 = vmul.f32 %v5965, 0.6931472
        %v5967 = vlog2.pop %v5958
        %v5968 = vmul.f32 %v5967, 0.6931472
        %v5969 = vlog2.pop %v5961
        %v5970 = vmul.f32 %v5969, 0.6931472
        %v5971 = vlog2.pop %v5964
        %v5972 = vmul.f32 %v5971, 0.6931472
        %v5973 = vadd.f32 %v5931, %v5966
        %v5974 = vadd.f32 %v5934, %v5968
        %v5975 = vadd.f32 %v5937, %v5970
        %v5976 = vadd.f32 %v5940, %v5972
        %v5977 = vsub.f32 %v5925, %v5973
        %v5978 = vsub.f32 %v5926, %v5974
        %v5979 = vsub.f32 %v5927, %v5975
        %v5980 = vsub.f32 %v5928, %v5976
        %v5981 = vsel %vm651, %v5977, -inf
        %v5982 = vsel %vm651, %v5978, -inf
        %v5983 = vmax.f32 %v5981, %v5982
        %v5984 = vrot.slane %v5983, 4
        %v5985 = vmax.f32 %v5983, %v5984
        %v5986 = vrot.slane %v5985, 2
        %v5987 = vmax.f32 %v5985, %v5986
        %v5988 = vrot.slane %v5987, 1
        %v5989 = vmax.f32 %v5987, %v5988
        %v5990 = vsel %vm651, %v5979, -inf
        %v5991 = vsel %vm651, %v5980, -inf
        %v5992 = vmax.f32 %v5990, %v5991
        %v5993 = vrot.slane %v5992, 4
        %v5994 = vmax.f32 %v5992, %v5993
        %v5995 = vrot.slane %v5994, 2
        %v5996 = vmax.f32 %v5994, %v5995
        %v5997 = vrot.slane %v5996, 1
        %v5998 = vmax.f32 %v5996, %v5997
        %v5999 = vsub.f32 %v5977, %v5989
        %v6000 = vsub.f32 %v5978, %v5989
        %v6001 = vsub.f32 %v5979, %v5998
        %v6002 = vsub.f32 %v5980, %v5998
        %v6003 = vmul.f32 %v5999, 1.442695
        %v6004 = vpow.pop %v6003
        %v6005 = vmul.f32 %v6000, 1.442695
        %v6006 = vpow.pop %v6005
        %v6007 = vmul.f32 %v6001, 1.442695
        %v6008 = vpow.pop %v6007
        %v6009 = vmul.f32 %v6002, 1.442695
        %v6010 = vpow.pop %v6009
        %v6011 = vsel %vm651, %v6004, 0.0
        %v6012 = vsel %vm651, %v6006, 0.0
        %v6013 = vadd.f32 %v6011, %v6012
        %v6014 = vrot.slane %v6013, 4
        %v6015 = vadd.f32 %v6013, %v6014
        %v6016 = vrot.slane %v6015, 2
        %v6017 = vadd.f32 %v6015, %v6016
        %v6018 = vrot.slane %v6017, 1
        %v6019 = vadd.f32 %v6017, %v6018
        %v6020 = vsel %vm651, %v6008, 0.0
        %v6021 = vsel %vm651, %v6010, 0.0
        %v6022 = vadd.f32 %v6020, %v6021
        %v6023 = vrot.slane %v6022, 4
        %v6024 = vadd.f32 %v6022, %v6023
        %v6025 = vrot.slane %v6024, 2
        %v6026 = vadd.f32 %v6024, %v6025
        %v6027 = vrot.slane %v6026, 1
        %v6028 = vadd.f32 %v6026, %v6027
        %v6029 = vlog2.pop %v6019
        %v6030 = vmul.f32 %v6029, 0.6931472
        %v6031 = vlog2.pop %v6028
        %v6032 = vmul.f32 %v6031, 0.6931472
        %v6033 = vadd.f32 %v5989, %v6030
        %v6034 = vadd.f32 %v5998, %v6032
        %v6035 = vsub.f32 %v5977, %v6033
        %v6036 = vsub.f32 %v5978, %v6033
        %v6037 = vsub.f32 %v5979, %v6034
        %v6038 = vsub.f32 %v5980, %v6034
        %v6039 = vsel %vm651, %v6035, -inf
        %6040 = vmax.xlane.f32.xlu0 %v6039
        %v6041 = vpop.xlane.xlu0 %6040
        %v6042 = vsel %vm651, %v6036, -inf
        %6043 = vmax.xlane.f32.xlu0 %v6042
        %v6044 = vpop.xlane.xlu0 %6043
        %v6045 = vsel %vm651, %v6037, -inf
        %6046 = vmax.xlane.f32.xlu0 %v6045
        %v6047 = vpop.xlane.xlu0 %6046
        %v6048 = vsel %vm651, %v6038, -inf
        %6049 = vmax.xlane.f32.xlu0 %v6048
        %v6050 = vpop.xlane.xlu0 %6049
        %v6051 = vsub.f32 %v6035, %v6041
        %v6052 = vsub.f32 %v6036, %v6044
        %v6053 = vsub.f32 %v6037, %v6047
        %v6054 = vsub.f32 %v6038, %v6050
        %v6055 = vmul.f32 %v6051, 1.442695
        %v6056 = vpow.pop %v6055
        %v6057 = vmul.f32 %v6052, 1.442695
        %v6058 = vpow.pop %v6057
        %v6059 = vmul.f32 %v6053, 1.442695
        %v6060 = vpow.pop %v6059
        %v6061 = vmul.f32 %v6054, 1.442695
        %v6062 = vpow.pop %v6061
        %v6063 = vsel %vm651, %v6056, 0.0
        %6064 = vadd.xlane.f32.xlu0 %v6063
        %v6065 = vpop.xlane.xlu0 %6064
        %v6066 = vsel %vm651, %v6058, 0.0
        %6067 = vadd.xlane.f32.xlu0 %v6066
        %v6068 = vpop.xlane.xlu0 %6067
        %v6069 = vsel %vm651, %v6060, 0.0
        %6070 = vadd.xlane.f32.xlu0 %v6069
        %v6071 = vpop.xlane.xlu0 %6070
        %v6072 = vsel %vm651, %v6062, 0.0
        %6073 = vadd.xlane.f32.xlu0 %v6072
        %v6074 = vpop.xlane.xlu0 %6073
        %v6075 = vlog2.pop %v6065
        %v6076 = vmul.f32 %v6075, 0.6931472
        %v6077 = vlog2.pop %v6068
        %v6078 = vmul.f32 %v6077, 0.6931472
        %v6079 = vlog2.pop %v6071
        %v6080 = vmul.f32 %v6079, 0.6931472
        %v6081 = vlog2.pop %v6074
        %v6082 = vmul.f32 %v6081, 0.6931472
        %v6083 = vadd.f32 %v6041, %v6076
        %v6084 = vadd.f32 %v6044, %v6078
        %v6085 = vadd.f32 %v6047, %v6080
        %v6086 = vadd.f32 %v6050, %v6082
        %v6087 = vsub.f32 %v6035, %v6083
        %v6088 = vsub.f32 %v6036, %v6084
        %v6089 = vsub.f32 %v6037, %v6085
        %v6090 = vsub.f32 %v6038, %v6086
        %v6091 = vsel %vm651, %v6087, -inf
        %v6092 = vsel %vm651, %v6088, -inf
        %v6093 = vmax.f32 %v6091, %v6092
        %v6094 = vrot.slane %v6093, 4
        %v6095 = vmax.f32 %v6093, %v6094
        %v6096 = vrot.slane %v6095, 2
        %v6097 = vmax.f32 %v6095, %v6096
        %v6098 = vrot.slane %v6097, 1
        %v6099 = vmax.f32 %v6097, %v6098
        %v6100 = vsel %vm651, %v6089, -inf
        %v6101 = vsel %vm651, %v6090, -inf
        %v6102 = vmax.f32 %v6100, %v6101
        %v6103 = vrot.slane %v6102, 4
        %v6104 = vmax.f32 %v6102, %v6103
        %v6105 = vrot.slane %v6104, 2
        %v6106 = vmax.f32 %v6104, %v6105
        %v6107 = vrot.slane %v6106, 1
        %v6108 = vmax.f32 %v6106, %v6107
        %v6109 = vsub.f32 %v6087, %v6099
        %v6110 = vsub.f32 %v6088, %v6099
        %v6111 = vsub.f32 %v6089, %v6108
        %v6112 = vsub.f32 %v6090, %v6108
        %v6113 = vmul.f32 %v6109, 1.442695
        %v6114 = vpow.pop %v6113
        %v6115 = vmul.f32 %v6110, 1.442695
        %v6116 = vpow.pop %v6115
        %v6117 = vmul.f32 %v6111, 1.442695
        %v6118 = vpow.pop %v6117
        %v6119 = vmul.f32 %v6112, 1.442695
        %v6120 = vpow.pop %v6119
        %v6121 = vsel %vm651, %v6114, 0.0
        %v6122 = vsel %vm651, %v6116, 0.0
        %v6123 = vadd.f32 %v6121, %v6122
        %v6124 = vrot.slane %v6123, 4
        %v6125 = vadd.f32 %v6123, %v6124
        %v6126 = vrot.slane %v6125, 2
        %v6127 = vadd.f32 %v6125, %v6126
        %v6128 = vrot.slane %v6127, 1
        %v6129 = vadd.f32 %v6127, %v6128
        %v6130 = vsel %vm651, %v6118, 0.0
        %v6131 = vsel %vm651, %v6120, 0.0
        %v6132 = vadd.f32 %v6130, %v6131
        %v6133 = vrot.slane %v6132, 4
        %v6134 = vadd.f32 %v6132, %v6133
        %v6135 = vrot.slane %v6134, 2
        %v6136 = vadd.f32 %v6134, %v6135
        %v6137 = vrot.slane %v6136, 1
        %v6138 = vadd.f32 %v6136, %v6137
        %v6139 = vlog2.pop %v6129
        %v6140 = vmul.f32 %v6139, 0.6931472
        %v6141 = vlog2.pop %v6138
        %v6142 = vmul.f32 %v6141, 0.6931472
        %v6143 = vadd.f32 %v6099, %v6140
        %v6144 = vadd.f32 %v6108, %v6142
        %v6145 = vsub.f32 %v6087, %v6143
        %v6146 = vsub.f32 %v6088, %v6143
        %v6147 = vsub.f32 %v6089, %v6144
        %v6148 = vsub.f32 %v6090, %v6144
        %v6149 = vsel %vm651, %v6145, -inf
        %6150 = vmax.xlane.f32.xlu0 %v6149
        %v6151 = vpop.xlane.xlu0 %6150
        %v6152 = vsel %vm651, %v6146, -inf
        %6153 = vmax.xlane.f32.xlu0 %v6152
        %v6154 = vpop.xlane.xlu0 %6153
        %v6155 = vsel %vm651, %v6147, -inf
        %6156 = vmax.xlane.f32.xlu0 %v6155
        %v6157 = vpop.xlane.xlu0 %6156
        %v6158 = vsel %vm651, %v6148, -inf
        %6159 = vmax.xlane.f32.xlu0 %v6158
        %v6160 = vpop.xlane.xlu0 %6159
        %v6161 = vsub.f32 %v6145, %v6151
        %v6162 = vsub.f32 %v6146, %v6154
        %v6163 = vsub.f32 %v6147, %v6157
        %v6164 = vsub.f32 %v6148, %v6160
        %v6165 = vmul.f32 %v6161, 1.442695
        %v6166 = vpow.pop %v6165
        %v6167 = vmul.f32 %v6162, 1.442695
        %v6168 = vpow.pop %v6167
        %v6169 = vmul.f32 %v6163, 1.442695
        %v6170 = vpow.pop %v6169
        %v6171 = vmul.f32 %v6164, 1.442695
        %v6172 = vpow.pop %v6171
        %v6173 = vsel %vm651, %v6166, 0.0
        %6174 = vadd.xlane.f32.xlu0 %v6173
        %v6175 = vpop.xlane.xlu0 %6174
        %v6176 = vsel %vm651, %v6168, 0.0
        %6177 = vadd.xlane.f32.xlu0 %v6176
        %v6178 = vpop.xlane.xlu0 %6177
        %v6179 = vsel %vm651, %v6170, 0.0
        %6180 = vadd.xlane.f32.xlu0 %v6179
        %v6181 = vpop.xlane.xlu0 %6180
        %v6182 = vsel %vm651, %v6172, 0.0
        %6183 = vadd.xlane.f32.xlu0 %v6182
        %v6184 = vpop.xlane.xlu0 %6183
        %v6185 = vlog2.pop %v6175
        %v6186 = vmul.f32 %v6185, 0.6931472
        %v6187 = vlog2.pop %v6178
        %v6188 = vmul.f32 %v6187, 0.6931472
        %v6189 = vlog2.pop %v6181
        %v6190 = vmul.f32 %v6189, 0.6931472
        %v6191 = vlog2.pop %v6184
        %v6192 = vmul.f32 %v6191, 0.6931472
        %v6193 = vadd.f32 %v6151, %v6186
        %v6194 = vadd.f32 %v6154, %v6188
        %v6195 = vadd.f32 %v6157, %v6190
        %v6196 = vadd.f32 %v6160, %v6192
        %v6197 = vsub.f32 %v6145, %v6193
        %v6198 = vsub.f32 %v6146, %v6194
        %v6199 = vsub.f32 %v6147, %v6195
        %v6200 = vsub.f32 %v6148, %v6196
        %v6201 = vsel %vm651, %v6197, -inf
        %v6202 = vsel %vm651, %v6198, -inf
        %v6203 = vmax.f32 %v6201, %v6202
        %v6204 = vrot.slane %v6203, 4
        %v6205 = vmax.f32 %v6203, %v6204
        %v6206 = vrot.slane %v6205, 2
        %v6207 = vmax.f32 %v6205, %v6206
        %v6208 = vrot.slane %v6207, 1
        %v6209 = vmax.f32 %v6207, %v6208
        %v6210 = vsel %vm651, %v6199, -inf
        %v6211 = vsel %vm651, %v6200, -inf
        %v6212 = vmax.f32 %v6210, %v6211
        %v6213 = vrot.slane %v6212, 4
        %v6214 = vmax.f32 %v6212, %v6213
        %v6215 = vrot.slane %v6214, 2
        %v6216 = vmax.f32 %v6214, %v6215
        %v6217 = vrot.slane %v6216, 1
        %v6218 = vmax.f32 %v6216, %v6217
        %v6219 = vsub.f32 %v6197, %v6209
        %v6220 = vsub.f32 %v6198, %v6209
        %v6221 = vsub.f32 %v6199, %v6218
        %v6222 = vsub.f32 %v6200, %v6218
        %v6223 = vmul.f32 %v6219, 1.442695
        %v6224 = vpow.pop %v6223
        %v6225 = vmul.f32 %v6220, 1.442695
        %v6226 = vpow.pop %v6225
        %v6227 = vmul.f32 %v6221, 1.442695
        %v6228 = vpow.pop %v6227
        %v6229 = vmul.f32 %v6222, 1.442695
        %v6230 = vpow.pop %v6229
        %v6231 = vsel %vm651, %v6224, 0.0
        %v6232 = vsel %vm651, %v6226, 0.0
        %v6233 = vadd.f32 %v6231, %v6232
        %v6234 = vrot.slane %v6233, 4
        %v6235 = vadd.f32 %v6233, %v6234
        %v6236 = vrot.slane %v6235, 2
        %v6237 = vadd.f32 %v6235, %v6236
        %v6238 = vrot.slane %v6237, 1
        %v6239 = vadd.f32 %v6237, %v6238
        %v6240 = vsel %vm651, %v6228, 0.0
        %v6241 = vsel %vm651, %v6230, 0.0
        %v6242 = vadd.f32 %v6240, %v6241
        %v6243 = vrot.slane %v6242, 4
        %v6244 = vadd.f32 %v6242, %v6243
        %v6245 = vrot.slane %v6244, 2
        %v6246 = vadd.f32 %v6244, %v6245
        %v6247 = vrot.slane %v6246, 1
        %v6248 = vadd.f32 %v6246, %v6247
        %v6249 = vlog2.pop %v6239
        %v6250 = vmul.f32 %v6249, 0.6931472
        %v6251 = vlog2.pop %v6248
        %v6252 = vmul.f32 %v6251, 0.6931472
        %v6253 = vadd.f32 %v6209, %v6250
        %v6254 = vadd.f32 %v6218, %v6252
        %v6255 = vsub.f32 %v6197, %v6253
        %v6256 = vsub.f32 %v6198, %v6253
        %v6257 = vsub.f32 %v6199, %v6254
        %v6258 = vsub.f32 %v6200, %v6254
        %v6259 = vsel %vm651, %v6255, -inf
        %6260 = vmax.xlane.f32.xlu0 %v6259
        %v6261 = vpop.xlane.xlu0 %6260
        %v6262 = vsel %vm651, %v6256, -inf
        %6263 = vmax.xlane.f32.xlu0 %v6262
        %v6264 = vpop.xlane.xlu0 %6263
        %v6265 = vsel %vm651, %v6257, -inf
        %6266 = vmax.xlane.f32.xlu0 %v6265
        %v6267 = vpop.xlane.xlu0 %6266
        %v6268 = vsel %vm651, %v6258, -inf
        %6269 = vmax.xlane.f32.xlu0 %v6268
        %v6270 = vpop.xlane.xlu0 %6269
        %v6271 = vsub.f32 %v6255, %v6261
        %v6272 = vsub.f32 %v6256, %v6264
        %v6273 = vsub.f32 %v6257, %v6267
        %v6274 = vsub.f32 %v6258, %v6270
        %v6275 = vmul.f32 %v6271, 1.442695
        %v6276 = vpow.pop %v6275
        %v6277 = vmul.f32 %v6272, 1.442695
        %v6278 = vpow.pop %v6277
        %v6279 = vmul.f32 %v6273, 1.442695
        %v6280 = vpow.pop %v6279
        %v6281 = vmul.f32 %v6274, 1.442695
        %v6282 = vpow.pop %v6281
        %v6283 = vsel %vm651, %v6276, 0.0
        %6284 = vadd.xlane.f32.xlu0 %v6283
        %v6285 = vpop.xlane.xlu0 %6284
        %v6286 = vsel %vm651, %v6278, 0.0
        %6287 = vadd.xlane.f32.xlu0 %v6286
        %v6288 = vpop.xlane.xlu0 %6287
        %v6289 = vsel %vm651, %v6280, 0.0
        %6290 = vadd.xlane.f32.xlu0 %v6289
        %v6291 = vpop.xlane.xlu0 %6290
        %v6292 = vsel %vm651, %v6282, 0.0
        %6293 = vadd.xlane.f32.xlu0 %v6292
        %v6294 = vpop.xlane.xlu0 %6293
        %v6295 = vlog2.pop %v6285
        %v6296 = vmul.f32 %v6295, 0.6931472
        %v6297 = vlog2.pop %v6288
        %v6298 = vmul.f32 %v6297, 0.6931472
        %v6299 = vlog2.pop %v6291
        %v6300 = vmul.f32 %v6299, 0.6931472
        %v6301 = vlog2.pop %v6294
        %v6302 = vmul.f32 %v6301, 0.6931472
        %v6303 = vadd.f32 %v6261, %v6296
        %v6304 = vadd.f32 %v6264, %v6298
        %v6305 = vadd.f32 %v6267, %v6300
        %v6306 = vadd.f32 %v6270, %v6302
        %v6307 = vsub.f32 %v6255, %v6303
        %v6308 = vsub.f32 %v6256, %v6304
        %v6309 = vsub.f32 %v6257, %v6305
        %v6310 = vsub.f32 %v6258, %v6306
        %v6311 = vsel %vm651, %v6307, -inf
        %v6312 = vsel %vm651, %v6308, -inf
        %v6313 = vmax.f32 %v6311, %v6312
        %v6314 = vrot.slane %v6313, 4
        %v6315 = vmax.f32 %v6313, %v6314
        %v6316 = vrot.slane %v6315, 2
        %v6317 = vmax.f32 %v6315, %v6316
        %v6318 = vrot.slane %v6317, 1
        %v6319 = vmax.f32 %v6317, %v6318
        %v6320 = vsel %vm651, %v6309, -inf
        %v6321 = vsel %vm651, %v6310, -inf
        %v6322 = vmax.f32 %v6320, %v6321
        %v6323 = vrot.slane %v6322, 4
        %v6324 = vmax.f32 %v6322, %v6323
        %v6325 = vrot.slane %v6324, 2
        %v6326 = vmax.f32 %v6324, %v6325
        %v6327 = vrot.slane %v6326, 1
        %v6328 = vmax.f32 %v6326, %v6327
        %v6329 = vsub.f32 %v6307, %v6319
        %v6330 = vsub.f32 %v6308, %v6319
        %v6331 = vsub.f32 %v6309, %v6328
        %v6332 = vsub.f32 %v6310, %v6328
        %v6333 = vmul.f32 %v6329, 1.442695
        %v6334 = vpow.pop %v6333
        %v6335 = vmul.f32 %v6330, 1.442695
        %v6336 = vpow.pop %v6335
        %v6337 = vmul.f32 %v6331, 1.442695
        %v6338 = vpow.pop %v6337
        %v6339 = vmul.f32 %v6332, 1.442695
        %v6340 = vpow.pop %v6339
        %v6341 = vsel %vm651, %v6334, 0.0
        %v6342 = vsel %vm651, %v6336, 0.0
        %v6343 = vadd.f32 %v6341, %v6342
        %v6344 = vrot.slane %v6343, 4
        %v6345 = vadd.f32 %v6343, %v6344
        %v6346 = vrot.slane %v6345, 2
        %v6347 = vadd.f32 %v6345, %v6346
        %v6348 = vrot.slane %v6347, 1
        %v6349 = vadd.f32 %v6347, %v6348
        %v6350 = vsel %vm651, %v6338, 0.0
        %v6351 = vsel %vm651, %v6340, 0.0
        %v6352 = vadd.f32 %v6350, %v6351
        %v6353 = vrot.slane %v6352, 4
        %v6354 = vadd.f32 %v6352, %v6353
        %v6355 = vrot.slane %v6354, 2
        %v6356 = vadd.f32 %v6354, %v6355
        %v6357 = vrot.slane %v6356, 1
        %v6358 = vadd.f32 %v6356, %v6357
        %v6359 = vlog2.pop %v6349
        %v6360 = vmul.f32 %v6359, 0.6931472
        %v6361 = vlog2.pop %v6358
        %v6362 = vmul.f32 %v6361, 0.6931472
        %v6363 = vadd.f32 %v6319, %v6360
        %v6364 = vadd.f32 %v6328, %v6362
        %v6365 = vsub.f32 %v6307, %v6363
        %v6366 = vsub.f32 %v6308, %v6363
        %v6367 = vsub.f32 %v6309, %v6364
        %v6368 = vsub.f32 %v6310, %v6364
        %v6369 = vsel %vm651, %v6365, -inf
        %6370 = vmax.xlane.f32.xlu0 %v6369
        %v6371 = vpop.xlane.xlu0 %6370
        %v6372 = vsel %vm651, %v6366, -inf
        %6373 = vmax.xlane.f32.xlu0 %v6372
        %v6374 = vpop.xlane.xlu0 %6373
        %v6375 = vsel %vm651, %v6367, -inf
        %6376 = vmax.xlane.f32.xlu0 %v6375
        %v6377 = vpop.xlane.xlu0 %6376
        %v6378 = vsel %vm651, %v6368, -inf
        %6379 = vmax.xlane.f32.xlu0 %v6378
        %v6380 = vpop.xlane.xlu0 %6379
        %v6381 = vsub.f32 %v6365, %v6371
        %v6382 = vsub.f32 %v6366, %v6374
        %v6383 = vsub.f32 %v6367, %v6377
        %v6384 = vsub.f32 %v6368, %v6380
        %v6385 = vmul.f32 %v6381, 1.442695
        %v6386 = vpow.pop %v6385
        %v6387 = vmul.f32 %v6382, 1.442695
        %v6388 = vpow.pop %v6387
        %v6389 = vmul.f32 %v6383, 1.442695
        %v6390 = vpow.pop %v6389
        %v6391 = vmul.f32 %v6384, 1.442695
        %v6392 = vpow.pop %v6391
        %v6393 = vsel %vm651, %v6386, 0.0
        %6394 = vadd.xlane.f32.xlu0 %v6393
        %v6395 = vpop.xlane.xlu0 %6394
        %v6396 = vsel %vm651, %v6388, 0.0
        %6397 = vadd.xlane.f32.xlu0 %v6396
        %v6398 = vpop.xlane.xlu0 %6397
        %v6399 = vsel %vm651, %v6390, 0.0
        %6400 = vadd.xlane.f32.xlu0 %v6399
        %v6401 = vpop.xlane.xlu0 %6400
        %v6402 = vsel %vm651, %v6392, 0.0
        %6403 = vadd.xlane.f32.xlu0 %v6402
        %v6404 = vpop.xlane.xlu0 %6403
        %v6405 = vlog2.pop %v6395
        %v6406 = vmul.f32 %v6405, 0.6931472
        %v6407 = vlog2.pop %v6398
        %v6408 = vmul.f32 %v6407, 0.6931472
        %v6409 = vlog2.pop %v6401
        %v6410 = vmul.f32 %v6409, 0.6931472
        %v6411 = vlog2.pop %v6404
        %v6412 = vmul.f32 %v6411, 0.6931472
        %v6413 = vadd.f32 %v6371, %v6406
        %v6414 = vadd.f32 %v6374, %v6408
        %v6415 = vadd.f32 %v6377, %v6410
        %v6416 = vadd.f32 %v6380, %v6412
        %v6417 = vsub.f32 %v6365, %v6413
        %v6418 = vsub.f32 %v6366, %v6414
        %v6419 = vsub.f32 %v6367, %v6415
        %v6420 = vsub.f32 %v6368, %v6416
        %v6421 = vsel %vm651, %v6417, -inf
        %v6422 = vsel %vm651, %v6418, -inf
        %v6423 = vmax.f32 %v6421, %v6422
        %v6424 = vrot.slane %v6423, 4
        %v6425 = vmax.f32 %v6423, %v6424
        %v6426 = vrot.slane %v6425, 2
        %v6427 = vmax.f32 %v6425, %v6426
        %v6428 = vrot.slane %v6427, 1
        %v6429 = vmax.f32 %v6427, %v6428
        %v6430 = vsel %vm651, %v6419, -inf
        %v6431 = vsel %vm651, %v6420, -inf
        %v6432 = vmax.f32 %v6430, %v6431
        %v6433 = vrot.slane %v6432, 4
        %v6434 = vmax.f32 %v6432, %v6433
        %v6435 = vrot.slane %v6434, 2
        %v6436 = vmax.f32 %v6434, %v6435
        %v6437 = vrot.slane %v6436, 1
        %v6438 = vmax.f32 %v6436, %v6437
        %v6439 = vsub.f32 %v6417, %v6429
        %v6440 = vsub.f32 %v6418, %v6429
        %v6441 = vsub.f32 %v6419, %v6438
        %v6442 = vsub.f32 %v6420, %v6438
        %v6443 = vmul.f32 %v6439, 1.442695
        %v6444 = vpow.pop %v6443
        %v6445 = vmul.f32 %v6440, 1.442695
        %v6446 = vpow.pop %v6445
        %v6447 = vmul.f32 %v6441, 1.442695
        %v6448 = vpow.pop %v6447
        %v6449 = vmul.f32 %v6442, 1.442695
        %v6450 = vpow.pop %v6449
        %v6451 = vsel %vm651, %v6444, 0.0
        %v6452 = vsel %vm651, %v6446, 0.0
        %v6453 = vadd.f32 %v6451, %v6452
        %v6454 = vrot.slane %v6453, 4
        %v6455 = vadd.f32 %v6453, %v6454
        %v6456 = vrot.slane %v6455, 2
        %v6457 = vadd.f32 %v6455, %v6456
        %v6458 = vrot.slane %v6457, 1
        %v6459 = vadd.f32 %v6457, %v6458
        %v6460 = vsel %vm651, %v6448, 0.0
        %v6461 = vsel %vm651, %v6450, 0.0
        %v6462 = vadd.f32 %v6460, %v6461
        %v6463 = vrot.slane %v6462, 4
        %v6464 = vadd.f32 %v6462, %v6463
        %v6465 = vrot.slane %v6464, 2
        %v6466 = vadd.f32 %v6464, %v6465
        %v6467 = vrot.slane %v6466, 1
        %v6468 = vadd.f32 %v6466, %v6467
        %v6469 = vlog2.pop %v6459
        %v6470 = vmul.f32 %v6469, 0.6931472
        %v6471 = vlog2.pop %v6468
        %v6472 = vmul.f32 %v6471, 0.6931472
        %v6473 = vadd.f32 %v6429, %v6470
        %v6474 = vadd.f32 %v6438, %v6472
        %v6475 = vsub.f32 %v6417, %v6473
        %v6476 = vsub.f32 %v6418, %v6473
        %v6477 = vsub.f32 %v6419, %v6474
        %v6478 = vsub.f32 %v6420, %v6474
        %v6479 = vsel %vm651, %v6475, -inf
        %6480 = vmax.xlane.f32.xlu0 %v6479
        %v6481 = vpop.xlane.xlu0 %6480
        %v6482 = vsel %vm651, %v6476, -inf
        %6483 = vmax.xlane.f32.xlu0 %v6482
        %v6484 = vpop.xlane.xlu0 %6483
        %v6485 = vsel %vm651, %v6477, -inf
        %6486 = vmax.xlane.f32.xlu0 %v6485
        %v6487 = vpop.xlane.xlu0 %6486
        %v6488 = vsel %vm651, %v6478, -inf
        %6489 = vmax.xlane.f32.xlu0 %v6488
        %v6490 = vpop.xlane.xlu0 %6489
        %v6491 = vsub.f32 %v6475, %v6481
        %v6492 = vsub.f32 %v6476, %v6484
        %v6493 = vsub.f32 %v6477, %v6487
        %v6494 = vsub.f32 %v6478, %v6490
        %v6495 = vmul.f32 %v6491, 1.442695
        %v6496 = vpow.pop %v6495
        %v6497 = vmul.f32 %v6492, 1.442695
        %v6498 = vpow.pop %v6497
        %v6499 = vmul.f32 %v6493, 1.442695
        %v6500 = vpow.pop %v6499
        %v6501 = vmul.f32 %v6494, 1.442695
        %v6502 = vpow.pop %v6501
        %v6503 = vsel %vm651, %v6496, 0.0
        %6504 = vadd.xlane.f32.xlu0 %v6503
        %v6505 = vpop.xlane.xlu0 %6504
        %v6506 = vsel %vm651, %v6498, 0.0
        %6507 = vadd.xlane.f32.xlu0 %v6506
        %v6508 = vpop.xlane.xlu0 %6507
        %v6509 = vsel %vm651, %v6500, 0.0
        %6510 = vadd.xlane.f32.xlu0 %v6509
        %v6511 = vpop.xlane.xlu0 %6510
        %v6512 = vsel %vm651, %v6502, 0.0
        %6513 = vadd.xlane.f32.xlu0 %v6512
        %v6514 = vpop.xlane.xlu0 %6513
        %v6515 = vlog2.pop %v6505
        %v6516 = vmul.f32 %v6515, 0.6931472
        %v6517 = vlog2.pop %v6508
        %v6518 = vmul.f32 %v6517, 0.6931472
        %v6519 = vlog2.pop %v6511
        %v6520 = vmul.f32 %v6519, 0.6931472
        %v6521 = vlog2.pop %v6514
        %v6522 = vmul.f32 %v6521, 0.6931472
        %v6523 = vadd.f32 %v6481, %v6516
        %v6524 = vadd.f32 %v6484, %v6518
        %v6525 = vadd.f32 %v6487, %v6520
        %v6526 = vadd.f32 %v6490, %v6522
        %v6527 = vsub.f32 %v6475, %v6523
        %v6528 = vsub.f32 %v6476, %v6524
        %v6529 = vsub.f32 %v6477, %v6525
        %v6530 = vsub.f32 %v6478, %v6526
        %v6531 = vsel %vm651, %v6527, -inf
        %v6532 = vsel %vm651, %v6528, -inf
        %v6533 = vmax.f32 %v6531, %v6532
        %v6534 = vrot.slane %v6533, 4
        %v6535 = vmax.f32 %v6533, %v6534
        %v6536 = vrot.slane %v6535, 2
        %v6537 = vmax.f32 %v6535, %v6536
        %v6538 = vrot.slane %v6537, 1
        %v6539 = vmax.f32 %v6537, %v6538
        %v6540 = vsel %vm651, %v6529, -inf
        %v6541 = vsel %vm651, %v6530, -inf
        %v6542 = vmax.f32 %v6540, %v6541
        %v6543 = vrot.slane %v6542, 4
        %v6544 = vmax.f32 %v6542, %v6543
        %v6545 = vrot.slane %v6544, 2
        %v6546 = vmax.f32 %v6544, %v6545
        %v6547 = vrot.slane %v6546, 1
        %v6548 = vmax.f32 %v6546, %v6547
        %v6549 = vsub.f32 %v6527, %v6539
        %v6550 = vsub.f32 %v6528, %v6539
        %v6551 = vsub.f32 %v6529, %v6548
        %v6552 = vsub.f32 %v6530, %v6548
        %v6553 = vmul.f32 %v6549, 1.442695
        %v6554 = vpow.pop %v6553
        %v6555 = vmul.f32 %v6550, 1.442695
        %v6556 = vpow.pop %v6555
        %v6557 = vmul.f32 %v6551, 1.442695
        %v6558 = vpow.pop %v6557
        %v6559 = vmul.f32 %v6552, 1.442695
        %v6560 = vpow.pop %v6559
        %v6561 = vsel %vm651, %v6554, 0.0
        %v6562 = vsel %vm651, %v6556, 0.0
        %v6563 = vadd.f32 %v6561, %v6562
        %v6564 = vrot.slane %v6563, 4
        %v6565 = vadd.f32 %v6563, %v6564
        %v6566 = vrot.slane %v6565, 2
        %v6567 = vadd.f32 %v6565, %v6566
        %v6568 = vrot.slane %v6567, 1
        %v6569 = vadd.f32 %v6567, %v6568
        %v6570 = vsel %vm651, %v6558, 0.0
        %v6571 = vsel %vm651, %v6560, 0.0
        %v6572 = vadd.f32 %v6570, %v6571
        %v6573 = vrot.slane %v6572, 4
        %v6574 = vadd.f32 %v6572, %v6573
        %v6575 = vrot.slane %v6574, 2
        %v6576 = vadd.f32 %v6574, %v6575
        %v6577 = vrot.slane %v6576, 1
        %v6578 = vadd.f32 %v6576, %v6577
        %v6579 = vlog2.pop %v6569
        %v6580 = vmul.f32 %v6579, 0.6931472
        %v6581 = vlog2.pop %v6578
        %v6582 = vmul.f32 %v6581, 0.6931472
        %v6583 = vadd.f32 %v6539, %v6580
        %v6584 = vadd.f32 %v6548, %v6582
        %v6585 = vsub.f32 %v6527, %v6583
        %v6586 = vsub.f32 %v6528, %v6583
        %v6587 = vsub.f32 %v6529, %v6584
        %v6588 = vsub.f32 %v6530, %v6584
        %v6589 = vsel %vm651, %v6585, -inf
        %6590 = vmax.xlane.f32.xlu0 %v6589
        %v6591 = vpop.xlane.xlu0 %6590
        %v6592 = vsel %vm651, %v6586, -inf
        %6593 = vmax.xlane.f32.xlu0 %v6592
        %v6594 = vpop.xlane.xlu0 %6593
        %v6595 = vsel %vm651, %v6587, -inf
        %6596 = vmax.xlane.f32.xlu0 %v6595
        %v6597 = vpop.xlane.xlu0 %6596
        %v6598 = vsel %vm651, %v6588, -inf
        %6599 = vmax.xlane.f32.xlu0 %v6598
        %v6600 = vpop.xlane.xlu0 %6599
        %v6601 = vsub.f32 %v6585, %v6591
        %v6602 = vsub.f32 %v6586, %v6594
        %v6603 = vsub.f32 %v6587, %v6597
        %v6604 = vsub.f32 %v6588, %v6600
        %v6605 = vmul.f32 %v6601, 1.442695
        %v6606 = vpow.pop %v6605
        %v6607 = vmul.f32 %v6602, 1.442695
        %v6608 = vpow.pop %v6607
        %v6609 = vmul.f32 %v6603, 1.442695
        %v6610 = vpow.pop %v6609
        %v6611 = vmul.f32 %v6604, 1.442695
        %v6612 = vpow.pop %v6611
        %v6613 = vsel %vm651, %v6606, 0.0
        %6614 = vadd.xlane.f32.xlu0 %v6613
        %v6615 = vpop.xlane.xlu0 %6614
        %v6616 = vsel %vm651, %v6608, 0.0
        %6617 = vadd.xlane.f32.xlu0 %v6616
        %v6618 = vpop.xlane.xlu0 %6617
        %v6619 = vsel %vm651, %v6610, 0.0
        %6620 = vadd.xlane.f32.xlu0 %v6619
        %v6621 = vpop.xlane.xlu0 %6620
        %v6622 = vsel %vm651, %v6612, 0.0
        %6623 = vadd.xlane.f32.xlu0 %v6622
        %v6624 = vpop.xlane.xlu0 %6623
        %v6625 = vlog2.pop %v6615
        %v6626 = vmul.f32 %v6625, 0.6931472
        %v6627 = vlog2.pop %v6618
        %v6628 = vmul.f32 %v6627, 0.6931472
        %v6629 = vlog2.pop %v6621
        %v6630 = vmul.f32 %v6629, 0.6931472
        %v6631 = vlog2.pop %v6624
        %v6632 = vmul.f32 %v6631, 0.6931472
        %v6633 = vadd.f32 %v6591, %v6626
        %v6634 = vadd.f32 %v6594, %v6628
        %v6635 = vadd.f32 %v6597, %v6630
        %v6636 = vadd.f32 %v6600, %v6632
        %v6637 = vsub.f32 %v6585, %v6633
        %v6638 = vsub.f32 %v6586, %v6634
        %v6639 = vsub.f32 %v6587, %v6635
        %v6640 = vsub.f32 %v6588, %v6636
        %v6641 = vsel %vm651, %v6637, -inf
        %v6642 = vsel %vm651, %v6638, -inf
        %v6643 = vmax.f32 %v6641, %v6642
        %v6644 = vrot.slane %v6643, 4
        %v6645 = vmax.f32 %v6643, %v6644
        %v6646 = vrot.slane %v6645, 2
        %v6647 = vmax.f32 %v6645, %v6646
        %v6648 = vrot.slane %v6647, 1
        %v6649 = vmax.f32 %v6647, %v6648
        %v6650 = vsel %vm651, %v6639, -inf
        %v6651 = vsel %vm651, %v6640, -inf
        %v6652 = vmax.f32 %v6650, %v6651
        %v6653 = vrot.slane %v6652, 4
        %v6654 = vmax.f32 %v6652, %v6653
        %v6655 = vrot.slane %v6654, 2
        %v6656 = vmax.f32 %v6654, %v6655
        %v6657 = vrot.slane %v6656, 1
        %v6658 = vmax.f32 %v6656, %v6657
        %v6659 = vsub.f32 %v6637, %v6649
        %v6660 = vsub.f32 %v6638, %v6649
        %v6661 = vsub.f32 %v6639, %v6658
        %v6662 = vsub.f32 %v6640, %v6658
        %v6663 = vmul.f32 %v6659, 1.442695
        %v6664 = vpow.pop %v6663
        %v6665 = vmul.f32 %v6660, 1.442695
        %v6666 = vpow.pop %v6665
        %v6667 = vmul.f32 %v6661, 1.442695
        %v6668 = vpow.pop %v6667
        %v6669 = vmul.f32 %v6662, 1.442695
        %v6670 = vpow.pop %v6669
        %v6671 = vsel %vm651, %v6664, 0.0
        %v6672 = vsel %vm651, %v6666, 0.0
        %v6673 = vadd.f32 %v6671, %v6672
        %v6674 = vrot.slane %v6673, 4
        %v6675 = vadd.f32 %v6673, %v6674
        %v6676 = vrot.slane %v6675, 2
        %v6677 = vadd.f32 %v6675, %v6676
        %v6678 = vrot.slane %v6677, 1
        %v6679 = vadd.f32 %v6677, %v6678
        %v6680 = vsel %vm651, %v6668, 0.0
        %v6681 = vsel %vm651, %v6670, 0.0
        %v6682 = vadd.f32 %v6680, %v6681
        %v6683 = vrot.slane %v6682, 4
        %v6684 = vadd.f32 %v6682, %v6683
        %v6685 = vrot.slane %v6684, 2
        %v6686 = vadd.f32 %v6684, %v6685
        %v6687 = vrot.slane %v6686, 1
        %v6688 = vadd.f32 %v6686, %v6687
        %v6689 = vlog2.pop %v6679
        %v6690 = vmul.f32 %v6689, 0.6931472
        %v6691 = vlog2.pop %v6688
        %v6692 = vmul.f32 %v6691, 0.6931472
        %v6693 = vadd.f32 %v6649, %v6690
        %v6694 = vadd.f32 %v6658, %v6692
        %v6695 = vsub.f32 %v6637, %v6693
        %v6696 = vsub.f32 %v6638, %v6693
        %v6697 = vsub.f32 %v6639, %v6694
        %v6698 = vsub.f32 %v6640, %v6694
        %v6699 = vsel %vm651, %v6695, -inf
        %6700 = vmax.xlane.f32.xlu0 %v6699
        %v6701 = vpop.xlane.xlu0 %6700
        %v6702 = vsel %vm651, %v6696, -inf
        %6703 = vmax.xlane.f32.xlu0 %v6702
        %v6704 = vpop.xlane.xlu0 %6703
        %v6705 = vsel %vm651, %v6697, -inf
        %6706 = vmax.xlane.f32.xlu0 %v6705
        %v6707 = vpop.xlane.xlu0 %6706
        %v6708 = vsel %vm651, %v6698, -inf
        %6709 = vmax.xlane.f32.xlu0 %v6708
        %v6710 = vpop.xlane.xlu0 %6709
        %v6711 = vsub.f32 %v6695, %v6701
        %v6712 = vsub.f32 %v6696, %v6704
        %v6713 = vsub.f32 %v6697, %v6707
        %v6714 = vsub.f32 %v6698, %v6710
        %v6715 = vmul.f32 %v6711, 1.442695
        %v6716 = vpow.pop %v6715
        %v6717 = vmul.f32 %v6712, 1.442695
        %v6718 = vpow.pop %v6717
        %v6719 = vmul.f32 %v6713, 1.442695
        %v6720 = vpow.pop %v6719
        %v6721 = vmul.f32 %v6714, 1.442695
        %v6722 = vpow.pop %v6721
        %v6723 = vsel %vm651, %v6716, 0.0
        %6724 = vadd.xlane.f32.xlu0 %v6723
        %v6725 = vpop.xlane.xlu0 %6724
        %v6726 = vsel %vm651, %v6718, 0.0
        %6727 = vadd.xlane.f32.xlu0 %v6726
        %v6728 = vpop.xlane.xlu0 %6727
        %v6729 = vsel %vm651, %v6720, 0.0
        %6730 = vadd.xlane.f32.xlu0 %v6729
        %v6731 = vpop.xlane.xlu0 %6730
        %v6732 = vsel %vm651, %v6722, 0.0
        %6733 = vadd.xlane.f32.xlu0 %v6732
        %v6734 = vpop.xlane.xlu0 %6733
        %v6735 = vlog2.pop %v6725
        %v6736 = vmul.f32 %v6735, 0.6931472
        %v6737 = vlog2.pop %v6728
        %v6738 = vmul.f32 %v6737, 0.6931472
        %v6739 = vlog2.pop %v6731
        %v6740 = vmul.f32 %v6739, 0.6931472
        %v6741 = vlog2.pop %v6734
        %v6742 = vmul.f32 %v6741, 0.6931472
        %v6743 = vadd.f32 %v6701, %v6736
        %v6744 = vadd.f32 %v6704, %v6738
        %v6745 = vadd.f32 %v6707, %v6740
        %v6746 = vadd.f32 %v6710, %v6742
        %v6747 = vsub.f32 %v6695, %v6743
        %v6748 = vsub.f32 %v6696, %v6744
        %v6749 = vsub.f32 %v6697, %v6745
        %v6750 = vsub.f32 %v6698, %v6746
        %v6751 = vsel %vm651, %v6747, -inf
        %v6752 = vsel %vm651, %v6748, -inf
        %v6753 = vmax.f32 %v6751, %v6752
        %v6754 = vrot.slane %v6753, 4
        %v6755 = vmax.f32 %v6753, %v6754
        %v6756 = vrot.slane %v6755, 2
        %v6757 = vmax.f32 %v6755, %v6756
        %v6758 = vrot.slane %v6757, 1
        %v6759 = vmax.f32 %v6757, %v6758
        %v6760 = vsel %vm651, %v6749, -inf
        %v6761 = vsel %vm651, %v6750, -inf
        %v6762 = vmax.f32 %v6760, %v6761
        %v6763 = vrot.slane %v6762, 4
        %v6764 = vmax.f32 %v6762, %v6763
        %v6765 = vrot.slane %v6764, 2
        %v6766 = vmax.f32 %v6764, %v6765
        %v6767 = vrot.slane %v6766, 1
        %v6768 = vmax.f32 %v6766, %v6767
        %v6769 = vsub.f32 %v6747, %v6759
        %v6770 = vsub.f32 %v6748, %v6759
        %v6771 = vsub.f32 %v6749, %v6768
        %v6772 = vsub.f32 %v6750, %v6768
        %v6773 = vmul.f32 %v6769, 1.442695
        %v6774 = vpow.pop %v6773
        %v6775 = vmul.f32 %v6770, 1.442695
        %v6776 = vpow.pop %v6775
        %v6777 = vmul.f32 %v6771, 1.442695
        %v6778 = vpow.pop %v6777
        %v6779 = vmul.f32 %v6772, 1.442695
        %v6780 = vpow.pop %v6779
        %v6781 = vsel %vm651, %v6774, 0.0
        %v6782 = vsel %vm651, %v6776, 0.0
        %v6783 = vadd.f32 %v6781, %v6782
        %v6784 = vrot.slane %v6783, 4
        %v6785 = vadd.f32 %v6783, %v6784
        %v6786 = vrot.slane %v6785, 2
        %v6787 = vadd.f32 %v6785, %v6786
        %v6788 = vrot.slane %v6787, 1
        %v6789 = vadd.f32 %v6787, %v6788
        %v6790 = vsel %vm651, %v6778, 0.0
        %v6791 = vsel %vm651, %v6780, 0.0
        %v6792 = vadd.f32 %v6790, %v6791
        %v6793 = vrot.slane %v6792, 4
        %v6794 = vadd.f32 %v6792, %v6793
        %v6795 = vrot.slane %v6794, 2
        %v6796 = vadd.f32 %v6794, %v6795
        %v6797 = vrot.slane %v6796, 1
        %v6798 = vadd.f32 %v6796, %v6797
        %v6799 = vlog2.pop %v6789
        %v6800 = vmul.f32 %v6799, 0.6931472
        %v6801 = vlog2.pop %v6798
        %v6802 = vmul.f32 %v6801, 0.6931472
        %v6803 = vadd.f32 %v6759, %v6800
        %v6804 = vadd.f32 %v6768, %v6802
        %v6805 = vsub.f32 %v6747, %v6803
        %v6806 = vsub.f32 %v6748, %v6803
        %v6807 = vsub.f32 %v6749, %v6804
        %v6808 = vsub.f32 %v6750, %v6804
        %v6809 = vsel %vm651, %v6805, -inf
        %6810 = vmax.xlane.f32.xlu0 %v6809
        %v6811 = vpop.xlane.xlu0 %6810
        %v6812 = vsel %vm651, %v6806, -inf
        %6813 = vmax.xlane.f32.xlu0 %v6812
        %v6814 = vpop.xlane.xlu0 %6813
        %v6815 = vsel %vm651, %v6807, -inf
        %6816 = vmax.xlane.f32.xlu0 %v6815
        %v6817 = vpop.xlane.xlu0 %6816
        %v6818 = vsel %vm651, %v6808, -inf
        %6819 = vmax.xlane.f32.xlu0 %v6818
        %v6820 = vpop.xlane.xlu0 %6819
        %v6821 = vsub.f32 %v6805, %v6811
        %v6822 = vsub.f32 %v6806, %v6814
        %v6823 = vsub.f32 %v6807, %v6817
        %v6824 = vsub.f32 %v6808, %v6820
        %v6825 = vmul.f32 %v6821, 1.442695
        %v6826 = vpow.pop %v6825
        %v6827 = vmul.f32 %v6822, 1.442695
        %v6828 = vpow.pop %v6827
        %v6829 = vmul.f32 %v6823, 1.442695
        %v6830 = vpow.pop %v6829
        %v6831 = vmul.f32 %v6824, 1.442695
        %v6832 = vpow.pop %v6831
        %v6833 = vsel %vm651, %v6826, 0.0
        %6834 = vadd.xlane.f32.xlu0 %v6833
        %v6835 = vpop.xlane.xlu0 %6834
        %v6836 = vsel %vm651, %v6828, 0.0
        %6837 = vadd.xlane.f32.xlu0 %v6836
        %v6838 = vpop.xlane.xlu0 %6837
        %v6839 = vsel %vm651, %v6830, 0.0
        %6840 = vadd.xlane.f32.xlu0 %v6839
        %v6841 = vpop.xlane.xlu0 %6840
        %v6842 = vsel %vm651, %v6832, 0.0
        %6843 = vadd.xlane.f32.xlu0 %v6842
        %v6844 = vpop.xlane.xlu0 %6843
        %v6845 = vlog2.pop %v6835
        %v6846 = vmul.f32 %v6845, 0.6931472
        %v6847 = vlog2.pop %v6838
        %v6848 = vmul.f32 %v6847, 0.6931472
        %v6849 = vlog2.pop %v6841
        %v6850 = vmul.f32 %v6849, 0.6931472
        %v6851 = vlog2.pop %v6844
        %v6852 = vmul.f32 %v6851, 0.6931472
        %v6853 = vadd.f32 %v6811, %v6846
        %v6854 = vadd.f32 %v6814, %v6848
        %v6855 = vadd.f32 %v6817, %v6850
        %v6856 = vadd.f32 %v6820, %v6852
        %v6857 = vsub.f32 %v6805, %v6853
        %v6858 = vsub.f32 %v6806, %v6854
        %v6859 = vsub.f32 %v6807, %v6855
        %v6860 = vsub.f32 %v6808, %v6856
        %v6861 = vsel %vm651, %v6857, -inf
        %v6862 = vsel %vm651, %v6858, -inf
        %v6863 = vmax.f32 %v6861, %v6862
        %v6864 = vrot.slane %v6863, 4
        %v6865 = vmax.f32 %v6863, %v6864
        %v6866 = vrot.slane %v6865, 2
        %v6867 = vmax.f32 %v6865, %v6866
        %v6868 = vrot.slane %v6867, 1
        %v6869 = vmax.f32 %v6867, %v6868
        %v6870 = vsel %vm651, %v6859, -inf
        %v6871 = vsel %vm651, %v6860, -inf
        %v6872 = vmax.f32 %v6870, %v6871
        %v6873 = vrot.slane %v6872, 4
        %v6874 = vmax.f32 %v6872, %v6873
        %v6875 = vrot.slane %v6874, 2
        %v6876 = vmax.f32 %v6874, %v6875
        %v6877 = vrot.slane %v6876, 1
        %v6878 = vmax.f32 %v6876, %v6877
        %v6879 = vsub.f32 %v6857, %v6869
        %v6880 = vsub.f32 %v6858, %v6869
        %v6881 = vsub.f32 %v6859, %v6878
        %v6882 = vsub.f32 %v6860, %v6878
        %v6883 = vmul.f32 %v6879, 1.442695
        %v6884 = vpow.pop %v6883
        %v6885 = vmul.f32 %v6880, 1.442695
        %v6886 = vpow.pop %v6885
        %v6887 = vmul.f32 %v6881, 1.442695
        %v6888 = vpow.pop %v6887
        %v6889 = vmul.f32 %v6882, 1.442695
        %v6890 = vpow.pop %v6889
        %v6891 = vsel %vm651, %v6884, 0.0
        %v6892 = vsel %vm651, %v6886, 0.0
        %v6893 = vadd.f32 %v6891, %v6892
        %v6894 = vrot.slane %v6893, 4
        %v6895 = vadd.f32 %v6893, %v6894
        %v6896 = vrot.slane %v6895, 2
        %v6897 = vadd.f32 %v6895, %v6896
        %v6898 = vrot.slane %v6897, 1
        %v6899 = vadd.f32 %v6897, %v6898
        %v6900 = vsel %vm651, %v6888, 0.0
        %v6901 = vsel %vm651, %v6890, 0.0
        %v6902 = vadd.f32 %v6900, %v6901
        %v6903 = vrot.slane %v6902, 4
        %v6904 = vadd.f32 %v6902, %v6903
        %v6905 = vrot.slane %v6904, 2
        %v6906 = vadd.f32 %v6904, %v6905
        %v6907 = vrot.slane %v6906, 1
        %v6908 = vadd.f32 %v6906, %v6907
        %v6909 = vlog2.pop %v6899
        %v6910 = vmul.f32 %v6909, 0.6931472
        %v6911 = vlog2.pop %v6908
        %v6912 = vmul.f32 %v6911, 0.6931472
        %v6913 = vadd.f32 %v6869, %v6910
        %v6914 = vadd.f32 %v6878, %v6912
        %v6915 = vsub.f32 %v6857, %v6913
        %v6916 = vsub.f32 %v6858, %v6913
        %v6917 = vsub.f32 %v6859, %v6914
        %v6918 = vsub.f32 %v6860, %v6914
        %v6919 = vsel %vm651, %v6915, -inf
        %6920 = vmax.xlane.f32.xlu0 %v6919
        %v6921 = vpop.xlane.xlu0 %6920
        %v6922 = vsel %vm651, %v6916, -inf
        %6923 = vmax.xlane.f32.xlu0 %v6922
        %v6924 = vpop.xlane.xlu0 %6923
        %v6925 = vsel %vm651, %v6917, -inf
        %6926 = vmax.xlane.f32.xlu0 %v6925
        %v6927 = vpop.xlane.xlu0 %6926
        %v6928 = vsel %vm651, %v6918, -inf
        %6929 = vmax.xlane.f32.xlu0 %v6928
        %v6930 = vpop.xlane.xlu0 %6929
        %v6931 = vsub.f32 %v6915, %v6921
        %v6932 = vsub.f32 %v6916, %v6924
        %v6933 = vsub.f32 %v6917, %v6927
        %v6934 = vsub.f32 %v6918, %v6930
        %v6935 = vmul.f32 %v6931, 1.442695
        %v6936 = vpow.pop %v6935
        %v6937 = vmul.f32 %v6932, 1.442695
        %v6938 = vpow.pop %v6937
        %v6939 = vmul.f32 %v6933, 1.442695
        %v6940 = vpow.pop %v6939
        %v6941 = vmul.f32 %v6934, 1.442695
        %v6942 = vpow.pop %v6941
        %v6943 = vsel %vm651, %v6936, 0.0
        %6944 = vadd.xlane.f32.xlu0 %v6943
        %v6945 = vpop.xlane.xlu0 %6944
        %v6946 = vsel %vm651, %v6938, 0.0
        %6947 = vadd.xlane.f32.xlu0 %v6946
        %v6948 = vpop.xlane.xlu0 %6947
        %v6949 = vsel %vm651, %v6940, 0.0
        %6950 = vadd.xlane.f32.xlu0 %v6949
        %v6951 = vpop.xlane.xlu0 %6950
        %v6952 = vsel %vm651, %v6942, 0.0
        %6953 = vadd.xlane.f32.xlu0 %v6952
        %v6954 = vpop.xlane.xlu0 %6953
        %v6955 = vlog2.pop %v6945
        %v6956 = vmul.f32 %v6955, 0.6931472
        %v6957 = vlog2.pop %v6948
        %v6958 = vmul.f32 %v6957, 0.6931472
        %v6959 = vlog2.pop %v6951
        %v6960 = vmul.f32 %v6959, 0.6931472
        %v6961 = vlog2.pop %v6954
        %v6962 = vmul.f32 %v6961, 0.6931472
        %v6963 = vadd.f32 %v6921, %v6956
        %v6964 = vadd.f32 %v6924, %v6958
        %v6965 = vadd.f32 %v6927, %v6960
        %v6966 = vadd.f32 %v6930, %v6962
        %v6967 = vsub.f32 %v6915, %v6963
        %v6968 = vsub.f32 %v6916, %v6964
        %v6969 = vsub.f32 %v6917, %v6965
        %v6970 = vsub.f32 %v6918, %v6966
        %v6971 = vsel %vm651, %v6967, -inf
        %v6972 = vsel %vm651, %v6968, -inf
        %v6973 = vmax.f32 %v6971, %v6972
        %v6974 = vrot.slane %v6973, 4
        %v6975 = vmax.f32 %v6973, %v6974
        %v6976 = vrot.slane %v6975, 2
        %v6977 = vmax.f32 %v6975, %v6976
        %v6978 = vrot.slane %v6977, 1
        %v6979 = vmax.f32 %v6977, %v6978
        %v6980 = vsel %vm651, %v6969, -inf
        %v6981 = vsel %vm651, %v6970, -inf
        %v6982 = vmax.f32 %v6980, %v6981
        %v6983 = vrot.slane %v6982, 4
        %v6984 = vmax.f32 %v6982, %v6983
        %v6985 = vrot.slane %v6984, 2
        %v6986 = vmax.f32 %v6984, %v6985
        %v6987 = vrot.slane %v6986, 1
        %v6988 = vmax.f32 %v6986, %v6987
        %v6989 = vsub.f32 %v6967, %v6979
        %v6990 = vsub.f32 %v6968, %v6979
        %v6991 = vsub.f32 %v6969, %v6988
        %v6992 = vsub.f32 %v6970, %v6988
        %v6993 = vmul.f32 %v6989, 1.442695
        %v6994 = vpow.pop %v6993
        %v6995 = vmul.f32 %v6990, 1.442695
        %v6996 = vpow.pop %v6995
        %v6997 = vmul.f32 %v6991, 1.442695
        %v6998 = vpow.pop %v6997
        %v6999 = vmul.f32 %v6992, 1.442695
        %v7000 = vpow.pop %v6999
        %v7001 = vsel %vm651, %v6994, 0.0
        %v7002 = vsel %vm651, %v6996, 0.0
        %v7003 = vadd.f32 %v7001, %v7002
        %v7004 = vrot.slane %v7003, 4
        %v7005 = vadd.f32 %v7003, %v7004
        %v7006 = vrot.slane %v7005, 2
        %v7007 = vadd.f32 %v7005, %v7006
        %v7008 = vrot.slane %v7007, 1
        %v7009 = vadd.f32 %v7007, %v7008
        %v7010 = vsel %vm651, %v6998, 0.0
        %v7011 = vsel %vm651, %v7000, 0.0
        %v7012 = vadd.f32 %v7010, %v7011
        %v7013 = vrot.slane %v7012, 4
        %v7014 = vadd.f32 %v7012, %v7013
        %v7015 = vrot.slane %v7014, 2
        %v7016 = vadd.f32 %v7014, %v7015
        %v7017 = vrot.slane %v7016, 1
        %v7018 = vadd.f32 %v7016, %v7017
        %v7019 = vlog2.pop %v7009
        %v7020 = vmul.f32 %v7019, 0.6931472
        %v7021 = vlog2.pop %v7018
        %v7022 = vmul.f32 %v7021, 0.6931472
        %v7023 = vadd.f32 %v6979, %v7020
        %v7024 = vadd.f32 %v6988, %v7022
        %v7025 = vsub.f32 %v6967, %v7023
        %v7026 = vsub.f32 %v6968, %v7023
        %v7027 = vsub.f32 %v6969, %v7024
        %v7028 = vsub.f32 %v6970, %v7024
        %v7029 = vsel %vm651, %v7025, -inf
        %7030 = vmax.xlane.f32.xlu0 %v7029
        %v7031 = vpop.xlane.xlu0 %7030
        %v7032 = vsel %vm651, %v7026, -inf
        %7033 = vmax.xlane.f32.xlu0 %v7032
        %v7034 = vpop.xlane.xlu0 %7033
        %v7035 = vsel %vm651, %v7027, -inf
        %7036 = vmax.xlane.f32.xlu0 %v7035
        %v7037 = vpop.xlane.xlu0 %7036
        %v7038 = vsel %vm651, %v7028, -inf
        %7039 = vmax.xlane.f32.xlu0 %v7038
        %v7040 = vpop.xlane.xlu0 %7039
        %v7041 = vsub.f32 %v7025, %v7031
        %v7042 = vsub.f32 %v7026, %v7034
        %v7043 = vsub.f32 %v7027, %v7037
        %v7044 = vsub.f32 %v7028, %v7040
        %v7045 = vmul.f32 %v7041, 1.442695
        %v7046 = vpow.pop %v7045
        %v7047 = vmul.f32 %v7042, 1.442695
        %v7048 = vpow.pop %v7047
        %v7049 = vmul.f32 %v7043, 1.442695
        %v7050 = vpow.pop %v7049
        %v7051 = vmul.f32 %v7044, 1.442695
        %v7052 = vpow.pop %v7051
        %v7053 = vsel %vm651, %v7046, 0.0
        %7054 = vadd.xlane.f32.xlu0 %v7053
        %v7055 = vpop.xlane.xlu0 %7054
        %v7056 = vsel %vm651, %v7048, 0.0
        %7057 = vadd.xlane.f32.xlu0 %v7056
        %v7058 = vpop.xlane.xlu0 %7057
        %v7059 = vsel %vm651, %v7050, 0.0
        %7060 = vadd.xlane.f32.xlu0 %v7059
        %v7061 = vpop.xlane.xlu0 %7060
        %v7062 = vsel %vm651, %v7052, 0.0
        %7063 = vadd.xlane.f32.xlu0 %v7062
        %v7064 = vpop.xlane.xlu0 %7063
        %v7065 = vlog2.pop %v7055
        %v7066 = vmul.f32 %v7065, 0.6931472
        %v7067 = vlog2.pop %v7058
        %v7068 = vmul.f32 %v7067, 0.6931472
        %v7069 = vlog2.pop %v7061
        %v7070 = vmul.f32 %v7069, 0.6931472
        %v7071 = vlog2.pop %v7064
        %v7072 = vmul.f32 %v7071, 0.6931472
        %v7073 = vadd.f32 %v7031, %v7066
        %v7074 = vadd.f32 %v7034, %v7068
        %v7075 = vadd.f32 %v7037, %v7070
        %v7076 = vadd.f32 %v7040, %v7072
        %v7077 = vsub.f32 %v7025, %v7073
        %v7078 = vsub.f32 %v7026, %v7074
        %v7079 = vsub.f32 %v7027, %v7075
        %v7080 = vsub.f32 %v7028, %v7076
        %v7081 = vsel %vm651, %v7077, -inf
        %v7082 = vsel %vm651, %v7078, -inf
        %v7083 = vmax.f32 %v7081, %v7082
        %v7084 = vrot.slane %v7083, 4
        %v7085 = vmax.f32 %v7083, %v7084
        %v7086 = vrot.slane %v7085, 2
        %v7087 = vmax.f32 %v7085, %v7086
        %v7088 = vrot.slane %v7087, 1
        %v7089 = vmax.f32 %v7087, %v7088
        %v7090 = vsel %vm651, %v7079, -inf
        %v7091 = vsel %vm651, %v7080, -inf
        %v7092 = vmax.f32 %v7090, %v7091
        %v7093 = vrot.slane %v7092, 4
        %v7094 = vmax.f32 %v7092, %v7093
        %v7095 = vrot.slane %v7094, 2
        %v7096 = vmax.f32 %v7094, %v7095
        %v7097 = vrot.slane %v7096, 1
        %v7098 = vmax.f32 %v7096, %v7097
        %v7099 = vsub.f32 %v7077, %v7089
        %v7100 = vsub.f32 %v7078, %v7089
        %v7101 = vsub.f32 %v7079, %v7098
        %v7102 = vsub.f32 %v7080, %v7098
        %v7103 = vmul.f32 %v7099, 1.442695
        %v7104 = vpow.pop %v7103
        %v7105 = vmul.f32 %v7100, 1.442695
        %v7106 = vpow.pop %v7105
        %v7107 = vmul.f32 %v7101, 1.442695
        %v7108 = vpow.pop %v7107
        %v7109 = vmul.f32 %v7102, 1.442695
        %v7110 = vpow.pop %v7109
        %v7111 = vsel %vm651, %v7104, 0.0
        %v7112 = vsel %vm651, %v7106, 0.0
        %v7113 = vadd.f32 %v7111, %v7112
        %v7114 = vrot.slane %v7113, 4
        %v7115 = vadd.f32 %v7113, %v7114
        %v7116 = vrot.slane %v7115, 2
        %v7117 = vadd.f32 %v7115, %v7116
        %v7118 = vrot.slane %v7117, 1
        %v7119 = vadd.f32 %v7117, %v7118
        %v7120 = vsel %vm651, %v7108, 0.0
        %v7121 = vsel %vm651, %v7110, 0.0
        %v7122 = vadd.f32 %v7120, %v7121
        %v7123 = vrot.slane %v7122, 4
        %v7124 = vadd.f32 %v7122, %v7123
        %v7125 = vrot.slane %v7124, 2
        %v7126 = vadd.f32 %v7124, %v7125
        %v7127 = vrot.slane %v7126, 1
        %v7128 = vadd.f32 %v7126, %v7127
        %v7129 = vlog2.pop %v7119
        %v7130 = vmul.f32 %v7129, 0.6931472
        %v7131 = vlog2.pop %v7128
        %v7132 = vmul.f32 %v7131, 0.6931472
        %v7133 = vadd.f32 %v7089, %v7130
        %v7134 = vadd.f32 %v7098, %v7132
        %v7135 = vsub.f32 %v7077, %v7133
        %v7136 = vsub.f32 %v7078, %v7133
        %v7137 = vsub.f32 %v7079, %v7134
        %v7138 = vsub.f32 %v7080, %v7134
        %v7139 = vmul.f32 %v7135, 1.442695
        %v7140 = vpow.pop %v7139
        %v7141 = vmul.f32 %v7136, 1.442695
        %v7142 = vpow.pop %v7141
        %v7143 = vmul.f32 %v7137, 1.442695
        %v7144 = vpow.pop %v7143
        %v7145 = vmul.f32 %v7138, 1.442695
        %v7146 = vpow.pop %v7145
        %v7147 = vld [vmem:[#allocation3] sm:$0xff]
        %v7148 = vld [vmem:[#allocation3 + $0x8] sm:$0xff]
        %v7149 = vld [vmem:[#allocation3 + $0x10] sm:$0xff]
        %v7150 = vld [vmem:[#allocation3 + $0x18] sm:$0xff]
        %v7151 = vld [vmem:[#allocation4] sm:$0xff]
        %v7152 = vld [vmem:[#allocation4 + $0x8] sm:$0xff]
        %v7153 = vld [vmem:[#allocation4 + $0x10] sm:$0xff]
        %v7154 = vld [vmem:[#allocation4 + $0x18] sm:$0xff]
        %v7156 = vsel %vm651, %v7140, 0
        %v7159 = vsel %vm651, %v7142, 0
        %7161 = vmatpush.msra.mxu0 0.0
        %7162 = vmatpush.msra.mxu0 0.0
        %7163 = vmatpush.msra.mxu0 0.0
        %7164 = vmatpush.msra.mxu0 0.0
        %7165 = vmatpush.msra.mxu0 0.0
        %7166 = vmatpush.msra.mxu0 0.0
        %7167 = vmatpush.msra.mxu0 0.0
        %7168 = vmatpush.msra.mxu0 0.0
        %7169 = vmatpush.msra.mxu0 0.0
        %7170 = vmatpush.msra.mxu0 0.0
        %7171 = vmatpush.msra.mxu0 0.0
        %7172 = vmatpush.msra.mxu0 0.0
        %7173 = vmatpush.msra.mxu0 0.0
        %7174 = vmatpush.msra.mxu0 0.0
        %7175 = vmatpush.msra.mxu0 %v7152
        %7176 = vmatpush.msra.mxu0 %v7151
        %7177 = vmatmul.f32.gmra.mxu0 %v7156
        %v7178 = vpop.f32.mrf.mxu0
        %v7179 = vadd.f32 0.0, %v7178
        %7180 = vmatmul.f32.gmra.mxu0 %v7159
        %v7181 = vpop.f32.mrf.mxu0
        %v7182 = vadd.f32 0.0, %v7181
        %7183 = vdwg.mxu0
        %v7185 = vsel %vm651, %v7144, 0
        %v7188 = vsel %vm651, %v7146, 0
        %7190 = vmatpush.msra.mxu0 0.0
        %7191 = vmatpush.msra.mxu0 0.0
        %7192 = vmatpush.msra.mxu0 0.0
        %7193 = vmatpush.msra.mxu0 0.0
        %7194 = vmatpush.msra.mxu0 0.0
        %7195 = vmatpush.msra.mxu0 0.0
        %7196 = vmatpush.msra.mxu0 0.0
        %7197 = vmatpush.msra.mxu0 0.0
        %7198 = vmatpush.msra.mxu0 0.0
        %7199 = vmatpush.msra.mxu0 0.0
        %7200 = vmatpush.msra.mxu0 0.0
        %7201 = vmatpush.msra.mxu0 0.0
        %7202 = vmatpush.msra.mxu0 0.0
        %7203 = vmatpush.msra.mxu0 0.0
        %7204 = vmatpush.msra.mxu0 %v7154
        %7205 = vmatpush.msra.mxu0 %v7153
        %7206 = vmatmul.f32.gmra.mxu0 %v7185
        %v7207 = vpop.f32.mrf.mxu0
        %v7208 = vadd.f32 0.0, %v7207
        %7209 = vmatmul.f32.gmra.mxu0 %v7188
        %v7210 = vpop.f32.mrf.mxu0
        %v7211 = vadd.f32 0.0, %v7210
        %7212 = vdwg.mxu0
        %v7214 = vsel %vm651, %v7179, 0
        %v7217 = vsel %vm651, %v7182, 0
        %7219 = vmatpush.xpose.msra.mxu0 0.0
        %7220 = vmatpush.xpose.msra.mxu0 0.0
        %7221 = vmatpush.xpose.msra.mxu0 0.0
        %7222 = vmatpush.xpose.msra.mxu0 0.0
        %7223 = vmatpush.xpose.msra.mxu0 0.0
        %7224 = vmatpush.xpose.msra.mxu0 0.0
        %7225 = vmatpush.xpose.msra.mxu0 0.0
        %7226 = vmatpush.xpose.msra.mxu0 0.0
        %7227 = vmatpush.xpose.msra.mxu0 0.0
        %7228 = vmatpush.xpose.msra.mxu0 0.0
        %7229 = vmatpush.xpose.msra.mxu0 0.0
        %7230 = vmatpush.xpose.msra.mxu0 0.0
        %7231 = vmatpush.xpose.msra.mxu0 0.0
        %7232 = vmatpush.xpose.msra.mxu0 0.0
        %7233 = vmatpush.xpose.msra.mxu0 %v7159
        %7234 = vmatpush.xpose.msra.mxu0 %v7156
        %7235 = vmatmul.f32.gmra.mxu0 %v7214
        %v7236 = vpop.f32.mrf.mxu0
        %v7237 = vadd.f32 0.0, %v7236
        %7238 = vmatmul.f32.gmra.mxu0 %v7217
        %v7239 = vpop.f32.mrf.mxu0
        %v7240 = vadd.f32 0.0, %v7239
        %7241 = vdwg.mxu0
        %v7243 = vsel %vm651, %v7208, 0
        %v7246 = vsel %vm651, %v7211, 0
        %7248 = vmatpush.xpose.msra.mxu0 0.0
        %7249 = vmatpush.xpose.msra.mxu0 0.0
        %7250 = vmatpush.xpose.msra.mxu0 0.0
        %7251 = vmatpush.xpose.msra.mxu0 0.0
        %7252 = vmatpush.xpose.msra.mxu0 0.0
        %7253 = vmatpush.xpose.msra.mxu0 0.0
        %7254 = vmatpush.xpose.msra.mxu0 0.0
        %7255 = vmatpush.xpose.msra.mxu0 0.0
        %7256 = vmatpush.xpose.msra.mxu0 0.0
        %7257 = vmatpush.xpose.msra.mxu0 0.0
        %7258 = vmatpush.xpose.msra.mxu0 0.0
        %7259 = vmatpush.xpose.msra.mxu0 0.0
        %7260 = vmatpush.xpose.msra.mxu0 0.0
        %7261 = vmatpush.xpose.msra.mxu0 0.0
        %7262 = vmatpush.xpose.msra.mxu0 %v7188
        %7263 = vmatpush.xpose.msra.mxu0 %v7185
        %7264 = vmatmul.f32.gmra.mxu0 %v7243
        %v7265 = vpop.f32.mrf.mxu0
        %v7266 = vadd.f32 0.0, %v7265
        %7267 = vmatmul.f32.gmra.mxu0 %v7246
        %v7268 = vpop.f32.mrf.mxu0
        %v7269 = vadd.f32 0.0, %v7268
        %7270 = vdwg.mxu0
        %v7271 = vsub.f32 %v7147, %v7237
        %v7272 = vsub.f32 %v7148, %v7240
        %v7273 = vsub.f32 %v7149, %v7266
        %v7274 = vsub.f32 %v7150, %v7269
        %v7275 = vmax.f32 %v7271, 0.0
        %v7276 = vmax.f32 %v7272, 0.0
        %v7277 = vmax.f32 %v7273, 0.0
        %v7278 = vmax.f32 %v7274, 0.0
        %v7279 = vsel %vm651, %v7275, 0.0
        %7280 = vadd.xlane.f32.xlu0 %v7279
        %v7281 = vpop.xlane.xlu0 %7280
        %v7282 = vsel %vm651, %v7276, 0.0
        %7283 = vadd.xlane.f32.xlu0 %v7282
        %v7284 = vpop.xlane.xlu0 %7283
        %v7285 = vsel %vm651, %v7277, 0.0
        %7286 = vadd.xlane.f32.xlu0 %v7285
        %v7287 = vpop.xlane.xlu0 %7286
        %v7288 = vsel %vm651, %v7278, 0.0
        %7289 = vadd.xlane.f32.xlu0 %v7288
        %v7290 = vpop.xlane.xlu0 %7289
        %v7295 = vperm.slane %v7281, %v946
        %v7296 = vperm.slane %v7284, %v1469
        %v7297 = vsel %vm1471, %v7296, %v7295
        %v7298 = vperm.slane %v7287, %v946
        %v7299 = vperm.slane %v7290, %v1469
        %v7300 = vsel %vm1471, %v7299, %v7298
        %v7301 = vsel %vm1494, %v7300, %v7297
        %vm7303 = vcmask 123904
        %v7304 = vsel %vm7303, %v7301, 0.0
        %7305 = vadd.xlane.f32.xlu0 %v7304
        %v7306 = vpop.xlane.xlu0 %7305
        %v7307 = vsub.f32 0.0, %v7306
        %v7309 = vperm.slane %v7307, %v946
        %vm7311 = vcmask 8192
        %7312 = vst.msk [vmem:[%s550] sm:$0x1] %vm7311, %v7309
        %s7313 = sand.u32 %s325, 1
        %s7314 = scalar_lea.sflag [#allocation11], %s7313
        %s7315 = sand.u32 %s325, 1
        %s7316 = scalar_lea.vmem [#allocation17], %s7315
        // Predicated region
        $region85: #{tpu_custom_call.1} parent=67 // pred_check
          %p7317 = pneg %p335
        $region86: #{tpu_custom_call.1} parent=67 // pred_check_branch
          %7319 = sbr.rel (%p7317) target = $region88
        $region87: #{tpu_custom_call.1} parent=67 // pred_region
          %7321 = vsyncadd %s7314, 0
          %s7322 = scalar_lea.hbm %s14, %s50
          %s7324 = sshll.u32 %s7316, 4
          %s7325 = int_to_ptr.vmem [resolvable:$true] %s7324
          %s7326 = sshll.u32 %s7322, 4
          %s7327 = int_to_ptr.hbm [resolvable:$true] %s7326
          %7329 = dma.vmem_to_hbm [thread:$0]  %s7325, 16, %s7327, %s7314
        $region88: #{tpu_custom_call.1} parent=67 // pred_fallthru
          _
      $region68: #{tpu_custom_call.1} parent=5 // pred_fallthru
        _
      %p7330 = scmp.le.s32.totalorder 2, %s45
      // Predicated region
      $region89: #{tpu_custom_call.1} parent=5 // pred_check
        %p7331 = pneg %p7330
      $region90: #{tpu_custom_call.1} parent=5 // pred_check_branch
        %7333 = sbr.rel (%p7331) target = $region92
      $region91: #{tpu_custom_call.1} parent=5 // pred_region
        %s7334 = ssub.s32 %s45, 2
        // Predicated region
        $region93: #{tpu_custom_call.1} parent=91 // pred_check
          %p7335 = pneg %p341
        $region94: #{tpu_custom_call.1} parent=91 // pred_check_branch
          %7337 = sbr.rel (%p7335) target = $region96
        $region95: #{tpu_custom_call.1} parent=91 // pred_region
          %s7338 = sand.u32 %s326, 1
          %s7339 = scalar_lea.sflag [#allocation11], %s7338
          %s7340 = sand.u32 %s326, 1
          %s7341 = scalar_lea.vmem [#allocation17], %s7340
          %7343 = dma.done %s7339, 16
        $region96: #{tpu_custom_call.1} parent=91 // pred_fallthru
          _
      $region92: #{tpu_custom_call.1} parent=5 // pred_fallthru
        _
    $region6: #{tpu_custom_call.1} parent=1 // loop_footer
      %s49 = sadd.s32 1, %s45
    $region7: #{tpu_custom_call.1} parent=1 // loop_footer_branch
      %44 = sbr.rel target = $region3
    $region8: #{tpu_custom_call.1} parent=1 // loop_exit
      _
    %7344 = vsyncpa [#allocation10], 1
    %s7345 = scalar_lea.sflag [#allocation10], 1
    %7346 = vsyncpa %s7345, 1
    %7347 = vsyncpa [#allocation13], 1
    %s7348 = scalar_lea.sflag [#allocation13], 1
    %7349 = vsyncpa %s7348, 1
    %7350 = vsyncpa [#allocation16], 1
    %7351 = vsyncpa [#allocation11], 1
    %s7352 = scalar_lea.sflag [#allocation11], 1
    %7353 = vsyncpa %s7352, 1

</llo_original>
